<compile_context>
chip_gen: v7x
topology: tpu7x:2x2x1
jax: 0.10.0
libtpu: 0.0.40
codegen_flags: <defaults>
</compile_context>

<pallas_src>
import functools

import jax
import jax.numpy as jnp
from jax.experimental import pallas as pl
from jax.experimental.pallas import tpu as pltpu


def _round_up(x: int, m: int) -> int:
    return (x + m - 1) // m * m


# ----------------------------------------------------------------------------
# Pallas kernel 1: conv-as-matmul, lane-dense output
#   out(OC, tn) = relu( W(OC, K) @ P(K, tn) + b(OC, 1) )
# ----------------------------------------------------------------------------
def _conv_mm_kernel(w_ref, p_ref, b_ref, o_ref):
    acc = jnp.dot(w_ref[...], p_ref[...], preferred_element_type=jnp.float32)
    acc = jnp.maximum(acc + b_ref[...], 0.0)          # f32 epilogue
    o_ref[...] = acc.astype(o_ref.dtype)


# ----------------------------------------------------------------------------
# Pallas kernel 2: fused fc1(+ReLU) -> fc2
#   h = relu(x @ W1 + b1);  q = h @ W2 + b2
# ----------------------------------------------------------------------------
def _fc_fused_kernel(x_ref, w1_ref, b1_ref, w2_ref, b2_ref, o_ref):
    h = jnp.dot(x_ref[...], w1_ref[...], preferred_element_type=jnp.float32)
    h = jnp.maximum(h + b1_ref[...], 0.0)
    q = jnp.dot(h.astype(jnp.bfloat16), w2_ref[...],
                preferred_element_type=jnp.float32)
    o_ref[...] = (q + b2_ref[...]).astype(o_ref.dtype)


# ----------------------------------------------------------------------------
# im2col glue for (C, B, H, W) activations — pure slicing/reshape, no transpose
# ----------------------------------------------------------------------------
def _im2col_cf(x, kh, kw, stride):
    """x: (C, B, H, W) -> patches (C*KH*KW, B*OH*OW), row order (c, kh, kw)."""
    C, B, H, W = x.shape
    oh = (H - kh) // stride + 1
    ow = (W - kw) // stride + 1
    cols = []
    for i in range(kh):
        for j in range(kw):
            cols.append(x[:, :, i:i + stride * oh:stride, j:j + stride * ow:stride])
    p = jnp.stack(cols, axis=1)                       # (C, KH*KW, B, OH, OW)
    p = p.reshape(C * kh * kw, B * oh * ow)           # contiguous merge only
    return p, oh, ow


def conv2d_relu_cf(x_cf, w2d, b_col, *, stride, kh, kw):
    """Conv2d (valid) + ReLU on channel-first-across-batch activations.

    x_cf: (C, B, H, W) bf16; w2d: (OC, C*KH*KW) bf16; b_col: (OC, 1) f32.
    Returns (OC, B, OH, OW) bf16."""
    C, B, H, W = x_cf.shape
    OC, K = w2d.shape
    assert K == C * kh * kw

    patches, oh, ow = _im2col_cf(x_cf, kh, kw, stride)    # (K, N) bf16
    N = B * oh * ow
    tn = min(1024, _round_up(N, 128))
    Npad = _round_up(N, tn)
    if Npad != N:
        patches = jnp.pad(patches, ((0, 0), (0, Npad - N)))

    y = pl.pallas_call(
        _conv_mm_kernel,
        out_shape=jax.ShapeDtypeStruct((OC, Npad), jnp.bfloat16),
        grid=(Npad // tn,),
        in_specs=[
            pl.BlockSpec((OC, K), lambda j: (0, 0)),      # weight, pinned
            pl.BlockSpec((K, tn), lambda j: (0, j)),      # patch tile (pipelined)
            pl.BlockSpec((OC, 1), lambda j: (0, 0)),      # bias, pinned
        ],
        out_specs=pl.BlockSpec((OC, tn), lambda j: (0, j)),
        compiler_params=pltpu.CompilerParams(
            dimension_semantics=("parallel",)),
    )(w2d, patches, b_col)

    return y[:, :N].reshape(OC, B, oh, ow)


def fc_fused(x, w1, b1, w2, b2):
    """x: (B, K) bf16 -> relu(x@w1+b1)@w2+b2, f32, shape (B, N2)."""
    B, K = x.shape
    N1 = w1.shape[1]
    N2 = w2.shape[1]
    tm = min(128, _round_up(B, 8))
    Mpad = _round_up(B, tm)
    if Mpad != B:
        x = jnp.pad(x, ((0, Mpad - B), (0, 0)))

    out = pl.pallas_call(
        _fc_fused_kernel,
        out_shape=jax.ShapeDtypeStruct((Mpad, N2), jnp.float32),
        grid=(Mpad // tm,),
        in_specs=[
            pl.BlockSpec((tm, K), lambda i: (i, 0)),      # activation tile
            pl.BlockSpec((K, N1), lambda i: (0, 0)),      # fc1 weight, pinned
            pl.BlockSpec((1, N1), lambda i: (0, 0)),
            pl.BlockSpec((N1, N2), lambda i: (0, 0)),     # fc2 weight, pinned
            pl.BlockSpec((1, N2), lambda i: (0, 0)),
        ],
        out_specs=pl.BlockSpec((tm, N2), lambda i: (i, 0)),
        compiler_params=pltpu.CompilerParams(
            dimension_semantics=("parallel",)),
    )(x, w1, b1, w2, b2)
    return out[:B]


# ----------------------------------------------------------------------------
# QNetwork parameters (pre-transformed for the kernels) + forward
# ----------------------------------------------------------------------------
def init_qnetwork_params(key, in_channels, action_dim):
    def uniform(k, shape, fan_in):
        bound = 1.0 / jnp.sqrt(fan_in)
        return jax.random.uniform(k, shape, jnp.float32, -bound, bound)

    ks = jax.random.split(key, 10)
    # PyTorch-layout raw weights.
    c1w = uniform(ks[0], (32, in_channels, 8, 8), in_channels * 64)
    c1b = uniform(ks[1], (32,), in_channels * 64)
    c2w = uniform(ks[2], (64, 32, 4, 4), 32 * 16)
    c2b = uniform(ks[3], (64,), 32 * 16)
    c3w = uniform(ks[4], (64, 64, 3, 3), 64 * 9)
    c3b = uniform(ks[5], (64,), 64 * 9)
    f1w = uniform(ks[6], (512, 7 * 7 * 64), 7 * 7 * 64)   # torch (out, in)
    f1b = uniform(ks[7], (512,), 7 * 7 * 64)
    f2w = uniform(ks[8], (action_dim, 512), 512)
    f2b = uniform(ks[9], (action_dim,), 512)

    a_pad = _round_up(action_dim, 128)   # lane-dense fc2 output, sliced outside
    params = {
        # conv weights: (OC, C*KH*KW) bf16 — torch reshape, feature order (c,kh,kw)
        "conv1_w": c1w.reshape(32, -1).astype(jnp.bfloat16),
        "conv1_b": c1b.reshape(32, 1),
        "conv2_w": c2w.reshape(64, -1).astype(jnp.bfloat16),
        "conv2_b": c2b.reshape(64, 1),
        "conv3_w": c3w.reshape(64, -1).astype(jnp.bfloat16),
        "conv3_b": c3b.reshape(64, 1),
        # fc weights pre-transposed to (K, N) bf16; biases (1, N) f32.
        "fc1_w": f1w.T.astype(jnp.bfloat16),
        "fc1_b": f1b.reshape(1, 512),
        "fc2_w": jnp.zeros((512, a_pad), jnp.bfloat16)
                   .at[:, :action_dim].set(f2w.T.astype(jnp.bfloat16)),
        "fc2_b": jnp.zeros((1, a_pad), jnp.float32)
                   .at[:, :action_dim].set(f2b),
    }
    return params


def qnetwork_forward(params, x, action_dim):
    """x: (B, C, 84, 84) f32, NCHW (PyTorch convention). Returns (B, action_dim)."""
    B = x.shape[0]
    # One cheap input permutation into the channel-first-across-batch layout.
    x = x.transpose(1, 0, 2, 3).astype(jnp.bfloat16)                     # (C,B,84,84)
    x = conv2d_relu_cf(x, params["conv1_w"], params["conv1_b"],
                       stride=4, kh=8, kw=8)                             # (32,B,20,20)
    x = conv2d_relu_cf(x, params["conv2_w"], params["conv2_b"],
                       stride=2, kh=4, kw=4)                             # (64,B,9,9)
    x = conv2d_relu_cf(x, params["conv3_w"], params["conv3_b"],
                       stride=1, kh=3, kw=3)                             # (64,B,7,7)
    # Flatten in torch's (C, H, W) order: one small activation transpose.
    x = x.transpose(1, 0, 2, 3).reshape(B, -1)                           # (B, 3136)
    q = fc_fused(x, params["fc1_w"], params["fc1_b"],
                 params["fc2_w"], params["fc2_b"])                       # (B, a_pad)
    return q[:, :action_dim]


if __name__ == "__main__":
    # DQN architecture is hard-wired to 84x84 spatial inputs (fc1 expects 7*7*64),
    # so "small" here means small batch / channel count: B=2, C=4 stacked frames.
    batch = 2
    in_channels = 4
    action_dim = 6

    key = jax.random.PRNGKey(0)
    pkey, xkey = jax.random.split(key)
    params = init_qnetwork_params(pkey, in_channels, action_dim)
    x = jax.random.normal(xkey, (batch, in_channels, 84, 84), jnp.float32)

    fwd = jax.jit(qnetwork_forward, static_argnums=2)
    q = fwd(params, x, action_dim)
    q = jax.block_until_ready(q)
    assert q.shape == (batch, action_dim), q.shape
    print("KERNEL_OK")
</pallas_src>

<mosaic_0001>
module attributes {stable_mosaic.version = 11 : i64} {
  func.func @_conv_mm_kernel(%arg0: i32, %arg1: memref<32x256xbf16, #tpu.memory_space<vmem>>, %arg2: memref<256x896xbf16, #tpu.memory_space<vmem>>, %arg3: memref<32x1xf32, #tpu.memory_space<vmem>>, %arg4: memref<32x896xbf16, #tpu.memory_space<vmem>>) attributes {dimension_semantics = [#tpu.dimension_semantics<parallel>], iteration_bounds = array<i64: 1>, scalar_prefetch = 0 : i64, scratch_operands = 0 : i64, tpu.core_type = #tpu.core_type<tc>, window_params = [{pipeline_mode = #tpu.pipeline_mode<synchronous>, transform_indices = @transform_0, window_bounds = array<i64: 32, 256>}, {transform_indices = @transform_1, window_bounds = array<i64: 256, 896>}, {pipeline_mode = #tpu.pipeline_mode<synchronous>, transform_indices = @transform_2, window_bounds = array<i64: 32, 1>}, {transform_indices = @transform_3, window_bounds = array<i64: 32, 896>}]} {
    %c0 = arith.constant 0 : index
    %c0_0 = arith.constant 0 : index
    %0 = vector.load %arg1[%c0, %c0_0] : memref<32x256xbf16, #tpu.memory_space<vmem>>, vector<32x256xbf16>
    %c0_1 = arith.constant 0 : index
    %c0_2 = arith.constant 0 : index
    %1 = vector.load %arg2[%c0_1, %c0_2] : memref<256x896xbf16, #tpu.memory_space<vmem>>, vector<256x896xbf16>
    %cst = arith.constant dense<0.000000e+00> : vector<32x896xf32>
    %2 = tpu.matmul %0, %1, %cst {dimension_numbers = #tpu.dot_dimension_numbers<[1], [0], [0], [1], [0, 0, 1, 1], [], []>} : vector<32x256xbf16>, vector<256x896xbf16>, vector<32x896xf32> -> vector<32x896xf32>
    %c0_3 = arith.constant 0 : index
    %c0_4 = arith.constant 0 : index
    %3 = vector.load %arg3[%c0_3, %c0_4] : memref<32x1xf32, #tpu.memory_space<vmem>>, vector<32x1xf32>
    %4 = vector.broadcast %3 : vector<32x1xf32> to vector<32x896xf32>
    %5 = arith.addf %2, %4 : vector<32x896xf32>
    %cst_5 = arith.constant 0.000000e+00 : f32
    %6 = vector.broadcast %cst_5 : f32 to vector<32x896xf32>
    %7 = arith.maximumf %5, %6 : vector<32x896xf32>
    %8 = arith.truncf %7 : vector<32x896xf32> to vector<32x896xbf16>
    %c0_6 = arith.constant 0 : index
    %c0_7 = arith.constant 0 : index
    %9 = vector.load %arg4[%c0_6, %c0_7] : memref<32x896xbf16, #tpu.memory_space<vmem>>, vector<32x896xbf16>
    tpu.vector_store %arg4[%c0_6, %c0_7], %8 {strides = array<i32>} : memref<32x896xbf16, #tpu.memory_space<vmem>>, vector<32x896xbf16>,
    return
  }
  func.func @transform_0(%arg0: i32) -> (i32, i32) {
    %c0_i32 = arith.constant 0 : i32
    %c0_i32_0 = arith.constant 0 : i32
    %c0_i32_1 = arith.constant 0 : i32
    return %c0_i32, %c0_i32_0 : i32, i32
  }
  func.func @transform_1(%arg0: i32) -> (i32, i32) {
    %c0_i32 = arith.constant 0 : i32
    %c0_i32_0 = arith.constant 0 : i32
    return %c0_i32, %arg0 : i32, i32
  }
  func.func @transform_2(%arg0: i32) -> (i32, i32) {
    %c0_i32 = arith.constant 0 : i32
    %c0_i32_0 = arith.constant 0 : i32
    %c0_i32_1 = arith.constant 0 : i32
    return %c0_i32, %c0_i32_0 : i32, i32
  }
  func.func @transform_3(%arg0: i32) -> (i32, i32) {
    %c0_i32 = arith.constant 0 : i32
    %c0_i32_0 = arith.constant 0 : i32
    return %c0_i32, %arg0 : i32, i32
  }
}

module attributes {stable_mosaic.version = 11 : i64} {
  func.func @_conv_mm_kernel(%arg0: i32, %arg1: memref<64x512xbf16, #tpu.memory_space<vmem>>, %arg2: memref<512x256xbf16, #tpu.memory_space<vmem>>, %arg3: memref<64x1xf32, #tpu.memory_space<vmem>>, %arg4: memref<64x256xbf16, #tpu.memory_space<vmem>>) attributes {dimension_semantics = [#tpu.dimension_semantics<parallel>], iteration_bounds = array<i64: 1>, scalar_prefetch = 0 : i64, scratch_operands = 0 : i64, tpu.core_type = #tpu.core_type<tc>, window_params = [{pipeline_mode = #tpu.pipeline_mode<synchronous>, transform_indices = @transform_0, window_bounds = array<i64: 64, 512>}, {transform_indices = @transform_1, window_bounds = array<i64: 512, 256>}, {pipeline_mode = #tpu.pipeline_mode<synchronous>, transform_indices = @transform_2, window_bounds = array<i64: 64, 1>}, {transform_indices = @transform_3, window_bounds = array<i64: 64, 256>}]} {
    %c0 = arith.constant 0 : index
    %c0_0 = arith.constant 0 : index
    %0 = vector.load %arg1[%c0, %c0_0] : memref<64x512xbf16, #tpu.memory_space<vmem>>, vector<64x512xbf16>
    %c0_1 = arith.constant 0 : index
    %c0_2 = arith.constant 0 : index
    %1 = vector.load %arg2[%c0_1, %c0_2] : memref<512x256xbf16, #tpu.memory_space<vmem>>, vector<512x256xbf16>
    %cst = arith.constant dense<0.000000e+00> : vector<64x256xf32>
    %2 = tpu.matmul %0, %1, %cst {dimension_numbers = #tpu.dot_dimension_numbers<[1], [0], [0], [1], [0, 0, 1, 1], [], []>} : vector<64x512xbf16>, vector<512x256xbf16>, vector<64x256xf32> -> vector<64x256xf32>
    %c0_3 = arith.constant 0 : index
    %c0_4 = arith.constant 0 : index
    %3 = vector.load %arg3[%c0_3, %c0_4] : memref<64x1xf32, #tpu.memory_space<vmem>>, vector<64x1xf32>
    %4 = vector.broadcast %3 : vector<64x1xf32> to vector<64x256xf32>
    %5 = arith.addf %2, %4 : vector<64x256xf32>
    %cst_5 = arith.constant 0.000000e+00 : f32
    %6 = vector.broadcast %cst_5 : f32 to vector<64x256xf32>
    %7 = arith.maximumf %5, %6 : vector<64x256xf32>
    %8 = arith.truncf %7 : vector<64x256xf32> to vector<64x256xbf16>
    %c0_6 = arith.constant 0 : index
    %c0_7 = arith.constant 0 : index
    %9 = vector.load %arg4[%c0_6, %c0_7] : memref<64x256xbf16, #tpu.memory_space<vmem>>, vector<64x256xbf16>
    tpu.vector_store %arg4[%c0_6, %c0_7], %8 {strides = array<i32>} : memref<64x256xbf16, #tpu.memory_space<vmem>>, vector<64x256xbf16>,
    return
  }
  func.func @transform_0(%arg0: i32) -> (i32, i32) {
    %c0_i32 = arith.constant 0 : i32
    %c0_i32_0 = arith.constant 0 : i32
    %c0_i32_1 = arith.constant 0 : i32
    return %c0_i32, %c0_i32_0 : i32, i32
  }
  func.func @transform_1(%arg0: i32) -> (i32, i32) {
    %c0_i32 = arith.constant 0 : i32
    %c0_i32_0 = arith.constant 0 : i32
    return %c0_i32, %arg0 : i32, i32
  }
  func.func @transform_2(%arg0: i32) -> (i32, i32) {
    %c0_i32 = arith.constant 0 : i32
    %c0_i32_0 = arith.constant 0 : i32
    %c0_i32_1 = arith.constant 0 : i32
    return %c0_i32, %c0_i32_0 : i32, i32
  }
  func.func @transform_3(%arg0: i32) -> (i32, i32) {
    %c0_i32 = arith.constant 0 : i32
    %c0_i32_0 = arith.constant 0 : i32
    return %c0_i32, %arg0 : i32, i32
  }
}

module attributes {stable_mosaic.version = 11 : i64} {
  func.func @_conv_mm_kernel(%arg0: i32, %arg1: memref<64x576xbf16, #tpu.memory_space<vmem>>, %arg2: memref<576x128xbf16, #tpu.memory_space<vmem>>, %arg3: memref<64x1xf32, #tpu.memory_space<vmem>>, %arg4: memref<64x128xbf16, #tpu.memory_space<vmem>>) attributes {dimension_semantics = [#tpu.dimension_semantics<parallel>], iteration_bounds = array<i64: 1>, scalar_prefetch = 0 : i64, scratch_operands = 0 : i64, tpu.core_type = #tpu.core_type<tc>, window_params = [{pipeline_mode = #tpu.pipeline_mode<synchronous>, transform_indices = @transform_0, window_bounds = array<i64: 64, 576>}, {transform_indices = @transform_1, window_bounds = array<i64: 576, 128>}, {pipeline_mode = #tpu.pipeline_mode<synchronous>, transform_indices = @transform_2, window_bounds = array<i64: 64, 1>}, {transform_indices = @transform_3, window_bounds = array<i64: 64, 128>}]} {
    %c0 = arith.constant 0 : index
    %c0_0 = arith.constant 0 : index
    %0 = vector.load %arg1[%c0, %c0_0] : memref<64x576xbf16, #tpu.memory_space<vmem>>, vector<64x576xbf16>
    %c0_1 = arith.constant 0 : index
    %c0_2 = arith.constant 0 : index
    %1 = vector.load %arg2[%c0_1, %c0_2] : memref<576x128xbf16, #tpu.memory_space<vmem>>, vector<576x128xbf16>
    %cst = arith.constant dense<0.000000e+00> : vector<64x128xf32>
    %2 = tpu.matmul %0, %1, %cst {dimension_numbers = #tpu.dot_dimension_numbers<[1], [0], [0], [1], [0, 0, 1, 1], [], []>} : vector<64x576xbf16>, vector<576x128xbf16>, vector<64x128xf32> -> vector<64x128xf32>
    %c0_3 = arith.constant 0 : index
    %c0_4 = arith.constant 0 : index
    %3 = vector.load %arg3[%c0_3, %c0_4] : memref<64x1xf32, #tpu.memory_space<vmem>>, vector<64x1xf32>
    %4 = vector.broadcast %3 : vector<64x1xf32> to vector<64x128xf32>
    %5 = arith.addf %2, %4 : vector<64x128xf32>
    %cst_5 = arith.constant 0.000000e+00 : f32
    %6 = vector.broadcast %cst_5 : f32 to vector<64x128xf32>
    %7 = arith.maximumf %5, %6 : vector<64x128xf32>
    %8 = arith.truncf %7 : vector<64x128xf32> to vector<64x128xbf16>
    %c0_6 = arith.constant 0 : index
    %c0_7 = arith.constant 0 : index
    %9 = vector.load %arg4[%c0_6, %c0_7] : memref<64x128xbf16, #tpu.memory_space<vmem>>, vector<64x128xbf16>
    tpu.vector_store %arg4[%c0_6, %c0_7], %8 {strides = array<i32>} : memref<64x128xbf16, #tpu.memory_space<vmem>>, vector<64x128xbf16>,
    return
  }
  func.func @transform_0(%arg0: i32) -> (i32, i32) {
    %c0_i32 = arith.constant 0 : i32
    %c0_i32_0 = arith.constant 0 : i32
    %c0_i32_1 = arith.constant 0 : i32
    return %c0_i32, %c0_i32_0 : i32, i32
  }
  func.func @transform_1(%arg0: i32) -> (i32, i32) {
    %c0_i32 = arith.constant 0 : i32
    %c0_i32_0 = arith.constant 0 : i32
    return %c0_i32, %arg0 : i32, i32
  }
  func.func @transform_2(%arg0: i32) -> (i32, i32) {
    %c0_i32 = arith.constant 0 : i32
    %c0_i32_0 = arith.constant 0 : i32
    %c0_i32_1 = arith.constant 0 : i32
    return %c0_i32, %c0_i32_0 : i32, i32
  }
  func.func @transform_3(%arg0: i32) -> (i32, i32) {
    %c0_i32 = arith.constant 0 : i32
    %c0_i32_0 = arith.constant 0 : i32
    return %c0_i32, %arg0 : i32, i32
  }
}

module attributes {stable_mosaic.version = 11 : i64} {
  func.func @_fc_fused_kernel(%arg0: i32, %arg1: memref<8x3136xbf16, #tpu.memory_space<vmem>>, %arg2: memref<3136x512xbf16, #tpu.memory_space<vmem>>, %arg3: memref<1x512xf32, #tpu.memory_space<vmem>>, %arg4: memref<512x128xbf16, #tpu.memory_space<vmem>>, %arg5: memref<1x128xf32, #tpu.memory_space<vmem>>, %arg6: memref<8x128xf32, #tpu.memory_space<vmem>>) attributes {dimension_semantics = [#tpu.dimension_semantics<parallel>], iteration_bounds = array<i64: 1>, scalar_prefetch = 0 : i64, scratch_operands = 0 : i64, tpu.core_type = #tpu.core_type<tc>, window_params = [{transform_indices = @transform_0, window_bounds = array<i64: 8, 3136>}, {pipeline_mode = #tpu.pipeline_mode<synchronous>, transform_indices = @transform_1, window_bounds = array<i64: 3136, 512>}, {pipeline_mode = #tpu.pipeline_mode<synchronous>, transform_indices = @transform_2, window_bounds = array<i64: 1, 512>}, {pipeline_mode = #tpu.pipeline_mode<synchronous>, transform_indices = @transform_3, window_bounds = array<i64: 512, 128>}, {pipeline_mode = #tpu.pipeline_mode<synchronous>, transform_indices = @transform_4, window_bounds = array<i64: 1, 128>}, {transform_indices = @transform_5, window_bounds = array<i64: 8, 128>}]} {
    %c0 = arith.constant 0 : index
    %c0_0 = arith.constant 0 : index
    %0 = vector.load %arg1[%c0, %c0_0] : memref<8x3136xbf16, #tpu.memory_space<vmem>>, vector<8x3136xbf16>
    %c0_1 = arith.constant 0 : index
    %c0_2 = arith.constant 0 : index
    %1 = vector.load %arg2[%c0_1, %c0_2] : memref<3136x512xbf16, #tpu.memory_space<vmem>>, vector<3136x512xbf16>
    %cst = arith.constant dense<0.000000e+00> : vector<8x512xf32>
    %2 = tpu.matmul %0, %1, %cst {dimension_numbers = #tpu.dot_dimension_numbers<[1], [0], [0], [1], [0, 0, 1, 1], [], []>} : vector<8x3136xbf16>, vector<3136x512xbf16>, vector<8x512xf32> -> vector<8x512xf32>
    %c0_3 = arith.constant 0 : index
    %c0_4 = arith.constant 0 : index
    %3 = vector.load %arg3[%c0_3, %c0_4] : memref<1x512xf32, #tpu.memory_space<vmem>>, vector<1x512xf32>
    %4 = vector.broadcast %3 : vector<1x512xf32> to vector<8x512xf32>
    %5 = arith.addf %2, %4 : vector<8x512xf32>
    %cst_5 = arith.constant 0.000000e+00 : f32
    %6 = vector.broadcast %cst_5 : f32 to vector<8x512xf32>
    %7 = arith.maximumf %5, %6 : vector<8x512xf32>
    %8 = arith.truncf %7 : vector<8x512xf32> to vector<8x512xbf16>
    %c0_6 = arith.constant 0 : index
    %c0_7 = arith.constant 0 : index
    %9 = vector.load %arg4[%c0_6, %c0_7] : memref<512x128xbf16, #tpu.memory_space<vmem>>, vector<512x128xbf16>
    %cst_8 = arith.constant dense<0.000000e+00> : vector<8x128xf32>
    %10 = tpu.matmul %8, %9, %cst_8 {dimension_numbers = #tpu.dot_dimension_numbers<[1], [0], [0], [1], [0, 0, 1, 1], [], []>} : vector<8x512xbf16>, vector<512x128xbf16>, vector<8x128xf32> -> vector<8x128xf32>
    %c0_9 = arith.constant 0 : index
    %c0_10 = arith.constant 0 : index
    %11 = vector.load %arg5[%c0_9, %c0_10] : memref<1x128xf32, #tpu.memory_space<vmem>>, vector<1x128xf32>
    %12 = vector.broadcast %11 : vector<1x128xf32> to vector<8x128xf32>
    %13 = arith.addf %10, %12 : vector<8x128xf32>
    %c0_11 = arith.constant 0 : index
    %c0_12 = arith.constant 0 : index
    %14 = vector.load %arg6[%c0_11, %c0_12] : memref<8x128xf32, #tpu.memory_space<vmem>>, vector<8x128xf32>
    tpu.vector_store %arg6[%c0_11, %c0_12], %13 {strides = array<i32>} : memref<8x128xf32, #tpu.memory_space<vmem>>, vector<8x128xf32>,
    return
  }
  func.func @transform_0(%arg0: i32) -> (i32, i32) {
    %c0_i32 = arith.constant 0 : i32
    %c0_i32_0 = arith.constant 0 : i32
    return %arg0, %c0_i32 : i32, i32
  }
  func.func @transform_1(%arg0: i32) -> (i32, i32) {
    %c0_i32 = arith.constant 0 : i32
    %c0_i32_0 = arith.constant 0 : i32
    %c0_i32_1 = arith.constant 0 : i32
    return %c0_i32, %c0_i32_0 : i32, i32
  }
  func.func @transform_2(%arg0: i32) -> (i32, i32) {
    %c0_i32 = arith.constant 0 : i32
    %c0_i32_0 = arith.constant 0 : i32
    %c0_i32_1 = arith.constant 0 : i32
    return %c0_i32, %c0_i32_0 : i32, i32
  }
  func.func @transform_3(%arg0: i32) -> (i32, i32) {
    %c0_i32 = arith.constant 0 : i32
    %c0_i32_0 = arith.constant 0 : i32
    %c0_i32_1 = arith.constant 0 : i32
    return %c0_i32, %c0_i32_0 : i32, i32
  }
  func.func @transform_4(%arg0: i32) -> (i32, i32) {
    %c0_i32 = arith.constant 0 : i32
    %c0_i32_0 = arith.constant 0 : i32
    %c0_i32_1 = arith.constant 0 : i32
    return %c0_i32, %c0_i32_0 : i32, i32
  }
  func.func @transform_5(%arg0: i32) -> (i32, i32) {
    %c0_i32 = arith.constant 0 : i32
    %c0_i32_0 = arith.constant 0 : i32
    return %arg0, %c0_i32 : i32, i32
  }
}

</mosaic_0001>

<llo_original>
// kernel: qnetwork_forward.4
$region0: #{qnetwork_forward.4}
  #allocation0 [shape = 'u32[]', space=smem, size = 0x4, offset = 0x4, fixed_abs, tag = 'smem constant byte address 0x4 - core index']
  #allocation1 [shape = 'u32[144,128]{1,0:T(1,128)}', space=vmem, size = 0x12000, scoped, tag = 'internal scratch']
  %s0 = inlined_call_operand.vmem [shape: bf16[32,256], index: 0, kind: input, shape index: {}]
  %s1 = inlined_call_operand.vmem [shape: bf16[256,896], index: 1, kind: input, shape index: {}]
  %s2 = inlined_call_operand.vmem [shape: f32[32,1], index: 2, kind: input, shape index: {}]
  %s3 = inlined_call_operand.vmem [shape: bf16[32,896], index: 3, kind: output, shape index: {}]
  %s4 = sld [smem:[#allocation0]]
  $region22: #{qnetwork_forward.4} parent=0
    _
  %s6 = ssub.s32 1, %s4
  %s7 = scalar_select 0, %s6, %s4
  // Predicated region
  $region2: #{qnetwork_forward.4} parent=0 // pred_check
    _
  $region3: #{qnetwork_forward.4} parent=0 // pred_check_branch
    %9 = sbr.rel (0) target = $region5
  $region4: #{qnetwork_forward.4} parent=0 // pred_region
    _
  $region5: #{qnetwork_forward.4} parent=0 // pred_fallthru
    _
  // Predicated region
  $region6: #{qnetwork_forward.4} parent=0 // pred_check
    _
  $region7: #{qnetwork_forward.4} parent=0 // pred_check_branch
    %11 = sbr.rel (0) target = $region9
  $region8: #{qnetwork_forward.4} parent=0 // pred_region
    _
  $region9: #{qnetwork_forward.4} parent=0 // pred_fallthru
    _
  // Predicated region
  $region10: #{qnetwork_forward.4} parent=0 // pred_check
    _
  $region11: #{qnetwork_forward.4} parent=0 // pred_check_branch
    %13 = sbr.rel (0) target = $region13
  $region12: #{qnetwork_forward.4} parent=0 // pred_region
    _
  $region13: #{qnetwork_forward.4} parent=0 // pred_fallthru
    _
  %v15 = vld [vmem:[%s0] sm:$0xff]
  %v16 = vld [vmem:[%s0 + $0x8] sm:$0xff]
  %v17 = vld [vmem:[%s0 + $0x10] sm:$0xff]
  %v18 = vld [vmem:[%s0 + $0x18] sm:$0xff]
  %v19 = vld [vmem:[%s1] sm:$0xff]
  %v20 = vld [vmem:[%s1 + $0x8] sm:$0xff]
  %v21 = vld [vmem:[%s1 + $0x10] sm:$0xff]
  %v22 = vld [vmem:[%s1 + $0x18] sm:$0xf]
  %v23 = vld [vmem:[%s1 + $0x1c] sm:$0xff]
  %v24 = vld [vmem:[%s1 + $0x24] sm:$0xff]
  %v25 = vld [vmem:[%s1 + $0x2c] sm:$0xff]
  %v26 = vld [vmem:[%s1 + $0x34] sm:$0xf]
  %v27 = vld [vmem:[%s1 + $0x38] sm:$0xff]
  %v28 = vld [vmem:[%s1 + $0x40] sm:$0xff]
  %v29 = vld [vmem:[%s1 + $0x48] sm:$0xff]
  %v30 = vld [vmem:[%s1 + $0x50] sm:$0xf]
  %v31 = vld [vmem:[%s1 + $0x54] sm:$0xff]
  %v32 = vld [vmem:[%s1 + $0x5c] sm:$0xff]
  %v33 = vld [vmem:[%s1 + $0x64] sm:$0xff]
  %v34 = vld [vmem:[%s1 + $0x6c] sm:$0xf]
  %v35 = vld [vmem:[%s1 + $0x70] sm:$0xff]
  %v36 = vld [vmem:[%s1 + $0x78] sm:$0xff]
  %v37 = vld [vmem:[%s1 + $0x80] sm:$0xff]
  %v38 = vld [vmem:[%s1 + $0x88] sm:$0xf]
  %v39 = vld [vmem:[%s1 + $0x8c] sm:$0xff]
  %v40 = vld [vmem:[%s1 + $0x94] sm:$0xff]
  %v41 = vld [vmem:[%s1 + $0x9c] sm:$0xff]
  %v42 = vld [vmem:[%s1 + $0xa4] sm:$0xf]
  %v43 = vld [vmem:[%s1 + $0xa8] sm:$0xff]
  %v44 = vld [vmem:[%s1 + $0xb0] sm:$0xff]
  %v45 = vld [vmem:[%s1 + $0xb8] sm:$0xff]
  %v46 = vld [vmem:[%s1 + $0xc0] sm:$0xf]
  %v47 = vld [vmem:[%s1 + $0xc4] sm:$0xff]
  %v48 = vld [vmem:[%s1 + $0xcc] sm:$0xff]
  %v49 = vld [vmem:[%s1 + $0xd4] sm:$0xff]
  %v50 = vld [vmem:[%s1 + $0xdc] sm:$0xf]
  %v51 = vld [vmem:[%s1 + $0xe0] sm:$0xff]
  %v52 = vld [vmem:[%s1 + $0xe8] sm:$0xff]
  %v53 = vld [vmem:[%s1 + $0xf0] sm:$0xff]
  %v54 = vld [vmem:[%s1 + $0xf8] sm:$0xf]
  %v55 = vld [vmem:[%s1 + $0xfc] sm:$0xff]
  %v56 = vld [vmem:[%s1 + $0x104] sm:$0xff]
  %v57 = vld [vmem:[%s1 + $0x10c] sm:$0xff]
  %v58 = vld [vmem:[%s1 + $0x114] sm:$0xf]
  %v59 = vld [vmem:[%s1 + $0x118] sm:$0xff]
  %v60 = vld [vmem:[%s1 + $0x120] sm:$0xff]
  %v61 = vld [vmem:[%s1 + $0x128] sm:$0xff]
  %v62 = vld [vmem:[%s1 + $0x130] sm:$0xf]
  %v63 = vld [vmem:[%s1 + $0x134] sm:$0xff]
  %v64 = vld [vmem:[%s1 + $0x13c] sm:$0xff]
  %v65 = vld [vmem:[%s1 + $0x144] sm:$0xff]
  %v66 = vld [vmem:[%s1 + $0x14c] sm:$0xf]
  %v67 = vld [vmem:[%s1 + $0x150] sm:$0xff]
  %v68 = vld [vmem:[%s1 + $0x158] sm:$0xff]
  %v69 = vld [vmem:[%s1 + $0x160] sm:$0xff]
  %v70 = vld [vmem:[%s1 + $0x168] sm:$0xf]
  %v71 = vld [vmem:[%s1 + $0x16c] sm:$0xff]
  %v72 = vld [vmem:[%s1 + $0x174] sm:$0xff]
  %v73 = vld [vmem:[%s1 + $0x17c] sm:$0xff]
  %v74 = vld [vmem:[%s1 + $0x184] sm:$0xf]
  %v75 = vld [vmem:[%s1 + $0x188] sm:$0xff]
  %v76 = vld [vmem:[%s1 + $0x190] sm:$0xff]
  %v77 = vld [vmem:[%s1 + $0x198] sm:$0xff]
  %v78 = vld [vmem:[%s1 + $0x1a0] sm:$0xf]
  %v79 = vld [vmem:[%s1 + $0x1a4] sm:$0xff]
  %v80 = vld [vmem:[%s1 + $0x1ac] sm:$0xff]
  %v81 = vld [vmem:[%s1 + $0x1b4] sm:$0xff]
  %v82 = vld [vmem:[%s1 + $0x1bc] sm:$0xf]
  %v83 = vld [vmem:[%s1 + $0x1c0] sm:$0xff]
  %v84 = vld [vmem:[%s1 + $0x1c8] sm:$0xff]
  %v85 = vld [vmem:[%s1 + $0x1d0] sm:$0xff]
  %v86 = vld [vmem:[%s1 + $0x1d8] sm:$0xf]
  %v87 = vld [vmem:[%s1 + $0x1dc] sm:$0xff]
  %v88 = vld [vmem:[%s1 + $0x1e4] sm:$0xff]
  %v89 = vld [vmem:[%s1 + $0x1ec] sm:$0xff]
  %v90 = vld [vmem:[%s1 + $0x1f4] sm:$0xf]
  %v91 = vld [vmem:[%s1 + $0x1f8] sm:$0xff]
  %v92 = vld [vmem:[%s1 + $0x200] sm:$0xff]
  %v93 = vld [vmem:[%s1 + $0x208] sm:$0xff]
  %v94 = vld [vmem:[%s1 + $0x210] sm:$0xf]
  %v95 = vld [vmem:[%s1 + $0x214] sm:$0xff]
  %v96 = vld [vmem:[%s1 + $0x21c] sm:$0xff]
  %v97 = vld [vmem:[%s1 + $0x224] sm:$0xff]
  %v98 = vld [vmem:[%s1 + $0x22c] sm:$0xf]
  %v99 = vld [vmem:[%s1 + $0x230] sm:$0xff]
  %v100 = vld [vmem:[%s1 + $0x238] sm:$0xff]
  %v101 = vld [vmem:[%s1 + $0x240] sm:$0xff]
  %v102 = vld [vmem:[%s1 + $0x248] sm:$0xf]
  %v103 = vld [vmem:[%s1 + $0x24c] sm:$0xff]
  %v104 = vld [vmem:[%s1 + $0x254] sm:$0xff]
  %v105 = vld [vmem:[%s1 + $0x25c] sm:$0xff]
  %v106 = vld [vmem:[%s1 + $0x264] sm:$0xf]
  %v107 = vld [vmem:[%s1 + $0x268] sm:$0xff]
  %v108 = vld [vmem:[%s1 + $0x270] sm:$0xff]
  %v109 = vld [vmem:[%s1 + $0x278] sm:$0xff]
  %v110 = vld [vmem:[%s1 + $0x280] sm:$0xf]
  %v111 = vld [vmem:[%s1 + $0x284] sm:$0xff]
  %v112 = vld [vmem:[%s1 + $0x28c] sm:$0xff]
  %v113 = vld [vmem:[%s1 + $0x294] sm:$0xff]
  %v114 = vld [vmem:[%s1 + $0x29c] sm:$0xf]
  %v115 = vld [vmem:[%s1 + $0x2a0] sm:$0xff]
  %v116 = vld [vmem:[%s1 + $0x2a8] sm:$0xff]
  %v117 = vld [vmem:[%s1 + $0x2b0] sm:$0xff]
  %v118 = vld [vmem:[%s1 + $0x2b8] sm:$0xf]
  %v119 = vld [vmem:[%s1 + $0x2bc] sm:$0xff]
  %v120 = vld [vmem:[%s1 + $0x2c4] sm:$0xff]
  %v121 = vld [vmem:[%s1 + $0x2cc] sm:$0xff]
  %v122 = vld [vmem:[%s1 + $0x2d4] sm:$0xf]
  %v123 = vld [vmem:[%s1 + $0x2d8] sm:$0xff]
  %v124 = vld [vmem:[%s1 + $0x2e0] sm:$0xff]
  %v125 = vld [vmem:[%s1 + $0x2e8] sm:$0xff]
  %v126 = vld [vmem:[%s1 + $0x2f0] sm:$0xf]
  %v127 = vld [vmem:[%s1 + $0x2f4] sm:$0xff]
  %v128 = vld [vmem:[%s1 + $0x2fc] sm:$0xff]
  %v129 = vld [vmem:[%s1 + $0x304] sm:$0xff]
  %v130 = vld [vmem:[%s1 + $0x30c] sm:$0xf]
  %v131 = vld [vmem:[%s1 + $0x310] sm:$0xff]
  %v132 = vld [vmem:[%s1 + $0x318] sm:$0xff]
  %v133 = vld [vmem:[%s1 + $0x320] sm:$0xff]
  %v134 = vld [vmem:[%s1 + $0x328] sm:$0xf]
  %v135 = vld [vmem:[%s1 + $0x32c] sm:$0xff]
  %v136 = vld [vmem:[%s1 + $0x334] sm:$0xff]
  %v137 = vld [vmem:[%s1 + $0x33c] sm:$0xff]
  %v138 = vld [vmem:[%s1 + $0x344] sm:$0xf]
  %v139 = vld [vmem:[%s1 + $0x348] sm:$0xff]
  %v140 = vld [vmem:[%s1 + $0x350] sm:$0xff]
  %v141 = vld [vmem:[%s1 + $0x358] sm:$0xff]
  %v142 = vld [vmem:[%s1 + $0x360] sm:$0xf]
  %v143 = vld [vmem:[%s1 + $0x364] sm:$0xff]
  %v144 = vld [vmem:[%s1 + $0x36c] sm:$0xff]
  %v145 = vld [vmem:[%s1 + $0x374] sm:$0xff]
  %v146 = vld [vmem:[%s1 + $0x37c] sm:$0xf]
  %v147 = vld [vmem:[%s2] sm:$0xff]
  %v148 = vld [vmem:[%s2 + $0x8] sm:$0xff]
  %v149 = vld [vmem:[%s2 + $0x10] sm:$0xff]
  %v150 = vld [vmem:[%s2 + $0x18] sm:$0xff]
  %152 = vset.pattern.permute.xlu0 0
  %153 = vperm.xlu0 %152, %v147
  %v154 = vpop.permute.xlu0 %153
  %157 = vset.pattern.permute.xlu0 0
  %158 = vperm.xlu0 %157, %v148
  %v159 = vpop.permute.xlu0 %158
  %162 = vset.pattern.permute.xlu0 0
  %163 = vperm.xlu0 %162, %v149
  %v164 = vpop.permute.xlu0 %163
  %167 = vset.pattern.permute.xlu0 0
  %168 = vperm.xlu0 %167, %v150
  %v169 = vpop.permute.xlu0 %168
  %v175 = vunpack.c.l.b16 %v15
  %v176 = vunpack.c.h.b16 %v15
  %v177 = vunpack.c.l.b16 %v16
  %v178 = vunpack.c.h.b16 %v16
  %v179 = vunpack.c.l.b16 %v17
  %v180 = vunpack.c.h.b16 %v17
  %v181 = vunpack.c.l.b16 %v18
  %v182 = vunpack.c.h.b16 %v18
  %v183 = vpack.c.b16 %v177, %v175
  %v184 = vpack.c.b16 %v178, %v176
  %v185 = vpack.c.b16 %v181, %v179
  %v186 = vpack.c.b16 %v182, %v180
  %v319 = vunpack.c.l.b16 %v19
  %v320 = vunpack.c.h.b16 %v19
  %v321 = vunpack.c.l.b16 %v20
  %v322 = vunpack.c.h.b16 %v20
  %v323 = vunpack.c.l.b16 %v21
  %v324 = vunpack.c.h.b16 %v21
  %v325 = vunpack.c.l.b16 %v22
  %v326 = vunpack.c.l.b16 %v23
  %v327 = vunpack.c.h.b16 %v23
  %v328 = vunpack.c.l.b16 %v24
  %v329 = vunpack.c.h.b16 %v24
  %v330 = vunpack.c.l.b16 %v25
  %v331 = vunpack.c.h.b16 %v25
  %v332 = vunpack.c.l.b16 %v26
  %v333 = vunpack.c.l.b16 %v27
  %v334 = vunpack.c.h.b16 %v27
  %v335 = vunpack.c.l.b16 %v28
  %v336 = vunpack.c.h.b16 %v28
  %v337 = vunpack.c.l.b16 %v29
  %v338 = vunpack.c.h.b16 %v29
  %v339 = vunpack.c.l.b16 %v30
  %v340 = vunpack.c.l.b16 %v31
  %v341 = vunpack.c.h.b16 %v31
  %v342 = vunpack.c.l.b16 %v32
  %v343 = vunpack.c.h.b16 %v32
  %v344 = vunpack.c.l.b16 %v33
  %v345 = vunpack.c.h.b16 %v33
  %v346 = vunpack.c.l.b16 %v34
  %v347 = vunpack.c.l.b16 %v35
  %v348 = vunpack.c.h.b16 %v35
  %v349 = vunpack.c.l.b16 %v36
  %v350 = vunpack.c.h.b16 %v36
  %v351 = vunpack.c.l.b16 %v37
  %v352 = vunpack.c.h.b16 %v37
  %v353 = vunpack.c.l.b16 %v38
  %v354 = vunpack.c.l.b16 %v39
  %v355 = vunpack.c.h.b16 %v39
  %v356 = vunpack.c.l.b16 %v40
  %v357 = vunpack.c.h.b16 %v40
  %v358 = vunpack.c.l.b16 %v41
  %v359 = vunpack.c.h.b16 %v41
  %v360 = vunpack.c.l.b16 %v42
  %v361 = vunpack.c.l.b16 %v43
  %v362 = vunpack.c.h.b16 %v43
  %v363 = vunpack.c.l.b16 %v44
  %v364 = vunpack.c.h.b16 %v44
  %v365 = vunpack.c.l.b16 %v45
  %v366 = vunpack.c.h.b16 %v45
  %v367 = vunpack.c.l.b16 %v46
  %v368 = vunpack.c.l.b16 %v47
  %v369 = vunpack.c.h.b16 %v47
  %v370 = vunpack.c.l.b16 %v48
  %v371 = vunpack.c.h.b16 %v48
  %v372 = vunpack.c.l.b16 %v49
  %v373 = vunpack.c.h.b16 %v49
  %v374 = vunpack.c.l.b16 %v50
  %v375 = vunpack.c.l.b16 %v51
  %v376 = vunpack.c.h.b16 %v51
  %v377 = vunpack.c.l.b16 %v52
  %v378 = vunpack.c.h.b16 %v52
  %v379 = vunpack.c.l.b16 %v53
  %v380 = vunpack.c.h.b16 %v53
  %v381 = vunpack.c.l.b16 %v54
  %v382 = vunpack.c.l.b16 %v55
  %v383 = vunpack.c.h.b16 %v55
  %v384 = vunpack.c.l.b16 %v56
  %v385 = vunpack.c.h.b16 %v56
  %v386 = vunpack.c.l.b16 %v57
  %v387 = vunpack.c.h.b16 %v57
  %v388 = vunpack.c.l.b16 %v58
  %v389 = vunpack.c.l.b16 %v59
  %v390 = vunpack.c.h.b16 %v59
  %v391 = vunpack.c.l.b16 %v60
  %v392 = vunpack.c.h.b16 %v60
  %v393 = vunpack.c.l.b16 %v61
  %v394 = vunpack.c.h.b16 %v61
  %v395 = vunpack.c.l.b16 %v62
  %v396 = vunpack.c.l.b16 %v63
  %v397 = vunpack.c.h.b16 %v63
  %v398 = vunpack.c.l.b16 %v64
  %v399 = vunpack.c.h.b16 %v64
  %v400 = vunpack.c.l.b16 %v65
  %v401 = vunpack.c.h.b16 %v65
  %v402 = vunpack.c.l.b16 %v66
  %v403 = vunpack.c.l.b16 %v67
  %v404 = vunpack.c.h.b16 %v67
  %v405 = vunpack.c.l.b16 %v68
  %v406 = vunpack.c.h.b16 %v68
  %v407 = vunpack.c.l.b16 %v69
  %v408 = vunpack.c.h.b16 %v69
  %v409 = vunpack.c.l.b16 %v70
  %v410 = vunpack.c.l.b16 %v71
  %v411 = vunpack.c.h.b16 %v71
  %v412 = vunpack.c.l.b16 %v72
  %v413 = vunpack.c.h.b16 %v72
  %v414 = vunpack.c.l.b16 %v73
  %v415 = vunpack.c.h.b16 %v73
  %v416 = vunpack.c.l.b16 %v74
  %v417 = vunpack.c.l.b16 %v75
  %v418 = vunpack.c.h.b16 %v75
  %v419 = vunpack.c.l.b16 %v76
  %v420 = vunpack.c.h.b16 %v76
  %v421 = vunpack.c.l.b16 %v77
  %v422 = vunpack.c.h.b16 %v77
  %v423 = vunpack.c.l.b16 %v78
  %v424 = vunpack.c.l.b16 %v79
  %v425 = vunpack.c.h.b16 %v79
  %v426 = vunpack.c.l.b16 %v80
  %v427 = vunpack.c.h.b16 %v80
  %v428 = vunpack.c.l.b16 %v81
  %v429 = vunpack.c.h.b16 %v81
  %v430 = vunpack.c.l.b16 %v82
  %v431 = vunpack.c.l.b16 %v83
  %v432 = vunpack.c.h.b16 %v83
  %v433 = vunpack.c.l.b16 %v84
  %v434 = vunpack.c.h.b16 %v84
  %v435 = vunpack.c.l.b16 %v85
  %v436 = vunpack.c.h.b16 %v85
  %v437 = vunpack.c.l.b16 %v86
  %v438 = vunpack.c.l.b16 %v87
  %v439 = vunpack.c.h.b16 %v87
  %v440 = vunpack.c.l.b16 %v88
  %v441 = vunpack.c.h.b16 %v88
  %v442 = vunpack.c.l.b16 %v89
  %v443 = vunpack.c.h.b16 %v89
  %v444 = vunpack.c.l.b16 %v90
  %v445 = vunpack.c.l.b16 %v91
  %v446 = vunpack.c.h.b16 %v91
  %v447 = vunpack.c.l.b16 %v92
  %v448 = vunpack.c.h.b16 %v92
  %v449 = vunpack.c.l.b16 %v93
  %v450 = vunpack.c.h.b16 %v93
  %v451 = vunpack.c.l.b16 %v94
  %v452 = vunpack.c.l.b16 %v95
  %v453 = vunpack.c.h.b16 %v95
  %v454 = vunpack.c.l.b16 %v96
  %v455 = vunpack.c.h.b16 %v96
  %v456 = vunpack.c.l.b16 %v97
  %v457 = vunpack.c.h.b16 %v97
  %v458 = vunpack.c.l.b16 %v98
  %v459 = vunpack.c.l.b16 %v99
  %v460 = vunpack.c.h.b16 %v99
  %v461 = vunpack.c.l.b16 %v100
  %v462 = vunpack.c.h.b16 %v100
  %v463 = vunpack.c.l.b16 %v101
  %v464 = vunpack.c.h.b16 %v101
  %v465 = vunpack.c.l.b16 %v102
  %v466 = vunpack.c.l.b16 %v103
  %v467 = vunpack.c.h.b16 %v103
  %v468 = vunpack.c.l.b16 %v104
  %v469 = vunpack.c.h.b16 %v104
  %v470 = vunpack.c.l.b16 %v105
  %v471 = vunpack.c.h.b16 %v105
  %v472 = vunpack.c.l.b16 %v106
  %v473 = vunpack.c.l.b16 %v107
  %v474 = vunpack.c.h.b16 %v107
  %v475 = vunpack.c.l.b16 %v108
  %v476 = vunpack.c.h.b16 %v108
  %v477 = vunpack.c.l.b16 %v109
  %v478 = vunpack.c.h.b16 %v109
  %v479 = vunpack.c.l.b16 %v110
  %v480 = vunpack.c.l.b16 %v111
  %v481 = vunpack.c.h.b16 %v111
  %v482 = vunpack.c.l.b16 %v112
  %v483 = vunpack.c.h.b16 %v112
  %v484 = vunpack.c.l.b16 %v113
  %v485 = vunpack.c.h.b16 %v113
  %v486 = vunpack.c.l.b16 %v114
  %v487 = vunpack.c.l.b16 %v115
  %v488 = vunpack.c.h.b16 %v115
  %v489 = vunpack.c.l.b16 %v116
  %v490 = vunpack.c.h.b16 %v116
  %v491 = vunpack.c.l.b16 %v117
  %v492 = vunpack.c.h.b16 %v117
  %v493 = vunpack.c.l.b16 %v118
  %v494 = vunpack.c.l.b16 %v119
  %v495 = vunpack.c.h.b16 %v119
  %v496 = vunpack.c.l.b16 %v120
  %v497 = vunpack.c.h.b16 %v120
  %v498 = vunpack.c.l.b16 %v121
  %v499 = vunpack.c.h.b16 %v121
  %v500 = vunpack.c.l.b16 %v122
  %v501 = vunpack.c.l.b16 %v123
  %v502 = vunpack.c.h.b16 %v123
  %v503 = vunpack.c.l.b16 %v124
  %v504 = vunpack.c.h.b16 %v124
  %v505 = vunpack.c.l.b16 %v125
  %v506 = vunpack.c.h.b16 %v125
  %v507 = vunpack.c.l.b16 %v126
  %v508 = vunpack.c.l.b16 %v127
  %v509 = vunpack.c.h.b16 %v127
  %v510 = vunpack.c.l.b16 %v128
  %v511 = vunpack.c.h.b16 %v128
  %v512 = vunpack.c.l.b16 %v129
  %v513 = vunpack.c.h.b16 %v129
  %v514 = vunpack.c.l.b16 %v130
  %v515 = vunpack.c.l.b16 %v131
  %v516 = vunpack.c.h.b16 %v131
  %v517 = vunpack.c.l.b16 %v132
  %v518 = vunpack.c.h.b16 %v132
  %v519 = vunpack.c.l.b16 %v133
  %v520 = vunpack.c.h.b16 %v133
  %v521 = vunpack.c.l.b16 %v134
  %v522 = vunpack.c.l.b16 %v135
  %v523 = vunpack.c.h.b16 %v135
  %v524 = vunpack.c.l.b16 %v136
  %v525 = vunpack.c.h.b16 %v136
  %v526 = vunpack.c.l.b16 %v137
  %v527 = vunpack.c.h.b16 %v137
  %v528 = vunpack.c.l.b16 %v138
  %v529 = vunpack.c.l.b16 %v139
  %v530 = vunpack.c.h.b16 %v139
  %v531 = vunpack.c.l.b16 %v140
  %v532 = vunpack.c.h.b16 %v140
  %v533 = vunpack.c.l.b16 %v141
  %v534 = vunpack.c.h.b16 %v141
  %v535 = vunpack.c.l.b16 %v142
  %v536 = vunpack.c.l.b16 %v143
  %v537 = vunpack.c.h.b16 %v143
  %v538 = vunpack.c.l.b16 %v144
  %v539 = vunpack.c.h.b16 %v144
  %v540 = vunpack.c.l.b16 %v145
  %v541 = vunpack.c.h.b16 %v145
  %v542 = vunpack.c.l.b16 %v146
  %v543 = vpack.c.b16 %v326, %v319
  %v544 = vpack.c.b16 %v327, %v320
  %v545 = vpack.c.b16 %v328, %v321
  %v546 = vpack.c.b16 %v329, %v322
  %v547 = vpack.c.b16 %v330, %v323
  %v548 = vpack.c.b16 %v331, %v324
  %v549 = vpack.c.b16 %v332, %v325
  %v550 = vpack.c.b16 %v340, %v333
  %v551 = vpack.c.b16 %v341, %v334
  %v552 = vpack.c.b16 %v342, %v335
  %v553 = vpack.c.b16 %v343, %v336
  %v554 = vpack.c.b16 %v344, %v337
  %v555 = vpack.c.b16 %v345, %v338
  %v556 = vpack.c.b16 %v346, %v339
  %v557 = vpack.c.b16 %v354, %v347
  %v558 = vpack.c.b16 %v355, %v348
  %v559 = vpack.c.b16 %v356, %v349
  %v560 = vpack.c.b16 %v357, %v350
  %v561 = vpack.c.b16 %v358, %v351
  %v562 = vpack.c.b16 %v359, %v352
  %v563 = vpack.c.b16 %v360, %v353
  %v564 = vpack.c.b16 %v368, %v361
  %v565 = vpack.c.b16 %v369, %v362
  %v566 = vpack.c.b16 %v370, %v363
  %v567 = vpack.c.b16 %v371, %v364
  %v568 = vpack.c.b16 %v372, %v365
  %v569 = vpack.c.b16 %v373, %v366
  %v570 = vpack.c.b16 %v374, %v367
  %v571 = vpack.c.b16 %v382, %v375
  %v572 = vpack.c.b16 %v383, %v376
  %v573 = vpack.c.b16 %v384, %v377
  %v574 = vpack.c.b16 %v385, %v378
  %v575 = vpack.c.b16 %v386, %v379
  %v576 = vpack.c.b16 %v387, %v380
  %v577 = vpack.c.b16 %v388, %v381
  %v578 = vpack.c.b16 %v396, %v389
  %v579 = vpack.c.b16 %v397, %v390
  %v580 = vpack.c.b16 %v398, %v391
  %v581 = vpack.c.b16 %v399, %v392
  %v582 = vpack.c.b16 %v400, %v393
  %v583 = vpack.c.b16 %v401, %v394
  %v584 = vpack.c.b16 %v402, %v395
  %v585 = vpack.c.b16 %v410, %v403
  %v586 = vpack.c.b16 %v411, %v404
  %v587 = vpack.c.b16 %v412, %v405
  %v588 = vpack.c.b16 %v413, %v406
  %v589 = vpack.c.b16 %v414, %v407
  %v590 = vpack.c.b16 %v415, %v408
  %v591 = vpack.c.b16 %v416, %v409
  %v592 = vpack.c.b16 %v424, %v417
  %v593 = vpack.c.b16 %v425, %v418
  %v594 = vpack.c.b16 %v426, %v419
  %v595 = vpack.c.b16 %v427, %v420
  %v596 = vpack.c.b16 %v428, %v421
  %v597 = vpack.c.b16 %v429, %v422
  %v598 = vpack.c.b16 %v430, %v423
  %v599 = vpack.c.b16 %v438, %v431
  %v600 = vpack.c.b16 %v439, %v432
  %v601 = vpack.c.b16 %v440, %v433
  %v602 = vpack.c.b16 %v441, %v434
  %v603 = vpack.c.b16 %v442, %v435
  %v604 = vpack.c.b16 %v443, %v436
  %v605 = vpack.c.b16 %v444, %v437
  %v606 = vpack.c.b16 %v452, %v445
  %v607 = vpack.c.b16 %v453, %v446
  %v608 = vpack.c.b16 %v454, %v447
  %v609 = vpack.c.b16 %v455, %v448
  %v610 = vpack.c.b16 %v456, %v449
  %v611 = vpack.c.b16 %v457, %v450
  %v612 = vpack.c.b16 %v458, %v451
  %v613 = vpack.c.b16 %v466, %v459
  %v614 = vpack.c.b16 %v467, %v460
  %v615 = vpack.c.b16 %v468, %v461
  %v616 = vpack.c.b16 %v469, %v462
  %v617 = vpack.c.b16 %v470, %v463
  %v618 = vpack.c.b16 %v471, %v464
  %v619 = vpack.c.b16 %v472, %v465
  %v620 = vpack.c.b16 %v480, %v473
  %v621 = vpack.c.b16 %v481, %v474
  %v622 = vpack.c.b16 %v482, %v475
  %v623 = vpack.c.b16 %v483, %v476
  %v624 = vpack.c.b16 %v484, %v477
  %v625 = vpack.c.b16 %v485, %v478
  %v626 = vpack.c.b16 %v486, %v479
  %v627 = vpack.c.b16 %v494, %v487
  %v628 = vpack.c.b16 %v495, %v488
  %v629 = vpack.c.b16 %v496, %v489
  %v630 = vpack.c.b16 %v497, %v490
  %v631 = vpack.c.b16 %v498, %v491
  %v632 = vpack.c.b16 %v499, %v492
  %v633 = vpack.c.b16 %v500, %v493
  %v634 = vpack.c.b16 %v508, %v501
  %v635 = vpack.c.b16 %v509, %v502
  %v636 = vpack.c.b16 %v510, %v503
  %v637 = vpack.c.b16 %v511, %v504
  %v638 = vpack.c.b16 %v512, %v505
  %v639 = vpack.c.b16 %v513, %v506
  %v640 = vpack.c.b16 %v514, %v507
  %v641 = vpack.c.b16 %v522, %v515
  %v642 = vpack.c.b16 %v523, %v516
  %v643 = vpack.c.b16 %v524, %v517
  %v644 = vpack.c.b16 %v525, %v518
  %v645 = vpack.c.b16 %v526, %v519
  %v646 = vpack.c.b16 %v527, %v520
  %v647 = vpack.c.b16 %v528, %v521
  %v648 = vpack.c.b16 %v536, %v529
  %v649 = vpack.c.b16 %v537, %v530
  %v650 = vpack.c.b16 %v538, %v531
  %v651 = vpack.c.b16 %v539, %v532
  %v652 = vpack.c.b16 %v540, %v533
  %v653 = vpack.c.b16 %v541, %v534
  %v654 = vpack.c.b16 %v542, %v535
  %767 = vmatprep.subr.bf16.mxu0 %v544
  %768 = vmatpush1.bf16.msra.mxu0 %v543
  %769 = vmatprep.subr.bf16.mxu0 %v551
  %770 = vmatpush1.bf16.msra.mxu0 %v550
  %771 = vmatprep.subr.bf16.mxu0 %v558
  %772 = vmatpush1.bf16.msra.mxu0 %v557
  %773 = vmatprep.subr.bf16.mxu0 %v565
  %774 = vmatpush1.bf16.msra.mxu0 %v564
  %775 = vmatprep.subr.bf16.mxu0 %v572
  %776 = vmatpush1.bf16.msra.mxu0 %v571
  %777 = vmatprep.subr.bf16.mxu0 %v579
  %778 = vmatpush1.bf16.msra.mxu0 %v578
  %779 = vmatprep.subr.bf16.mxu0 %v586
  %780 = vmatpush1.bf16.msra.mxu0 %v585
  %781 = vmatprep.subr.bf16.mxu0 %v593
  %782 = vmatpush1.bf16.msra.mxu0 %v592
  %783 = vmatprep.subr.bf16.mxu0 %v600
  %784 = vmatpush1.bf16.msra.mxu0 %v599
  %785 = vmatprep.subr.bf16.mxu0 %v607
  %786 = vmatpush1.bf16.msra.mxu0 %v606
  %787 = vmatprep.subr.bf16.mxu0 %v614
  %788 = vmatpush1.bf16.msra.mxu0 %v613
  %789 = vmatprep.subr.bf16.mxu0 %v621
  %790 = vmatpush1.bf16.msra.mxu0 %v620
  %791 = vmatprep.subr.bf16.mxu0 %v628
  %792 = vmatpush1.bf16.msra.mxu0 %v627
  %793 = vmatprep.subr.bf16.mxu0 %v635
  %794 = vmatpush1.bf16.msra.mxu0 %v634
  %795 = vmatprep.subr.bf16.mxu0 %v642
  %796 = vmatpush1.bf16.msra.mxu0 %v641
  %797 = vmatprep.subr.bf16.mxu0 %v649
  %798 = vmatpush1.bf16.msra.mxu0 %v648
  %799 = vmatprep.mubr.bf16.mxu0 %v184
  %800 = vmatmul.mubr.bf16.gmra.mrb[0].mxu0 %v183
  %v801 = vpop.f32.mrb[0].mxu0
  %v802 = vadd.f32 %v154, %v801
  %v803 = vpop.f32.mrb[0].mxu0
  %v804 = vadd.f32 %v154, %v803
  %v805 = vpop.f32.mrb[0].mxu0
  %v806 = vadd.f32 %v159, %v805
  %v807 = vpop.f32.mrb[0].mxu0
  %v808 = vadd.f32 %v159, %v807
  %809 = vmatprep.mubr.bf16.mxu0 %v186
  %810 = vmatmul.mubr.bf16.gmra.mrb[0].mxu0 %v185
  %v811 = vpop.f32.mrb[0].mxu0
  %v812 = vadd.f32 %v164, %v811
  %v813 = vpop.f32.mrb[0].mxu0
  %v814 = vadd.f32 %v164, %v813
  %v815 = vpop.f32.mrb[0].mxu0
  %v816 = vadd.f32 %v169, %v815
  %v817 = vpop.f32.mrb[0].mxu0
  %v818 = vadd.f32 %v169, %v817
  %819 = vdwg.mxu0
  %820 = vmatprep.subr.bf16.mxu0 %v546
  %821 = vmatpush1.bf16.msra.mxu0 %v545
  %822 = vmatprep.subr.bf16.mxu0 %v553
  %823 = vmatpush1.bf16.msra.mxu0 %v552
  %824 = vmatprep.subr.bf16.mxu0 %v560
  %825 = vmatpush1.bf16.msra.mxu0 %v559
  %826 = vmatprep.subr.bf16.mxu0 %v567
  %827 = vmatpush1.bf16.msra.mxu0 %v566
  %828 = vmatprep.subr.bf16.mxu0 %v574
  %829 = vmatpush1.bf16.msra.mxu0 %v573
  %830 = vmatprep.subr.bf16.mxu0 %v581
  %831 = vmatpush1.bf16.msra.mxu0 %v580
  %832 = vmatprep.subr.bf16.mxu0 %v588
  %833 = vmatpush1.bf16.msra.mxu0 %v587
  %834 = vmatprep.subr.bf16.mxu0 %v595
  %835 = vmatpush1.bf16.msra.mxu0 %v594
  %836 = vmatprep.subr.bf16.mxu0 %v602
  %837 = vmatpush1.bf16.msra.mxu0 %v601
  %838 = vmatprep.subr.bf16.mxu0 %v609
  %839 = vmatpush1.bf16.msra.mxu0 %v608
  %840 = vmatprep.subr.bf16.mxu0 %v616
  %841 = vmatpush1.bf16.msra.mxu0 %v615
  %842 = vmatprep.subr.bf16.mxu0 %v623
  %843 = vmatpush1.bf16.msra.mxu0 %v622
  %844 = vmatprep.subr.bf16.mxu0 %v630
  %845 = vmatpush1.bf16.msra.mxu0 %v629
  %846 = vmatprep.subr.bf16.mxu0 %v637
  %847 = vmatpush1.bf16.msra.mxu0 %v636
  %848 = vmatprep.subr.bf16.mxu0 %v644
  %849 = vmatpush1.bf16.msra.mxu0 %v643
  %850 = vmatprep.subr.bf16.mxu0 %v651
  %851 = vmatpush1.bf16.msra.mxu0 %v650
  %852 = vmatprep.mubr.bf16.mxu0 %v184
  %853 = vmatmul.mubr.bf16.gmra.mrb[0].mxu0 %v183
  %v854 = vpop.f32.mrb[0].mxu0
  %v855 = vadd.f32 %v154, %v854
  %v856 = vpop.f32.mrb[0].mxu0
  %v857 = vadd.f32 %v154, %v856
  %v858 = vpop.f32.mrb[0].mxu0
  %v859 = vadd.f32 %v159, %v858
  %v860 = vpop.f32.mrb[0].mxu0
  %v861 = vadd.f32 %v159, %v860
  %862 = vmatprep.mubr.bf16.mxu0 %v186
  %863 = vmatmul.mubr.bf16.gmra.mrb[0].mxu0 %v185
  %v864 = vpop.f32.mrb[0].mxu0
  %v865 = vadd.f32 %v164, %v864
  %v866 = vpop.f32.mrb[0].mxu0
  %v867 = vadd.f32 %v164, %v866
  %v868 = vpop.f32.mrb[0].mxu0
  %v869 = vadd.f32 %v169, %v868
  %v870 = vpop.f32.mrb[0].mxu0
  %v871 = vadd.f32 %v169, %v870
  %872 = vdwg.mxu0
  %873 = vmatprep.subr.bf16.mxu0 %v548
  %874 = vmatpush1.bf16.msra.mxu0 %v547
  %875 = vmatprep.subr.bf16.mxu0 %v555
  %876 = vmatpush1.bf16.msra.mxu0 %v554
  %877 = vmatprep.subr.bf16.mxu0 %v562
  %878 = vmatpush1.bf16.msra.mxu0 %v561
  %879 = vmatprep.subr.bf16.mxu0 %v569
  %880 = vmatpush1.bf16.msra.mxu0 %v568
  %881 = vmatprep.subr.bf16.mxu0 %v576
  %882 = vmatpush1.bf16.msra.mxu0 %v575
  %883 = vmatprep.subr.bf16.mxu0 %v583
  %884 = vmatpush1.bf16.msra.mxu0 %v582
  %885 = vmatprep.subr.bf16.mxu0 %v590
  %886 = vmatpush1.bf16.msra.mxu0 %v589
  %887 = vmatprep.subr.bf16.mxu0 %v597
  %888 = vmatpush1.bf16.msra.mxu0 %v596
  %889 = vmatprep.subr.bf16.mxu0 %v604
  %890 = vmatpush1.bf16.msra.mxu0 %v603
  %891 = vmatprep.subr.bf16.mxu0 %v611
  %892 = vmatpush1.bf16.msra.mxu0 %v610
  %893 = vmatprep.subr.bf16.mxu0 %v618
  %894 = vmatpush1.bf16.msra.mxu0 %v617
  %895 = vmatprep.subr.bf16.mxu0 %v625
  %896 = vmatpush1.bf16.msra.mxu0 %v624
  %897 = vmatprep.subr.bf16.mxu0 %v632
  %898 = vmatpush1.bf16.msra.mxu0 %v631
  %899 = vmatprep.subr.bf16.mxu0 %v639
  %900 = vmatpush1.bf16.msra.mxu0 %v638
  %901 = vmatprep.subr.bf16.mxu0 %v646
  %902 = vmatpush1.bf16.msra.mxu0 %v645
  %903 = vmatprep.subr.bf16.mxu0 %v653
  %904 = vmatpush1.bf16.msra.mxu0 %v652
  %905 = vmatprep.mubr.bf16.mxu0 %v184
  %906 = vmatmul.mubr.bf16.gmra.mrb[0].mxu0 %v183
  %v907 = vpop.f32.mrb[0].mxu0
  %v908 = vadd.f32 %v154, %v907
  %v909 = vpop.f32.mrb[0].mxu0
  %v910 = vadd.f32 %v154, %v909
  %v911 = vpop.f32.mrb[0].mxu0
  %v912 = vadd.f32 %v159, %v911
  %v913 = vpop.f32.mrb[0].mxu0
  %v914 = vadd.f32 %v159, %v913
  %915 = vmatprep.mubr.bf16.mxu0 %v186
  %916 = vmatmul.mubr.bf16.gmra.mrb[0].mxu0 %v185
  %v917 = vpop.f32.mrb[0].mxu0
  %v918 = vadd.f32 %v164, %v917
  %v919 = vpop.f32.mrb[0].mxu0
  %v920 = vadd.f32 %v164, %v919
  %v921 = vpop.f32.mrb[0].mxu0
  %v922 = vadd.f32 %v169, %v921
  %v923 = vpop.f32.mrb[0].mxu0
  %v924 = vadd.f32 %v169, %v923
  %925 = vdwg.mxu0
  %926 = vmatprep.subr.bf16.mxu0 0
  %927 = vmatpush1.bf16.msra.mxu0 %v549
  %928 = vmatprep.subr.bf16.mxu0 0
  %929 = vmatpush1.bf16.msra.mxu0 %v556
  %930 = vmatprep.subr.bf16.mxu0 0
  %931 = vmatpush1.bf16.msra.mxu0 %v563
  %932 = vmatprep.subr.bf16.mxu0 0
  %933 = vmatpush1.bf16.msra.mxu0 %v570
  %934 = vmatprep.subr.bf16.mxu0 0
  %935 = vmatpush1.bf16.msra.mxu0 %v577
  %936 = vmatprep.subr.bf16.mxu0 0
  %937 = vmatpush1.bf16.msra.mxu0 %v584
  %938 = vmatprep.subr.bf16.mxu0 0
  %939 = vmatpush1.bf16.msra.mxu0 %v591
  %940 = vmatprep.subr.bf16.mxu0 0
  %941 = vmatpush1.bf16.msra.mxu0 %v598
  %942 = vmatprep.subr.bf16.mxu0 0
  %943 = vmatpush1.bf16.msra.mxu0 %v605
  %944 = vmatprep.subr.bf16.mxu0 0
  %945 = vmatpush1.bf16.msra.mxu0 %v612
  %946 = vmatprep.subr.bf16.mxu0 0
  %947 = vmatpush1.bf16.msra.mxu0 %v619
  %948 = vmatprep.subr.bf16.mxu0 0
  %949 = vmatpush1.bf16.msra.mxu0 %v626
  %950 = vmatprep.subr.bf16.mxu0 0
  %951 = vmatpush1.bf16.msra.mxu0 %v633
  %952 = vmatprep.subr.bf16.mxu0 0
  %953 = vmatpush1.bf16.msra.mxu0 %v640
  %954 = vmatprep.subr.bf16.mxu0 0
  %955 = vmatpush1.bf16.msra.mxu0 %v647
  %956 = vmatprep.subr.bf16.mxu0 0
  %957 = vmatpush1.bf16.msra.mxu0 %v654
  %958 = vmatprep.mubr.bf16.mxu0 %v184
  %959 = vmatmul.mubr.bf16.gmra.mrb[0].mxu0 %v183
  %v960 = vpop.f32.mrb[0].mxu0
  %v961 = vadd.f32 %v154, %v960
  %v962 = vpop.f32.mrb[0].mxu0
  %v963 = vpop.f32.mrb[0].mxu0
  %v964 = vadd.f32 %v159, %v963
  %v965 = vpop.f32.mrb[0].mxu0
  %966 = vmatprep.mubr.bf16.mxu0 %v186
  %967 = vmatmul.mubr.bf16.gmra.mrb[0].mxu0 %v185
  %v968 = vpop.f32.mrb[0].mxu0
  %v969 = vadd.f32 %v164, %v968
  %v970 = vpop.f32.mrb[0].mxu0
  %v971 = vpop.f32.mrb[0].mxu0
  %v972 = vadd.f32 %v169, %v971
  %v973 = vpop.f32.mrb[0].mxu0
  %974 = vdwg.mxu0
  %v975 = vmax.f32 %v802, 0.0
  %v976 = vmax.f32 %v804, 0.0
  %v977 = vmax.f32 %v855, 0.0
  %v978 = vmax.f32 %v857, 0.0
  %v979 = vmax.f32 %v908, 0.0
  %v980 = vmax.f32 %v910, 0.0
  %v981 = vmax.f32 %v961, 0.0
  %v982 = vmax.f32 %v806, 0.0
  %v983 = vmax.f32 %v808, 0.0
  %v984 = vmax.f32 %v859, 0.0
  %v985 = vmax.f32 %v861, 0.0
  %v986 = vmax.f32 %v912, 0.0
  %v987 = vmax.f32 %v914, 0.0
  %v988 = vmax.f32 %v964, 0.0
  %v989 = vmax.f32 %v812, 0.0
  %v990 = vmax.f32 %v814, 0.0
  %v991 = vmax.f32 %v865, 0.0
  %v992 = vmax.f32 %v867, 0.0
  %v993 = vmax.f32 %v918, 0.0
  %v994 = vmax.f32 %v920, 0.0
  %v995 = vmax.f32 %v969, 0.0
  %v996 = vmax.f32 %v816, 0.0
  %v997 = vmax.f32 %v818, 0.0
  %v998 = vmax.f32 %v869, 0.0
  %v999 = vmax.f32 %v871, 0.0
  %v1000 = vmax.f32 %v922, 0.0
  %v1001 = vmax.f32 %v924, 0.0
  %v1002 = vmax.f32 %v972, 0.0
  %v1003 = vpack.c.bf16 %v982, %v975
  %v1004 = vpack.c.bf16 %v983, %v976
  %v1005 = vpack.c.bf16 %v984, %v977
  %v1006 = vpack.c.bf16 %v985, %v978
  %v1007 = vpack.c.bf16 %v986, %v979
  %v1008 = vpack.c.bf16 %v987, %v980
  %v1009 = vpack.c.bf16 %v988, %v981
  %v1010 = vpack.c.bf16 %v996, %v989
  %v1011 = vpack.c.bf16 %v997, %v990
  %v1012 = vpack.c.bf16 %v998, %v991
  %v1013 = vpack.c.bf16 %v999, %v992
  %v1014 = vpack.c.bf16 %v1000, %v993
  %v1015 = vpack.c.bf16 %v1001, %v994
  %v1016 = vpack.c.bf16 %v1002, %v995
  %v1031 = vunpack.c.l.b16 %v1003
  %v1032 = vunpack.c.l.b16 %v1004
  %v1033 = vunpack.c.l.b16 %v1005
  %v1034 = vunpack.c.l.b16 %v1006
  %v1035 = vunpack.c.l.b16 %v1007
  %v1036 = vunpack.c.l.b16 %v1008
  %v1037 = vunpack.c.l.b16 %v1009
  %v1038 = vunpack.c.h.b16 %v1003
  %v1039 = vunpack.c.h.b16 %v1004
  %v1040 = vunpack.c.h.b16 %v1005
  %v1041 = vunpack.c.h.b16 %v1006
  %v1042 = vunpack.c.h.b16 %v1007
  %v1043 = vunpack.c.h.b16 %v1008
  %v1044 = vunpack.c.h.b16 %v1009
  %v1045 = vunpack.c.l.b16 %v1010
  %v1046 = vunpack.c.l.b16 %v1011
  %v1047 = vunpack.c.l.b16 %v1012
  %v1048 = vunpack.c.l.b16 %v1013
  %v1049 = vunpack.c.l.b16 %v1014
  %v1050 = vunpack.c.l.b16 %v1015
  %v1051 = vunpack.c.l.b16 %v1016
  %v1052 = vunpack.c.h.b16 %v1010
  %v1053 = vunpack.c.h.b16 %v1011
  %v1054 = vunpack.c.h.b16 %v1012
  %v1055 = vunpack.c.h.b16 %v1013
  %v1056 = vunpack.c.h.b16 %v1014
  %v1057 = vunpack.c.h.b16 %v1015
  %v1058 = vunpack.c.h.b16 %v1016
  %v1059 = vpack.c.b16 %v1032, %v1031
  %v1060 = vpack.c.b16 %v1034, %v1033
  %v1061 = vpack.c.b16 %v1036, %v1035
  %v1062 = vpack.c.b16 %v1037, %v1037
  %v1063 = vpack.c.b16 %v1039, %v1038
  %v1064 = vpack.c.b16 %v1041, %v1040
  %v1065 = vpack.c.b16 %v1043, %v1042
  %v1066 = vpack.c.b16 %v1044, %v1044
  %v1067 = vpack.c.b16 %v1046, %v1045
  %v1068 = vpack.c.b16 %v1048, %v1047
  %v1069 = vpack.c.b16 %v1050, %v1049
  %v1070 = vpack.c.b16 %v1051, %v1051
  %v1071 = vpack.c.b16 %v1053, %v1052
  %v1072 = vpack.c.b16 %v1055, %v1054
  %v1073 = vpack.c.b16 %v1057, %v1056
  %v1074 = vpack.c.b16 %v1058, %v1058
  %1091 = vst [vmem:[%s3] sm:$0xff] %v1059
  %1092 = vst [vmem:[%s3 + $0x8] sm:$0xff] %v1060
  %1093 = vst [vmem:[%s3 + $0x10] sm:$0xff] %v1061
  %1094 = vst [vmem:[%s3 + $0x18] sm:$0xf] %v1062
  %1095 = vst [vmem:[%s3 + $0x1c] sm:$0xff] %v1063
  %1096 = vst [vmem:[%s3 + $0x24] sm:$0xff] %v1064
  %1097 = vst [vmem:[%s3 + $0x2c] sm:$0xff] %v1065
  %1098 = vst [vmem:[%s3 + $0x34] sm:$0xf] %v1066
  %1099 = vst [vmem:[%s3 + $0x38] sm:$0xff] %v1067
  %1100 = vst [vmem:[%s3 + $0x40] sm:$0xff] %v1068
  %1101 = vst [vmem:[%s3 + $0x48] sm:$0xff] %v1069
  %1102 = vst [vmem:[%s3 + $0x50] sm:$0xf] %v1070
  %1103 = vst [vmem:[%s3 + $0x54] sm:$0xff] %v1071
  %1104 = vst [vmem:[%s3 + $0x5c] sm:$0xff] %v1072
  %1105 = vst [vmem:[%s3 + $0x64] sm:$0xff] %v1073
  %1106 = vst [vmem:[%s3 + $0x6c] sm:$0xf] %v1074
  // Predicated region
  $region14: #{qnetwork_forward.4} parent=0 // pred_check
    _
  $region15: #{qnetwork_forward.4} parent=0 // pred_check_branch
    %1108 = sbr.rel (0) target = $region17
  $region16: #{qnetwork_forward.4} parent=0 // pred_region
    _
  $region17: #{qnetwork_forward.4} parent=0 // pred_fallthru
    _
  // Predicated region
  $region18: #{qnetwork_forward.4} parent=0 // pred_check
    _
  $region19: #{qnetwork_forward.4} parent=0 // pred_check_branch
    %1110 = sbr.rel (0) target = $region21
  $region20: #{qnetwork_forward.4} parent=0 // pred_region
    _
  $region21: #{qnetwork_forward.4} parent=0 // pred_fallthru
    _

// kernel: qnetwork_forward.5
$region0: #{qnetwork_forward.5}
  #allocation0 [shape = 'u32[]', space=smem, size = 0x4, offset = 0x4, fixed_abs, tag = 'smem constant byte address 0x4 - core index']
  #allocation1 [shape = 'u32[144,128]{1,0:T(1,128)}', space=vmem, size = 0x12000, scoped, tag = 'internal scratch']
  %s0 = inlined_call_operand.vmem [shape: bf16[64,512], index: 0, kind: input, shape index: {}]
  %s1 = inlined_call_operand.vmem [shape: bf16[512,256], index: 1, kind: input, shape index: {}]
  %s2 = inlined_call_operand.vmem [shape: f32[64,1], index: 2, kind: input, shape index: {}]
  %s3 = inlined_call_operand.vmem [shape: bf16[64,256], index: 3, kind: output, shape index: {}]
  %s4 = sld [smem:[#allocation0]]
  $region22: #{qnetwork_forward.5} parent=0
    _
  %s6 = ssub.s32 1, %s4
  %s7 = scalar_select 0, %s6, %s4
  // Predicated region
  $region2: #{qnetwork_forward.5} parent=0 // pred_check
    _
  $region3: #{qnetwork_forward.5} parent=0 // pred_check_branch
    %9 = sbr.rel (0) target = $region5
  $region4: #{qnetwork_forward.5} parent=0 // pred_region
    _
  $region5: #{qnetwork_forward.5} parent=0 // pred_fallthru
    _
  // Predicated region
  $region6: #{qnetwork_forward.5} parent=0 // pred_check
    _
  $region7: #{qnetwork_forward.5} parent=0 // pred_check_branch
    %11 = sbr.rel (0) target = $region9
  $region8: #{qnetwork_forward.5} parent=0 // pred_region
    _
  $region9: #{qnetwork_forward.5} parent=0 // pred_fallthru
    _
  // Predicated region
  $region10: #{qnetwork_forward.5} parent=0 // pred_check
    _
  $region11: #{qnetwork_forward.5} parent=0 // pred_check_branch
    %13 = sbr.rel (0) target = $region13
  $region12: #{qnetwork_forward.5} parent=0 // pred_region
    _
  $region13: #{qnetwork_forward.5} parent=0 // pred_fallthru
    _
  %v14 = vld [vmem:[%s0] sm:$0xff]
  %v15 = vld [vmem:[%s0 + $0x8] sm:$0xff]
  %v16 = vld [vmem:[%s0 + $0x10] sm:$0xff]
  %v17 = vld [vmem:[%s0 + $0x18] sm:$0xff]
  %v18 = vld [vmem:[%s0 + $0x20] sm:$0xff]
  %v19 = vld [vmem:[%s0 + $0x28] sm:$0xff]
  %v20 = vld [vmem:[%s0 + $0x30] sm:$0xff]
  %v21 = vld [vmem:[%s0 + $0x38] sm:$0xff]
  %v22 = vld [vmem:[%s0 + $0x40] sm:$0xff]
  %v23 = vld [vmem:[%s0 + $0x48] sm:$0xff]
  %v24 = vld [vmem:[%s0 + $0x50] sm:$0xff]
  %v25 = vld [vmem:[%s0 + $0x58] sm:$0xff]
  %v26 = vld [vmem:[%s0 + $0x60] sm:$0xff]
  %v27 = vld [vmem:[%s0 + $0x68] sm:$0xff]
  %v28 = vld [vmem:[%s0 + $0x70] sm:$0xff]
  %v29 = vld [vmem:[%s0 + $0x78] sm:$0xff]
  %v30 = vld [vmem:[%s1] sm:$0xff]
  %v31 = vld [vmem:[%s1 + $0x8] sm:$0xff]
  %v32 = vld [vmem:[%s1 + $0x10] sm:$0xff]
  %v33 = vld [vmem:[%s1 + $0x18] sm:$0xff]
  %v34 = vld [vmem:[%s1 + $0x20] sm:$0xff]
  %v35 = vld [vmem:[%s1 + $0x28] sm:$0xff]
  %v36 = vld [vmem:[%s1 + $0x30] sm:$0xff]
  %v37 = vld [vmem:[%s1 + $0x38] sm:$0xff]
  %v38 = vld [vmem:[%s1 + $0x40] sm:$0xff]
  %v39 = vld [vmem:[%s1 + $0x48] sm:$0xff]
  %v40 = vld [vmem:[%s1 + $0x50] sm:$0xff]
  %v41 = vld [vmem:[%s1 + $0x58] sm:$0xff]
  %v42 = vld [vmem:[%s1 + $0x60] sm:$0xff]
  %v43 = vld [vmem:[%s1 + $0x68] sm:$0xff]
  %v44 = vld [vmem:[%s1 + $0x70] sm:$0xff]
  %v45 = vld [vmem:[%s1 + $0x78] sm:$0xff]
  %v46 = vld [vmem:[%s1 + $0x80] sm:$0xff]
  %v47 = vld [vmem:[%s1 + $0x88] sm:$0xff]
  %v48 = vld [vmem:[%s1 + $0x90] sm:$0xff]
  %v49 = vld [vmem:[%s1 + $0x98] sm:$0xff]
  %v50 = vld [vmem:[%s1 + $0xa0] sm:$0xff]
  %v51 = vld [vmem:[%s1 + $0xa8] sm:$0xff]
  %v52 = vld [vmem:[%s1 + $0xb0] sm:$0xff]
  %v53 = vld [vmem:[%s1 + $0xb8] sm:$0xff]
  %v54 = vld [vmem:[%s1 + $0xc0] sm:$0xff]
  %v55 = vld [vmem:[%s1 + $0xc8] sm:$0xff]
  %v56 = vld [vmem:[%s1 + $0xd0] sm:$0xff]
  %v57 = vld [vmem:[%s1 + $0xd8] sm:$0xff]
  %v58 = vld [vmem:[%s1 + $0xe0] sm:$0xff]
  %v59 = vld [vmem:[%s1 + $0xe8] sm:$0xff]
  %v60 = vld [vmem:[%s1 + $0xf0] sm:$0xff]
  %v61 = vld [vmem:[%s1 + $0xf8] sm:$0xff]
  %v62 = vld [vmem:[%s1 + $0x100] sm:$0xff]
  %v63 = vld [vmem:[%s1 + $0x108] sm:$0xff]
  %v64 = vld [vmem:[%s1 + $0x110] sm:$0xff]
  %v65 = vld [vmem:[%s1 + $0x118] sm:$0xff]
  %v66 = vld [vmem:[%s1 + $0x120] sm:$0xff]
  %v67 = vld [vmem:[%s1 + $0x128] sm:$0xff]
  %v68 = vld [vmem:[%s1 + $0x130] sm:$0xff]
  %v69 = vld [vmem:[%s1 + $0x138] sm:$0xff]
  %v70 = vld [vmem:[%s1 + $0x140] sm:$0xff]
  %v71 = vld [vmem:[%s1 + $0x148] sm:$0xff]
  %v72 = vld [vmem:[%s1 + $0x150] sm:$0xff]
  %v73 = vld [vmem:[%s1 + $0x158] sm:$0xff]
  %v74 = vld [vmem:[%s1 + $0x160] sm:$0xff]
  %v75 = vld [vmem:[%s1 + $0x168] sm:$0xff]
  %v76 = vld [vmem:[%s1 + $0x170] sm:$0xff]
  %v77 = vld [vmem:[%s1 + $0x178] sm:$0xff]
  %v78 = vld [vmem:[%s1 + $0x180] sm:$0xff]
  %v79 = vld [vmem:[%s1 + $0x188] sm:$0xff]
  %v80 = vld [vmem:[%s1 + $0x190] sm:$0xff]
  %v81 = vld [vmem:[%s1 + $0x198] sm:$0xff]
  %v82 = vld [vmem:[%s1 + $0x1a0] sm:$0xff]
  %v83 = vld [vmem:[%s1 + $0x1a8] sm:$0xff]
  %v84 = vld [vmem:[%s1 + $0x1b0] sm:$0xff]
  %v85 = vld [vmem:[%s1 + $0x1b8] sm:$0xff]
  %v86 = vld [vmem:[%s1 + $0x1c0] sm:$0xff]
  %v87 = vld [vmem:[%s1 + $0x1c8] sm:$0xff]
  %v88 = vld [vmem:[%s1 + $0x1d0] sm:$0xff]
  %v89 = vld [vmem:[%s1 + $0x1d8] sm:$0xff]
  %v90 = vld [vmem:[%s1 + $0x1e0] sm:$0xff]
  %v91 = vld [vmem:[%s1 + $0x1e8] sm:$0xff]
  %v92 = vld [vmem:[%s1 + $0x1f0] sm:$0xff]
  %v93 = vld [vmem:[%s1 + $0x1f8] sm:$0xff]
  %v94 = vld [vmem:[%s2] sm:$0xff]
  %v95 = vld [vmem:[%s2 + $0x8] sm:$0xff]
  %v96 = vld [vmem:[%s2 + $0x10] sm:$0xff]
  %v97 = vld [vmem:[%s2 + $0x18] sm:$0xff]
  %v98 = vld [vmem:[%s2 + $0x20] sm:$0xff]
  %v99 = vld [vmem:[%s2 + $0x28] sm:$0xff]
  %v100 = vld [vmem:[%s2 + $0x30] sm:$0xff]
  %v101 = vld [vmem:[%s2 + $0x38] sm:$0xff]
  %103 = vset.pattern.permute.xlu0 0
  %104 = vperm.xlu0 %103, %v94
  %v105 = vpop.permute.xlu0 %104
  %108 = vset.pattern.permute.xlu0 0
  %109 = vperm.xlu0 %108, %v95
  %v110 = vpop.permute.xlu0 %109
  %113 = vset.pattern.permute.xlu0 0
  %114 = vperm.xlu0 %113, %v96
  %v115 = vpop.permute.xlu0 %114
  %118 = vset.pattern.permute.xlu0 0
  %119 = vperm.xlu0 %118, %v97
  %v120 = vpop.permute.xlu0 %119
  %123 = vset.pattern.permute.xlu0 0
  %124 = vperm.xlu0 %123, %v98
  %v125 = vpop.permute.xlu0 %124
  %128 = vset.pattern.permute.xlu0 0
  %129 = vperm.xlu0 %128, %v99
  %v130 = vpop.permute.xlu0 %129
  %133 = vset.pattern.permute.xlu0 0
  %134 = vperm.xlu0 %133, %v100
  %v135 = vpop.permute.xlu0 %134
  %138 = vset.pattern.permute.xlu0 0
  %139 = vperm.xlu0 %138, %v101
  %v140 = vpop.permute.xlu0 %139
  %v158 = vunpack.c.l.b16 %v14
  %v159 = vunpack.c.h.b16 %v14
  %v160 = vunpack.c.l.b16 %v15
  %v161 = vunpack.c.h.b16 %v15
  %v162 = vunpack.c.l.b16 %v16
  %v163 = vunpack.c.h.b16 %v16
  %v164 = vunpack.c.l.b16 %v17
  %v165 = vunpack.c.h.b16 %v17
  %v166 = vunpack.c.l.b16 %v18
  %v167 = vunpack.c.h.b16 %v18
  %v168 = vunpack.c.l.b16 %v19
  %v169 = vunpack.c.h.b16 %v19
  %v170 = vunpack.c.l.b16 %v20
  %v171 = vunpack.c.h.b16 %v20
  %v172 = vunpack.c.l.b16 %v21
  %v173 = vunpack.c.h.b16 %v21
  %v174 = vunpack.c.l.b16 %v22
  %v175 = vunpack.c.h.b16 %v22
  %v176 = vunpack.c.l.b16 %v23
  %v177 = vunpack.c.h.b16 %v23
  %v178 = vunpack.c.l.b16 %v24
  %v179 = vunpack.c.h.b16 %v24
  %v180 = vunpack.c.l.b16 %v25
  %v181 = vunpack.c.h.b16 %v25
  %v182 = vunpack.c.l.b16 %v26
  %v183 = vunpack.c.h.b16 %v26
  %v184 = vunpack.c.l.b16 %v27
  %v185 = vunpack.c.h.b16 %v27
  %v186 = vunpack.c.l.b16 %v28
  %v187 = vunpack.c.h.b16 %v28
  %v188 = vunpack.c.l.b16 %v29
  %v189 = vunpack.c.h.b16 %v29
  %v190 = vpack.c.b16 %v162, %v158
  %v191 = vpack.c.b16 %v163, %v159
  %v192 = vpack.c.b16 %v164, %v160
  %v193 = vpack.c.b16 %v165, %v161
  %v194 = vpack.c.b16 %v170, %v166
  %v195 = vpack.c.b16 %v171, %v167
  %v196 = vpack.c.b16 %v172, %v168
  %v197 = vpack.c.b16 %v173, %v169
  %v198 = vpack.c.b16 %v178, %v174
  %v199 = vpack.c.b16 %v179, %v175
  %v200 = vpack.c.b16 %v180, %v176
  %v201 = vpack.c.b16 %v181, %v177
  %v202 = vpack.c.b16 %v186, %v182
  %v203 = vpack.c.b16 %v187, %v183
  %v204 = vpack.c.b16 %v188, %v184
  %v205 = vpack.c.b16 %v189, %v185
  %v286 = vunpack.c.l.b16 %v30
  %v287 = vunpack.c.h.b16 %v30
  %v288 = vunpack.c.l.b16 %v31
  %v289 = vunpack.c.h.b16 %v31
  %v290 = vunpack.c.l.b16 %v32
  %v291 = vunpack.c.h.b16 %v32
  %v292 = vunpack.c.l.b16 %v33
  %v293 = vunpack.c.h.b16 %v33
  %v294 = vunpack.c.l.b16 %v34
  %v295 = vunpack.c.h.b16 %v34
  %v296 = vunpack.c.l.b16 %v35
  %v297 = vunpack.c.h.b16 %v35
  %v298 = vunpack.c.l.b16 %v36
  %v299 = vunpack.c.h.b16 %v36
  %v300 = vunpack.c.l.b16 %v37
  %v301 = vunpack.c.h.b16 %v37
  %v302 = vunpack.c.l.b16 %v38
  %v303 = vunpack.c.h.b16 %v38
  %v304 = vunpack.c.l.b16 %v39
  %v305 = vunpack.c.h.b16 %v39
  %v306 = vunpack.c.l.b16 %v40
  %v307 = vunpack.c.h.b16 %v40
  %v308 = vunpack.c.l.b16 %v41
  %v309 = vunpack.c.h.b16 %v41
  %v310 = vunpack.c.l.b16 %v42
  %v311 = vunpack.c.h.b16 %v42
  %v312 = vunpack.c.l.b16 %v43
  %v313 = vunpack.c.h.b16 %v43
  %v314 = vunpack.c.l.b16 %v44
  %v315 = vunpack.c.h.b16 %v44
  %v316 = vunpack.c.l.b16 %v45
  %v317 = vunpack.c.h.b16 %v45
  %v318 = vunpack.c.l.b16 %v46
  %v319 = vunpack.c.h.b16 %v46
  %v320 = vunpack.c.l.b16 %v47
  %v321 = vunpack.c.h.b16 %v47
  %v322 = vunpack.c.l.b16 %v48
  %v323 = vunpack.c.h.b16 %v48
  %v324 = vunpack.c.l.b16 %v49
  %v325 = vunpack.c.h.b16 %v49
  %v326 = vunpack.c.l.b16 %v50
  %v327 = vunpack.c.h.b16 %v50
  %v328 = vunpack.c.l.b16 %v51
  %v329 = vunpack.c.h.b16 %v51
  %v330 = vunpack.c.l.b16 %v52
  %v331 = vunpack.c.h.b16 %v52
  %v332 = vunpack.c.l.b16 %v53
  %v333 = vunpack.c.h.b16 %v53
  %v334 = vunpack.c.l.b16 %v54
  %v335 = vunpack.c.h.b16 %v54
  %v336 = vunpack.c.l.b16 %v55
  %v337 = vunpack.c.h.b16 %v55
  %v338 = vunpack.c.l.b16 %v56
  %v339 = vunpack.c.h.b16 %v56
  %v340 = vunpack.c.l.b16 %v57
  %v341 = vunpack.c.h.b16 %v57
  %v342 = vunpack.c.l.b16 %v58
  %v343 = vunpack.c.h.b16 %v58
  %v344 = vunpack.c.l.b16 %v59
  %v345 = vunpack.c.h.b16 %v59
  %v346 = vunpack.c.l.b16 %v60
  %v347 = vunpack.c.h.b16 %v60
  %v348 = vunpack.c.l.b16 %v61
  %v349 = vunpack.c.h.b16 %v61
  %v350 = vunpack.c.l.b16 %v62
  %v351 = vunpack.c.h.b16 %v62
  %v352 = vunpack.c.l.b16 %v63
  %v353 = vunpack.c.h.b16 %v63
  %v354 = vunpack.c.l.b16 %v64
  %v355 = vunpack.c.h.b16 %v64
  %v356 = vunpack.c.l.b16 %v65
  %v357 = vunpack.c.h.b16 %v65
  %v358 = vunpack.c.l.b16 %v66
  %v359 = vunpack.c.h.b16 %v66
  %v360 = vunpack.c.l.b16 %v67
  %v361 = vunpack.c.h.b16 %v67
  %v362 = vunpack.c.l.b16 %v68
  %v363 = vunpack.c.h.b16 %v68
  %v364 = vunpack.c.l.b16 %v69
  %v365 = vunpack.c.h.b16 %v69
  %v366 = vunpack.c.l.b16 %v70
  %v367 = vunpack.c.h.b16 %v70
  %v368 = vunpack.c.l.b16 %v71
  %v369 = vunpack.c.h.b16 %v71
  %v370 = vunpack.c.l.b16 %v72
  %v371 = vunpack.c.h.b16 %v72
  %v372 = vunpack.c.l.b16 %v73
  %v373 = vunpack.c.h.b16 %v73
  %v374 = vunpack.c.l.b16 %v74
  %v375 = vunpack.c.h.b16 %v74
  %v376 = vunpack.c.l.b16 %v75
  %v377 = vunpack.c.h.b16 %v75
  %v378 = vunpack.c.l.b16 %v76
  %v379 = vunpack.c.h.b16 %v76
  %v380 = vunpack.c.l.b16 %v77
  %v381 = vunpack.c.h.b16 %v77
  %v382 = vunpack.c.l.b16 %v78
  %v383 = vunpack.c.h.b16 %v78
  %v384 = vunpack.c.l.b16 %v79
  %v385 = vunpack.c.h.b16 %v79
  %v386 = vunpack.c.l.b16 %v80
  %v387 = vunpack.c.h.b16 %v80
  %v388 = vunpack.c.l.b16 %v81
  %v389 = vunpack.c.h.b16 %v81
  %v390 = vunpack.c.l.b16 %v82
  %v391 = vunpack.c.h.b16 %v82
  %v392 = vunpack.c.l.b16 %v83
  %v393 = vunpack.c.h.b16 %v83
  %v394 = vunpack.c.l.b16 %v84
  %v395 = vunpack.c.h.b16 %v84
  %v396 = vunpack.c.l.b16 %v85
  %v397 = vunpack.c.h.b16 %v85
  %v398 = vunpack.c.l.b16 %v86
  %v399 = vunpack.c.h.b16 %v86
  %v400 = vunpack.c.l.b16 %v87
  %v401 = vunpack.c.h.b16 %v87
  %v402 = vunpack.c.l.b16 %v88
  %v403 = vunpack.c.h.b16 %v88
  %v404 = vunpack.c.l.b16 %v89
  %v405 = vunpack.c.h.b16 %v89
  %v406 = vunpack.c.l.b16 %v90
  %v407 = vunpack.c.h.b16 %v90
  %v408 = vunpack.c.l.b16 %v91
  %v409 = vunpack.c.h.b16 %v91
  %v410 = vunpack.c.l.b16 %v92
  %v411 = vunpack.c.h.b16 %v92
  %v412 = vunpack.c.l.b16 %v93
  %v413 = vunpack.c.h.b16 %v93
  %v414 = vpack.c.b16 %v288, %v286
  %v415 = vpack.c.b16 %v289, %v287
  %v416 = vpack.c.b16 %v292, %v290
  %v417 = vpack.c.b16 %v293, %v291
  %v418 = vpack.c.b16 %v296, %v294
  %v419 = vpack.c.b16 %v297, %v295
  %v420 = vpack.c.b16 %v300, %v298
  %v421 = vpack.c.b16 %v301, %v299
  %v422 = vpack.c.b16 %v304, %v302
  %v423 = vpack.c.b16 %v305, %v303
  %v424 = vpack.c.b16 %v308, %v306
  %v425 = vpack.c.b16 %v309, %v307
  %v426 = vpack.c.b16 %v312, %v310
  %v427 = vpack.c.b16 %v313, %v311
  %v428 = vpack.c.b16 %v316, %v314
  %v429 = vpack.c.b16 %v317, %v315
  %v430 = vpack.c.b16 %v320, %v318
  %v431 = vpack.c.b16 %v321, %v319
  %v432 = vpack.c.b16 %v324, %v322
  %v433 = vpack.c.b16 %v325, %v323
  %v434 = vpack.c.b16 %v328, %v326
  %v435 = vpack.c.b16 %v329, %v327
  %v436 = vpack.c.b16 %v332, %v330
  %v437 = vpack.c.b16 %v333, %v331
  %v438 = vpack.c.b16 %v336, %v334
  %v439 = vpack.c.b16 %v337, %v335
  %v440 = vpack.c.b16 %v340, %v338
  %v441 = vpack.c.b16 %v341, %v339
  %v442 = vpack.c.b16 %v344, %v342
  %v443 = vpack.c.b16 %v345, %v343
  %v444 = vpack.c.b16 %v348, %v346
  %v445 = vpack.c.b16 %v349, %v347
  %v446 = vpack.c.b16 %v352, %v350
  %v447 = vpack.c.b16 %v353, %v351
  %v448 = vpack.c.b16 %v356, %v354
  %v449 = vpack.c.b16 %v357, %v355
  %v450 = vpack.c.b16 %v360, %v358
  %v451 = vpack.c.b16 %v361, %v359
  %v452 = vpack.c.b16 %v364, %v362
  %v453 = vpack.c.b16 %v365, %v363
  %v454 = vpack.c.b16 %v368, %v366
  %v455 = vpack.c.b16 %v369, %v367
  %v456 = vpack.c.b16 %v372, %v370
  %v457 = vpack.c.b16 %v373, %v371
  %v458 = vpack.c.b16 %v376, %v374
  %v459 = vpack.c.b16 %v377, %v375
  %v460 = vpack.c.b16 %v380, %v378
  %v461 = vpack.c.b16 %v381, %v379
  %v462 = vpack.c.b16 %v384, %v382
  %v463 = vpack.c.b16 %v385, %v383
  %v464 = vpack.c.b16 %v388, %v386
  %v465 = vpack.c.b16 %v389, %v387
  %v466 = vpack.c.b16 %v392, %v390
  %v467 = vpack.c.b16 %v393, %v391
  %v468 = vpack.c.b16 %v396, %v394
  %v469 = vpack.c.b16 %v397, %v395
  %v470 = vpack.c.b16 %v400, %v398
  %v471 = vpack.c.b16 %v401, %v399
  %v472 = vpack.c.b16 %v404, %v402
  %v473 = vpack.c.b16 %v405, %v403
  %v474 = vpack.c.b16 %v408, %v406
  %v475 = vpack.c.b16 %v409, %v407
  %v476 = vpack.c.b16 %v412, %v410
  %v477 = vpack.c.b16 %v413, %v411
  %542 = vmatprep.subr.bf16.mxu0 %v415
  %543 = vmatpush1.bf16.msra.mxu0 %v414
  %544 = vmatprep.subr.bf16.mxu0 %v417
  %545 = vmatpush1.bf16.msra.mxu0 %v416
  %546 = vmatprep.subr.bf16.mxu0 %v419
  %547 = vmatpush1.bf16.msra.mxu0 %v418
  %548 = vmatprep.subr.bf16.mxu0 %v421
  %549 = vmatpush1.bf16.msra.mxu0 %v420
  %550 = vmatprep.subr.bf16.mxu0 %v423
  %551 = vmatpush1.bf16.msra.mxu0 %v422
  %552 = vmatprep.subr.bf16.mxu0 %v425
  %553 = vmatpush1.bf16.msra.mxu0 %v424
  %554 = vmatprep.subr.bf16.mxu0 %v427
  %555 = vmatpush1.bf16.msra.mxu0 %v426
  %556 = vmatprep.subr.bf16.mxu0 %v429
  %557 = vmatpush1.bf16.msra.mxu0 %v428
  %558 = vmatprep.subr.bf16.mxu0 %v431
  %559 = vmatpush1.bf16.msra.mxu0 %v430
  %560 = vmatprep.subr.bf16.mxu0 %v433
  %561 = vmatpush1.bf16.msra.mxu0 %v432
  %562 = vmatprep.subr.bf16.mxu0 %v435
  %563 = vmatpush1.bf16.msra.mxu0 %v434
  %564 = vmatprep.subr.bf16.mxu0 %v437
  %565 = vmatpush1.bf16.msra.mxu0 %v436
  %566 = vmatprep.subr.bf16.mxu0 %v439
  %567 = vmatpush1.bf16.msra.mxu0 %v438
  %568 = vmatprep.subr.bf16.mxu0 %v441
  %569 = vmatpush1.bf16.msra.mxu0 %v440
  %570 = vmatprep.subr.bf16.mxu0 %v443
  %571 = vmatpush1.bf16.msra.mxu0 %v442
  %572 = vmatprep.subr.bf16.mxu0 %v445
  %573 = vmatpush1.bf16.msra.mxu0 %v444
  %574 = vmatprep.mubr.bf16.mxu0 %v191
  %575 = vmatmul.mubr.bf16.gmra.mrb[0].mxu0 %v190
  %v576 = vpop.f32.mrb[0].mxu0
  %v577 = vadd.f32 %v105, %v576
  %v578 = vpop.f32.mrb[0].mxu0
  %v579 = vadd.f32 %v105, %v578
  %v580 = vpop.f32.mrb[0].mxu0
  %v581 = vadd.f32 %v110, %v580
  %v582 = vpop.f32.mrb[0].mxu0
  %v583 = vadd.f32 %v110, %v582
  %584 = vmatprep.mubr.bf16.mxu0 %v195
  %585 = vmatmul.mubr.bf16.gmra.mrb[0].mxu0 %v194
  %v586 = vpop.f32.mrb[0].mxu0
  %v587 = vadd.f32 %v115, %v586
  %v588 = vpop.f32.mrb[0].mxu0
  %v589 = vadd.f32 %v115, %v588
  %v590 = vpop.f32.mrb[0].mxu0
  %v591 = vadd.f32 %v120, %v590
  %v592 = vpop.f32.mrb[0].mxu0
  %v593 = vadd.f32 %v120, %v592
  %594 = vmatprep.mubr.bf16.mxu0 %v199
  %595 = vmatmul.mubr.bf16.gmra.mrb[0].mxu0 %v198
  %v596 = vpop.f32.mrb[0].mxu0
  %v597 = vadd.f32 %v125, %v596
  %v598 = vpop.f32.mrb[0].mxu0
  %v599 = vadd.f32 %v125, %v598
  %v600 = vpop.f32.mrb[0].mxu0
  %v601 = vadd.f32 %v130, %v600
  %v602 = vpop.f32.mrb[0].mxu0
  %v603 = vadd.f32 %v130, %v602
  %604 = vmatprep.mubr.bf16.mxu0 %v203
  %605 = vmatmul.mubr.bf16.gmra.mrb[0].mxu0 %v202
  %v606 = vpop.f32.mrb[0].mxu0
  %v607 = vadd.f32 %v135, %v606
  %v608 = vpop.f32.mrb[0].mxu0
  %v609 = vadd.f32 %v135, %v608
  %v610 = vpop.f32.mrb[0].mxu0
  %v611 = vadd.f32 %v140, %v610
  %v612 = vpop.f32.mrb[0].mxu0
  %v613 = vadd.f32 %v140, %v612
  %614 = vdwg.mxu0
  %615 = vmatprep.subr.bf16.mxu0 %v447
  %616 = vmatpush1.bf16.msra.mxu0 %v446
  %617 = vmatprep.subr.bf16.mxu0 %v449
  %618 = vmatpush1.bf16.msra.mxu0 %v448
  %619 = vmatprep.subr.bf16.mxu0 %v451
  %620 = vmatpush1.bf16.msra.mxu0 %v450
  %621 = vmatprep.subr.bf16.mxu0 %v453
  %622 = vmatpush1.bf16.msra.mxu0 %v452
  %623 = vmatprep.subr.bf16.mxu0 %v455
  %624 = vmatpush1.bf16.msra.mxu0 %v454
  %625 = vmatprep.subr.bf16.mxu0 %v457
  %626 = vmatpush1.bf16.msra.mxu0 %v456
  %627 = vmatprep.subr.bf16.mxu0 %v459
  %628 = vmatpush1.bf16.msra.mxu0 %v458
  %629 = vmatprep.subr.bf16.mxu0 %v461
  %630 = vmatpush1.bf16.msra.mxu0 %v460
  %631 = vmatprep.subr.bf16.mxu0 %v463
  %632 = vmatpush1.bf16.msra.mxu0 %v462
  %633 = vmatprep.subr.bf16.mxu0 %v465
  %634 = vmatpush1.bf16.msra.mxu0 %v464
  %635 = vmatprep.subr.bf16.mxu0 %v467
  %636 = vmatpush1.bf16.msra.mxu0 %v466
  %637 = vmatprep.subr.bf16.mxu0 %v469
  %638 = vmatpush1.bf16.msra.mxu0 %v468
  %639 = vmatprep.subr.bf16.mxu0 %v471
  %640 = vmatpush1.bf16.msra.mxu0 %v470
  %641 = vmatprep.subr.bf16.mxu0 %v473
  %642 = vmatpush1.bf16.msra.mxu0 %v472
  %643 = vmatprep.subr.bf16.mxu0 %v475
  %644 = vmatpush1.bf16.msra.mxu0 %v474
  %645 = vmatprep.subr.bf16.mxu0 %v477
  %646 = vmatpush1.bf16.msra.mxu0 %v476
  %647 = vmatprep.mubr.bf16.mxu0 %v193
  %648 = vmatmul.mubr.bf16.gmra.mrb[0].mxu0 %v192
  %v649 = vpop.f32.mrb[0].mxu0
  %v650 = vadd.f32 %v577, %v649
  %v651 = vpop.f32.mrb[0].mxu0
  %v652 = vadd.f32 %v579, %v651
  %v653 = vpop.f32.mrb[0].mxu0
  %v654 = vadd.f32 %v581, %v653
  %v655 = vpop.f32.mrb[0].mxu0
  %v656 = vadd.f32 %v583, %v655
  %657 = vmatprep.mubr.bf16.mxu0 %v197
  %658 = vmatmul.mubr.bf16.gmra.mrb[0].mxu0 %v196
  %v659 = vpop.f32.mrb[0].mxu0
  %v660 = vadd.f32 %v587, %v659
  %v661 = vpop.f32.mrb[0].mxu0
  %v662 = vadd.f32 %v589, %v661
  %v663 = vpop.f32.mrb[0].mxu0
  %v664 = vadd.f32 %v591, %v663
  %v665 = vpop.f32.mrb[0].mxu0
  %v666 = vadd.f32 %v593, %v665
  %667 = vmatprep.mubr.bf16.mxu0 %v201
  %668 = vmatmul.mubr.bf16.gmra.mrb[0].mxu0 %v200
  %v669 = vpop.f32.mrb[0].mxu0
  %v670 = vadd.f32 %v597, %v669
  %v671 = vpop.f32.mrb[0].mxu0
  %v672 = vadd.f32 %v599, %v671
  %v673 = vpop.f32.mrb[0].mxu0
  %v674 = vadd.f32 %v601, %v673
  %v675 = vpop.f32.mrb[0].mxu0
  %v676 = vadd.f32 %v603, %v675
  %677 = vmatprep.mubr.bf16.mxu0 %v205
  %678 = vmatmul.mubr.bf16.gmra.mrb[0].mxu0 %v204
  %v679 = vpop.f32.mrb[0].mxu0
  %v680 = vadd.f32 %v607, %v679
  %v681 = vpop.f32.mrb[0].mxu0
  %v682 = vadd.f32 %v609, %v681
  %v683 = vpop.f32.mrb[0].mxu0
  %v684 = vadd.f32 %v611, %v683
  %v685 = vpop.f32.mrb[0].mxu0
  %v686 = vadd.f32 %v613, %v685
  %687 = vdwg.mxu0
  %v688 = vmax.f32 %v650, 0.0
  %v689 = vmax.f32 %v652, 0.0
  %v690 = vmax.f32 %v654, 0.0
  %v691 = vmax.f32 %v656, 0.0
  %v692 = vmax.f32 %v660, 0.0
  %v693 = vmax.f32 %v662, 0.0
  %v694 = vmax.f32 %v664, 0.0
  %v695 = vmax.f32 %v666, 0.0
  %v696 = vmax.f32 %v670, 0.0
  %v697 = vmax.f32 %v672, 0.0
  %v698 = vmax.f32 %v674, 0.0
  %v699 = vmax.f32 %v676, 0.0
  %v700 = vmax.f32 %v680, 0.0
  %v701 = vmax.f32 %v682, 0.0
  %v702 = vmax.f32 %v684, 0.0
  %v703 = vmax.f32 %v686, 0.0
  %v704 = vpack.c.bf16 %v690, %v688
  %v705 = vpack.c.bf16 %v691, %v689
  %v706 = vpack.c.bf16 %v694, %v692
  %v707 = vpack.c.bf16 %v695, %v693
  %v708 = vpack.c.bf16 %v698, %v696
  %v709 = vpack.c.bf16 %v699, %v697
  %v710 = vpack.c.bf16 %v702, %v700
  %v711 = vpack.c.bf16 %v703, %v701
  %v720 = vunpack.c.l.b16 %v704
  %v721 = vunpack.c.l.b16 %v705
  %v722 = vunpack.c.h.b16 %v704
  %v723 = vunpack.c.h.b16 %v705
  %v724 = vunpack.c.l.b16 %v706
  %v725 = vunpack.c.l.b16 %v707
  %v726 = vunpack.c.h.b16 %v706
  %v727 = vunpack.c.h.b16 %v707
  %v728 = vunpack.c.l.b16 %v708
  %v729 = vunpack.c.l.b16 %v709
  %v730 = vunpack.c.h.b16 %v708
  %v731 = vunpack.c.h.b16 %v709
  %v732 = vunpack.c.l.b16 %v710
  %v733 = vunpack.c.l.b16 %v711
  %v734 = vunpack.c.h.b16 %v710
  %v735 = vunpack.c.h.b16 %v711
  %v736 = vpack.c.b16 %v721, %v720
  %v737 = vpack.c.b16 %v723, %v722
  %v738 = vpack.c.b16 %v725, %v724
  %v739 = vpack.c.b16 %v727, %v726
  %v740 = vpack.c.b16 %v729, %v728
  %v741 = vpack.c.b16 %v731, %v730
  %v742 = vpack.c.b16 %v733, %v732
  %v743 = vpack.c.b16 %v735, %v734
  %752 = vst [vmem:[%s3] sm:$0xff] %v736
  %753 = vst [vmem:[%s3 + $0x8] sm:$0xff] %v737
  %754 = vst [vmem:[%s3 + $0x10] sm:$0xff] %v738
  %755 = vst [vmem:[%s3 + $0x18] sm:$0xff] %v739
  %756 = vst [vmem:[%s3 + $0x20] sm:$0xff] %v740
  %757 = vst [vmem:[%s3 + $0x28] sm:$0xff] %v741
  %758 = vst [vmem:[%s3 + $0x30] sm:$0xff] %v742
  %759 = vst [vmem:[%s3 + $0x38] sm:$0xff] %v743
  // Predicated region
  $region14: #{qnetwork_forward.5} parent=0 // pred_check
    _
  $region15: #{qnetwork_forward.5} parent=0 // pred_check_branch
    %761 = sbr.rel (0) target = $region17
  $region16: #{qnetwork_forward.5} parent=0 // pred_region
    _
  $region17: #{qnetwork_forward.5} parent=0 // pred_fallthru
    _
  // Predicated region
  $region18: #{qnetwork_forward.5} parent=0 // pred_check
    _
  $region19: #{qnetwork_forward.5} parent=0 // pred_check_branch
    %763 = sbr.rel (0) target = $region21
  $region20: #{qnetwork_forward.5} parent=0 // pred_region
    _
  $region21: #{qnetwork_forward.5} parent=0 // pred_fallthru
    _

// kernel: qnetwork_forward.6
$region0: #{qnetwork_forward.6}
  #allocation0 [shape = 'u32[]', space=smem, size = 0x4, offset = 0x4, fixed_abs, tag = 'smem constant byte address 0x4 - core index']
  #allocation1 [shape = 'u32[144,128]{1,0:T(1,128)}', space=vmem, size = 0x12000, scoped, tag = 'internal scratch']
  %s0 = inlined_call_operand.vmem [shape: bf16[64,576], index: 0, kind: input, shape index: {}]
  %s1 = inlined_call_operand.vmem [shape: bf16[576,128], index: 1, kind: input, shape index: {}]
  %s2 = inlined_call_operand.vmem [shape: f32[64,1], index: 2, kind: input, shape index: {}]
  %s3 = inlined_call_operand.vmem [shape: bf16[64,128], index: 3, kind: output, shape index: {}]
  %s4 = sld [smem:[#allocation0]]
  $region22: #{qnetwork_forward.6} parent=0
    _
  %s6 = ssub.s32 1, %s4
  %s7 = scalar_select 0, %s6, %s4
  // Predicated region
  $region2: #{qnetwork_forward.6} parent=0 // pred_check
    _
  $region3: #{qnetwork_forward.6} parent=0 // pred_check_branch
    %9 = sbr.rel (0) target = $region5
  $region4: #{qnetwork_forward.6} parent=0 // pred_region
    _
  $region5: #{qnetwork_forward.6} parent=0 // pred_fallthru
    _
  // Predicated region
  $region6: #{qnetwork_forward.6} parent=0 // pred_check
    _
  $region7: #{qnetwork_forward.6} parent=0 // pred_check_branch
    %11 = sbr.rel (0) target = $region9
  $region8: #{qnetwork_forward.6} parent=0 // pred_region
    _
  $region9: #{qnetwork_forward.6} parent=0 // pred_fallthru
    _
  // Predicated region
  $region10: #{qnetwork_forward.6} parent=0 // pred_check
    _
  $region11: #{qnetwork_forward.6} parent=0 // pred_check_branch
    %13 = sbr.rel (0) target = $region13
  $region12: #{qnetwork_forward.6} parent=0 // pred_region
    _
  $region13: #{qnetwork_forward.6} parent=0 // pred_fallthru
    _
  %v15 = vld [vmem:[%s0] sm:$0xff]
  %v16 = vld [vmem:[%s0 + $0x8] sm:$0xff]
  %v17 = vld [vmem:[%s0 + $0x10] sm:$0xf]
  %v18 = vld [vmem:[%s0 + $0x14] sm:$0xff]
  %v19 = vld [vmem:[%s0 + $0x1c] sm:$0xff]
  %v20 = vld [vmem:[%s0 + $0x24] sm:$0xf]
  %v21 = vld [vmem:[%s0 + $0x28] sm:$0xff]
  %v22 = vld [vmem:[%s0 + $0x30] sm:$0xff]
  %v23 = vld [vmem:[%s0 + $0x38] sm:$0xf]
  %v24 = vld [vmem:[%s0 + $0x3c] sm:$0xff]
  %v25 = vld [vmem:[%s0 + $0x44] sm:$0xff]
  %v26 = vld [vmem:[%s0 + $0x4c] sm:$0xf]
  %v27 = vld [vmem:[%s0 + $0x50] sm:$0xff]
  %v28 = vld [vmem:[%s0 + $0x58] sm:$0xff]
  %v29 = vld [vmem:[%s0 + $0x60] sm:$0xf]
  %v30 = vld [vmem:[%s0 + $0x64] sm:$0xff]
  %v31 = vld [vmem:[%s0 + $0x6c] sm:$0xff]
  %v32 = vld [vmem:[%s0 + $0x74] sm:$0xf]
  %v33 = vld [vmem:[%s0 + $0x78] sm:$0xff]
  %v34 = vld [vmem:[%s0 + $0x80] sm:$0xff]
  %v35 = vld [vmem:[%s0 + $0x88] sm:$0xf]
  %v36 = vld [vmem:[%s0 + $0x8c] sm:$0xff]
  %v37 = vld [vmem:[%s0 + $0x94] sm:$0xff]
  %v38 = vld [vmem:[%s0 + $0x9c] sm:$0xf]
  %v39 = vld [vmem:[%s1] sm:$0xf]
  %v40 = vld [vmem:[%s1 + $0x4] sm:$0xf]
  %v41 = vld [vmem:[%s1 + $0x8] sm:$0xf]
  %v42 = vld [vmem:[%s1 + $0xc] sm:$0xf]
  %v43 = vld [vmem:[%s1 + $0x10] sm:$0xf]
  %v44 = vld [vmem:[%s1 + $0x14] sm:$0xf]
  %v45 = vld [vmem:[%s1 + $0x18] sm:$0xf]
  %v46 = vld [vmem:[%s1 + $0x1c] sm:$0xf]
  %v47 = vld [vmem:[%s1 + $0x20] sm:$0xf]
  %v48 = vld [vmem:[%s1 + $0x24] sm:$0xf]
  %v49 = vld [vmem:[%s1 + $0x28] sm:$0xf]
  %v50 = vld [vmem:[%s1 + $0x2c] sm:$0xf]
  %v51 = vld [vmem:[%s1 + $0x30] sm:$0xf]
  %v52 = vld [vmem:[%s1 + $0x34] sm:$0xf]
  %v53 = vld [vmem:[%s1 + $0x38] sm:$0xf]
  %v54 = vld [vmem:[%s1 + $0x3c] sm:$0xf]
  %v55 = vld [vmem:[%s1 + $0x40] sm:$0xf]
  %v56 = vld [vmem:[%s1 + $0x44] sm:$0xf]
  %v57 = vld [vmem:[%s1 + $0x48] sm:$0xf]
  %v58 = vld [vmem:[%s1 + $0x4c] sm:$0xf]
  %v59 = vld [vmem:[%s1 + $0x50] sm:$0xf]
  %v60 = vld [vmem:[%s1 + $0x54] sm:$0xf]
  %v61 = vld [vmem:[%s1 + $0x58] sm:$0xf]
  %v62 = vld [vmem:[%s1 + $0x5c] sm:$0xf]
  %v63 = vld [vmem:[%s1 + $0x60] sm:$0xf]
  %v64 = vld [vmem:[%s1 + $0x64] sm:$0xf]
  %v65 = vld [vmem:[%s1 + $0x68] sm:$0xf]
  %v66 = vld [vmem:[%s1 + $0x6c] sm:$0xf]
  %v67 = vld [vmem:[%s1 + $0x70] sm:$0xf]
  %v68 = vld [vmem:[%s1 + $0x74] sm:$0xf]
  %v69 = vld [vmem:[%s1 + $0x78] sm:$0xf]
  %v70 = vld [vmem:[%s1 + $0x7c] sm:$0xf]
  %v71 = vld [vmem:[%s1 + $0x80] sm:$0xf]
  %v72 = vld [vmem:[%s1 + $0x84] sm:$0xf]
  %v73 = vld [vmem:[%s1 + $0x88] sm:$0xf]
  %v74 = vld [vmem:[%s1 + $0x8c] sm:$0xf]
  %v75 = vld [vmem:[%s1 + $0x90] sm:$0xf]
  %v76 = vld [vmem:[%s1 + $0x94] sm:$0xf]
  %v77 = vld [vmem:[%s1 + $0x98] sm:$0xf]
  %v78 = vld [vmem:[%s1 + $0x9c] sm:$0xf]
  %v79 = vld [vmem:[%s1 + $0xa0] sm:$0xf]
  %v80 = vld [vmem:[%s1 + $0xa4] sm:$0xf]
  %v81 = vld [vmem:[%s1 + $0xa8] sm:$0xf]
  %v82 = vld [vmem:[%s1 + $0xac] sm:$0xf]
  %v83 = vld [vmem:[%s1 + $0xb0] sm:$0xf]
  %v84 = vld [vmem:[%s1 + $0xb4] sm:$0xf]
  %v85 = vld [vmem:[%s1 + $0xb8] sm:$0xf]
  %v86 = vld [vmem:[%s1 + $0xbc] sm:$0xf]
  %v87 = vld [vmem:[%s1 + $0xc0] sm:$0xf]
  %v88 = vld [vmem:[%s1 + $0xc4] sm:$0xf]
  %v89 = vld [vmem:[%s1 + $0xc8] sm:$0xf]
  %v90 = vld [vmem:[%s1 + $0xcc] sm:$0xf]
  %v91 = vld [vmem:[%s1 + $0xd0] sm:$0xf]
  %v92 = vld [vmem:[%s1 + $0xd4] sm:$0xf]
  %v93 = vld [vmem:[%s1 + $0xd8] sm:$0xf]
  %v94 = vld [vmem:[%s1 + $0xdc] sm:$0xf]
  %v95 = vld [vmem:[%s1 + $0xe0] sm:$0xf]
  %v96 = vld [vmem:[%s1 + $0xe4] sm:$0xf]
  %v97 = vld [vmem:[%s1 + $0xe8] sm:$0xf]
  %v98 = vld [vmem:[%s1 + $0xec] sm:$0xf]
  %v99 = vld [vmem:[%s1 + $0xf0] sm:$0xf]
  %v100 = vld [vmem:[%s1 + $0xf4] sm:$0xf]
  %v101 = vld [vmem:[%s1 + $0xf8] sm:$0xf]
  %v102 = vld [vmem:[%s1 + $0xfc] sm:$0xf]
  %v103 = vld [vmem:[%s1 + $0x100] sm:$0xf]
  %v104 = vld [vmem:[%s1 + $0x104] sm:$0xf]
  %v105 = vld [vmem:[%s1 + $0x108] sm:$0xf]
  %v106 = vld [vmem:[%s1 + $0x10c] sm:$0xf]
  %v107 = vld [vmem:[%s1 + $0x110] sm:$0xf]
  %v108 = vld [vmem:[%s1 + $0x114] sm:$0xf]
  %v109 = vld [vmem:[%s1 + $0x118] sm:$0xf]
  %v110 = vld [vmem:[%s1 + $0x11c] sm:$0xf]
  %v111 = vld [vmem:[%s2] sm:$0xff]
  %v112 = vld [vmem:[%s2 + $0x8] sm:$0xff]
  %v113 = vld [vmem:[%s2 + $0x10] sm:$0xff]
  %v114 = vld [vmem:[%s2 + $0x18] sm:$0xff]
  %v115 = vld [vmem:[%s2 + $0x20] sm:$0xff]
  %v116 = vld [vmem:[%s2 + $0x28] sm:$0xff]
  %v117 = vld [vmem:[%s2 + $0x30] sm:$0xff]
  %v118 = vld [vmem:[%s2 + $0x38] sm:$0xff]
  %120 = vset.pattern.permute.xlu0 0
  %121 = vperm.xlu0 %120, %v111
  %v122 = vpop.permute.xlu0 %121
  %125 = vset.pattern.permute.xlu0 0
  %126 = vperm.xlu0 %125, %v112
  %v127 = vpop.permute.xlu0 %126
  %130 = vset.pattern.permute.xlu0 0
  %131 = vperm.xlu0 %130, %v113
  %v132 = vpop.permute.xlu0 %131
  %135 = vset.pattern.permute.xlu0 0
  %136 = vperm.xlu0 %135, %v114
  %v137 = vpop.permute.xlu0 %136
  %140 = vset.pattern.permute.xlu0 0
  %141 = vperm.xlu0 %140, %v115
  %v142 = vpop.permute.xlu0 %141
  %145 = vset.pattern.permute.xlu0 0
  %146 = vperm.xlu0 %145, %v116
  %v147 = vpop.permute.xlu0 %146
  %150 = vset.pattern.permute.xlu0 0
  %151 = vperm.xlu0 %150, %v117
  %v152 = vpop.permute.xlu0 %151
  %155 = vset.pattern.permute.xlu0 0
  %156 = vperm.xlu0 %155, %v118
  %v157 = vpop.permute.xlu0 %156
  %v183 = vunpack.c.l.b16 %v15
  %v184 = vunpack.c.h.b16 %v15
  %v185 = vunpack.c.l.b16 %v16
  %v186 = vunpack.c.h.b16 %v16
  %v187 = vunpack.c.l.b16 %v17
  %v188 = vunpack.c.l.b16 %v18
  %v189 = vunpack.c.h.b16 %v18
  %v190 = vunpack.c.l.b16 %v19
  %v191 = vunpack.c.h.b16 %v19
  %v192 = vunpack.c.l.b16 %v20
  %v193 = vunpack.c.l.b16 %v21
  %v194 = vunpack.c.h.b16 %v21
  %v195 = vunpack.c.l.b16 %v22
  %v196 = vunpack.c.h.b16 %v22
  %v197 = vunpack.c.l.b16 %v23
  %v198 = vunpack.c.l.b16 %v24
  %v199 = vunpack.c.h.b16 %v24
  %v200 = vunpack.c.l.b16 %v25
  %v201 = vunpack.c.h.b16 %v25
  %v202 = vunpack.c.l.b16 %v26
  %v203 = vunpack.c.l.b16 %v27
  %v204 = vunpack.c.h.b16 %v27
  %v205 = vunpack.c.l.b16 %v28
  %v206 = vunpack.c.h.b16 %v28
  %v207 = vunpack.c.l.b16 %v29
  %v208 = vunpack.c.l.b16 %v30
  %v209 = vunpack.c.h.b16 %v30
  %v210 = vunpack.c.l.b16 %v31
  %v211 = vunpack.c.h.b16 %v31
  %v212 = vunpack.c.l.b16 %v32
  %v213 = vunpack.c.l.b16 %v33
  %v214 = vunpack.c.h.b16 %v33
  %v215 = vunpack.c.l.b16 %v34
  %v216 = vunpack.c.h.b16 %v34
  %v217 = vunpack.c.l.b16 %v35
  %v218 = vunpack.c.l.b16 %v36
  %v219 = vunpack.c.h.b16 %v36
  %v220 = vunpack.c.l.b16 %v37
  %v221 = vunpack.c.h.b16 %v37
  %v222 = vunpack.c.l.b16 %v38
  %v223 = vpack.c.b16 %v188, %v183
  %v224 = vpack.c.b16 %v189, %v184
  %v225 = vpack.c.b16 %v190, %v185
  %v226 = vpack.c.b16 %v191, %v186
  %v227 = vpack.c.b16 %v192, %v187
  %v228 = vpack.c.b16 %v198, %v193
  %v229 = vpack.c.b16 %v199, %v194
  %v230 = vpack.c.b16 %v200, %v195
  %v231 = vpack.c.b16 %v201, %v196
  %v232 = vpack.c.b16 %v202, %v197
  %v233 = vpack.c.b16 %v208, %v203
  %v234 = vpack.c.b16 %v209, %v204
  %v235 = vpack.c.b16 %v210, %v205
  %v236 = vpack.c.b16 %v211, %v206
  %v237 = vpack.c.b16 %v212, %v207
  %v238 = vpack.c.b16 %v218, %v213
  %v239 = vpack.c.b16 %v219, %v214
  %v240 = vpack.c.b16 %v220, %v215
  %v241 = vpack.c.b16 %v221, %v216
  %v242 = vpack.c.b16 %v222, %v217
  %v331 = vunpack.c.l.b16 %v39
  %v332 = vunpack.c.l.b16 %v40
  %v333 = vunpack.c.l.b16 %v41
  %v334 = vunpack.c.l.b16 %v42
  %v335 = vunpack.c.l.b16 %v43
  %v336 = vunpack.c.l.b16 %v44
  %v337 = vunpack.c.l.b16 %v45
  %v338 = vunpack.c.l.b16 %v46
  %v339 = vunpack.c.l.b16 %v47
  %v340 = vunpack.c.l.b16 %v48
  %v341 = vunpack.c.l.b16 %v49
  %v342 = vunpack.c.l.b16 %v50
  %v343 = vunpack.c.l.b16 %v51
  %v344 = vunpack.c.l.b16 %v52
  %v345 = vunpack.c.l.b16 %v53
  %v346 = vunpack.c.l.b16 %v54
  %v347 = vunpack.c.l.b16 %v55
  %v348 = vunpack.c.l.b16 %v56
  %v349 = vunpack.c.l.b16 %v57
  %v350 = vunpack.c.l.b16 %v58
  %v351 = vunpack.c.l.b16 %v59
  %v352 = vunpack.c.l.b16 %v60
  %v353 = vunpack.c.l.b16 %v61
  %v354 = vunpack.c.l.b16 %v62
  %v355 = vunpack.c.l.b16 %v63
  %v356 = vunpack.c.l.b16 %v64
  %v357 = vunpack.c.l.b16 %v65
  %v358 = vunpack.c.l.b16 %v66
  %v359 = vunpack.c.l.b16 %v67
  %v360 = vunpack.c.l.b16 %v68
  %v361 = vunpack.c.l.b16 %v69
  %v362 = vunpack.c.l.b16 %v70
  %v363 = vunpack.c.l.b16 %v71
  %v364 = vunpack.c.l.b16 %v72
  %v365 = vunpack.c.l.b16 %v73
  %v366 = vunpack.c.l.b16 %v74
  %v367 = vunpack.c.l.b16 %v75
  %v368 = vunpack.c.l.b16 %v76
  %v369 = vunpack.c.l.b16 %v77
  %v370 = vunpack.c.l.b16 %v78
  %v371 = vunpack.c.l.b16 %v79
  %v372 = vunpack.c.l.b16 %v80
  %v373 = vunpack.c.l.b16 %v81
  %v374 = vunpack.c.l.b16 %v82
  %v375 = vunpack.c.l.b16 %v83
  %v376 = vunpack.c.l.b16 %v84
  %v377 = vunpack.c.l.b16 %v85
  %v378 = vunpack.c.l.b16 %v86
  %v379 = vunpack.c.l.b16 %v87
  %v380 = vunpack.c.l.b16 %v88
  %v381 = vunpack.c.l.b16 %v89
  %v382 = vunpack.c.l.b16 %v90
  %v383 = vunpack.c.l.b16 %v91
  %v384 = vunpack.c.l.b16 %v92
  %v385 = vunpack.c.l.b16 %v93
  %v386 = vunpack.c.l.b16 %v94
  %v387 = vunpack.c.l.b16 %v95
  %v388 = vunpack.c.l.b16 %v96
  %v389 = vunpack.c.l.b16 %v97
  %v390 = vunpack.c.l.b16 %v98
  %v391 = vunpack.c.l.b16 %v99
  %v392 = vunpack.c.l.b16 %v100
  %v393 = vunpack.c.l.b16 %v101
  %v394 = vunpack.c.l.b16 %v102
  %v395 = vunpack.c.l.b16 %v103
  %v396 = vunpack.c.l.b16 %v104
  %v397 = vunpack.c.l.b16 %v105
  %v398 = vunpack.c.l.b16 %v106
  %v399 = vunpack.c.l.b16 %v107
  %v400 = vunpack.c.l.b16 %v108
  %v401 = vunpack.c.l.b16 %v109
  %v402 = vunpack.c.l.b16 %v110
  %v403 = vpack.c.b16 %v332, %v331
  %v404 = vpack.c.b16 %v334, %v333
  %v405 = vpack.c.b16 %v336, %v335
  %v406 = vpack.c.b16 %v338, %v337
  %v407 = vpack.c.b16 %v340, %v339
  %v408 = vpack.c.b16 %v342, %v341
  %v409 = vpack.c.b16 %v344, %v343
  %v410 = vpack.c.b16 %v346, %v345
  %v411 = vpack.c.b16 %v348, %v347
  %v412 = vpack.c.b16 %v350, %v349
  %v413 = vpack.c.b16 %v352, %v351
  %v414 = vpack.c.b16 %v354, %v353
  %v415 = vpack.c.b16 %v356, %v355
  %v416 = vpack.c.b16 %v358, %v357
  %v417 = vpack.c.b16 %v360, %v359
  %v418 = vpack.c.b16 %v362, %v361
  %v419 = vpack.c.b16 %v364, %v363
  %v420 = vpack.c.b16 %v366, %v365
  %v421 = vpack.c.b16 %v368, %v367
  %v422 = vpack.c.b16 %v370, %v369
  %v423 = vpack.c.b16 %v372, %v371
  %v424 = vpack.c.b16 %v374, %v373
  %v425 = vpack.c.b16 %v376, %v375
  %v426 = vpack.c.b16 %v378, %v377
  %v427 = vpack.c.b16 %v380, %v379
  %v428 = vpack.c.b16 %v382, %v381
  %v429 = vpack.c.b16 %v384, %v383
  %v430 = vpack.c.b16 %v386, %v385
  %v431 = vpack.c.b16 %v388, %v387
  %v432 = vpack.c.b16 %v390, %v389
  %v433 = vpack.c.b16 %v392, %v391
  %v434 = vpack.c.b16 %v394, %v393
  %v435 = vpack.c.b16 %v396, %v395
  %v436 = vpack.c.b16 %v398, %v397
  %v437 = vpack.c.b16 %v400, %v399
  %v438 = vpack.c.b16 %v402, %v401
  %vm475 = vcmask 523264
  %v477 = vsel %vm475, %v227, 0
  %v480 = vsel %vm475, %v232, 0
  %v483 = vsel %vm475, %v237, 0
  %v486 = vsel %vm475, %v242, 0
  %488 = vmatprep.subr.bf16.mxu0 0
  %489 = vmatpush1.bf16.msra.mxu0 %v403
  %490 = vmatprep.subr.bf16.mxu0 0
  %491 = vmatpush1.bf16.msra.mxu0 %v404
  %492 = vmatprep.subr.bf16.mxu0 0
  %493 = vmatpush1.bf16.msra.mxu0 %v405
  %494 = vmatprep.subr.bf16.mxu0 0
  %495 = vmatpush1.bf16.msra.mxu0 %v406
  %496 = vmatprep.subr.bf16.mxu0 0
  %497 = vmatpush1.bf16.msra.mxu0 %v407
  %498 = vmatprep.subr.bf16.mxu0 0
  %499 = vmatpush1.bf16.msra.mxu0 %v408
  %500 = vmatprep.subr.bf16.mxu0 0
  %501 = vmatpush1.bf16.msra.mxu0 %v409
  %502 = vmatprep.subr.bf16.mxu0 0
  %503 = vmatpush1.bf16.msra.mxu0 %v410
  %504 = vmatprep.subr.bf16.mxu0 0
  %505 = vmatpush1.bf16.msra.mxu0 %v411
  %506 = vmatprep.subr.bf16.mxu0 0
  %507 = vmatpush1.bf16.msra.mxu0 %v412
  %508 = vmatprep.subr.bf16.mxu0 0
  %509 = vmatpush1.bf16.msra.mxu0 %v413
  %510 = vmatprep.subr.bf16.mxu0 0
  %511 = vmatpush1.bf16.msra.mxu0 %v414
  %512 = vmatprep.subr.bf16.mxu0 0
  %513 = vmatpush1.bf16.msra.mxu0 %v415
  %514 = vmatprep.subr.bf16.mxu0 0
  %515 = vmatpush1.bf16.msra.mxu0 %v416
  %516 = vmatprep.subr.bf16.mxu0 0
  %517 = vmatpush1.bf16.msra.mxu0 %v417
  %518 = vmatprep.subr.bf16.mxu0 0
  %519 = vmatpush1.bf16.msra.mxu0 %v418
  %520 = vmatprep.mubr.bf16.mxu0 %v224
  %521 = vmatmul.mubr.bf16.gmra.mrb[0].mxu0 %v223
  %v522 = vpop.f32.mrb[0].mxu0
  %v523 = vadd.f32 %v122, %v522
  %v524 = vpop.f32.mrb[0].mxu0
  %v525 = vpop.f32.mrb[0].mxu0
  %v526 = vadd.f32 %v127, %v525
  %v527 = vpop.f32.mrb[0].mxu0
  %528 = vmatprep.mubr.bf16.mxu0 %v229
  %529 = vmatmul.mubr.bf16.gmra.mrb[0].mxu0 %v228
  %v530 = vpop.f32.mrb[0].mxu0
  %v531 = vadd.f32 %v132, %v530
  %v532 = vpop.f32.mrb[0].mxu0
  %v533 = vpop.f32.mrb[0].mxu0
  %v534 = vadd.f32 %v137, %v533
  %v535 = vpop.f32.mrb[0].mxu0
  %536 = vmatprep.mubr.bf16.mxu0 %v234
  %537 = vmatmul.mubr.bf16.gmra.mrb[0].mxu0 %v233
  %v538 = vpop.f32.mrb[0].mxu0
  %v539 = vadd.f32 %v142, %v538
  %v540 = vpop.f32.mrb[0].mxu0
  %v541 = vpop.f32.mrb[0].mxu0
  %v542 = vadd.f32 %v147, %v541
  %v543 = vpop.f32.mrb[0].mxu0
  %544 = vmatprep.mubr.bf16.mxu0 %v239
  %545 = vmatmul.mubr.bf16.gmra.mrb[0].mxu0 %v238
  %v546 = vpop.f32.mrb[0].mxu0
  %v547 = vadd.f32 %v152, %v546
  %v548 = vpop.f32.mrb[0].mxu0
  %v549 = vpop.f32.mrb[0].mxu0
  %v550 = vadd.f32 %v157, %v549
  %v551 = vpop.f32.mrb[0].mxu0
  %552 = vdwg.mxu0
  %553 = vmatprep.subr.bf16.mxu0 0
  %554 = vmatpush1.bf16.msra.mxu0 %v419
  %555 = vmatprep.subr.bf16.mxu0 0
  %556 = vmatpush1.bf16.msra.mxu0 %v420
  %557 = vmatprep.subr.bf16.mxu0 0
  %558 = vmatpush1.bf16.msra.mxu0 %v421
  %559 = vmatprep.subr.bf16.mxu0 0
  %560 = vmatpush1.bf16.msra.mxu0 %v422
  %561 = vmatprep.subr.bf16.mxu0 0
  %562 = vmatpush1.bf16.msra.mxu0 %v423
  %563 = vmatprep.subr.bf16.mxu0 0
  %564 = vmatpush1.bf16.msra.mxu0 %v424
  %565 = vmatprep.subr.bf16.mxu0 0
  %566 = vmatpush1.bf16.msra.mxu0 %v425
  %567 = vmatprep.subr.bf16.mxu0 0
  %568 = vmatpush1.bf16.msra.mxu0 %v426
  %569 = vmatprep.subr.bf16.mxu0 0
  %570 = vmatpush1.bf16.msra.mxu0 %v427
  %571 = vmatprep.subr.bf16.mxu0 0
  %572 = vmatpush1.bf16.msra.mxu0 %v428
  %573 = vmatprep.subr.bf16.mxu0 0
  %574 = vmatpush1.bf16.msra.mxu0 %v429
  %575 = vmatprep.subr.bf16.mxu0 0
  %576 = vmatpush1.bf16.msra.mxu0 %v430
  %577 = vmatprep.subr.bf16.mxu0 0
  %578 = vmatpush1.bf16.msra.mxu0 %v431
  %579 = vmatprep.subr.bf16.mxu0 0
  %580 = vmatpush1.bf16.msra.mxu0 %v432
  %581 = vmatprep.subr.bf16.mxu0 0
  %582 = vmatpush1.bf16.msra.mxu0 %v433
  %583 = vmatprep.subr.bf16.mxu0 0
  %584 = vmatpush1.bf16.msra.mxu0 %v434
  %585 = vmatprep.mubr.bf16.mxu0 %v226
  %586 = vmatmul.mubr.bf16.gmra.mrb[0].mxu0 %v225
  %v587 = vpop.f32.mrb[0].mxu0
  %v588 = vadd.f32 %v523, %v587
  %v589 = vpop.f32.mrb[0].mxu0
  %v590 = vpop.f32.mrb[0].mxu0
  %v591 = vadd.f32 %v526, %v590
  %v592 = vpop.f32.mrb[0].mxu0
  %593 = vmatprep.mubr.bf16.mxu0 %v231
  %594 = vmatmul.mubr.bf16.gmra.mrb[0].mxu0 %v230
  %v595 = vpop.f32.mrb[0].mxu0
  %v596 = vadd.f32 %v531, %v595
  %v597 = vpop.f32.mrb[0].mxu0
  %v598 = vpop.f32.mrb[0].mxu0
  %v599 = vadd.f32 %v534, %v598
  %v600 = vpop.f32.mrb[0].mxu0
  %601 = vmatprep.mubr.bf16.mxu0 %v236
  %602 = vmatmul.mubr.bf16.gmra.mrb[0].mxu0 %v235
  %v603 = vpop.f32.mrb[0].mxu0
  %v604 = vadd.f32 %v539, %v603
  %v605 = vpop.f32.mrb[0].mxu0
  %v606 = vpop.f32.mrb[0].mxu0
  %v607 = vadd.f32 %v542, %v606
  %v608 = vpop.f32.mrb[0].mxu0
  %609 = vmatprep.mubr.bf16.mxu0 %v241
  %610 = vmatmul.mubr.bf16.gmra.mrb[0].mxu0 %v240
  %v611 = vpop.f32.mrb[0].mxu0
  %v612 = vadd.f32 %v547, %v611
  %v613 = vpop.f32.mrb[0].mxu0
  %v614 = vpop.f32.mrb[0].mxu0
  %v615 = vadd.f32 %v550, %v614
  %v616 = vpop.f32.mrb[0].mxu0
  %617 = vdwg.mxu0
  %618 = vmatprep.subr.bf16.mxu0 0
  %619 = vmatpush1.bf16.msra.mxu0 %v435
  %620 = vmatprep.subr.bf16.mxu0 0
  %621 = vmatpush1.bf16.msra.mxu0 %v436
  %622 = vmatprep.subr.bf16.mxu0 0
  %623 = vmatpush1.bf16.msra.mxu0 %v437
  %624 = vmatprep.subr.bf16.mxu0 0
  %625 = vmatpush1.bf16.msra.mxu0 %v438
  %626 = vmatprep.subr.bf16.mxu0 0
  %627 = vmatpush1.bf16.msra.mxu0 0
  %628 = vmatprep.subr.bf16.mxu0 0
  %629 = vmatpush1.bf16.msra.mxu0 0
  %630 = vmatprep.subr.bf16.mxu0 0
  %631 = vmatpush1.bf16.msra.mxu0 0
  %632 = vmatprep.subr.bf16.mxu0 0
  %633 = vmatpush1.bf16.msra.mxu0 0
  %634 = vmatprep.subr.bf16.mxu0 0
  %635 = vmatpush1.bf16.msra.mxu0 0
  %636 = vmatprep.subr.bf16.mxu0 0
  %637 = vmatpush1.bf16.msra.mxu0 0
  %638 = vmatprep.subr.bf16.mxu0 0
  %639 = vmatpush1.bf16.msra.mxu0 0
  %640 = vmatprep.subr.bf16.mxu0 0
  %641 = vmatpush1.bf16.msra.mxu0 0
  %642 = vmatprep.subr.bf16.mxu0 0
  %643 = vmatpush1.bf16.msra.mxu0 0
  %644 = vmatprep.subr.bf16.mxu0 0
  %645 = vmatpush1.bf16.msra.mxu0 0
  %646 = vmatprep.subr.bf16.mxu0 0
  %647 = vmatpush1.bf16.msra.mxu0 0
  %648 = vmatprep.subr.bf16.mxu0 0
  %649 = vmatpush1.bf16.msra.mxu0 0
  %650 = vmatprep.mubr.bf16.mxu0 0
  %651 = vmatmul.mubr.bf16.gmra.mrb[0].mxu0 %v477
  %v652 = vpop.f32.mrb[0].mxu0
  %v653 = vadd.f32 %v588, %v652
  %v654 = vpop.f32.mrb[0].mxu0
  %v655 = vpop.f32.mrb[0].mxu0
  %v656 = vadd.f32 %v591, %v655
  %v657 = vpop.f32.mrb[0].mxu0
  %658 = vmatprep.mubr.bf16.mxu0 0
  %659 = vmatmul.mubr.bf16.gmra.mrb[0].mxu0 %v480
  %v660 = vpop.f32.mrb[0].mxu0
  %v661 = vadd.f32 %v596, %v660
  %v662 = vpop.f32.mrb[0].mxu0
  %v663 = vpop.f32.mrb[0].mxu0
  %v664 = vadd.f32 %v599, %v663
  %v665 = vpop.f32.mrb[0].mxu0
  %666 = vmatprep.mubr.bf16.mxu0 0
  %667 = vmatmul.mubr.bf16.gmra.mrb[0].mxu0 %v483
  %v668 = vpop.f32.mrb[0].mxu0
  %v669 = vadd.f32 %v604, %v668
  %v670 = vpop.f32.mrb[0].mxu0
  %v671 = vpop.f32.mrb[0].mxu0
  %v672 = vadd.f32 %v607, %v671
  %v673 = vpop.f32.mrb[0].mxu0
  %674 = vmatprep.mubr.bf16.mxu0 0
  %675 = vmatmul.mubr.bf16.gmra.mrb[0].mxu0 %v486
  %v676 = vpop.f32.mrb[0].mxu0
  %v677 = vadd.f32 %v612, %v676
  %v678 = vpop.f32.mrb[0].mxu0
  %v679 = vpop.f32.mrb[0].mxu0
  %v680 = vadd.f32 %v615, %v679
  %v681 = vpop.f32.mrb[0].mxu0
  %682 = vdwg.mxu0
  %v683 = vmax.f32 %v653, 0.0
  %v684 = vmax.f32 %v656, 0.0
  %v685 = vmax.f32 %v661, 0.0
  %v686 = vmax.f32 %v664, 0.0
  %v687 = vmax.f32 %v669, 0.0
  %v688 = vmax.f32 %v672, 0.0
  %v689 = vmax.f32 %v677, 0.0
  %v690 = vmax.f32 %v680, 0.0
  %v691 = vpack.c.bf16 %v684, %v683
  %v692 = vpack.c.bf16 %v686, %v685
  %v693 = vpack.c.bf16 %v688, %v687
  %v694 = vpack.c.bf16 %v690, %v689
  %v699 = vunpack.c.l.b16 %v691
  %v700 = vunpack.c.h.b16 %v691
  %v701 = vunpack.c.l.b16 %v692
  %v702 = vunpack.c.h.b16 %v692
  %v703 = vunpack.c.l.b16 %v693
  %v704 = vunpack.c.h.b16 %v693
  %v705 = vunpack.c.l.b16 %v694
  %v706 = vunpack.c.h.b16 %v694
  %v707 = vpack.c.b16 %v699, %v699
  %v708 = vpack.c.b16 %v700, %v700
  %v709 = vpack.c.b16 %v701, %v701
  %v710 = vpack.c.b16 %v702, %v702
  %v711 = vpack.c.b16 %v703, %v703
  %v712 = vpack.c.b16 %v704, %v704
  %v713 = vpack.c.b16 %v705, %v705
  %v714 = vpack.c.b16 %v706, %v706
  %723 = vst [vmem:[%s3] sm:$0xf] %v707
  %724 = vst [vmem:[%s3 + $0x4] sm:$0xf] %v708
  %725 = vst [vmem:[%s3 + $0x8] sm:$0xf] %v709
  %726 = vst [vmem:[%s3 + $0xc] sm:$0xf] %v710
  %727 = vst [vmem:[%s3 + $0x10] sm:$0xf] %v711
  %728 = vst [vmem:[%s3 + $0x14] sm:$0xf] %v712
  %729 = vst [vmem:[%s3 + $0x18] sm:$0xf] %v713
  %730 = vst [vmem:[%s3 + $0x1c] sm:$0xf] %v714
  // Predicated region
  $region14: #{qnetwork_forward.6} parent=0 // pred_check
    _
  $region15: #{qnetwork_forward.6} parent=0 // pred_check_branch
    %732 = sbr.rel (0) target = $region17
  $region16: #{qnetwork_forward.6} parent=0 // pred_region
    _
  $region17: #{qnetwork_forward.6} parent=0 // pred_fallthru
    _
  // Predicated region
  $region18: #{qnetwork_forward.6} parent=0 // pred_check
    _
  $region19: #{qnetwork_forward.6} parent=0 // pred_check_branch
    %734 = sbr.rel (0) target = $region21
  $region20: #{qnetwork_forward.6} parent=0 // pred_region
    _
  $region21: #{qnetwork_forward.6} parent=0 // pred_fallthru
    _

// kernel: qnetwork_forward.7
$region0: #{qnetwork_forward.7}
  #allocation0 [shape = 'u32[]', space=smem, size = 0x4, offset = 0x4, fixed_abs, tag = 'smem constant byte address 0x4 - core index']
  #allocation1 [shape = 'u32[144,128]{1,0:T(1,128)}', space=vmem, size = 0x12000, scoped, tag = 'internal scratch']
  %s0 = inlined_call_operand.vmem [shape: bf16[8,3136], index: 0, kind: input, shape index: {}]
  %s1 = inlined_call_operand.vmem [shape: bf16[3136,512], index: 1, kind: input, shape index: {}]
  %s2 = inlined_call_operand.vmem [shape: f32[1,512], index: 2, kind: input, shape index: {}]
  %s3 = inlined_call_operand.vmem [shape: bf16[512,128], index: 3, kind: input, shape index: {}]
  %s4 = inlined_call_operand.vmem [shape: f32[1,128], index: 4, kind: input, shape index: {}]
  %s5 = inlined_call_operand.vmem [shape: f32[8,128], index: 5, kind: output, shape index: {}]
  %s6 = sld [smem:[#allocation0]]
  $region30: #{qnetwork_forward.7} parent=0
    _
  %s8 = ssub.s32 1, %s6
  %s9 = scalar_select 0, %s8, %s6
  // Predicated region
  $region2: #{qnetwork_forward.7} parent=0 // pred_check
    _
  $region3: #{qnetwork_forward.7} parent=0 // pred_check_branch
    %11 = sbr.rel (0) target = $region5
  $region4: #{qnetwork_forward.7} parent=0 // pred_region
    _
  $region5: #{qnetwork_forward.7} parent=0 // pred_fallthru
    _
  // Predicated region
  $region6: #{qnetwork_forward.7} parent=0 // pred_check
    _
  $region7: #{qnetwork_forward.7} parent=0 // pred_check_branch
    %13 = sbr.rel (0) target = $region9
  $region8: #{qnetwork_forward.7} parent=0 // pred_region
    _
  $region9: #{qnetwork_forward.7} parent=0 // pred_fallthru
    _
  // Predicated region
  $region10: #{qnetwork_forward.7} parent=0 // pred_check
    _
  $region11: #{qnetwork_forward.7} parent=0 // pred_check_branch
    %15 = sbr.rel (0) target = $region13
  $region12: #{qnetwork_forward.7} parent=0 // pred_region
    _
  $region13: #{qnetwork_forward.7} parent=0 // pred_fallthru
    _
  // Predicated region
  $region14: #{qnetwork_forward.7} parent=0 // pred_check
    _
  $region15: #{qnetwork_forward.7} parent=0 // pred_check_branch
    %17 = sbr.rel (0) target = $region17
  $region16: #{qnetwork_forward.7} parent=0 // pred_region
    _
  $region17: #{qnetwork_forward.7} parent=0 // pred_fallthru
    _
  // Predicated region
  $region18: #{qnetwork_forward.7} parent=0 // pred_check
    _
  $region19: #{qnetwork_forward.7} parent=0 // pred_check_branch
    %19 = sbr.rel (0) target = $region21
  $region20: #{qnetwork_forward.7} parent=0 // pred_region
    _
  $region21: #{qnetwork_forward.7} parent=0 // pred_fallthru
    _
  %v21 = vld [vmem:[%s0] sm:$0xff]
  %v22 = vld [vmem:[%s0 + $0x8] sm:$0xff]
  %v23 = vld [vmem:[%s0 + $0x10] sm:$0xff]
  %v24 = vld [vmem:[%s0 + $0x18] sm:$0xff]
  %v25 = vld [vmem:[%s0 + $0x20] sm:$0xff]
  %v26 = vld [vmem:[%s0 + $0x28] sm:$0xff]
  %v27 = vld [vmem:[%s0 + $0x30] sm:$0xff]
  %v28 = vld [vmem:[%s0 + $0x38] sm:$0xff]
  %v29 = vld [vmem:[%s0 + $0x40] sm:$0xff]
  %v30 = vld [vmem:[%s0 + $0x48] sm:$0xff]
  %v31 = vld [vmem:[%s0 + $0x50] sm:$0xff]
  %v32 = vld [vmem:[%s0 + $0x58] sm:$0xff]
  %v33 = vld [vmem:[%s0 + $0x60] sm:$0xf]
  %v34 = vld [vmem:[%s1] sm:$0xff]
  %v35 = vld [vmem:[%s1 + $0x8] sm:$0xff]
  %v36 = vld [vmem:[%s1 + $0x10] sm:$0xff]
  %v37 = vld [vmem:[%s1 + $0x18] sm:$0xff]
  %v38 = vld [vmem:[%s1 + $0x20] sm:$0xff]
  %v39 = vld [vmem:[%s1 + $0x28] sm:$0xff]
  %v40 = vld [vmem:[%s1 + $0x30] sm:$0xff]
  %v41 = vld [vmem:[%s1 + $0x38] sm:$0xff]
  %v42 = vld [vmem:[%s1 + $0x40] sm:$0xff]
  %v43 = vld [vmem:[%s1 + $0x48] sm:$0xff]
  %v44 = vld [vmem:[%s1 + $0x50] sm:$0xff]
  %v45 = vld [vmem:[%s1 + $0x58] sm:$0xff]
  %v46 = vld [vmem:[%s1 + $0x60] sm:$0xff]
  %v47 = vld [vmem:[%s1 + $0x68] sm:$0xff]
  %v48 = vld [vmem:[%s1 + $0x70] sm:$0xff]
  %v49 = vld [vmem:[%s1 + $0x78] sm:$0xff]
  %v50 = vld [vmem:[%s1 + $0x80] sm:$0xff]
  %v51 = vld [vmem:[%s1 + $0x88] sm:$0xff]
  %v52 = vld [vmem:[%s1 + $0x90] sm:$0xff]
  %v53 = vld [vmem:[%s1 + $0x98] sm:$0xff]
  %v54 = vld [vmem:[%s1 + $0xa0] sm:$0xff]
  %v55 = vld [vmem:[%s1 + $0xa8] sm:$0xff]
  %v56 = vld [vmem:[%s1 + $0xb0] sm:$0xff]
  %v57 = vld [vmem:[%s1 + $0xb8] sm:$0xff]
  %v58 = vld [vmem:[%s1 + $0xc0] sm:$0xff]
  %v59 = vld [vmem:[%s1 + $0xc8] sm:$0xff]
  %v60 = vld [vmem:[%s1 + $0xd0] sm:$0xff]
  %v61 = vld [vmem:[%s1 + $0xd8] sm:$0xff]
  %v62 = vld [vmem:[%s1 + $0xe0] sm:$0xff]
  %v63 = vld [vmem:[%s1 + $0xe8] sm:$0xff]
  %v64 = vld [vmem:[%s1 + $0xf0] sm:$0xff]
  %v65 = vld [vmem:[%s1 + $0xf8] sm:$0xff]
  %v66 = vld [vmem:[%s1 + $0x100] sm:$0xff]
  %v67 = vld [vmem:[%s1 + $0x108] sm:$0xff]
  %v68 = vld [vmem:[%s1 + $0x110] sm:$0xff]
  %v69 = vld [vmem:[%s1 + $0x118] sm:$0xff]
  %v70 = vld [vmem:[%s1 + $0x120] sm:$0xff]
  %v71 = vld [vmem:[%s1 + $0x128] sm:$0xff]
  %v72 = vld [vmem:[%s1 + $0x130] sm:$0xff]
  %v73 = vld [vmem:[%s1 + $0x138] sm:$0xff]
  %v74 = vld [vmem:[%s1 + $0x140] sm:$0xff]
  %v75 = vld [vmem:[%s1 + $0x148] sm:$0xff]
  %v76 = vld [vmem:[%s1 + $0x150] sm:$0xff]
  %v77 = vld [vmem:[%s1 + $0x158] sm:$0xff]
  %v78 = vld [vmem:[%s1 + $0x160] sm:$0xff]
  %v79 = vld [vmem:[%s1 + $0x168] sm:$0xff]
  %v80 = vld [vmem:[%s1 + $0x170] sm:$0xff]
  %v81 = vld [vmem:[%s1 + $0x178] sm:$0xff]
  %v82 = vld [vmem:[%s1 + $0x180] sm:$0xff]
  %v83 = vld [vmem:[%s1 + $0x188] sm:$0xff]
  %v84 = vld [vmem:[%s1 + $0x190] sm:$0xff]
  %v85 = vld [vmem:[%s1 + $0x198] sm:$0xff]
  %v86 = vld [vmem:[%s1 + $0x1a0] sm:$0xff]
  %v87 = vld [vmem:[%s1 + $0x1a8] sm:$0xff]
  %v88 = vld [vmem:[%s1 + $0x1b0] sm:$0xff]
  %v89 = vld [vmem:[%s1 + $0x1b8] sm:$0xff]
  %v90 = vld [vmem:[%s1 + $0x1c0] sm:$0xff]
  %v91 = vld [vmem:[%s1 + $0x1c8] sm:$0xff]
  %v92 = vld [vmem:[%s1 + $0x1d0] sm:$0xff]
  %v93 = vld [vmem:[%s1 + $0x1d8] sm:$0xff]
  %v94 = vld [vmem:[%s1 + $0x1e0] sm:$0xff]
  %v95 = vld [vmem:[%s1 + $0x1e8] sm:$0xff]
  %v96 = vld [vmem:[%s1 + $0x1f0] sm:$0xff]
  %v97 = vld [vmem:[%s1 + $0x1f8] sm:$0xff]
  %v98 = vld [vmem:[%s1 + $0x200] sm:$0xff]
  %v99 = vld [vmem:[%s1 + $0x208] sm:$0xff]
  %v100 = vld [vmem:[%s1 + $0x210] sm:$0xff]
  %v101 = vld [vmem:[%s1 + $0x218] sm:$0xff]
  %v102 = vld [vmem:[%s1 + $0x220] sm:$0xff]
  %v103 = vld [vmem:[%s1 + $0x228] sm:$0xff]
  %v104 = vld [vmem:[%s1 + $0x230] sm:$0xff]
  %v105 = vld [vmem:[%s1 + $0x238] sm:$0xff]
  %v106 = vld [vmem:[%s1 + $0x240] sm:$0xff]
  %v107 = vld [vmem:[%s1 + $0x248] sm:$0xff]
  %v108 = vld [vmem:[%s1 + $0x250] sm:$0xff]
  %v109 = vld [vmem:[%s1 + $0x258] sm:$0xff]
  %v110 = vld [vmem:[%s1 + $0x260] sm:$0xff]
  %v111 = vld [vmem:[%s1 + $0x268] sm:$0xff]
  %v112 = vld [vmem:[%s1 + $0x270] sm:$0xff]
  %v113 = vld [vmem:[%s1 + $0x278] sm:$0xff]
  %v114 = vld [vmem:[%s1 + $0x280] sm:$0xff]
  %v115 = vld [vmem:[%s1 + $0x288] sm:$0xff]
  %v116 = vld [vmem:[%s1 + $0x290] sm:$0xff]
  %v117 = vld [vmem:[%s1 + $0x298] sm:$0xff]
  %v118 = vld [vmem:[%s1 + $0x2a0] sm:$0xff]
  %v119 = vld [vmem:[%s1 + $0x2a8] sm:$0xff]
  %v120 = vld [vmem:[%s1 + $0x2b0] sm:$0xff]
  %v121 = vld [vmem:[%s1 + $0x2b8] sm:$0xff]
  %v122 = vld [vmem:[%s1 + $0x2c0] sm:$0xff]
  %v123 = vld [vmem:[%s1 + $0x2c8] sm:$0xff]
  %v124 = vld [vmem:[%s1 + $0x2d0] sm:$0xff]
  %v125 = vld [vmem:[%s1 + $0x2d8] sm:$0xff]
  %v126 = vld [vmem:[%s1 + $0x2e0] sm:$0xff]
  %v127 = vld [vmem:[%s1 + $0x2e8] sm:$0xff]
  %v128 = vld [vmem:[%s1 + $0x2f0] sm:$0xff]
  %v129 = vld [vmem:[%s1 + $0x2f8] sm:$0xff]
  %v130 = vld [vmem:[%s1 + $0x300] sm:$0xff]
  %v131 = vld [vmem:[%s1 + $0x308] sm:$0xff]
  %v132 = vld [vmem:[%s1 + $0x310] sm:$0xff]
  %v133 = vld [vmem:[%s1 + $0x318] sm:$0xff]
  %v134 = vld [vmem:[%s1 + $0x320] sm:$0xff]
  %v135 = vld [vmem:[%s1 + $0x328] sm:$0xff]
  %v136 = vld [vmem:[%s1 + $0x330] sm:$0xff]
  %v137 = vld [vmem:[%s1 + $0x338] sm:$0xff]
  %v138 = vld [vmem:[%s1 + $0x340] sm:$0xff]
  %v139 = vld [vmem:[%s1 + $0x348] sm:$0xff]
  %v140 = vld [vmem:[%s1 + $0x350] sm:$0xff]
  %v141 = vld [vmem:[%s1 + $0x358] sm:$0xff]
  %v142 = vld [vmem:[%s1 + $0x360] sm:$0xff]
  %v143 = vld [vmem:[%s1 + $0x368] sm:$0xff]
  %v144 = vld [vmem:[%s1 + $0x370] sm:$0xff]
  %v145 = vld [vmem:[%s1 + $0x378] sm:$0xff]
  %v146 = vld [vmem:[%s1 + $0x380] sm:$0xff]
  %v147 = vld [vmem:[%s1 + $0x388] sm:$0xff]
  %v148 = vld [vmem:[%s1 + $0x390] sm:$0xff]
  %v149 = vld [vmem:[%s1 + $0x398] sm:$0xff]
  %v150 = vld [vmem:[%s1 + $0x3a0] sm:$0xff]
  %v151 = vld [vmem:[%s1 + $0x3a8] sm:$0xff]
  %v152 = vld [vmem:[%s1 + $0x3b0] sm:$0xff]
  %v153 = vld [vmem:[%s1 + $0x3b8] sm:$0xff]
  %v154 = vld [vmem:[%s1 + $0x3c0] sm:$0xff]
  %v155 = vld [vmem:[%s1 + $0x3c8] sm:$0xff]
  %v156 = vld [vmem:[%s1 + $0x3d0] sm:$0xff]
  %v157 = vld [vmem:[%s1 + $0x3d8] sm:$0xff]
  %v158 = vld [vmem:[%s1 + $0x3e0] sm:$0xff]
  %v159 = vld [vmem:[%s1 + $0x3e8] sm:$0xff]
  %v160 = vld [vmem:[%s1 + $0x3f0] sm:$0xff]
  %v161 = vld [vmem:[%s1 + $0x3f8] sm:$0xff]
  %v162 = vld [vmem:[%s1 + $0x400] sm:$0xff]
  %v163 = vld [vmem:[%s1 + $0x408] sm:$0xff]
  %v164 = vld [vmem:[%s1 + $0x410] sm:$0xff]
  %v165 = vld [vmem:[%s1 + $0x418] sm:$0xff]
  %v166 = vld [vmem:[%s1 + $0x420] sm:$0xff]
  %v167 = vld [vmem:[%s1 + $0x428] sm:$0xff]
  %v168 = vld [vmem:[%s1 + $0x430] sm:$0xff]
  %v169 = vld [vmem:[%s1 + $0x438] sm:$0xff]
  %v170 = vld [vmem:[%s1 + $0x440] sm:$0xff]
  %v171 = vld [vmem:[%s1 + $0x448] sm:$0xff]
  %v172 = vld [vmem:[%s1 + $0x450] sm:$0xff]
  %v173 = vld [vmem:[%s1 + $0x458] sm:$0xff]
  %v174 = vld [vmem:[%s1 + $0x460] sm:$0xff]
  %v175 = vld [vmem:[%s1 + $0x468] sm:$0xff]
  %v176 = vld [vmem:[%s1 + $0x470] sm:$0xff]
  %v177 = vld [vmem:[%s1 + $0x478] sm:$0xff]
  %v178 = vld [vmem:[%s1 + $0x480] sm:$0xff]
  %v179 = vld [vmem:[%s1 + $0x488] sm:$0xff]
  %v180 = vld [vmem:[%s1 + $0x490] sm:$0xff]
  %v181 = vld [vmem:[%s1 + $0x498] sm:$0xff]
  %v182 = vld [vmem:[%s1 + $0x4a0] sm:$0xff]
  %v183 = vld [vmem:[%s1 + $0x4a8] sm:$0xff]
  %v184 = vld [vmem:[%s1 + $0x4b0] sm:$0xff]
  %v185 = vld [vmem:[%s1 + $0x4b8] sm:$0xff]
  %v186 = vld [vmem:[%s1 + $0x4c0] sm:$0xff]
  %v187 = vld [vmem:[%s1 + $0x4c8] sm:$0xff]
  %v188 = vld [vmem:[%s1 + $0x4d0] sm:$0xff]
  %v189 = vld [vmem:[%s1 + $0x4d8] sm:$0xff]
  %v190 = vld [vmem:[%s1 + $0x4e0] sm:$0xff]
  %v191 = vld [vmem:[%s1 + $0x4e8] sm:$0xff]
  %v192 = vld [vmem:[%s1 + $0x4f0] sm:$0xff]
  %v193 = vld [vmem:[%s1 + $0x4f8] sm:$0xff]
  %v194 = vld [vmem:[%s1 + $0x500] sm:$0xff]
  %v195 = vld [vmem:[%s1 + $0x508] sm:$0xff]
  %v196 = vld [vmem:[%s1 + $0x510] sm:$0xff]
  %v197 = vld [vmem:[%s1 + $0x518] sm:$0xff]
  %v198 = vld [vmem:[%s1 + $0x520] sm:$0xff]
  %v199 = vld [vmem:[%s1 + $0x528] sm:$0xff]
  %v200 = vld [vmem:[%s1 + $0x530] sm:$0xff]
  %v201 = vld [vmem:[%s1 + $0x538] sm:$0xff]
  %v202 = vld [vmem:[%s1 + $0x540] sm:$0xff]
  %v203 = vld [vmem:[%s1 + $0x548] sm:$0xff]
  %v204 = vld [vmem:[%s1 + $0x550] sm:$0xff]
  %v205 = vld [vmem:[%s1 + $0x558] sm:$0xff]
  %v206 = vld [vmem:[%s1 + $0x560] sm:$0xff]
  %v207 = vld [vmem:[%s1 + $0x568] sm:$0xff]
  %v208 = vld [vmem:[%s1 + $0x570] sm:$0xff]
  %v209 = vld [vmem:[%s1 + $0x578] sm:$0xff]
  %v210 = vld [vmem:[%s1 + $0x580] sm:$0xff]
  %v211 = vld [vmem:[%s1 + $0x588] sm:$0xff]
  %v212 = vld [vmem:[%s1 + $0x590] sm:$0xff]
  %v213 = vld [vmem:[%s1 + $0x598] sm:$0xff]
  %v214 = vld [vmem:[%s1 + $0x5a0] sm:$0xff]
  %v215 = vld [vmem:[%s1 + $0x5a8] sm:$0xff]
  %v216 = vld [vmem:[%s1 + $0x5b0] sm:$0xff]
  %v217 = vld [vmem:[%s1 + $0x5b8] sm:$0xff]
  %v218 = vld [vmem:[%s1 + $0x5c0] sm:$0xff]
  %v219 = vld [vmem:[%s1 + $0x5c8] sm:$0xff]
  %v220 = vld [vmem:[%s1 + $0x5d0] sm:$0xff]
  %v221 = vld [vmem:[%s1 + $0x5d8] sm:$0xff]
  %v222 = vld [vmem:[%s1 + $0x5e0] sm:$0xff]
  %v223 = vld [vmem:[%s1 + $0x5e8] sm:$0xff]
  %v224 = vld [vmem:[%s1 + $0x5f0] sm:$0xff]
  %v225 = vld [vmem:[%s1 + $0x5f8] sm:$0xff]
  %v226 = vld [vmem:[%s1 + $0x600] sm:$0xff]
  %v227 = vld [vmem:[%s1 + $0x608] sm:$0xff]
  %v228 = vld [vmem:[%s1 + $0x610] sm:$0xff]
  %v229 = vld [vmem:[%s1 + $0x618] sm:$0xff]
  %v230 = vld [vmem:[%s1 + $0x620] sm:$0xff]
  %v231 = vld [vmem:[%s1 + $0x628] sm:$0xff]
  %v232 = vld [vmem:[%s1 + $0x630] sm:$0xff]
  %v233 = vld [vmem:[%s1 + $0x638] sm:$0xff]
  %v234 = vld [vmem:[%s1 + $0x640] sm:$0xff]
  %v235 = vld [vmem:[%s1 + $0x648] sm:$0xff]
  %v236 = vld [vmem:[%s1 + $0x650] sm:$0xff]
  %v237 = vld [vmem:[%s1 + $0x658] sm:$0xff]
  %v238 = vld [vmem:[%s1 + $0x660] sm:$0xff]
  %v239 = vld [vmem:[%s1 + $0x668] sm:$0xff]
  %v240 = vld [vmem:[%s1 + $0x670] sm:$0xff]
  %v241 = vld [vmem:[%s1 + $0x678] sm:$0xff]
  %v242 = vld [vmem:[%s1 + $0x680] sm:$0xff]
  %v243 = vld [vmem:[%s1 + $0x688] sm:$0xff]
  %v244 = vld [vmem:[%s1 + $0x690] sm:$0xff]
  %v245 = vld [vmem:[%s1 + $0x698] sm:$0xff]
  %v246 = vld [vmem:[%s1 + $0x6a0] sm:$0xff]
  %v247 = vld [vmem:[%s1 + $0x6a8] sm:$0xff]
  %v248 = vld [vmem:[%s1 + $0x6b0] sm:$0xff]
  %v249 = vld [vmem:[%s1 + $0x6b8] sm:$0xff]
  %v250 = vld [vmem:[%s1 + $0x6c0] sm:$0xff]
  %v251 = vld [vmem:[%s1 + $0x6c8] sm:$0xff]
  %v252 = vld [vmem:[%s1 + $0x6d0] sm:$0xff]
  %v253 = vld [vmem:[%s1 + $0x6d8] sm:$0xff]
  %v254 = vld [vmem:[%s1 + $0x6e0] sm:$0xff]
  %v255 = vld [vmem:[%s1 + $0x6e8] sm:$0xff]
  %v256 = vld [vmem:[%s1 + $0x6f0] sm:$0xff]
  %v257 = vld [vmem:[%s1 + $0x6f8] sm:$0xff]
  %v258 = vld [vmem:[%s1 + $0x700] sm:$0xff]
  %v259 = vld [vmem:[%s1 + $0x708] sm:$0xff]
  %v260 = vld [vmem:[%s1 + $0x710] sm:$0xff]
  %v261 = vld [vmem:[%s1 + $0x718] sm:$0xff]
  %v262 = vld [vmem:[%s1 + $0x720] sm:$0xff]
  %v263 = vld [vmem:[%s1 + $0x728] sm:$0xff]
  %v264 = vld [vmem:[%s1 + $0x730] sm:$0xff]
  %v265 = vld [vmem:[%s1 + $0x738] sm:$0xff]
  %v266 = vld [vmem:[%s1 + $0x740] sm:$0xff]
  %v267 = vld [vmem:[%s1 + $0x748] sm:$0xff]
  %v268 = vld [vmem:[%s1 + $0x750] sm:$0xff]
  %v269 = vld [vmem:[%s1 + $0x758] sm:$0xff]
  %v270 = vld [vmem:[%s1 + $0x760] sm:$0xff]
  %v271 = vld [vmem:[%s1 + $0x768] sm:$0xff]
  %v272 = vld [vmem:[%s1 + $0x770] sm:$0xff]
  %v273 = vld [vmem:[%s1 + $0x778] sm:$0xff]
  %v274 = vld [vmem:[%s1 + $0x780] sm:$0xff]
  %v275 = vld [vmem:[%s1 + $0x788] sm:$0xff]
  %v276 = vld [vmem:[%s1 + $0x790] sm:$0xff]
  %v277 = vld [vmem:[%s1 + $0x798] sm:$0xff]
  %v278 = vld [vmem:[%s1 + $0x7a0] sm:$0xff]
  %v279 = vld [vmem:[%s1 + $0x7a8] sm:$0xff]
  %v280 = vld [vmem:[%s1 + $0x7b0] sm:$0xff]
  %v281 = vld [vmem:[%s1 + $0x7b8] sm:$0xff]
  %v282 = vld [vmem:[%s1 + $0x7c0] sm:$0xff]
  %v283 = vld [vmem:[%s1 + $0x7c8] sm:$0xff]
  %v284 = vld [vmem:[%s1 + $0x7d0] sm:$0xff]
  %v285 = vld [vmem:[%s1 + $0x7d8] sm:$0xff]
  %v286 = vld [vmem:[%s1 + $0x7e0] sm:$0xff]
  %v287 = vld [vmem:[%s1 + $0x7e8] sm:$0xff]
  %v288 = vld [vmem:[%s1 + $0x7f0] sm:$0xff]
  %v289 = vld [vmem:[%s1 + $0x7f8] sm:$0xff]
  %v290 = vld [vmem:[%s1 + $0x800] sm:$0xff]
  %v291 = vld [vmem:[%s1 + $0x808] sm:$0xff]
  %v292 = vld [vmem:[%s1 + $0x810] sm:$0xff]
  %v293 = vld [vmem:[%s1 + $0x818] sm:$0xff]
  %v294 = vld [vmem:[%s1 + $0x820] sm:$0xff]
  %v295 = vld [vmem:[%s1 + $0x828] sm:$0xff]
  %v296 = vld [vmem:[%s1 + $0x830] sm:$0xff]
  %v297 = vld [vmem:[%s1 + $0x838] sm:$0xff]
  %v298 = vld [vmem:[%s1 + $0x840] sm:$0xff]
  %v299 = vld [vmem:[%s1 + $0x848] sm:$0xff]
  %v300 = vld [vmem:[%s1 + $0x850] sm:$0xff]
  %v301 = vld [vmem:[%s1 + $0x858] sm:$0xff]
  %v302 = vld [vmem:[%s1 + $0x860] sm:$0xff]
  %v303 = vld [vmem:[%s1 + $0x868] sm:$0xff]
  %v304 = vld [vmem:[%s1 + $0x870] sm:$0xff]
  %v305 = vld [vmem:[%s1 + $0x878] sm:$0xff]
  %v306 = vld [vmem:[%s1 + $0x880] sm:$0xff]
  %v307 = vld [vmem:[%s1 + $0x888] sm:$0xff]
  %v308 = vld [vmem:[%s1 + $0x890] sm:$0xff]
  %v309 = vld [vmem:[%s1 + $0x898] sm:$0xff]
  %v310 = vld [vmem:[%s1 + $0x8a0] sm:$0xff]
  %v311 = vld [vmem:[%s1 + $0x8a8] sm:$0xff]
  %v312 = vld [vmem:[%s1 + $0x8b0] sm:$0xff]
  %v313 = vld [vmem:[%s1 + $0x8b8] sm:$0xff]
  %v314 = vld [vmem:[%s1 + $0x8c0] sm:$0xff]
  %v315 = vld [vmem:[%s1 + $0x8c8] sm:$0xff]
  %v316 = vld [vmem:[%s1 + $0x8d0] sm:$0xff]
  %v317 = vld [vmem:[%s1 + $0x8d8] sm:$0xff]
  %v318 = vld [vmem:[%s1 + $0x8e0] sm:$0xff]
  %v319 = vld [vmem:[%s1 + $0x8e8] sm:$0xff]
  %v320 = vld [vmem:[%s1 + $0x8f0] sm:$0xff]
  %v321 = vld [vmem:[%s1 + $0x8f8] sm:$0xff]
  %v322 = vld [vmem:[%s1 + $0x900] sm:$0xff]
  %v323 = vld [vmem:[%s1 + $0x908] sm:$0xff]
  %v324 = vld [vmem:[%s1 + $0x910] sm:$0xff]
  %v325 = vld [vmem:[%s1 + $0x918] sm:$0xff]
  %v326 = vld [vmem:[%s1 + $0x920] sm:$0xff]
  %v327 = vld [vmem:[%s1 + $0x928] sm:$0xff]
  %v328 = vld [vmem:[%s1 + $0x930] sm:$0xff]
  %v329 = vld [vmem:[%s1 + $0x938] sm:$0xff]
  %v330 = vld [vmem:[%s1 + $0x940] sm:$0xff]
  %v331 = vld [vmem:[%s1 + $0x948] sm:$0xff]
  %v332 = vld [vmem:[%s1 + $0x950] sm:$0xff]
  %v333 = vld [vmem:[%s1 + $0x958] sm:$0xff]
  %v334 = vld [vmem:[%s1 + $0x960] sm:$0xff]
  %v335 = vld [vmem:[%s1 + $0x968] sm:$0xff]
  %v336 = vld [vmem:[%s1 + $0x970] sm:$0xff]
  %v337 = vld [vmem:[%s1 + $0x978] sm:$0xff]
  %v338 = vld [vmem:[%s1 + $0x980] sm:$0xff]
  %v339 = vld [vmem:[%s1 + $0x988] sm:$0xff]
  %v340 = vld [vmem:[%s1 + $0x990] sm:$0xff]
  %v341 = vld [vmem:[%s1 + $0x998] sm:$0xff]
  %v342 = vld [vmem:[%s1 + $0x9a0] sm:$0xff]
  %v343 = vld [vmem:[%s1 + $0x9a8] sm:$0xff]
  %v344 = vld [vmem:[%s1 + $0x9b0] sm:$0xff]
  %v345 = vld [vmem:[%s1 + $0x9b8] sm:$0xff]
  %v346 = vld [vmem:[%s1 + $0x9c0] sm:$0xff]
  %v347 = vld [vmem:[%s1 + $0x9c8] sm:$0xff]
  %v348 = vld [vmem:[%s1 + $0x9d0] sm:$0xff]
  %v349 = vld [vmem:[%s1 + $0x9d8] sm:$0xff]
  %v350 = vld [vmem:[%s1 + $0x9e0] sm:$0xff]
  %v351 = vld [vmem:[%s1 + $0x9e8] sm:$0xff]
  %v352 = vld [vmem:[%s1 + $0x9f0] sm:$0xff]
  %v353 = vld [vmem:[%s1 + $0x9f8] sm:$0xff]
  %v354 = vld [vmem:[%s1 + $0xa00] sm:$0xff]
  %v355 = vld [vmem:[%s1 + $0xa08] sm:$0xff]
  %v356 = vld [vmem:[%s1 + $0xa10] sm:$0xff]
  %v357 = vld [vmem:[%s1 + $0xa18] sm:$0xff]
  %v358 = vld [vmem:[%s1 + $0xa20] sm:$0xff]
  %v359 = vld [vmem:[%s1 + $0xa28] sm:$0xff]
  %v360 = vld [vmem:[%s1 + $0xa30] sm:$0xff]
  %v361 = vld [vmem:[%s1 + $0xa38] sm:$0xff]
  %v362 = vld [vmem:[%s1 + $0xa40] sm:$0xff]
  %v363 = vld [vmem:[%s1 + $0xa48] sm:$0xff]
  %v364 = vld [vmem:[%s1 + $0xa50] sm:$0xff]
  %v365 = vld [vmem:[%s1 + $0xa58] sm:$0xff]
  %v366 = vld [vmem:[%s1 + $0xa60] sm:$0xff]
  %v367 = vld [vmem:[%s1 + $0xa68] sm:$0xff]
  %v368 = vld [vmem:[%s1 + $0xa70] sm:$0xff]
  %v369 = vld [vmem:[%s1 + $0xa78] sm:$0xff]
  %v370 = vld [vmem:[%s1 + $0xa80] sm:$0xff]
  %v371 = vld [vmem:[%s1 + $0xa88] sm:$0xff]
  %v372 = vld [vmem:[%s1 + $0xa90] sm:$0xff]
  %v373 = vld [vmem:[%s1 + $0xa98] sm:$0xff]
  %v374 = vld [vmem:[%s1 + $0xaa0] sm:$0xff]
  %v375 = vld [vmem:[%s1 + $0xaa8] sm:$0xff]
  %v376 = vld [vmem:[%s1 + $0xab0] sm:$0xff]
  %v377 = vld [vmem:[%s1 + $0xab8] sm:$0xff]
  %v378 = vld [vmem:[%s1 + $0xac0] sm:$0xff]
  %v379 = vld [vmem:[%s1 + $0xac8] sm:$0xff]
  %v380 = vld [vmem:[%s1 + $0xad0] sm:$0xff]
  %v381 = vld [vmem:[%s1 + $0xad8] sm:$0xff]
  %v382 = vld [vmem:[%s1 + $0xae0] sm:$0xff]
  %v383 = vld [vmem:[%s1 + $0xae8] sm:$0xff]
  %v384 = vld [vmem:[%s1 + $0xaf0] sm:$0xff]
  %v385 = vld [vmem:[%s1 + $0xaf8] sm:$0xff]
  %v386 = vld [vmem:[%s1 + $0xb00] sm:$0xff]
  %v387 = vld [vmem:[%s1 + $0xb08] sm:$0xff]
  %v388 = vld [vmem:[%s1 + $0xb10] sm:$0xff]
  %v389 = vld [vmem:[%s1 + $0xb18] sm:$0xff]
  %v390 = vld [vmem:[%s1 + $0xb20] sm:$0xff]
  %v391 = vld [vmem:[%s1 + $0xb28] sm:$0xff]
  %v392 = vld [vmem:[%s1 + $0xb30] sm:$0xff]
  %v393 = vld [vmem:[%s1 + $0xb38] sm:$0xff]
  %v394 = vld [vmem:[%s1 + $0xb40] sm:$0xff]
  %v395 = vld [vmem:[%s1 + $0xb48] sm:$0xff]
  %v396 = vld [vmem:[%s1 + $0xb50] sm:$0xff]
  %v397 = vld [vmem:[%s1 + $0xb58] sm:$0xff]
  %v398 = vld [vmem:[%s1 + $0xb60] sm:$0xff]
  %v399 = vld [vmem:[%s1 + $0xb68] sm:$0xff]
  %v400 = vld [vmem:[%s1 + $0xb70] sm:$0xff]
  %v401 = vld [vmem:[%s1 + $0xb78] sm:$0xff]
  %v402 = vld [vmem:[%s1 + $0xb80] sm:$0xff]
  %v403 = vld [vmem:[%s1 + $0xb88] sm:$0xff]
  %v404 = vld [vmem:[%s1 + $0xb90] sm:$0xff]
  %v405 = vld [vmem:[%s1 + $0xb98] sm:$0xff]
  %v406 = vld [vmem:[%s1 + $0xba0] sm:$0xff]
  %v407 = vld [vmem:[%s1 + $0xba8] sm:$0xff]
  %v408 = vld [vmem:[%s1 + $0xbb0] sm:$0xff]
  %v409 = vld [vmem:[%s1 + $0xbb8] sm:$0xff]
  %v410 = vld [vmem:[%s1 + $0xbc0] sm:$0xff]
  %v411 = vld [vmem:[%s1 + $0xbc8] sm:$0xff]
  %v412 = vld [vmem:[%s1 + $0xbd0] sm:$0xff]
  %v413 = vld [vmem:[%s1 + $0xbd8] sm:$0xff]
  %v414 = vld [vmem:[%s1 + $0xbe0] sm:$0xff]
  %v415 = vld [vmem:[%s1 + $0xbe8] sm:$0xff]
  %v416 = vld [vmem:[%s1 + $0xbf0] sm:$0xff]
  %v417 = vld [vmem:[%s1 + $0xbf8] sm:$0xff]
  %v418 = vld [vmem:[%s1 + $0xc00] sm:$0xff]
  %v419 = vld [vmem:[%s1 + $0xc08] sm:$0xff]
  %v420 = vld [vmem:[%s1 + $0xc10] sm:$0xff]
  %v421 = vld [vmem:[%s1 + $0xc18] sm:$0xff]
  %v422 = vld [vmem:[%s1 + $0xc20] sm:$0xff]
  %v423 = vld [vmem:[%s1 + $0xc28] sm:$0xff]
  %v424 = vld [vmem:[%s1 + $0xc30] sm:$0xff]
  %v425 = vld [vmem:[%s1 + $0xc38] sm:$0xff]
  %v426 = vld [vmem:[%s1 + $0xc40] sm:$0xff]
  %v427 = vld [vmem:[%s1 + $0xc48] sm:$0xff]
  %v428 = vld [vmem:[%s1 + $0xc50] sm:$0xff]
  %v429 = vld [vmem:[%s1 + $0xc58] sm:$0xff]
  %v430 = vld [vmem:[%s1 + $0xc60] sm:$0xff]
  %v431 = vld [vmem:[%s1 + $0xc68] sm:$0xff]
  %v432 = vld [vmem:[%s1 + $0xc70] sm:$0xff]
  %v433 = vld [vmem:[%s1 + $0xc78] sm:$0xff]
  %v434 = vld [vmem:[%s1 + $0xc80] sm:$0xff]
  %v435 = vld [vmem:[%s1 + $0xc88] sm:$0xff]
  %v436 = vld [vmem:[%s1 + $0xc90] sm:$0xff]
  %v437 = vld [vmem:[%s1 + $0xc98] sm:$0xff]
  %v438 = vld [vmem:[%s1 + $0xca0] sm:$0xff]
  %v439 = vld [vmem:[%s1 + $0xca8] sm:$0xff]
  %v440 = vld [vmem:[%s1 + $0xcb0] sm:$0xff]
  %v441 = vld [vmem:[%s1 + $0xcb8] sm:$0xff]
  %v442 = vld [vmem:[%s1 + $0xcc0] sm:$0xff]
  %v443 = vld [vmem:[%s1 + $0xcc8] sm:$0xff]
  %v444 = vld [vmem:[%s1 + $0xcd0] sm:$0xff]
  %v445 = vld [vmem:[%s1 + $0xcd8] sm:$0xff]
  %v446 = vld [vmem:[%s1 + $0xce0] sm:$0xff]
  %v447 = vld [vmem:[%s1 + $0xce8] sm:$0xff]
  %v448 = vld [vmem:[%s1 + $0xcf0] sm:$0xff]
  %v449 = vld [vmem:[%s1 + $0xcf8] sm:$0xff]
  %v450 = vld [vmem:[%s1 + $0xd00] sm:$0xff]
  %v451 = vld [vmem:[%s1 + $0xd08] sm:$0xff]
  %v452 = vld [vmem:[%s1 + $0xd10] sm:$0xff]
  %v453 = vld [vmem:[%s1 + $0xd18] sm:$0xff]
  %v454 = vld [vmem:[%s1 + $0xd20] sm:$0xff]
  %v455 = vld [vmem:[%s1 + $0xd28] sm:$0xff]
  %v456 = vld [vmem:[%s1 + $0xd30] sm:$0xff]
  %v457 = vld [vmem:[%s1 + $0xd38] sm:$0xff]
  %v458 = vld [vmem:[%s1 + $0xd40] sm:$0xff]
  %v459 = vld [vmem:[%s1 + $0xd48] sm:$0xff]
  %v460 = vld [vmem:[%s1 + $0xd50] sm:$0xff]
  %v461 = vld [vmem:[%s1 + $0xd58] sm:$0xff]
  %v462 = vld [vmem:[%s1 + $0xd60] sm:$0xff]
  %v463 = vld [vmem:[%s1 + $0xd68] sm:$0xff]
  %v464 = vld [vmem:[%s1 + $0xd70] sm:$0xff]
  %v465 = vld [vmem:[%s1 + $0xd78] sm:$0xff]
  %v466 = vld [vmem:[%s1 + $0xd80] sm:$0xff]
  %v467 = vld [vmem:[%s1 + $0xd88] sm:$0xff]
  %v468 = vld [vmem:[%s1 + $0xd90] sm:$0xff]
  %v469 = vld [vmem:[%s1 + $0xd98] sm:$0xff]
  %v470 = vld [vmem:[%s1 + $0xda0] sm:$0xff]
  %v471 = vld [vmem:[%s1 + $0xda8] sm:$0xff]
  %v472 = vld [vmem:[%s1 + $0xdb0] sm:$0xff]
  %v473 = vld [vmem:[%s1 + $0xdb8] sm:$0xff]
  %v474 = vld [vmem:[%s1 + $0xdc0] sm:$0xff]
  %v475 = vld [vmem:[%s1 + $0xdc8] sm:$0xff]
  %v476 = vld [vmem:[%s1 + $0xdd0] sm:$0xff]
  %v477 = vld [vmem:[%s1 + $0xdd8] sm:$0xff]
  %v478 = vld [vmem:[%s1 + $0xde0] sm:$0xff]
  %v479 = vld [vmem:[%s1 + $0xde8] sm:$0xff]
  %v480 = vld [vmem:[%s1 + $0xdf0] sm:$0xff]
  %v481 = vld [vmem:[%s1 + $0xdf8] sm:$0xff]
  %v482 = vld [vmem:[%s1 + $0xe00] sm:$0xff]
  %v483 = vld [vmem:[%s1 + $0xe08] sm:$0xff]
  %v484 = vld [vmem:[%s1 + $0xe10] sm:$0xff]
  %v485 = vld [vmem:[%s1 + $0xe18] sm:$0xff]
  %v486 = vld [vmem:[%s1 + $0xe20] sm:$0xff]
  %v487 = vld [vmem:[%s1 + $0xe28] sm:$0xff]
  %v488 = vld [vmem:[%s1 + $0xe30] sm:$0xff]
  %v489 = vld [vmem:[%s1 + $0xe38] sm:$0xff]
  %v490 = vld [vmem:[%s1 + $0xe40] sm:$0xff]
  %v491 = vld [vmem:[%s1 + $0xe48] sm:$0xff]
  %v492 = vld [vmem:[%s1 + $0xe50] sm:$0xff]
  %v493 = vld [vmem:[%s1 + $0xe58] sm:$0xff]
  %v494 = vld [vmem:[%s1 + $0xe60] sm:$0xff]
  %v495 = vld [vmem:[%s1 + $0xe68] sm:$0xff]
  %v496 = vld [vmem:[%s1 + $0xe70] sm:$0xff]
  %v497 = vld [vmem:[%s1 + $0xe78] sm:$0xff]
  %v498 = vld [vmem:[%s1 + $0xe80] sm:$0xff]
  %v499 = vld [vmem:[%s1 + $0xe88] sm:$0xff]
  %v500 = vld [vmem:[%s1 + $0xe90] sm:$0xff]
  %v501 = vld [vmem:[%s1 + $0xe98] sm:$0xff]
  %v502 = vld [vmem:[%s1 + $0xea0] sm:$0xff]
  %v503 = vld [vmem:[%s1 + $0xea8] sm:$0xff]
  %v504 = vld [vmem:[%s1 + $0xeb0] sm:$0xff]
  %v505 = vld [vmem:[%s1 + $0xeb8] sm:$0xff]
  %v506 = vld [vmem:[%s1 + $0xec0] sm:$0xff]
  %v507 = vld [vmem:[%s1 + $0xec8] sm:$0xff]
  %v508 = vld [vmem:[%s1 + $0xed0] sm:$0xff]
  %v509 = vld [vmem:[%s1 + $0xed8] sm:$0xff]
  %v510 = vld [vmem:[%s1 + $0xee0] sm:$0xff]
  %v511 = vld [vmem:[%s1 + $0xee8] sm:$0xff]
  %v512 = vld [vmem:[%s1 + $0xef0] sm:$0xff]
  %v513 = vld [vmem:[%s1 + $0xef8] sm:$0xff]
  %v514 = vld [vmem:[%s1 + $0xf00] sm:$0xff]
  %v515 = vld [vmem:[%s1 + $0xf08] sm:$0xff]
  %v516 = vld [vmem:[%s1 + $0xf10] sm:$0xff]
  %v517 = vld [vmem:[%s1 + $0xf18] sm:$0xff]
  %v518 = vld [vmem:[%s1 + $0xf20] sm:$0xff]
  %v519 = vld [vmem:[%s1 + $0xf28] sm:$0xff]
  %v520 = vld [vmem:[%s1 + $0xf30] sm:$0xff]
  %v521 = vld [vmem:[%s1 + $0xf38] sm:$0xff]
  %v522 = vld [vmem:[%s1 + $0xf40] sm:$0xff]
  %v523 = vld [vmem:[%s1 + $0xf48] sm:$0xff]
  %v524 = vld [vmem:[%s1 + $0xf50] sm:$0xff]
  %v525 = vld [vmem:[%s1 + $0xf58] sm:$0xff]
  %v526 = vld [vmem:[%s1 + $0xf60] sm:$0xff]
  %v527 = vld [vmem:[%s1 + $0xf68] sm:$0xff]
  %v528 = vld [vmem:[%s1 + $0xf70] sm:$0xff]
  %v529 = vld [vmem:[%s1 + $0xf78] sm:$0xff]
  %v530 = vld [vmem:[%s1 + $0xf80] sm:$0xff]
  %v531 = vld [vmem:[%s1 + $0xf88] sm:$0xff]
  %v532 = vld [vmem:[%s1 + $0xf90] sm:$0xff]
  %v533 = vld [vmem:[%s1 + $0xf98] sm:$0xff]
  %v534 = vld [vmem:[%s1 + $0xfa0] sm:$0xff]
  %v535 = vld [vmem:[%s1 + $0xfa8] sm:$0xff]
  %v536 = vld [vmem:[%s1 + $0xfb0] sm:$0xff]
  %v537 = vld [vmem:[%s1 + $0xfb8] sm:$0xff]
  %v538 = vld [vmem:[%s1 + $0xfc0] sm:$0xff]
  %v539 = vld [vmem:[%s1 + $0xfc8] sm:$0xff]
  %v540 = vld [vmem:[%s1 + $0xfd0] sm:$0xff]
  %v541 = vld [vmem:[%s1 + $0xfd8] sm:$0xff]
  %v542 = vld [vmem:[%s1 + $0xfe0] sm:$0xff]
  %v543 = vld [vmem:[%s1 + $0xfe8] sm:$0xff]
  %v544 = vld [vmem:[%s1 + $0xff0] sm:$0xff]
  %v545 = vld [vmem:[%s1 + $0xff8] sm:$0xff]
  %v546 = vld [vmem:[%s1 + $0x1000] sm:$0xff]
  %v547 = vld [vmem:[%s1 + $0x1008] sm:$0xff]
  %v548 = vld [vmem:[%s1 + $0x1010] sm:$0xff]
  %v549 = vld [vmem:[%s1 + $0x1018] sm:$0xff]
  %v550 = vld [vmem:[%s1 + $0x1020] sm:$0xff]
  %v551 = vld [vmem:[%s1 + $0x1028] sm:$0xff]
  %v552 = vld [vmem:[%s1 + $0x1030] sm:$0xff]
  %v553 = vld [vmem:[%s1 + $0x1038] sm:$0xff]
  %v554 = vld [vmem:[%s1 + $0x1040] sm:$0xff]
  %v555 = vld [vmem:[%s1 + $0x1048] sm:$0xff]
  %v556 = vld [vmem:[%s1 + $0x1050] sm:$0xff]
  %v557 = vld [vmem:[%s1 + $0x1058] sm:$0xff]
  %v558 = vld [vmem:[%s1 + $0x1060] sm:$0xff]
  %v559 = vld [vmem:[%s1 + $0x1068] sm:$0xff]
  %v560 = vld [vmem:[%s1 + $0x1070] sm:$0xff]
  %v561 = vld [vmem:[%s1 + $0x1078] sm:$0xff]
  %v562 = vld [vmem:[%s1 + $0x1080] sm:$0xff]
  %v563 = vld [vmem:[%s1 + $0x1088] sm:$0xff]
  %v564 = vld [vmem:[%s1 + $0x1090] sm:$0xff]
  %v565 = vld [vmem:[%s1 + $0x1098] sm:$0xff]
  %v566 = vld [vmem:[%s1 + $0x10a0] sm:$0xff]
  %v567 = vld [vmem:[%s1 + $0x10a8] sm:$0xff]
  %v568 = vld [vmem:[%s1 + $0x10b0] sm:$0xff]
  %v569 = vld [vmem:[%s1 + $0x10b8] sm:$0xff]
  %v570 = vld [vmem:[%s1 + $0x10c0] sm:$0xff]
  %v571 = vld [vmem:[%s1 + $0x10c8] sm:$0xff]
  %v572 = vld [vmem:[%s1 + $0x10d0] sm:$0xff]
  %v573 = vld [vmem:[%s1 + $0x10d8] sm:$0xff]
  %v574 = vld [vmem:[%s1 + $0x10e0] sm:$0xff]
  %v575 = vld [vmem:[%s1 + $0x10e8] sm:$0xff]
  %v576 = vld [vmem:[%s1 + $0x10f0] sm:$0xff]
  %v577 = vld [vmem:[%s1 + $0x10f8] sm:$0xff]
  %v578 = vld [vmem:[%s1 + $0x1100] sm:$0xff]
  %v579 = vld [vmem:[%s1 + $0x1108] sm:$0xff]
  %v580 = vld [vmem:[%s1 + $0x1110] sm:$0xff]
  %v581 = vld [vmem:[%s1 + $0x1118] sm:$0xff]
  %v582 = vld [vmem:[%s1 + $0x1120] sm:$0xff]
  %v583 = vld [vmem:[%s1 + $0x1128] sm:$0xff]
  %v584 = vld [vmem:[%s1 + $0x1130] sm:$0xff]
  %v585 = vld [vmem:[%s1 + $0x1138] sm:$0xff]
  %v586 = vld [vmem:[%s1 + $0x1140] sm:$0xff]
  %v587 = vld [vmem:[%s1 + $0x1148] sm:$0xff]
  %v588 = vld [vmem:[%s1 + $0x1150] sm:$0xff]
  %v589 = vld [vmem:[%s1 + $0x1158] sm:$0xff]
  %v590 = vld [vmem:[%s1 + $0x1160] sm:$0xff]
  %v591 = vld [vmem:[%s1 + $0x1168] sm:$0xff]
  %v592 = vld [vmem:[%s1 + $0x1170] sm:$0xff]
  %v593 = vld [vmem:[%s1 + $0x1178] sm:$0xff]
  %v594 = vld [vmem:[%s1 + $0x1180] sm:$0xff]
  %v595 = vld [vmem:[%s1 + $0x1188] sm:$0xff]
  %v596 = vld [vmem:[%s1 + $0x1190] sm:$0xff]
  %v597 = vld [vmem:[%s1 + $0x1198] sm:$0xff]
  %v598 = vld [vmem:[%s1 + $0x11a0] sm:$0xff]
  %v599 = vld [vmem:[%s1 + $0x11a8] sm:$0xff]
  %v600 = vld [vmem:[%s1 + $0x11b0] sm:$0xff]
  %v601 = vld [vmem:[%s1 + $0x11b8] sm:$0xff]
  %v602 = vld [vmem:[%s1 + $0x11c0] sm:$0xff]
  %v603 = vld [vmem:[%s1 + $0x11c8] sm:$0xff]
  %v604 = vld [vmem:[%s1 + $0x11d0] sm:$0xff]
  %v605 = vld [vmem:[%s1 + $0x11d8] sm:$0xff]
  %v606 = vld [vmem:[%s1 + $0x11e0] sm:$0xff]
  %v607 = vld [vmem:[%s1 + $0x11e8] sm:$0xff]
  %v608 = vld [vmem:[%s1 + $0x11f0] sm:$0xff]
  %v609 = vld [vmem:[%s1 + $0x11f8] sm:$0xff]
  %v610 = vld [vmem:[%s1 + $0x1200] sm:$0xff]
  %v611 = vld [vmem:[%s1 + $0x1208] sm:$0xff]
  %v612 = vld [vmem:[%s1 + $0x1210] sm:$0xff]
  %v613 = vld [vmem:[%s1 + $0x1218] sm:$0xff]
  %v614 = vld [vmem:[%s1 + $0x1220] sm:$0xff]
  %v615 = vld [vmem:[%s1 + $0x1228] sm:$0xff]
  %v616 = vld [vmem:[%s1 + $0x1230] sm:$0xff]
  %v617 = vld [vmem:[%s1 + $0x1238] sm:$0xff]
  %v618 = vld [vmem:[%s1 + $0x1240] sm:$0xff]
  %v619 = vld [vmem:[%s1 + $0x1248] sm:$0xff]
  %v620 = vld [vmem:[%s1 + $0x1250] sm:$0xff]
  %v621 = vld [vmem:[%s1 + $0x1258] sm:$0xff]
  %v622 = vld [vmem:[%s1 + $0x1260] sm:$0xff]
  %v623 = vld [vmem:[%s1 + $0x1268] sm:$0xff]
  %v624 = vld [vmem:[%s1 + $0x1270] sm:$0xff]
  %v625 = vld [vmem:[%s1 + $0x1278] sm:$0xff]
  %v626 = vld [vmem:[%s1 + $0x1280] sm:$0xff]
  %v627 = vld [vmem:[%s1 + $0x1288] sm:$0xff]
  %v628 = vld [vmem:[%s1 + $0x1290] sm:$0xff]
  %v629 = vld [vmem:[%s1 + $0x1298] sm:$0xff]
  %v630 = vld [vmem:[%s1 + $0x12a0] sm:$0xff]
  %v631 = vld [vmem:[%s1 + $0x12a8] sm:$0xff]
  %v632 = vld [vmem:[%s1 + $0x12b0] sm:$0xff]
  %v633 = vld [vmem:[%s1 + $0x12b8] sm:$0xff]
  %v634 = vld [vmem:[%s1 + $0x12c0] sm:$0xff]
  %v635 = vld [vmem:[%s1 + $0x12c8] sm:$0xff]
  %v636 = vld [vmem:[%s1 + $0x12d0] sm:$0xff]
  %v637 = vld [vmem:[%s1 + $0x12d8] sm:$0xff]
  %v638 = vld [vmem:[%s1 + $0x12e0] sm:$0xff]
  %v639 = vld [vmem:[%s1 + $0x12e8] sm:$0xff]
  %v640 = vld [vmem:[%s1 + $0x12f0] sm:$0xff]
  %v641 = vld [vmem:[%s1 + $0x12f8] sm:$0xff]
  %v642 = vld [vmem:[%s1 + $0x1300] sm:$0xff]
  %v643 = vld [vmem:[%s1 + $0x1308] sm:$0xff]
  %v644 = vld [vmem:[%s1 + $0x1310] sm:$0xff]
  %v645 = vld [vmem:[%s1 + $0x1318] sm:$0xff]
  %v646 = vld [vmem:[%s1 + $0x1320] sm:$0xff]
  %v647 = vld [vmem:[%s1 + $0x1328] sm:$0xff]
  %v648 = vld [vmem:[%s1 + $0x1330] sm:$0xff]
  %v649 = vld [vmem:[%s1 + $0x1338] sm:$0xff]
  %v650 = vld [vmem:[%s1 + $0x1340] sm:$0xff]
  %v651 = vld [vmem:[%s1 + $0x1348] sm:$0xff]
  %v652 = vld [vmem:[%s1 + $0x1350] sm:$0xff]
  %v653 = vld [vmem:[%s1 + $0x1358] sm:$0xff]
  %v654 = vld [vmem:[%s1 + $0x1360] sm:$0xff]
  %v655 = vld [vmem:[%s1 + $0x1368] sm:$0xff]
  %v656 = vld [vmem:[%s1 + $0x1370] sm:$0xff]
  %v657 = vld [vmem:[%s1 + $0x1378] sm:$0xff]
  %v658 = vld [vmem:[%s1 + $0x1380] sm:$0xff]
  %v659 = vld [vmem:[%s1 + $0x1388] sm:$0xff]
  %v660 = vld [vmem:[%s1 + $0x1390] sm:$0xff]
  %v661 = vld [vmem:[%s1 + $0x1398] sm:$0xff]
  %v662 = vld [vmem:[%s1 + $0x13a0] sm:$0xff]
  %v663 = vld [vmem:[%s1 + $0x13a8] sm:$0xff]
  %v664 = vld [vmem:[%s1 + $0x13b0] sm:$0xff]
  %v665 = vld [vmem:[%s1 + $0x13b8] sm:$0xff]
  %v666 = vld [vmem:[%s1 + $0x13c0] sm:$0xff]
  %v667 = vld [vmem:[%s1 + $0x13c8] sm:$0xff]
  %v668 = vld [vmem:[%s1 + $0x13d0] sm:$0xff]
  %v669 = vld [vmem:[%s1 + $0x13d8] sm:$0xff]
  %v670 = vld [vmem:[%s1 + $0x13e0] sm:$0xff]
  %v671 = vld [vmem:[%s1 + $0x13e8] sm:$0xff]
  %v672 = vld [vmem:[%s1 + $0x13f0] sm:$0xff]
  %v673 = vld [vmem:[%s1 + $0x13f8] sm:$0xff]
  %v674 = vld [vmem:[%s1 + $0x1400] sm:$0xff]
  %v675 = vld [vmem:[%s1 + $0x1408] sm:$0xff]
  %v676 = vld [vmem:[%s1 + $0x1410] sm:$0xff]
  %v677 = vld [vmem:[%s1 + $0x1418] sm:$0xff]
  %v678 = vld [vmem:[%s1 + $0x1420] sm:$0xff]
  %v679 = vld [vmem:[%s1 + $0x1428] sm:$0xff]
  %v680 = vld [vmem:[%s1 + $0x1430] sm:$0xff]
  %v681 = vld [vmem:[%s1 + $0x1438] sm:$0xff]
  %v682 = vld [vmem:[%s1 + $0x1440] sm:$0xff]
  %v683 = vld [vmem:[%s1 + $0x1448] sm:$0xff]
  %v684 = vld [vmem:[%s1 + $0x1450] sm:$0xff]
  %v685 = vld [vmem:[%s1 + $0x1458] sm:$0xff]
  %v686 = vld [vmem:[%s1 + $0x1460] sm:$0xff]
  %v687 = vld [vmem:[%s1 + $0x1468] sm:$0xff]
  %v688 = vld [vmem:[%s1 + $0x1470] sm:$0xff]
  %v689 = vld [vmem:[%s1 + $0x1478] sm:$0xff]
  %v690 = vld [vmem:[%s1 + $0x1480] sm:$0xff]
  %v691 = vld [vmem:[%s1 + $0x1488] sm:$0xff]
  %v692 = vld [vmem:[%s1 + $0x1490] sm:$0xff]
  %v693 = vld [vmem:[%s1 + $0x1498] sm:$0xff]
  %v694 = vld [vmem:[%s1 + $0x14a0] sm:$0xff]
  %v695 = vld [vmem:[%s1 + $0x14a8] sm:$0xff]
  %v696 = vld [vmem:[%s1 + $0x14b0] sm:$0xff]
  %v697 = vld [vmem:[%s1 + $0x14b8] sm:$0xff]
  %v698 = vld [vmem:[%s1 + $0x14c0] sm:$0xff]
  %v699 = vld [vmem:[%s1 + $0x14c8] sm:$0xff]
  %v700 = vld [vmem:[%s1 + $0x14d0] sm:$0xff]
  %v701 = vld [vmem:[%s1 + $0x14d8] sm:$0xff]
  %v702 = vld [vmem:[%s1 + $0x14e0] sm:$0xff]
  %v703 = vld [vmem:[%s1 + $0x14e8] sm:$0xff]
  %v704 = vld [vmem:[%s1 + $0x14f0] sm:$0xff]
  %v705 = vld [vmem:[%s1 + $0x14f8] sm:$0xff]
  %v706 = vld [vmem:[%s1 + $0x1500] sm:$0xff]
  %v707 = vld [vmem:[%s1 + $0x1508] sm:$0xff]
  %v708 = vld [vmem:[%s1 + $0x1510] sm:$0xff]
  %v709 = vld [vmem:[%s1 + $0x1518] sm:$0xff]
  %v710 = vld [vmem:[%s1 + $0x1520] sm:$0xff]
  %v711 = vld [vmem:[%s1 + $0x1528] sm:$0xff]
  %v712 = vld [vmem:[%s1 + $0x1530] sm:$0xff]
  %v713 = vld [vmem:[%s1 + $0x1538] sm:$0xff]
  %v714 = vld [vmem:[%s1 + $0x1540] sm:$0xff]
  %v715 = vld [vmem:[%s1 + $0x1548] sm:$0xff]
  %v716 = vld [vmem:[%s1 + $0x1550] sm:$0xff]
  %v717 = vld [vmem:[%s1 + $0x1558] sm:$0xff]
  %v718 = vld [vmem:[%s1 + $0x1560] sm:$0xff]
  %v719 = vld [vmem:[%s1 + $0x1568] sm:$0xff]
  %v720 = vld [vmem:[%s1 + $0x1570] sm:$0xff]
  %v721 = vld [vmem:[%s1 + $0x1578] sm:$0xff]
  %v722 = vld [vmem:[%s1 + $0x1580] sm:$0xff]
  %v723 = vld [vmem:[%s1 + $0x1588] sm:$0xff]
  %v724 = vld [vmem:[%s1 + $0x1590] sm:$0xff]
  %v725 = vld [vmem:[%s1 + $0x1598] sm:$0xff]
  %v726 = vld [vmem:[%s1 + $0x15a0] sm:$0xff]
  %v727 = vld [vmem:[%s1 + $0x15a8] sm:$0xff]
  %v728 = vld [vmem:[%s1 + $0x15b0] sm:$0xff]
  %v729 = vld [vmem:[%s1 + $0x15b8] sm:$0xff]
  %v730 = vld [vmem:[%s1 + $0x15c0] sm:$0xff]
  %v731 = vld [vmem:[%s1 + $0x15c8] sm:$0xff]
  %v732 = vld [vmem:[%s1 + $0x15d0] sm:$0xff]
  %v733 = vld [vmem:[%s1 + $0x15d8] sm:$0xff]
  %v734 = vld [vmem:[%s1 + $0x15e0] sm:$0xff]
  %v735 = vld [vmem:[%s1 + $0x15e8] sm:$0xff]
  %v736 = vld [vmem:[%s1 + $0x15f0] sm:$0xff]
  %v737 = vld [vmem:[%s1 + $0x15f8] sm:$0xff]
  %v738 = vld [vmem:[%s1 + $0x1600] sm:$0xff]
  %v739 = vld [vmem:[%s1 + $0x1608] sm:$0xff]
  %v740 = vld [vmem:[%s1 + $0x1610] sm:$0xff]
  %v741 = vld [vmem:[%s1 + $0x1618] sm:$0xff]
  %v742 = vld [vmem:[%s1 + $0x1620] sm:$0xff]
  %v743 = vld [vmem:[%s1 + $0x1628] sm:$0xff]
  %v744 = vld [vmem:[%s1 + $0x1630] sm:$0xff]
  %v745 = vld [vmem:[%s1 + $0x1638] sm:$0xff]
  %v746 = vld [vmem:[%s1 + $0x1640] sm:$0xff]
  %v747 = vld [vmem:[%s1 + $0x1648] sm:$0xff]
  %v748 = vld [vmem:[%s1 + $0x1650] sm:$0xff]
  %v749 = vld [vmem:[%s1 + $0x1658] sm:$0xff]
  %v750 = vld [vmem:[%s1 + $0x1660] sm:$0xff]
  %v751 = vld [vmem:[%s1 + $0x1668] sm:$0xff]
  %v752 = vld [vmem:[%s1 + $0x1670] sm:$0xff]
  %v753 = vld [vmem:[%s1 + $0x1678] sm:$0xff]
  %v754 = vld [vmem:[%s1 + $0x1680] sm:$0xff]
  %v755 = vld [vmem:[%s1 + $0x1688] sm:$0xff]
  %v756 = vld [vmem:[%s1 + $0x1690] sm:$0xff]
  %v757 = vld [vmem:[%s1 + $0x1698] sm:$0xff]
  %v758 = vld [vmem:[%s1 + $0x16a0] sm:$0xff]
  %v759 = vld [vmem:[%s1 + $0x16a8] sm:$0xff]
  %v760 = vld [vmem:[%s1 + $0x16b0] sm:$0xff]
  %v761 = vld [vmem:[%s1 + $0x16b8] sm:$0xff]
  %v762 = vld [vmem:[%s1 + $0x16c0] sm:$0xff]
  %v763 = vld [vmem:[%s1 + $0x16c8] sm:$0xff]
  %v764 = vld [vmem:[%s1 + $0x16d0] sm:$0xff]
  %v765 = vld [vmem:[%s1 + $0x16d8] sm:$0xff]
  %v766 = vld [vmem:[%s1 + $0x16e0] sm:$0xff]
  %v767 = vld [vmem:[%s1 + $0x16e8] sm:$0xff]
  %v768 = vld [vmem:[%s1 + $0x16f0] sm:$0xff]
  %v769 = vld [vmem:[%s1 + $0x16f8] sm:$0xff]
  %v770 = vld [vmem:[%s1 + $0x1700] sm:$0xff]
  %v771 = vld [vmem:[%s1 + $0x1708] sm:$0xff]
  %v772 = vld [vmem:[%s1 + $0x1710] sm:$0xff]
  %v773 = vld [vmem:[%s1 + $0x1718] sm:$0xff]
  %v774 = vld [vmem:[%s1 + $0x1720] sm:$0xff]
  %v775 = vld [vmem:[%s1 + $0x1728] sm:$0xff]
  %v776 = vld [vmem:[%s1 + $0x1730] sm:$0xff]
  %v777 = vld [vmem:[%s1 + $0x1738] sm:$0xff]
  %v778 = vld [vmem:[%s1 + $0x1740] sm:$0xff]
  %v779 = vld [vmem:[%s1 + $0x1748] sm:$0xff]
  %v780 = vld [vmem:[%s1 + $0x1750] sm:$0xff]
  %v781 = vld [vmem:[%s1 + $0x1758] sm:$0xff]
  %v782 = vld [vmem:[%s1 + $0x1760] sm:$0xff]
  %v783 = vld [vmem:[%s1 + $0x1768] sm:$0xff]
  %v784 = vld [vmem:[%s1 + $0x1770] sm:$0xff]
  %v785 = vld [vmem:[%s1 + $0x1778] sm:$0xff]
  %v786 = vld [vmem:[%s1 + $0x1780] sm:$0xff]
  %v787 = vld [vmem:[%s1 + $0x1788] sm:$0xff]
  %v788 = vld [vmem:[%s1 + $0x1790] sm:$0xff]
  %v789 = vld [vmem:[%s1 + $0x1798] sm:$0xff]
  %v790 = vld [vmem:[%s1 + $0x17a0] sm:$0xff]
  %v791 = vld [vmem:[%s1 + $0x17a8] sm:$0xff]
  %v792 = vld [vmem:[%s1 + $0x17b0] sm:$0xff]
  %v793 = vld [vmem:[%s1 + $0x17b8] sm:$0xff]
  %v794 = vld [vmem:[%s1 + $0x17c0] sm:$0xff]
  %v795 = vld [vmem:[%s1 + $0x17c8] sm:$0xff]
  %v796 = vld [vmem:[%s1 + $0x17d0] sm:$0xff]
  %v797 = vld [vmem:[%s1 + $0x17d8] sm:$0xff]
  %v798 = vld [vmem:[%s1 + $0x17e0] sm:$0xff]
  %v799 = vld [vmem:[%s1 + $0x17e8] sm:$0xff]
  %v800 = vld [vmem:[%s1 + $0x17f0] sm:$0xff]
  %v801 = vld [vmem:[%s1 + $0x17f8] sm:$0xff]
  %v802 = vld [vmem:[%s1 + $0x1800] sm:$0xff]
  %v803 = vld [vmem:[%s1 + $0x1808] sm:$0xff]
  %v804 = vld [vmem:[%s1 + $0x1810] sm:$0xff]
  %v805 = vld [vmem:[%s1 + $0x1818] sm:$0xff]
  %v806 = vld [vmem:[%s1 + $0x1820] sm:$0xff]
  %v807 = vld [vmem:[%s1 + $0x1828] sm:$0xff]
  %v808 = vld [vmem:[%s1 + $0x1830] sm:$0xff]
  %v809 = vld [vmem:[%s1 + $0x1838] sm:$0xff]
  %v810 = vld [vmem:[%s1 + $0x1840] sm:$0xff]
  %v811 = vld [vmem:[%s1 + $0x1848] sm:$0xff]
  %v812 = vld [vmem:[%s1 + $0x1850] sm:$0xff]
  %v813 = vld [vmem:[%s1 + $0x1858] sm:$0xff]
  %v814 = vld [vmem:[%s1 + $0x1860] sm:$0xff]
  %v815 = vld [vmem:[%s1 + $0x1868] sm:$0xff]
  %v816 = vld [vmem:[%s1 + $0x1870] sm:$0xff]
  %v817 = vld [vmem:[%s1 + $0x1878] sm:$0xff]
  %v818 = vld [vmem:[%s2] sm:$0xf]
  %v820 = vlaneseq
  %v821 = vshrl.u32 %v820, 7
  %v822 = vsub.s32 0, %v821
  %v823 = vrot.slane %v818, %v822
  %v824 = vlaneseq
  %v825 = vshrl.u32 %v824, 7
  %v826 = vsub.s32 1, %v825
  %v827 = vrot.slane %v818, %v826
  %v828 = vlaneseq
  %v829 = vshrl.u32 %v828, 7
  %v830 = vsub.s32 2, %v829
  %v831 = vrot.slane %v818, %v830
  %v832 = vlaneseq
  %v833 = vshrl.u32 %v832, 7
  %v834 = vsub.s32 3, %v833
  %v835 = vrot.slane %v818, %v834
  %v853 = vunpack.c.l.b16 %v21
  %v854 = vunpack.c.h.b16 %v21
  %v855 = vunpack.c.l.b16 %v22
  %v856 = vunpack.c.h.b16 %v22
  %v857 = vunpack.c.l.b16 %v23
  %v858 = vunpack.c.h.b16 %v23
  %v859 = vunpack.c.l.b16 %v24
  %v860 = vunpack.c.h.b16 %v24
  %v861 = vunpack.c.l.b16 %v25
  %v862 = vunpack.c.h.b16 %v25
  %v863 = vunpack.c.l.b16 %v26
  %v864 = vunpack.c.h.b16 %v26
  %v865 = vunpack.c.l.b16 %v27
  %v866 = vunpack.c.h.b16 %v27
  %v867 = vunpack.c.l.b16 %v28
  %v868 = vunpack.c.h.b16 %v28
  %v869 = vunpack.c.l.b16 %v29
  %v870 = vunpack.c.h.b16 %v29
  %v871 = vunpack.c.l.b16 %v30
  %v872 = vunpack.c.h.b16 %v30
  %v873 = vunpack.c.l.b16 %v31
  %v874 = vunpack.c.h.b16 %v31
  %v875 = vunpack.c.l.b16 %v32
  %v876 = vunpack.c.h.b16 %v32
  %v877 = vunpack.c.l.b16 %v33
  %v878 = vpack.c.b16 %v853, %v853
  %v879 = vpack.c.b16 %v854, %v854
  %v880 = vpack.c.b16 %v855, %v855
  %v881 = vpack.c.b16 %v856, %v856
  %v882 = vpack.c.b16 %v857, %v857
  %v883 = vpack.c.b16 %v858, %v858
  %v884 = vpack.c.b16 %v859, %v859
  %v885 = vpack.c.b16 %v860, %v860
  %v886 = vpack.c.b16 %v861, %v861
  %v887 = vpack.c.b16 %v862, %v862
  %v888 = vpack.c.b16 %v863, %v863
  %v889 = vpack.c.b16 %v864, %v864
  %v890 = vpack.c.b16 %v865, %v865
  %v891 = vpack.c.b16 %v866, %v866
  %v892 = vpack.c.b16 %v867, %v867
  %v893 = vpack.c.b16 %v868, %v868
  %v894 = vpack.c.b16 %v869, %v869
  %v895 = vpack.c.b16 %v870, %v870
  %v896 = vpack.c.b16 %v871, %v871
  %v897 = vpack.c.b16 %v872, %v872
  %v898 = vpack.c.b16 %v873, %v873
  %v899 = vpack.c.b16 %v874, %v874
  %v900 = vpack.c.b16 %v875, %v875
  %v901 = vpack.c.b16 %v876, %v876
  %v902 = vpack.c.b16 %v877, %v877
  %v1711 = vunpack.c.l.b16 %v34
  %v1712 = vunpack.c.h.b16 %v34
  %v1713 = vunpack.c.l.b16 %v35
  %v1714 = vunpack.c.h.b16 %v35
  %v1715 = vunpack.c.l.b16 %v36
  %v1716 = vunpack.c.h.b16 %v36
  %v1717 = vunpack.c.l.b16 %v37
  %v1718 = vunpack.c.h.b16 %v37
  %v1719 = vunpack.c.l.b16 %v38
  %v1720 = vunpack.c.h.b16 %v38
  %v1721 = vunpack.c.l.b16 %v39
  %v1722 = vunpack.c.h.b16 %v39
  %v1723 = vunpack.c.l.b16 %v40
  %v1724 = vunpack.c.h.b16 %v40
  %v1725 = vunpack.c.l.b16 %v41
  %v1726 = vunpack.c.h.b16 %v41
  %v1727 = vunpack.c.l.b16 %v42
  %v1728 = vunpack.c.h.b16 %v42
  %v1729 = vunpack.c.l.b16 %v43
  %v1730 = vunpack.c.h.b16 %v43
  %v1731 = vunpack.c.l.b16 %v44
  %v1732 = vunpack.c.h.b16 %v44
  %v1733 = vunpack.c.l.b16 %v45
  %v1734 = vunpack.c.h.b16 %v45
  %v1735 = vunpack.c.l.b16 %v46
  %v1736 = vunpack.c.h.b16 %v46
  %v1737 = vunpack.c.l.b16 %v47
  %v1738 = vunpack.c.h.b16 %v47
  %v1739 = vunpack.c.l.b16 %v48
  %v1740 = vunpack.c.h.b16 %v48
  %v1741 = vunpack.c.l.b16 %v49
  %v1742 = vunpack.c.h.b16 %v49
  %v1743 = vunpack.c.l.b16 %v50
  %v1744 = vunpack.c.h.b16 %v50
  %v1745 = vunpack.c.l.b16 %v51
  %v1746 = vunpack.c.h.b16 %v51
  %v1747 = vunpack.c.l.b16 %v52
  %v1748 = vunpack.c.h.b16 %v52
  %v1749 = vunpack.c.l.b16 %v53
  %v1750 = vunpack.c.h.b16 %v53
  %v1751 = vunpack.c.l.b16 %v54
  %v1752 = vunpack.c.h.b16 %v54
  %v1753 = vunpack.c.l.b16 %v55
  %v1754 = vunpack.c.h.b16 %v55
  %v1755 = vunpack.c.l.b16 %v56
  %v1756 = vunpack.c.h.b16 %v56
  %v1757 = vunpack.c.l.b16 %v57
  %v1758 = vunpack.c.h.b16 %v57
  %v1759 = vunpack.c.l.b16 %v58
  %v1760 = vunpack.c.h.b16 %v58
  %v1761 = vunpack.c.l.b16 %v59
  %v1762 = vunpack.c.h.b16 %v59
  %v1763 = vunpack.c.l.b16 %v60
  %v1764 = vunpack.c.h.b16 %v60
  %v1765 = vunpack.c.l.b16 %v61
  %v1766 = vunpack.c.h.b16 %v61
  %v1767 = vunpack.c.l.b16 %v62
  %v1768 = vunpack.c.h.b16 %v62
  %v1769 = vunpack.c.l.b16 %v63
  %v1770 = vunpack.c.h.b16 %v63
  %v1771 = vunpack.c.l.b16 %v64
  %v1772 = vunpack.c.h.b16 %v64
  %v1773 = vunpack.c.l.b16 %v65
  %v1774 = vunpack.c.h.b16 %v65
  %v1775 = vunpack.c.l.b16 %v66
  %v1776 = vunpack.c.h.b16 %v66
  %v1777 = vunpack.c.l.b16 %v67
  %v1778 = vunpack.c.h.b16 %v67
  %v1779 = vunpack.c.l.b16 %v68
  %v1780 = vunpack.c.h.b16 %v68
  %v1781 = vunpack.c.l.b16 %v69
  %v1782 = vunpack.c.h.b16 %v69
  %v1783 = vunpack.c.l.b16 %v70
  %v1784 = vunpack.c.h.b16 %v70
  %v1785 = vunpack.c.l.b16 %v71
  %v1786 = vunpack.c.h.b16 %v71
  %v1787 = vunpack.c.l.b16 %v72
  %v1788 = vunpack.c.h.b16 %v72
  %v1789 = vunpack.c.l.b16 %v73
  %v1790 = vunpack.c.h.b16 %v73
  %v1791 = vunpack.c.l.b16 %v74
  %v1792 = vunpack.c.h.b16 %v74
  %v1793 = vunpack.c.l.b16 %v75
  %v1794 = vunpack.c.h.b16 %v75
  %v1795 = vunpack.c.l.b16 %v76
  %v1796 = vunpack.c.h.b16 %v76
  %v1797 = vunpack.c.l.b16 %v77
  %v1798 = vunpack.c.h.b16 %v77
  %v1799 = vunpack.c.l.b16 %v78
  %v1800 = vunpack.c.h.b16 %v78
  %v1801 = vunpack.c.l.b16 %v79
  %v1802 = vunpack.c.h.b16 %v79
  %v1803 = vunpack.c.l.b16 %v80
  %v1804 = vunpack.c.h.b16 %v80
  %v1805 = vunpack.c.l.b16 %v81
  %v1806 = vunpack.c.h.b16 %v81
  %v1807 = vunpack.c.l.b16 %v82
  %v1808 = vunpack.c.h.b16 %v82
  %v1809 = vunpack.c.l.b16 %v83
  %v1810 = vunpack.c.h.b16 %v83
  %v1811 = vunpack.c.l.b16 %v84
  %v1812 = vunpack.c.h.b16 %v84
  %v1813 = vunpack.c.l.b16 %v85
  %v1814 = vunpack.c.h.b16 %v85
  %v1815 = vunpack.c.l.b16 %v86
  %v1816 = vunpack.c.h.b16 %v86
  %v1817 = vunpack.c.l.b16 %v87
  %v1818 = vunpack.c.h.b16 %v87
  %v1819 = vunpack.c.l.b16 %v88
  %v1820 = vunpack.c.h.b16 %v88
  %v1821 = vunpack.c.l.b16 %v89
  %v1822 = vunpack.c.h.b16 %v89
  %v1823 = vunpack.c.l.b16 %v90
  %v1824 = vunpack.c.h.b16 %v90
  %v1825 = vunpack.c.l.b16 %v91
  %v1826 = vunpack.c.h.b16 %v91
  %v1827 = vunpack.c.l.b16 %v92
  %v1828 = vunpack.c.h.b16 %v92
  %v1829 = vunpack.c.l.b16 %v93
  %v1830 = vunpack.c.h.b16 %v93
  %v1831 = vunpack.c.l.b16 %v94
  %v1832 = vunpack.c.h.b16 %v94
  %v1833 = vunpack.c.l.b16 %v95
  %v1834 = vunpack.c.h.b16 %v95
  %v1835 = vunpack.c.l.b16 %v96
  %v1836 = vunpack.c.h.b16 %v96
  %v1837 = vunpack.c.l.b16 %v97
  %v1838 = vunpack.c.h.b16 %v97
  %v1839 = vunpack.c.l.b16 %v98
  %v1840 = vunpack.c.h.b16 %v98
  %v1841 = vunpack.c.l.b16 %v99
  %v1842 = vunpack.c.h.b16 %v99
  %v1843 = vunpack.c.l.b16 %v100
  %v1844 = vunpack.c.h.b16 %v100
  %v1845 = vunpack.c.l.b16 %v101
  %v1846 = vunpack.c.h.b16 %v101
  %v1847 = vunpack.c.l.b16 %v102
  %v1848 = vunpack.c.h.b16 %v102
  %v1849 = vunpack.c.l.b16 %v103
  %v1850 = vunpack.c.h.b16 %v103
  %v1851 = vunpack.c.l.b16 %v104
  %v1852 = vunpack.c.h.b16 %v104
  %v1853 = vunpack.c.l.b16 %v105
  %v1854 = vunpack.c.h.b16 %v105
  %v1855 = vunpack.c.l.b16 %v106
  %v1856 = vunpack.c.h.b16 %v106
  %v1857 = vunpack.c.l.b16 %v107
  %v1858 = vunpack.c.h.b16 %v107
  %v1859 = vunpack.c.l.b16 %v108
  %v1860 = vunpack.c.h.b16 %v108
  %v1861 = vunpack.c.l.b16 %v109
  %v1862 = vunpack.c.h.b16 %v109
  %v1863 = vunpack.c.l.b16 %v110
  %v1864 = vunpack.c.h.b16 %v110
  %v1865 = vunpack.c.l.b16 %v111
  %v1866 = vunpack.c.h.b16 %v111
  %v1867 = vunpack.c.l.b16 %v112
  %v1868 = vunpack.c.h.b16 %v112
  %v1869 = vunpack.c.l.b16 %v113
  %v1870 = vunpack.c.h.b16 %v113
  %v1871 = vunpack.c.l.b16 %v114
  %v1872 = vunpack.c.h.b16 %v114
  %v1873 = vunpack.c.l.b16 %v115
  %v1874 = vunpack.c.h.b16 %v115
  %v1875 = vunpack.c.l.b16 %v116
  %v1876 = vunpack.c.h.b16 %v116
  %v1877 = vunpack.c.l.b16 %v117
  %v1878 = vunpack.c.h.b16 %v117
  %v1879 = vunpack.c.l.b16 %v118
  %v1880 = vunpack.c.h.b16 %v118
  %v1881 = vunpack.c.l.b16 %v119
  %v1882 = vunpack.c.h.b16 %v119
  %v1883 = vunpack.c.l.b16 %v120
  %v1884 = vunpack.c.h.b16 %v120
  %v1885 = vunpack.c.l.b16 %v121
  %v1886 = vunpack.c.h.b16 %v121
  %v1887 = vunpack.c.l.b16 %v122
  %v1888 = vunpack.c.h.b16 %v122
  %v1889 = vunpack.c.l.b16 %v123
  %v1890 = vunpack.c.h.b16 %v123
  %v1891 = vunpack.c.l.b16 %v124
  %v1892 = vunpack.c.h.b16 %v124
  %v1893 = vunpack.c.l.b16 %v125
  %v1894 = vunpack.c.h.b16 %v125
  %v1895 = vunpack.c.l.b16 %v126
  %v1896 = vunpack.c.h.b16 %v126
  %v1897 = vunpack.c.l.b16 %v127
  %v1898 = vunpack.c.h.b16 %v127
  %v1899 = vunpack.c.l.b16 %v128
  %v1900 = vunpack.c.h.b16 %v128
  %v1901 = vunpack.c.l.b16 %v129
  %v1902 = vunpack.c.h.b16 %v129
  %v1903 = vunpack.c.l.b16 %v130
  %v1904 = vunpack.c.h.b16 %v130
  %v1905 = vunpack.c.l.b16 %v131
  %v1906 = vunpack.c.h.b16 %v131
  %v1907 = vunpack.c.l.b16 %v132
  %v1908 = vunpack.c.h.b16 %v132
  %v1909 = vunpack.c.l.b16 %v133
  %v1910 = vunpack.c.h.b16 %v133
  %v1911 = vunpack.c.l.b16 %v134
  %v1912 = vunpack.c.h.b16 %v134
  %v1913 = vunpack.c.l.b16 %v135
  %v1914 = vunpack.c.h.b16 %v135
  %v1915 = vunpack.c.l.b16 %v136
  %v1916 = vunpack.c.h.b16 %v136
  %v1917 = vunpack.c.l.b16 %v137
  %v1918 = vunpack.c.h.b16 %v137
  %v1919 = vunpack.c.l.b16 %v138
  %v1920 = vunpack.c.h.b16 %v138
  %v1921 = vunpack.c.l.b16 %v139
  %v1922 = vunpack.c.h.b16 %v139
  %v1923 = vunpack.c.l.b16 %v140
  %v1924 = vunpack.c.h.b16 %v140
  %v1925 = vunpack.c.l.b16 %v141
  %v1926 = vunpack.c.h.b16 %v141
  %v1927 = vunpack.c.l.b16 %v142
  %v1928 = vunpack.c.h.b16 %v142
  %v1929 = vunpack.c.l.b16 %v143
  %v1930 = vunpack.c.h.b16 %v143
  %v1931 = vunpack.c.l.b16 %v144
  %v1932 = vunpack.c.h.b16 %v144
  %v1933 = vunpack.c.l.b16 %v145
  %v1934 = vunpack.c.h.b16 %v145
  %v1935 = vunpack.c.l.b16 %v146
  %v1936 = vunpack.c.h.b16 %v146
  %v1937 = vunpack.c.l.b16 %v147
  %v1938 = vunpack.c.h.b16 %v147
  %v1939 = vunpack.c.l.b16 %v148
  %v1940 = vunpack.c.h.b16 %v148
  %v1941 = vunpack.c.l.b16 %v149
  %v1942 = vunpack.c.h.b16 %v149
  %v1943 = vunpack.c.l.b16 %v150
  %v1944 = vunpack.c.h.b16 %v150
  %v1945 = vunpack.c.l.b16 %v151
  %v1946 = vunpack.c.h.b16 %v151
  %v1947 = vunpack.c.l.b16 %v152
  %v1948 = vunpack.c.h.b16 %v152
  %v1949 = vunpack.c.l.b16 %v153
  %v1950 = vunpack.c.h.b16 %v153
  %v1951 = vunpack.c.l.b16 %v154
  %v1952 = vunpack.c.h.b16 %v154
  %v1953 = vunpack.c.l.b16 %v155
  %v1954 = vunpack.c.h.b16 %v155
  %v1955 = vunpack.c.l.b16 %v156
  %v1956 = vunpack.c.h.b16 %v156
  %v1957 = vunpack.c.l.b16 %v157
  %v1958 = vunpack.c.h.b16 %v157
  %v1959 = vunpack.c.l.b16 %v158
  %v1960 = vunpack.c.h.b16 %v158
  %v1961 = vunpack.c.l.b16 %v159
  %v1962 = vunpack.c.h.b16 %v159
  %v1963 = vunpack.c.l.b16 %v160
  %v1964 = vunpack.c.h.b16 %v160
  %v1965 = vunpack.c.l.b16 %v161
  %v1966 = vunpack.c.h.b16 %v161
  %v1967 = vunpack.c.l.b16 %v162
  %v1968 = vunpack.c.h.b16 %v162
  %v1969 = vunpack.c.l.b16 %v163
  %v1970 = vunpack.c.h.b16 %v163
  %v1971 = vunpack.c.l.b16 %v164
  %v1972 = vunpack.c.h.b16 %v164
  %v1973 = vunpack.c.l.b16 %v165
  %v1974 = vunpack.c.h.b16 %v165
  %v1975 = vunpack.c.l.b16 %v166
  %v1976 = vunpack.c.h.b16 %v166
  %v1977 = vunpack.c.l.b16 %v167
  %v1978 = vunpack.c.h.b16 %v167
  %v1979 = vunpack.c.l.b16 %v168
  %v1980 = vunpack.c.h.b16 %v168
  %v1981 = vunpack.c.l.b16 %v169
  %v1982 = vunpack.c.h.b16 %v169
  %v1983 = vunpack.c.l.b16 %v170
  %v1984 = vunpack.c.h.b16 %v170
  %v1985 = vunpack.c.l.b16 %v171
  %v1986 = vunpack.c.h.b16 %v171
  %v1987 = vunpack.c.l.b16 %v172
  %v1988 = vunpack.c.h.b16 %v172
  %v1989 = vunpack.c.l.b16 %v173
  %v1990 = vunpack.c.h.b16 %v173
  %v1991 = vunpack.c.l.b16 %v174
  %v1992 = vunpack.c.h.b16 %v174
  %v1993 = vunpack.c.l.b16 %v175
  %v1994 = vunpack.c.h.b16 %v175
  %v1995 = vunpack.c.l.b16 %v176
  %v1996 = vunpack.c.h.b16 %v176
  %v1997 = vunpack.c.l.b16 %v177
  %v1998 = vunpack.c.h.b16 %v177
  %v1999 = vunpack.c.l.b16 %v178
  %v2000 = vunpack.c.h.b16 %v178
  %v2001 = vunpack.c.l.b16 %v179
  %v2002 = vunpack.c.h.b16 %v179
  %v2003 = vunpack.c.l.b16 %v180
  %v2004 = vunpack.c.h.b16 %v180
  %v2005 = vunpack.c.l.b16 %v181
  %v2006 = vunpack.c.h.b16 %v181
  %v2007 = vunpack.c.l.b16 %v182
  %v2008 = vunpack.c.h.b16 %v182
  %v2009 = vunpack.c.l.b16 %v183
  %v2010 = vunpack.c.h.b16 %v183
  %v2011 = vunpack.c.l.b16 %v184
  %v2012 = vunpack.c.h.b16 %v184
  %v2013 = vunpack.c.l.b16 %v185
  %v2014 = vunpack.c.h.b16 %v185
  %v2015 = vunpack.c.l.b16 %v186
  %v2016 = vunpack.c.h.b16 %v186
  %v2017 = vunpack.c.l.b16 %v187
  %v2018 = vunpack.c.h.b16 %v187
  %v2019 = vunpack.c.l.b16 %v188
  %v2020 = vunpack.c.h.b16 %v188
  %v2021 = vunpack.c.l.b16 %v189
  %v2022 = vunpack.c.h.b16 %v189
  %v2023 = vunpack.c.l.b16 %v190
  %v2024 = vunpack.c.h.b16 %v190
  %v2025 = vunpack.c.l.b16 %v191
  %v2026 = vunpack.c.h.b16 %v191
  %v2027 = vunpack.c.l.b16 %v192
  %v2028 = vunpack.c.h.b16 %v192
  %v2029 = vunpack.c.l.b16 %v193
  %v2030 = vunpack.c.h.b16 %v193
  %v2031 = vunpack.c.l.b16 %v194
  %v2032 = vunpack.c.h.b16 %v194
  %v2033 = vunpack.c.l.b16 %v195
  %v2034 = vunpack.c.h.b16 %v195
  %v2035 = vunpack.c.l.b16 %v196
  %v2036 = vunpack.c.h.b16 %v196
  %v2037 = vunpack.c.l.b16 %v197
  %v2038 = vunpack.c.h.b16 %v197
  %v2039 = vunpack.c.l.b16 %v198
  %v2040 = vunpack.c.h.b16 %v198
  %v2041 = vunpack.c.l.b16 %v199
  %v2042 = vunpack.c.h.b16 %v199
  %v2043 = vunpack.c.l.b16 %v200
  %v2044 = vunpack.c.h.b16 %v200
  %v2045 = vunpack.c.l.b16 %v201
  %v2046 = vunpack.c.h.b16 %v201
  %v2047 = vunpack.c.l.b16 %v202
  %v2048 = vunpack.c.h.b16 %v202
  %v2049 = vunpack.c.l.b16 %v203
  %v2050 = vunpack.c.h.b16 %v203
  %v2051 = vunpack.c.l.b16 %v204
  %v2052 = vunpack.c.h.b16 %v204
  %v2053 = vunpack.c.l.b16 %v205
  %v2054 = vunpack.c.h.b16 %v205
  %v2055 = vunpack.c.l.b16 %v206
  %v2056 = vunpack.c.h.b16 %v206
  %v2057 = vunpack.c.l.b16 %v207
  %v2058 = vunpack.c.h.b16 %v207
  %v2059 = vunpack.c.l.b16 %v208
  %v2060 = vunpack.c.h.b16 %v208
  %v2061 = vunpack.c.l.b16 %v209
  %v2062 = vunpack.c.h.b16 %v209
  %v2063 = vunpack.c.l.b16 %v210
  %v2064 = vunpack.c.h.b16 %v210
  %v2065 = vunpack.c.l.b16 %v211
  %v2066 = vunpack.c.h.b16 %v211
  %v2067 = vunpack.c.l.b16 %v212
  %v2068 = vunpack.c.h.b16 %v212
  %v2069 = vunpack.c.l.b16 %v213
  %v2070 = vunpack.c.h.b16 %v213
  %v2071 = vunpack.c.l.b16 %v214
  %v2072 = vunpack.c.h.b16 %v214
  %v2073 = vunpack.c.l.b16 %v215
  %v2074 = vunpack.c.h.b16 %v215
  %v2075 = vunpack.c.l.b16 %v216
  %v2076 = vunpack.c.h.b16 %v216
  %v2077 = vunpack.c.l.b16 %v217
  %v2078 = vunpack.c.h.b16 %v217
  %v2079 = vunpack.c.l.b16 %v218
  %v2080 = vunpack.c.h.b16 %v218
  %v2081 = vunpack.c.l.b16 %v219
  %v2082 = vunpack.c.h.b16 %v219
  %v2083 = vunpack.c.l.b16 %v220
  %v2084 = vunpack.c.h.b16 %v220
  %v2085 = vunpack.c.l.b16 %v221
  %v2086 = vunpack.c.h.b16 %v221
  %v2087 = vunpack.c.l.b16 %v222
  %v2088 = vunpack.c.h.b16 %v222
  %v2089 = vunpack.c.l.b16 %v223
  %v2090 = vunpack.c.h.b16 %v223
  %v2091 = vunpack.c.l.b16 %v224
  %v2092 = vunpack.c.h.b16 %v224
  %v2093 = vunpack.c.l.b16 %v225
  %v2094 = vunpack.c.h.b16 %v225
  %v2095 = vunpack.c.l.b16 %v226
  %v2096 = vunpack.c.h.b16 %v226
  %v2097 = vunpack.c.l.b16 %v227
  %v2098 = vunpack.c.h.b16 %v227
  %v2099 = vunpack.c.l.b16 %v228
  %v2100 = vunpack.c.h.b16 %v228
  %v2101 = vunpack.c.l.b16 %v229
  %v2102 = vunpack.c.h.b16 %v229
  %v2103 = vunpack.c.l.b16 %v230
  %v2104 = vunpack.c.h.b16 %v230
  %v2105 = vunpack.c.l.b16 %v231
  %v2106 = vunpack.c.h.b16 %v231
  %v2107 = vunpack.c.l.b16 %v232
  %v2108 = vunpack.c.h.b16 %v232
  %v2109 = vunpack.c.l.b16 %v233
  %v2110 = vunpack.c.h.b16 %v233
  %v2111 = vunpack.c.l.b16 %v234
  %v2112 = vunpack.c.h.b16 %v234
  %v2113 = vunpack.c.l.b16 %v235
  %v2114 = vunpack.c.h.b16 %v235
  %v2115 = vunpack.c.l.b16 %v236
  %v2116 = vunpack.c.h.b16 %v236
  %v2117 = vunpack.c.l.b16 %v237
  %v2118 = vunpack.c.h.b16 %v237
  %v2119 = vunpack.c.l.b16 %v238
  %v2120 = vunpack.c.h.b16 %v238
  %v2121 = vunpack.c.l.b16 %v239
  %v2122 = vunpack.c.h.b16 %v239
  %v2123 = vunpack.c.l.b16 %v240
  %v2124 = vunpack.c.h.b16 %v240
  %v2125 = vunpack.c.l.b16 %v241
  %v2126 = vunpack.c.h.b16 %v241
  %v2127 = vunpack.c.l.b16 %v242
  %v2128 = vunpack.c.h.b16 %v242
  %v2129 = vunpack.c.l.b16 %v243
  %v2130 = vunpack.c.h.b16 %v243
  %v2131 = vunpack.c.l.b16 %v244
  %v2132 = vunpack.c.h.b16 %v244
  %v2133 = vunpack.c.l.b16 %v245
  %v2134 = vunpack.c.h.b16 %v245
  %v2135 = vunpack.c.l.b16 %v246
  %v2136 = vunpack.c.h.b16 %v246
  %v2137 = vunpack.c.l.b16 %v247
  %v2138 = vunpack.c.h.b16 %v247
  %v2139 = vunpack.c.l.b16 %v248
  %v2140 = vunpack.c.h.b16 %v248
  %v2141 = vunpack.c.l.b16 %v249
  %v2142 = vunpack.c.h.b16 %v249
  %v2143 = vunpack.c.l.b16 %v250
  %v2144 = vunpack.c.h.b16 %v250
  %v2145 = vunpack.c.l.b16 %v251
  %v2146 = vunpack.c.h.b16 %v251
  %v2147 = vunpack.c.l.b16 %v252
  %v2148 = vunpack.c.h.b16 %v252
  %v2149 = vunpack.c.l.b16 %v253
  %v2150 = vunpack.c.h.b16 %v253
  %v2151 = vunpack.c.l.b16 %v254
  %v2152 = vunpack.c.h.b16 %v254
  %v2153 = vunpack.c.l.b16 %v255
  %v2154 = vunpack.c.h.b16 %v255
  %v2155 = vunpack.c.l.b16 %v256
  %v2156 = vunpack.c.h.b16 %v256
  %v2157 = vunpack.c.l.b16 %v257
  %v2158 = vunpack.c.h.b16 %v257
  %v2159 = vunpack.c.l.b16 %v258
  %v2160 = vunpack.c.h.b16 %v258
  %v2161 = vunpack.c.l.b16 %v259
  %v2162 = vunpack.c.h.b16 %v259
  %v2163 = vunpack.c.l.b16 %v260
  %v2164 = vunpack.c.h.b16 %v260
  %v2165 = vunpack.c.l.b16 %v261
  %v2166 = vunpack.c.h.b16 %v261
  %v2167 = vunpack.c.l.b16 %v262
  %v2168 = vunpack.c.h.b16 %v262
  %v2169 = vunpack.c.l.b16 %v263
  %v2170 = vunpack.c.h.b16 %v263
  %v2171 = vunpack.c.l.b16 %v264
  %v2172 = vunpack.c.h.b16 %v264
  %v2173 = vunpack.c.l.b16 %v265
  %v2174 = vunpack.c.h.b16 %v265
  %v2175 = vunpack.c.l.b16 %v266
  %v2176 = vunpack.c.h.b16 %v266
  %v2177 = vunpack.c.l.b16 %v267
  %v2178 = vunpack.c.h.b16 %v267
  %v2179 = vunpack.c.l.b16 %v268
  %v2180 = vunpack.c.h.b16 %v268
  %v2181 = vunpack.c.l.b16 %v269
  %v2182 = vunpack.c.h.b16 %v269
  %v2183 = vunpack.c.l.b16 %v270
  %v2184 = vunpack.c.h.b16 %v270
  %v2185 = vunpack.c.l.b16 %v271
  %v2186 = vunpack.c.h.b16 %v271
  %v2187 = vunpack.c.l.b16 %v272
  %v2188 = vunpack.c.h.b16 %v272
  %v2189 = vunpack.c.l.b16 %v273
  %v2190 = vunpack.c.h.b16 %v273
  %v2191 = vunpack.c.l.b16 %v274
  %v2192 = vunpack.c.h.b16 %v274
  %v2193 = vunpack.c.l.b16 %v275
  %v2194 = vunpack.c.h.b16 %v275
  %v2195 = vunpack.c.l.b16 %v276
  %v2196 = vunpack.c.h.b16 %v276
  %v2197 = vunpack.c.l.b16 %v277
  %v2198 = vunpack.c.h.b16 %v277
  %v2199 = vunpack.c.l.b16 %v278
  %v2200 = vunpack.c.h.b16 %v278
  %v2201 = vunpack.c.l.b16 %v279
  %v2202 = vunpack.c.h.b16 %v279
  %v2203 = vunpack.c.l.b16 %v280
  %v2204 = vunpack.c.h.b16 %v280
  %v2205 = vunpack.c.l.b16 %v281
  %v2206 = vunpack.c.h.b16 %v281
  %v2207 = vunpack.c.l.b16 %v282
  %v2208 = vunpack.c.h.b16 %v282
  %v2209 = vunpack.c.l.b16 %v283
  %v2210 = vunpack.c.h.b16 %v283
  %v2211 = vunpack.c.l.b16 %v284
  %v2212 = vunpack.c.h.b16 %v284
  %v2213 = vunpack.c.l.b16 %v285
  %v2214 = vunpack.c.h.b16 %v285
  %v2215 = vunpack.c.l.b16 %v286
  %v2216 = vunpack.c.h.b16 %v286
  %v2217 = vunpack.c.l.b16 %v287
  %v2218 = vunpack.c.h.b16 %v287
  %v2219 = vunpack.c.l.b16 %v288
  %v2220 = vunpack.c.h.b16 %v288
  %v2221 = vunpack.c.l.b16 %v289
  %v2222 = vunpack.c.h.b16 %v289
  %v2223 = vunpack.c.l.b16 %v290
  %v2224 = vunpack.c.h.b16 %v290
  %v2225 = vunpack.c.l.b16 %v291
  %v2226 = vunpack.c.h.b16 %v291
  %v2227 = vunpack.c.l.b16 %v292
  %v2228 = vunpack.c.h.b16 %v292
  %v2229 = vunpack.c.l.b16 %v293
  %v2230 = vunpack.c.h.b16 %v293
  %v2231 = vunpack.c.l.b16 %v294
  %v2232 = vunpack.c.h.b16 %v294
  %v2233 = vunpack.c.l.b16 %v295
  %v2234 = vunpack.c.h.b16 %v295
  %v2235 = vunpack.c.l.b16 %v296
  %v2236 = vunpack.c.h.b16 %v296
  %v2237 = vunpack.c.l.b16 %v297
  %v2238 = vunpack.c.h.b16 %v297
  %v2239 = vunpack.c.l.b16 %v298
  %v2240 = vunpack.c.h.b16 %v298
  %v2241 = vunpack.c.l.b16 %v299
  %v2242 = vunpack.c.h.b16 %v299
  %v2243 = vunpack.c.l.b16 %v300
  %v2244 = vunpack.c.h.b16 %v300
  %v2245 = vunpack.c.l.b16 %v301
  %v2246 = vunpack.c.h.b16 %v301
  %v2247 = vunpack.c.l.b16 %v302
  %v2248 = vunpack.c.h.b16 %v302
  %v2249 = vunpack.c.l.b16 %v303
  %v2250 = vunpack.c.h.b16 %v303
  %v2251 = vunpack.c.l.b16 %v304
  %v2252 = vunpack.c.h.b16 %v304
  %v2253 = vunpack.c.l.b16 %v305
  %v2254 = vunpack.c.h.b16 %v305
  %v2255 = vunpack.c.l.b16 %v306
  %v2256 = vunpack.c.h.b16 %v306
  %v2257 = vunpack.c.l.b16 %v307
  %v2258 = vunpack.c.h.b16 %v307
  %v2259 = vunpack.c.l.b16 %v308
  %v2260 = vunpack.c.h.b16 %v308
  %v2261 = vunpack.c.l.b16 %v309
  %v2262 = vunpack.c.h.b16 %v309
  %v2263 = vunpack.c.l.b16 %v310
  %v2264 = vunpack.c.h.b16 %v310
  %v2265 = vunpack.c.l.b16 %v311
  %v2266 = vunpack.c.h.b16 %v311
  %v2267 = vunpack.c.l.b16 %v312
  %v2268 = vunpack.c.h.b16 %v312
  %v2269 = vunpack.c.l.b16 %v313
  %v2270 = vunpack.c.h.b16 %v313
  %v2271 = vunpack.c.l.b16 %v314
  %v2272 = vunpack.c.h.b16 %v314
  %v2273 = vunpack.c.l.b16 %v315
  %v2274 = vunpack.c.h.b16 %v315
  %v2275 = vunpack.c.l.b16 %v316
  %v2276 = vunpack.c.h.b16 %v316
  %v2277 = vunpack.c.l.b16 %v317
  %v2278 = vunpack.c.h.b16 %v317
  %v2279 = vunpack.c.l.b16 %v318
  %v2280 = vunpack.c.h.b16 %v318
  %v2281 = vunpack.c.l.b16 %v319
  %v2282 = vunpack.c.h.b16 %v319
  %v2283 = vunpack.c.l.b16 %v320
  %v2284 = vunpack.c.h.b16 %v320
  %v2285 = vunpack.c.l.b16 %v321
  %v2286 = vunpack.c.h.b16 %v321
  %v2287 = vunpack.c.l.b16 %v322
  %v2288 = vunpack.c.h.b16 %v322
  %v2289 = vunpack.c.l.b16 %v323
  %v2290 = vunpack.c.h.b16 %v323
  %v2291 = vunpack.c.l.b16 %v324
  %v2292 = vunpack.c.h.b16 %v324
  %v2293 = vunpack.c.l.b16 %v325
  %v2294 = vunpack.c.h.b16 %v325
  %v2295 = vunpack.c.l.b16 %v326
  %v2296 = vunpack.c.h.b16 %v326
  %v2297 = vunpack.c.l.b16 %v327
  %v2298 = vunpack.c.h.b16 %v327
  %v2299 = vunpack.c.l.b16 %v328
  %v2300 = vunpack.c.h.b16 %v328
  %v2301 = vunpack.c.l.b16 %v329
  %v2302 = vunpack.c.h.b16 %v329
  %v2303 = vunpack.c.l.b16 %v330
  %v2304 = vunpack.c.h.b16 %v330
  %v2305 = vunpack.c.l.b16 %v331
  %v2306 = vunpack.c.h.b16 %v331
  %v2307 = vunpack.c.l.b16 %v332
  %v2308 = vunpack.c.h.b16 %v332
  %v2309 = vunpack.c.l.b16 %v333
  %v2310 = vunpack.c.h.b16 %v333
  %v2311 = vunpack.c.l.b16 %v334
  %v2312 = vunpack.c.h.b16 %v334
  %v2313 = vunpack.c.l.b16 %v335
  %v2314 = vunpack.c.h.b16 %v335
  %v2315 = vunpack.c.l.b16 %v336
  %v2316 = vunpack.c.h.b16 %v336
  %v2317 = vunpack.c.l.b16 %v337
  %v2318 = vunpack.c.h.b16 %v337
  %v2319 = vunpack.c.l.b16 %v338
  %v2320 = vunpack.c.h.b16 %v338
  %v2321 = vunpack.c.l.b16 %v339
  %v2322 = vunpack.c.h.b16 %v339
  %v2323 = vunpack.c.l.b16 %v340
  %v2324 = vunpack.c.h.b16 %v340
  %v2325 = vunpack.c.l.b16 %v341
  %v2326 = vunpack.c.h.b16 %v341
  %v2327 = vunpack.c.l.b16 %v342
  %v2328 = vunpack.c.h.b16 %v342
  %v2329 = vunpack.c.l.b16 %v343
  %v2330 = vunpack.c.h.b16 %v343
  %v2331 = vunpack.c.l.b16 %v344
  %v2332 = vunpack.c.h.b16 %v344
  %v2333 = vunpack.c.l.b16 %v345
  %v2334 = vunpack.c.h.b16 %v345
  %v2335 = vunpack.c.l.b16 %v346
  %v2336 = vunpack.c.h.b16 %v346
  %v2337 = vunpack.c.l.b16 %v347
  %v2338 = vunpack.c.h.b16 %v347
  %v2339 = vunpack.c.l.b16 %v348
  %v2340 = vunpack.c.h.b16 %v348
  %v2341 = vunpack.c.l.b16 %v349
  %v2342 = vunpack.c.h.b16 %v349
  %v2343 = vunpack.c.l.b16 %v350
  %v2344 = vunpack.c.h.b16 %v350
  %v2345 = vunpack.c.l.b16 %v351
  %v2346 = vunpack.c.h.b16 %v351
  %v2347 = vunpack.c.l.b16 %v352
  %v2348 = vunpack.c.h.b16 %v352
  %v2349 = vunpack.c.l.b16 %v353
  %v2350 = vunpack.c.h.b16 %v353
  %v2351 = vunpack.c.l.b16 %v354
  %v2352 = vunpack.c.h.b16 %v354
  %v2353 = vunpack.c.l.b16 %v355
  %v2354 = vunpack.c.h.b16 %v355
  %v2355 = vunpack.c.l.b16 %v356
  %v2356 = vunpack.c.h.b16 %v356
  %v2357 = vunpack.c.l.b16 %v357
  %v2358 = vunpack.c.h.b16 %v357
  %v2359 = vunpack.c.l.b16 %v358
  %v2360 = vunpack.c.h.b16 %v358
  %v2361 = vunpack.c.l.b16 %v359
  %v2362 = vunpack.c.h.b16 %v359
  %v2363 = vunpack.c.l.b16 %v360
  %v2364 = vunpack.c.h.b16 %v360
  %v2365 = vunpack.c.l.b16 %v361
  %v2366 = vunpack.c.h.b16 %v361
  %v2367 = vunpack.c.l.b16 %v362
  %v2368 = vunpack.c.h.b16 %v362
  %v2369 = vunpack.c.l.b16 %v363
  %v2370 = vunpack.c.h.b16 %v363
  %v2371 = vunpack.c.l.b16 %v364
  %v2372 = vunpack.c.h.b16 %v364
  %v2373 = vunpack.c.l.b16 %v365
  %v2374 = vunpack.c.h.b16 %v365
  %v2375 = vunpack.c.l.b16 %v366
  %v2376 = vunpack.c.h.b16 %v366
  %v2377 = vunpack.c.l.b16 %v367
  %v2378 = vunpack.c.h.b16 %v367
  %v2379 = vunpack.c.l.b16 %v368
  %v2380 = vunpack.c.h.b16 %v368
  %v2381 = vunpack.c.l.b16 %v369
  %v2382 = vunpack.c.h.b16 %v369
  %v2383 = vunpack.c.l.b16 %v370
  %v2384 = vunpack.c.h.b16 %v370
  %v2385 = vunpack.c.l.b16 %v371
  %v2386 = vunpack.c.h.b16 %v371
  %v2387 = vunpack.c.l.b16 %v372
  %v2388 = vunpack.c.h.b16 %v372
  %v2389 = vunpack.c.l.b16 %v373
  %v2390 = vunpack.c.h.b16 %v373
  %v2391 = vunpack.c.l.b16 %v374
  %v2392 = vunpack.c.h.b16 %v374
  %v2393 = vunpack.c.l.b16 %v375
  %v2394 = vunpack.c.h.b16 %v375
  %v2395 = vunpack.c.l.b16 %v376
  %v2396 = vunpack.c.h.b16 %v376
  %v2397 = vunpack.c.l.b16 %v377
  %v2398 = vunpack.c.h.b16 %v377
  %v2399 = vunpack.c.l.b16 %v378
  %v2400 = vunpack.c.h.b16 %v378
  %v2401 = vunpack.c.l.b16 %v379
  %v2402 = vunpack.c.h.b16 %v379
  %v2403 = vunpack.c.l.b16 %v380
  %v2404 = vunpack.c.h.b16 %v380
  %v2405 = vunpack.c.l.b16 %v381
  %v2406 = vunpack.c.h.b16 %v381
  %v2407 = vunpack.c.l.b16 %v382
  %v2408 = vunpack.c.h.b16 %v382
  %v2409 = vunpack.c.l.b16 %v383
  %v2410 = vunpack.c.h.b16 %v383
  %v2411 = vunpack.c.l.b16 %v384
  %v2412 = vunpack.c.h.b16 %v384
  %v2413 = vunpack.c.l.b16 %v385
  %v2414 = vunpack.c.h.b16 %v385
  %v2415 = vunpack.c.l.b16 %v386
  %v2416 = vunpack.c.h.b16 %v386
  %v2417 = vunpack.c.l.b16 %v387
  %v2418 = vunpack.c.h.b16 %v387
  %v2419 = vunpack.c.l.b16 %v388
  %v2420 = vunpack.c.h.b16 %v388
  %v2421 = vunpack.c.l.b16 %v389
  %v2422 = vunpack.c.h.b16 %v389
  %v2423 = vunpack.c.l.b16 %v390
  %v2424 = vunpack.c.h.b16 %v390
  %v2425 = vunpack.c.l.b16 %v391
  %v2426 = vunpack.c.h.b16 %v391
  %v2427 = vunpack.c.l.b16 %v392
  %v2428 = vunpack.c.h.b16 %v392
  %v2429 = vunpack.c.l.b16 %v393
  %v2430 = vunpack.c.h.b16 %v393
  %v2431 = vunpack.c.l.b16 %v394
  %v2432 = vunpack.c.h.b16 %v394
  %v2433 = vunpack.c.l.b16 %v395
  %v2434 = vunpack.c.h.b16 %v395
  %v2435 = vunpack.c.l.b16 %v396
  %v2436 = vunpack.c.h.b16 %v396
  %v2437 = vunpack.c.l.b16 %v397
  %v2438 = vunpack.c.h.b16 %v397
  %v2439 = vunpack.c.l.b16 %v398
  %v2440 = vunpack.c.h.b16 %v398
  %v2441 = vunpack.c.l.b16 %v399
  %v2442 = vunpack.c.h.b16 %v399
  %v2443 = vunpack.c.l.b16 %v400
  %v2444 = vunpack.c.h.b16 %v400
  %v2445 = vunpack.c.l.b16 %v401
  %v2446 = vunpack.c.h.b16 %v401
  %v2447 = vunpack.c.l.b16 %v402
  %v2448 = vunpack.c.h.b16 %v402
  %v2449 = vunpack.c.l.b16 %v403
  %v2450 = vunpack.c.h.b16 %v403
  %v2451 = vunpack.c.l.b16 %v404
  %v2452 = vunpack.c.h.b16 %v404
  %v2453 = vunpack.c.l.b16 %v405
  %v2454 = vunpack.c.h.b16 %v405
  %v2455 = vunpack.c.l.b16 %v406
  %v2456 = vunpack.c.h.b16 %v406
  %v2457 = vunpack.c.l.b16 %v407
  %v2458 = vunpack.c.h.b16 %v407
  %v2459 = vunpack.c.l.b16 %v408
  %v2460 = vunpack.c.h.b16 %v408
  %v2461 = vunpack.c.l.b16 %v409
  %v2462 = vunpack.c.h.b16 %v409
  %v2463 = vunpack.c.l.b16 %v410
  %v2464 = vunpack.c.h.b16 %v410
  %v2465 = vunpack.c.l.b16 %v411
  %v2466 = vunpack.c.h.b16 %v411
  %v2467 = vunpack.c.l.b16 %v412
  %v2468 = vunpack.c.h.b16 %v412
  %v2469 = vunpack.c.l.b16 %v413
  %v2470 = vunpack.c.h.b16 %v413
  %v2471 = vunpack.c.l.b16 %v414
  %v2472 = vunpack.c.h.b16 %v414
  %v2473 = vunpack.c.l.b16 %v415
  %v2474 = vunpack.c.h.b16 %v415
  %v2475 = vunpack.c.l.b16 %v416
  %v2476 = vunpack.c.h.b16 %v416
  %v2477 = vunpack.c.l.b16 %v417
  %v2478 = vunpack.c.h.b16 %v417
  %v2479 = vunpack.c.l.b16 %v418
  %v2480 = vunpack.c.h.b16 %v418
  %v2481 = vunpack.c.l.b16 %v419
  %v2482 = vunpack.c.h.b16 %v419
  %v2483 = vunpack.c.l.b16 %v420
  %v2484 = vunpack.c.h.b16 %v420
  %v2485 = vunpack.c.l.b16 %v421
  %v2486 = vunpack.c.h.b16 %v421
  %v2487 = vunpack.c.l.b16 %v422
  %v2488 = vunpack.c.h.b16 %v422
  %v2489 = vunpack.c.l.b16 %v423
  %v2490 = vunpack.c.h.b16 %v423
  %v2491 = vunpack.c.l.b16 %v424
  %v2492 = vunpack.c.h.b16 %v424
  %v2493 = vunpack.c.l.b16 %v425
  %v2494 = vunpack.c.h.b16 %v425
  %v2495 = vunpack.c.l.b16 %v426
  %v2496 = vunpack.c.h.b16 %v426
  %v2497 = vunpack.c.l.b16 %v427
  %v2498 = vunpack.c.h.b16 %v427
  %v2499 = vunpack.c.l.b16 %v428
  %v2500 = vunpack.c.h.b16 %v428
  %v2501 = vunpack.c.l.b16 %v429
  %v2502 = vunpack.c.h.b16 %v429
  %v2503 = vunpack.c.l.b16 %v430
  %v2504 = vunpack.c.h.b16 %v430
  %v2505 = vunpack.c.l.b16 %v431
  %v2506 = vunpack.c.h.b16 %v431
  %v2507 = vunpack.c.l.b16 %v432
  %v2508 = vunpack.c.h.b16 %v432
  %v2509 = vunpack.c.l.b16 %v433
  %v2510 = vunpack.c.h.b16 %v433
  %v2511 = vunpack.c.l.b16 %v434
  %v2512 = vunpack.c.h.b16 %v434
  %v2513 = vunpack.c.l.b16 %v435
  %v2514 = vunpack.c.h.b16 %v435
  %v2515 = vunpack.c.l.b16 %v436
  %v2516 = vunpack.c.h.b16 %v436
  %v2517 = vunpack.c.l.b16 %v437
  %v2518 = vunpack.c.h.b16 %v437
  %v2519 = vunpack.c.l.b16 %v438
  %v2520 = vunpack.c.h.b16 %v438
  %v2521 = vunpack.c.l.b16 %v439
  %v2522 = vunpack.c.h.b16 %v439
  %v2523 = vunpack.c.l.b16 %v440
  %v2524 = vunpack.c.h.b16 %v440
  %v2525 = vunpack.c.l.b16 %v441
  %v2526 = vunpack.c.h.b16 %v441
  %v2527 = vunpack.c.l.b16 %v442
  %v2528 = vunpack.c.h.b16 %v442
  %v2529 = vunpack.c.l.b16 %v443
  %v2530 = vunpack.c.h.b16 %v443
  %v2531 = vunpack.c.l.b16 %v444
  %v2532 = vunpack.c.h.b16 %v444
  %v2533 = vunpack.c.l.b16 %v445
  %v2534 = vunpack.c.h.b16 %v445
  %v2535 = vunpack.c.l.b16 %v446
  %v2536 = vunpack.c.h.b16 %v446
  %v2537 = vunpack.c.l.b16 %v447
  %v2538 = vunpack.c.h.b16 %v447
  %v2539 = vunpack.c.l.b16 %v448
  %v2540 = vunpack.c.h.b16 %v448
  %v2541 = vunpack.c.l.b16 %v449
  %v2542 = vunpack.c.h.b16 %v449
  %v2543 = vunpack.c.l.b16 %v450
  %v2544 = vunpack.c.h.b16 %v450
  %v2545 = vunpack.c.l.b16 %v451
  %v2546 = vunpack.c.h.b16 %v451
  %v2547 = vunpack.c.l.b16 %v452
  %v2548 = vunpack.c.h.b16 %v452
  %v2549 = vunpack.c.l.b16 %v453
  %v2550 = vunpack.c.h.b16 %v453
  %v2551 = vunpack.c.l.b16 %v454
  %v2552 = vunpack.c.h.b16 %v454
  %v2553 = vunpack.c.l.b16 %v455
  %v2554 = vunpack.c.h.b16 %v455
  %v2555 = vunpack.c.l.b16 %v456
  %v2556 = vunpack.c.h.b16 %v456
  %v2557 = vunpack.c.l.b16 %v457
  %v2558 = vunpack.c.h.b16 %v457
  %v2559 = vunpack.c.l.b16 %v458
  %v2560 = vunpack.c.h.b16 %v458
  %v2561 = vunpack.c.l.b16 %v459
  %v2562 = vunpack.c.h.b16 %v459
  %v2563 = vunpack.c.l.b16 %v460
  %v2564 = vunpack.c.h.b16 %v460
  %v2565 = vunpack.c.l.b16 %v461
  %v2566 = vunpack.c.h.b16 %v461
  %v2567 = vunpack.c.l.b16 %v462
  %v2568 = vunpack.c.h.b16 %v462
  %v2569 = vunpack.c.l.b16 %v463
  %v2570 = vunpack.c.h.b16 %v463
  %v2571 = vunpack.c.l.b16 %v464
  %v2572 = vunpack.c.h.b16 %v464
  %v2573 = vunpack.c.l.b16 %v465
  %v2574 = vunpack.c.h.b16 %v465
  %v2575 = vunpack.c.l.b16 %v466
  %v2576 = vunpack.c.h.b16 %v466
  %v2577 = vunpack.c.l.b16 %v467
  %v2578 = vunpack.c.h.b16 %v467
  %v2579 = vunpack.c.l.b16 %v468
  %v2580 = vunpack.c.h.b16 %v468
  %v2581 = vunpack.c.l.b16 %v469
  %v2582 = vunpack.c.h.b16 %v469
  %v2583 = vunpack.c.l.b16 %v470
  %v2584 = vunpack.c.h.b16 %v470
  %v2585 = vunpack.c.l.b16 %v471
  %v2586 = vunpack.c.h.b16 %v471
  %v2587 = vunpack.c.l.b16 %v472
  %v2588 = vunpack.c.h.b16 %v472
  %v2589 = vunpack.c.l.b16 %v473
  %v2590 = vunpack.c.h.b16 %v473
  %v2591 = vunpack.c.l.b16 %v474
  %v2592 = vunpack.c.h.b16 %v474
  %v2593 = vunpack.c.l.b16 %v475
  %v2594 = vunpack.c.h.b16 %v475
  %v2595 = vunpack.c.l.b16 %v476
  %v2596 = vunpack.c.h.b16 %v476
  %v2597 = vunpack.c.l.b16 %v477
  %v2598 = vunpack.c.h.b16 %v477
  %v2599 = vunpack.c.l.b16 %v478
  %v2600 = vunpack.c.h.b16 %v478
  %v2601 = vunpack.c.l.b16 %v479
  %v2602 = vunpack.c.h.b16 %v479
  %v2603 = vunpack.c.l.b16 %v480
  %v2604 = vunpack.c.h.b16 %v480
  %v2605 = vunpack.c.l.b16 %v481
  %v2606 = vunpack.c.h.b16 %v481
  %v2607 = vunpack.c.l.b16 %v482
  %v2608 = vunpack.c.h.b16 %v482
  %v2609 = vunpack.c.l.b16 %v483
  %v2610 = vunpack.c.h.b16 %v483
  %v2611 = vunpack.c.l.b16 %v484
  %v2612 = vunpack.c.h.b16 %v484
  %v2613 = vunpack.c.l.b16 %v485
  %v2614 = vunpack.c.h.b16 %v485
  %v2615 = vunpack.c.l.b16 %v486
  %v2616 = vunpack.c.h.b16 %v486
  %v2617 = vunpack.c.l.b16 %v487
  %v2618 = vunpack.c.h.b16 %v487
  %v2619 = vunpack.c.l.b16 %v488
  %v2620 = vunpack.c.h.b16 %v488
  %v2621 = vunpack.c.l.b16 %v489
  %v2622 = vunpack.c.h.b16 %v489
  %v2623 = vunpack.c.l.b16 %v490
  %v2624 = vunpack.c.h.b16 %v490
  %v2625 = vunpack.c.l.b16 %v491
  %v2626 = vunpack.c.h.b16 %v491
  %v2627 = vunpack.c.l.b16 %v492
  %v2628 = vunpack.c.h.b16 %v492
  %v2629 = vunpack.c.l.b16 %v493
  %v2630 = vunpack.c.h.b16 %v493
  %v2631 = vunpack.c.l.b16 %v494
  %v2632 = vunpack.c.h.b16 %v494
  %v2633 = vunpack.c.l.b16 %v495
  %v2634 = vunpack.c.h.b16 %v495
  %v2635 = vunpack.c.l.b16 %v496
  %v2636 = vunpack.c.h.b16 %v496
  %v2637 = vunpack.c.l.b16 %v497
  %v2638 = vunpack.c.h.b16 %v497
  %v2639 = vunpack.c.l.b16 %v498
  %v2640 = vunpack.c.h.b16 %v498
  %v2641 = vunpack.c.l.b16 %v499
  %v2642 = vunpack.c.h.b16 %v499
  %v2643 = vunpack.c.l.b16 %v500
  %v2644 = vunpack.c.h.b16 %v500
  %v2645 = vunpack.c.l.b16 %v501
  %v2646 = vunpack.c.h.b16 %v501
  %v2647 = vunpack.c.l.b16 %v502
  %v2648 = vunpack.c.h.b16 %v502
  %v2649 = vunpack.c.l.b16 %v503
  %v2650 = vunpack.c.h.b16 %v503
  %v2651 = vunpack.c.l.b16 %v504
  %v2652 = vunpack.c.h.b16 %v504
  %v2653 = vunpack.c.l.b16 %v505
  %v2654 = vunpack.c.h.b16 %v505
  %v2655 = vunpack.c.l.b16 %v506
  %v2656 = vunpack.c.h.b16 %v506
  %v2657 = vunpack.c.l.b16 %v507
  %v2658 = vunpack.c.h.b16 %v507
  %v2659 = vunpack.c.l.b16 %v508
  %v2660 = vunpack.c.h.b16 %v508
  %v2661 = vunpack.c.l.b16 %v509
  %v2662 = vunpack.c.h.b16 %v509
  %v2663 = vunpack.c.l.b16 %v510
  %v2664 = vunpack.c.h.b16 %v510
  %v2665 = vunpack.c.l.b16 %v511
  %v2666 = vunpack.c.h.b16 %v511
  %v2667 = vunpack.c.l.b16 %v512
  %v2668 = vunpack.c.h.b16 %v512
  %v2669 = vunpack.c.l.b16 %v513
  %v2670 = vunpack.c.h.b16 %v513
  %v2671 = vunpack.c.l.b16 %v514
  %v2672 = vunpack.c.h.b16 %v514
  %v2673 = vunpack.c.l.b16 %v515
  %v2674 = vunpack.c.h.b16 %v515
  %v2675 = vunpack.c.l.b16 %v516
  %v2676 = vunpack.c.h.b16 %v516
  %v2677 = vunpack.c.l.b16 %v517
  %v2678 = vunpack.c.h.b16 %v517
  %v2679 = vunpack.c.l.b16 %v518
  %v2680 = vunpack.c.h.b16 %v518
  %v2681 = vunpack.c.l.b16 %v519
  %v2682 = vunpack.c.h.b16 %v519
  %v2683 = vunpack.c.l.b16 %v520
  %v2684 = vunpack.c.h.b16 %v520
  %v2685 = vunpack.c.l.b16 %v521
  %v2686 = vunpack.c.h.b16 %v521
  %v2687 = vunpack.c.l.b16 %v522
  %v2688 = vunpack.c.h.b16 %v522
  %v2689 = vunpack.c.l.b16 %v523
  %v2690 = vunpack.c.h.b16 %v523
  %v2691 = vunpack.c.l.b16 %v524
  %v2692 = vunpack.c.h.b16 %v524
  %v2693 = vunpack.c.l.b16 %v525
  %v2694 = vunpack.c.h.b16 %v525
  %v2695 = vunpack.c.l.b16 %v526
  %v2696 = vunpack.c.h.b16 %v526
  %v2697 = vunpack.c.l.b16 %v527
  %v2698 = vunpack.c.h.b16 %v527
  %v2699 = vunpack.c.l.b16 %v528
  %v2700 = vunpack.c.h.b16 %v528
  %v2701 = vunpack.c.l.b16 %v529
  %v2702 = vunpack.c.h.b16 %v529
  %v2703 = vunpack.c.l.b16 %v530
  %v2704 = vunpack.c.h.b16 %v530
  %v2705 = vunpack.c.l.b16 %v531
  %v2706 = vunpack.c.h.b16 %v531
  %v2707 = vunpack.c.l.b16 %v532
  %v2708 = vunpack.c.h.b16 %v532
  %v2709 = vunpack.c.l.b16 %v533
  %v2710 = vunpack.c.h.b16 %v533
  %v2711 = vunpack.c.l.b16 %v534
  %v2712 = vunpack.c.h.b16 %v534
  %v2713 = vunpack.c.l.b16 %v535
  %v2714 = vunpack.c.h.b16 %v535
  %v2715 = vunpack.c.l.b16 %v536
  %v2716 = vunpack.c.h.b16 %v536
  %v2717 = vunpack.c.l.b16 %v537
  %v2718 = vunpack.c.h.b16 %v537
  %v2719 = vunpack.c.l.b16 %v538
  %v2720 = vunpack.c.h.b16 %v538
  %v2721 = vunpack.c.l.b16 %v539
  %v2722 = vunpack.c.h.b16 %v539
  %v2723 = vunpack.c.l.b16 %v540
  %v2724 = vunpack.c.h.b16 %v540
  %v2725 = vunpack.c.l.b16 %v541
  %v2726 = vunpack.c.h.b16 %v541
  %v2727 = vunpack.c.l.b16 %v542
  %v2728 = vunpack.c.h.b16 %v542
  %v2729 = vunpack.c.l.b16 %v543
  %v2730 = vunpack.c.h.b16 %v543
  %v2731 = vunpack.c.l.b16 %v544
  %v2732 = vunpack.c.h.b16 %v544
  %v2733 = vunpack.c.l.b16 %v545
  %v2734 = vunpack.c.h.b16 %v545
  %v2735 = vunpack.c.l.b16 %v546
  %v2736 = vunpack.c.h.b16 %v546
  %v2737 = vunpack.c.l.b16 %v547
  %v2738 = vunpack.c.h.b16 %v547
  %v2739 = vunpack.c.l.b16 %v548
  %v2740 = vunpack.c.h.b16 %v548
  %v2741 = vunpack.c.l.b16 %v549
  %v2742 = vunpack.c.h.b16 %v549
  %v2743 = vunpack.c.l.b16 %v550
  %v2744 = vunpack.c.h.b16 %v550
  %v2745 = vunpack.c.l.b16 %v551
  %v2746 = vunpack.c.h.b16 %v551
  %v2747 = vunpack.c.l.b16 %v552
  %v2748 = vunpack.c.h.b16 %v552
  %v2749 = vunpack.c.l.b16 %v553
  %v2750 = vunpack.c.h.b16 %v553
  %v2751 = vunpack.c.l.b16 %v554
  %v2752 = vunpack.c.h.b16 %v554
  %v2753 = vunpack.c.l.b16 %v555
  %v2754 = vunpack.c.h.b16 %v555
  %v2755 = vunpack.c.l.b16 %v556
  %v2756 = vunpack.c.h.b16 %v556
  %v2757 = vunpack.c.l.b16 %v557
  %v2758 = vunpack.c.h.b16 %v557
  %v2759 = vunpack.c.l.b16 %v558
  %v2760 = vunpack.c.h.b16 %v558
  %v2761 = vunpack.c.l.b16 %v559
  %v2762 = vunpack.c.h.b16 %v559
  %v2763 = vunpack.c.l.b16 %v560
  %v2764 = vunpack.c.h.b16 %v560
  %v2765 = vunpack.c.l.b16 %v561
  %v2766 = vunpack.c.h.b16 %v561
  %v2767 = vunpack.c.l.b16 %v562
  %v2768 = vunpack.c.h.b16 %v562
  %v2769 = vunpack.c.l.b16 %v563
  %v2770 = vunpack.c.h.b16 %v563
  %v2771 = vunpack.c.l.b16 %v564
  %v2772 = vunpack.c.h.b16 %v564
  %v2773 = vunpack.c.l.b16 %v565
  %v2774 = vunpack.c.h.b16 %v565
  %v2775 = vunpack.c.l.b16 %v566
  %v2776 = vunpack.c.h.b16 %v566
  %v2777 = vunpack.c.l.b16 %v567
  %v2778 = vunpack.c.h.b16 %v567
  %v2779 = vunpack.c.l.b16 %v568
  %v2780 = vunpack.c.h.b16 %v568
  %v2781 = vunpack.c.l.b16 %v569
  %v2782 = vunpack.c.h.b16 %v569
  %v2783 = vunpack.c.l.b16 %v570
  %v2784 = vunpack.c.h.b16 %v570
  %v2785 = vunpack.c.l.b16 %v571
  %v2786 = vunpack.c.h.b16 %v571
  %v2787 = vunpack.c.l.b16 %v572
  %v2788 = vunpack.c.h.b16 %v572
  %v2789 = vunpack.c.l.b16 %v573
  %v2790 = vunpack.c.h.b16 %v573
  %v2791 = vunpack.c.l.b16 %v574
  %v2792 = vunpack.c.h.b16 %v574
  %v2793 = vunpack.c.l.b16 %v575
  %v2794 = vunpack.c.h.b16 %v575
  %v2795 = vunpack.c.l.b16 %v576
  %v2796 = vunpack.c.h.b16 %v576
  %v2797 = vunpack.c.l.b16 %v577
  %v2798 = vunpack.c.h.b16 %v577
  %v2799 = vunpack.c.l.b16 %v578
  %v2800 = vunpack.c.h.b16 %v578
  %v2801 = vunpack.c.l.b16 %v579
  %v2802 = vunpack.c.h.b16 %v579
  %v2803 = vunpack.c.l.b16 %v580
  %v2804 = vunpack.c.h.b16 %v580
  %v2805 = vunpack.c.l.b16 %v581
  %v2806 = vunpack.c.h.b16 %v581
  %v2807 = vunpack.c.l.b16 %v582
  %v2808 = vunpack.c.h.b16 %v582
  %v2809 = vunpack.c.l.b16 %v583
  %v2810 = vunpack.c.h.b16 %v583
  %v2811 = vunpack.c.l.b16 %v584
  %v2812 = vunpack.c.h.b16 %v584
  %v2813 = vunpack.c.l.b16 %v585
  %v2814 = vunpack.c.h.b16 %v585
  %v2815 = vunpack.c.l.b16 %v586
  %v2816 = vunpack.c.h.b16 %v586
  %v2817 = vunpack.c.l.b16 %v587
  %v2818 = vunpack.c.h.b16 %v587
  %v2819 = vunpack.c.l.b16 %v588
  %v2820 = vunpack.c.h.b16 %v588
  %v2821 = vunpack.c.l.b16 %v589
  %v2822 = vunpack.c.h.b16 %v589
  %v2823 = vunpack.c.l.b16 %v590
  %v2824 = vunpack.c.h.b16 %v590
  %v2825 = vunpack.c.l.b16 %v591
  %v2826 = vunpack.c.h.b16 %v591
  %v2827 = vunpack.c.l.b16 %v592
  %v2828 = vunpack.c.h.b16 %v592
  %v2829 = vunpack.c.l.b16 %v593
  %v2830 = vunpack.c.h.b16 %v593
  %v2831 = vunpack.c.l.b16 %v594
  %v2832 = vunpack.c.h.b16 %v594
  %v2833 = vunpack.c.l.b16 %v595
  %v2834 = vunpack.c.h.b16 %v595
  %v2835 = vunpack.c.l.b16 %v596
  %v2836 = vunpack.c.h.b16 %v596
  %v2837 = vunpack.c.l.b16 %v597
  %v2838 = vunpack.c.h.b16 %v597
  %v2839 = vunpack.c.l.b16 %v598
  %v2840 = vunpack.c.h.b16 %v598
  %v2841 = vunpack.c.l.b16 %v599
  %v2842 = vunpack.c.h.b16 %v599
  %v2843 = vunpack.c.l.b16 %v600
  %v2844 = vunpack.c.h.b16 %v600
  %v2845 = vunpack.c.l.b16 %v601
  %v2846 = vunpack.c.h.b16 %v601
  %v2847 = vunpack.c.l.b16 %v602
  %v2848 = vunpack.c.h.b16 %v602
  %v2849 = vunpack.c.l.b16 %v603
  %v2850 = vunpack.c.h.b16 %v603
  %v2851 = vunpack.c.l.b16 %v604
  %v2852 = vunpack.c.h.b16 %v604
  %v2853 = vunpack.c.l.b16 %v605
  %v2854 = vunpack.c.h.b16 %v605
  %v2855 = vunpack.c.l.b16 %v606
  %v2856 = vunpack.c.h.b16 %v606
  %v2857 = vunpack.c.l.b16 %v607
  %v2858 = vunpack.c.h.b16 %v607
  %v2859 = vunpack.c.l.b16 %v608
  %v2860 = vunpack.c.h.b16 %v608
  %v2861 = vunpack.c.l.b16 %v609
  %v2862 = vunpack.c.h.b16 %v609
  %v2863 = vunpack.c.l.b16 %v610
  %v2864 = vunpack.c.h.b16 %v610
  %v2865 = vunpack.c.l.b16 %v611
  %v2866 = vunpack.c.h.b16 %v611
  %v2867 = vunpack.c.l.b16 %v612
  %v2868 = vunpack.c.h.b16 %v612
  %v2869 = vunpack.c.l.b16 %v613
  %v2870 = vunpack.c.h.b16 %v613
  %v2871 = vunpack.c.l.b16 %v614
  %v2872 = vunpack.c.h.b16 %v614
  %v2873 = vunpack.c.l.b16 %v615
  %v2874 = vunpack.c.h.b16 %v615
  %v2875 = vunpack.c.l.b16 %v616
  %v2876 = vunpack.c.h.b16 %v616
  %v2877 = vunpack.c.l.b16 %v617
  %v2878 = vunpack.c.h.b16 %v617
  %v2879 = vunpack.c.l.b16 %v618
  %v2880 = vunpack.c.h.b16 %v618
  %v2881 = vunpack.c.l.b16 %v619
  %v2882 = vunpack.c.h.b16 %v619
  %v2883 = vunpack.c.l.b16 %v620
  %v2884 = vunpack.c.h.b16 %v620
  %v2885 = vunpack.c.l.b16 %v621
  %v2886 = vunpack.c.h.b16 %v621
  %v2887 = vunpack.c.l.b16 %v622
  %v2888 = vunpack.c.h.b16 %v622
  %v2889 = vunpack.c.l.b16 %v623
  %v2890 = vunpack.c.h.b16 %v623
  %v2891 = vunpack.c.l.b16 %v624
  %v2892 = vunpack.c.h.b16 %v624
  %v2893 = vunpack.c.l.b16 %v625
  %v2894 = vunpack.c.h.b16 %v625
  %v2895 = vunpack.c.l.b16 %v626
  %v2896 = vunpack.c.h.b16 %v626
  %v2897 = vunpack.c.l.b16 %v627
  %v2898 = vunpack.c.h.b16 %v627
  %v2899 = vunpack.c.l.b16 %v628
  %v2900 = vunpack.c.h.b16 %v628
  %v2901 = vunpack.c.l.b16 %v629
  %v2902 = vunpack.c.h.b16 %v629
  %v2903 = vunpack.c.l.b16 %v630
  %v2904 = vunpack.c.h.b16 %v630
  %v2905 = vunpack.c.l.b16 %v631
  %v2906 = vunpack.c.h.b16 %v631
  %v2907 = vunpack.c.l.b16 %v632
  %v2908 = vunpack.c.h.b16 %v632
  %v2909 = vunpack.c.l.b16 %v633
  %v2910 = vunpack.c.h.b16 %v633
  %v2911 = vunpack.c.l.b16 %v634
  %v2912 = vunpack.c.h.b16 %v634
  %v2913 = vunpack.c.l.b16 %v635
  %v2914 = vunpack.c.h.b16 %v635
  %v2915 = vunpack.c.l.b16 %v636
  %v2916 = vunpack.c.h.b16 %v636
  %v2917 = vunpack.c.l.b16 %v637
  %v2918 = vunpack.c.h.b16 %v637
  %v2919 = vunpack.c.l.b16 %v638
  %v2920 = vunpack.c.h.b16 %v638
  %v2921 = vunpack.c.l.b16 %v639
  %v2922 = vunpack.c.h.b16 %v639
  %v2923 = vunpack.c.l.b16 %v640
  %v2924 = vunpack.c.h.b16 %v640
  %v2925 = vunpack.c.l.b16 %v641
  %v2926 = vunpack.c.h.b16 %v641
  %v2927 = vunpack.c.l.b16 %v642
  %v2928 = vunpack.c.h.b16 %v642
  %v2929 = vunpack.c.l.b16 %v643
  %v2930 = vunpack.c.h.b16 %v643
  %v2931 = vunpack.c.l.b16 %v644
  %v2932 = vunpack.c.h.b16 %v644
  %v2933 = vunpack.c.l.b16 %v645
  %v2934 = vunpack.c.h.b16 %v645
  %v2935 = vunpack.c.l.b16 %v646
  %v2936 = vunpack.c.h.b16 %v646
  %v2937 = vunpack.c.l.b16 %v647
  %v2938 = vunpack.c.h.b16 %v647
  %v2939 = vunpack.c.l.b16 %v648
  %v2940 = vunpack.c.h.b16 %v648
  %v2941 = vunpack.c.l.b16 %v649
  %v2942 = vunpack.c.h.b16 %v649
  %v2943 = vunpack.c.l.b16 %v650
  %v2944 = vunpack.c.h.b16 %v650
  %v2945 = vunpack.c.l.b16 %v651
  %v2946 = vunpack.c.h.b16 %v651
  %v2947 = vunpack.c.l.b16 %v652
  %v2948 = vunpack.c.h.b16 %v652
  %v2949 = vunpack.c.l.b16 %v653
  %v2950 = vunpack.c.h.b16 %v653
  %v2951 = vunpack.c.l.b16 %v654
  %v2952 = vunpack.c.h.b16 %v654
  %v2953 = vunpack.c.l.b16 %v655
  %v2954 = vunpack.c.h.b16 %v655
  %v2955 = vunpack.c.l.b16 %v656
  %v2956 = vunpack.c.h.b16 %v656
  %v2957 = vunpack.c.l.b16 %v657
  %v2958 = vunpack.c.h.b16 %v657
  %v2959 = vunpack.c.l.b16 %v658
  %v2960 = vunpack.c.h.b16 %v658
  %v2961 = vunpack.c.l.b16 %v659
  %v2962 = vunpack.c.h.b16 %v659
  %v2963 = vunpack.c.l.b16 %v660
  %v2964 = vunpack.c.h.b16 %v660
  %v2965 = vunpack.c.l.b16 %v661
  %v2966 = vunpack.c.h.b16 %v661
  %v2967 = vunpack.c.l.b16 %v662
  %v2968 = vunpack.c.h.b16 %v662
  %v2969 = vunpack.c.l.b16 %v663
  %v2970 = vunpack.c.h.b16 %v663
  %v2971 = vunpack.c.l.b16 %v664
  %v2972 = vunpack.c.h.b16 %v664
  %v2973 = vunpack.c.l.b16 %v665
  %v2974 = vunpack.c.h.b16 %v665
  %v2975 = vunpack.c.l.b16 %v666
  %v2976 = vunpack.c.h.b16 %v666
  %v2977 = vunpack.c.l.b16 %v667
  %v2978 = vunpack.c.h.b16 %v667
  %v2979 = vunpack.c.l.b16 %v668
  %v2980 = vunpack.c.h.b16 %v668
  %v2981 = vunpack.c.l.b16 %v669
  %v2982 = vunpack.c.h.b16 %v669
  %v2983 = vunpack.c.l.b16 %v670
  %v2984 = vunpack.c.h.b16 %v670
  %v2985 = vunpack.c.l.b16 %v671
  %v2986 = vunpack.c.h.b16 %v671
  %v2987 = vunpack.c.l.b16 %v672
  %v2988 = vunpack.c.h.b16 %v672
  %v2989 = vunpack.c.l.b16 %v673
  %v2990 = vunpack.c.h.b16 %v673
  %v2991 = vunpack.c.l.b16 %v674
  %v2992 = vunpack.c.h.b16 %v674
  %v2993 = vunpack.c.l.b16 %v675
  %v2994 = vunpack.c.h.b16 %v675
  %v2995 = vunpack.c.l.b16 %v676
  %v2996 = vunpack.c.h.b16 %v676
  %v2997 = vunpack.c.l.b16 %v677
  %v2998 = vunpack.c.h.b16 %v677
  %v2999 = vunpack.c.l.b16 %v678
  %v3000 = vunpack.c.h.b16 %v678
  %v3001 = vunpack.c.l.b16 %v679
  %v3002 = vunpack.c.h.b16 %v679
  %v3003 = vunpack.c.l.b16 %v680
  %v3004 = vunpack.c.h.b16 %v680
  %v3005 = vunpack.c.l.b16 %v681
  %v3006 = vunpack.c.h.b16 %v681
  %v3007 = vunpack.c.l.b16 %v682
  %v3008 = vunpack.c.h.b16 %v682
  %v3009 = vunpack.c.l.b16 %v683
  %v3010 = vunpack.c.h.b16 %v683
  %v3011 = vunpack.c.l.b16 %v684
  %v3012 = vunpack.c.h.b16 %v684
  %v3013 = vunpack.c.l.b16 %v685
  %v3014 = vunpack.c.h.b16 %v685
  %v3015 = vunpack.c.l.b16 %v686
  %v3016 = vunpack.c.h.b16 %v686
  %v3017 = vunpack.c.l.b16 %v687
  %v3018 = vunpack.c.h.b16 %v687
  %v3019 = vunpack.c.l.b16 %v688
  %v3020 = vunpack.c.h.b16 %v688
  %v3021 = vunpack.c.l.b16 %v689
  %v3022 = vunpack.c.h.b16 %v689
  %v3023 = vunpack.c.l.b16 %v690
  %v3024 = vunpack.c.h.b16 %v690
  %v3025 = vunpack.c.l.b16 %v691
  %v3026 = vunpack.c.h.b16 %v691
  %v3027 = vunpack.c.l.b16 %v692
  %v3028 = vunpack.c.h.b16 %v692
  %v3029 = vunpack.c.l.b16 %v693
  %v3030 = vunpack.c.h.b16 %v693
  %v3031 = vunpack.c.l.b16 %v694
  %v3032 = vunpack.c.h.b16 %v694
  %v3033 = vunpack.c.l.b16 %v695
  %v3034 = vunpack.c.h.b16 %v695
  %v3035 = vunpack.c.l.b16 %v696
  %v3036 = vunpack.c.h.b16 %v696
  %v3037 = vunpack.c.l.b16 %v697
  %v3038 = vunpack.c.h.b16 %v697
  %v3039 = vunpack.c.l.b16 %v698
  %v3040 = vunpack.c.h.b16 %v698
  %v3041 = vunpack.c.l.b16 %v699
  %v3042 = vunpack.c.h.b16 %v699
  %v3043 = vunpack.c.l.b16 %v700
  %v3044 = vunpack.c.h.b16 %v700
  %v3045 = vunpack.c.l.b16 %v701
  %v3046 = vunpack.c.h.b16 %v701
  %v3047 = vunpack.c.l.b16 %v702
  %v3048 = vunpack.c.h.b16 %v702
  %v3049 = vunpack.c.l.b16 %v703
  %v3050 = vunpack.c.h.b16 %v703
  %v3051 = vunpack.c.l.b16 %v704
  %v3052 = vunpack.c.h.b16 %v704
  %v3053 = vunpack.c.l.b16 %v705
  %v3054 = vunpack.c.h.b16 %v705
  %v3055 = vunpack.c.l.b16 %v706
  %v3056 = vunpack.c.h.b16 %v706
  %v3057 = vunpack.c.l.b16 %v707
  %v3058 = vunpack.c.h.b16 %v707
  %v3059 = vunpack.c.l.b16 %v708
  %v3060 = vunpack.c.h.b16 %v708
  %v3061 = vunpack.c.l.b16 %v709
  %v3062 = vunpack.c.h.b16 %v709
  %v3063 = vunpack.c.l.b16 %v710
  %v3064 = vunpack.c.h.b16 %v710
  %v3065 = vunpack.c.l.b16 %v711
  %v3066 = vunpack.c.h.b16 %v711
  %v3067 = vunpack.c.l.b16 %v712
  %v3068 = vunpack.c.h.b16 %v712
  %v3069 = vunpack.c.l.b16 %v713
  %v3070 = vunpack.c.h.b16 %v713
  %v3071 = vunpack.c.l.b16 %v714
  %v3072 = vunpack.c.h.b16 %v714
  %v3073 = vunpack.c.l.b16 %v715
  %v3074 = vunpack.c.h.b16 %v715
  %v3075 = vunpack.c.l.b16 %v716
  %v3076 = vunpack.c.h.b16 %v716
  %v3077 = vunpack.c.l.b16 %v717
  %v3078 = vunpack.c.h.b16 %v717
  %v3079 = vunpack.c.l.b16 %v718
  %v3080 = vunpack.c.h.b16 %v718
  %v3081 = vunpack.c.l.b16 %v719
  %v3082 = vunpack.c.h.b16 %v719
  %v3083 = vunpack.c.l.b16 %v720
  %v3084 = vunpack.c.h.b16 %v720
  %v3085 = vunpack.c.l.b16 %v721
  %v3086 = vunpack.c.h.b16 %v721
  %v3087 = vunpack.c.l.b16 %v722
  %v3088 = vunpack.c.h.b16 %v722
  %v3089 = vunpack.c.l.b16 %v723
  %v3090 = vunpack.c.h.b16 %v723
  %v3091 = vunpack.c.l.b16 %v724
  %v3092 = vunpack.c.h.b16 %v724
  %v3093 = vunpack.c.l.b16 %v725
  %v3094 = vunpack.c.h.b16 %v725
  %v3095 = vunpack.c.l.b16 %v726
  %v3096 = vunpack.c.h.b16 %v726
  %v3097 = vunpack.c.l.b16 %v727
  %v3098 = vunpack.c.h.b16 %v727
  %v3099 = vunpack.c.l.b16 %v728
  %v3100 = vunpack.c.h.b16 %v728
  %v3101 = vunpack.c.l.b16 %v729
  %v3102 = vunpack.c.h.b16 %v729
  %v3103 = vunpack.c.l.b16 %v730
  %v3104 = vunpack.c.h.b16 %v730
  %v3105 = vunpack.c.l.b16 %v731
  %v3106 = vunpack.c.h.b16 %v731
  %v3107 = vunpack.c.l.b16 %v732
  %v3108 = vunpack.c.h.b16 %v732
  %v3109 = vunpack.c.l.b16 %v733
  %v3110 = vunpack.c.h.b16 %v733
  %v3111 = vunpack.c.l.b16 %v734
  %v3112 = vunpack.c.h.b16 %v734
  %v3113 = vunpack.c.l.b16 %v735
  %v3114 = vunpack.c.h.b16 %v735
  %v3115 = vunpack.c.l.b16 %v736
  %v3116 = vunpack.c.h.b16 %v736
  %v3117 = vunpack.c.l.b16 %v737
  %v3118 = vunpack.c.h.b16 %v737
  %v3119 = vunpack.c.l.b16 %v738
  %v3120 = vunpack.c.h.b16 %v738
  %v3121 = vunpack.c.l.b16 %v739
  %v3122 = vunpack.c.h.b16 %v739
  %v3123 = vunpack.c.l.b16 %v740
  %v3124 = vunpack.c.h.b16 %v740
  %v3125 = vunpack.c.l.b16 %v741
  %v3126 = vunpack.c.h.b16 %v741
  %v3127 = vunpack.c.l.b16 %v742
  %v3128 = vunpack.c.h.b16 %v742
  %v3129 = vunpack.c.l.b16 %v743
  %v3130 = vunpack.c.h.b16 %v743
  %v3131 = vunpack.c.l.b16 %v744
  %v3132 = vunpack.c.h.b16 %v744
  %v3133 = vunpack.c.l.b16 %v745
  %v3134 = vunpack.c.h.b16 %v745
  %v3135 = vunpack.c.l.b16 %v746
  %v3136 = vunpack.c.h.b16 %v746
  %v3137 = vunpack.c.l.b16 %v747
  %v3138 = vunpack.c.h.b16 %v747
  %v3139 = vunpack.c.l.b16 %v748
  %v3140 = vunpack.c.h.b16 %v748
  %v3141 = vunpack.c.l.b16 %v749
  %v3142 = vunpack.c.h.b16 %v749
  %v3143 = vunpack.c.l.b16 %v750
  %v3144 = vunpack.c.h.b16 %v750
  %v3145 = vunpack.c.l.b16 %v751
  %v3146 = vunpack.c.h.b16 %v751
  %v3147 = vunpack.c.l.b16 %v752
  %v3148 = vunpack.c.h.b16 %v752
  %v3149 = vunpack.c.l.b16 %v753
  %v3150 = vunpack.c.h.b16 %v753
  %v3151 = vunpack.c.l.b16 %v754
  %v3152 = vunpack.c.h.b16 %v754
  %v3153 = vunpack.c.l.b16 %v755
  %v3154 = vunpack.c.h.b16 %v755
  %v3155 = vunpack.c.l.b16 %v756
  %v3156 = vunpack.c.h.b16 %v756
  %v3157 = vunpack.c.l.b16 %v757
  %v3158 = vunpack.c.h.b16 %v757
  %v3159 = vunpack.c.l.b16 %v758
  %v3160 = vunpack.c.h.b16 %v758
  %v3161 = vunpack.c.l.b16 %v759
  %v3162 = vunpack.c.h.b16 %v759
  %v3163 = vunpack.c.l.b16 %v760
  %v3164 = vunpack.c.h.b16 %v760
  %v3165 = vunpack.c.l.b16 %v761
  %v3166 = vunpack.c.h.b16 %v761
  %v3167 = vunpack.c.l.b16 %v762
  %v3168 = vunpack.c.h.b16 %v762
  %v3169 = vunpack.c.l.b16 %v763
  %v3170 = vunpack.c.h.b16 %v763
  %v3171 = vunpack.c.l.b16 %v764
  %v3172 = vunpack.c.h.b16 %v764
  %v3173 = vunpack.c.l.b16 %v765
  %v3174 = vunpack.c.h.b16 %v765
  %v3175 = vunpack.c.l.b16 %v766
  %v3176 = vunpack.c.h.b16 %v766
  %v3177 = vunpack.c.l.b16 %v767
  %v3178 = vunpack.c.h.b16 %v767
  %v3179 = vunpack.c.l.b16 %v768
  %v3180 = vunpack.c.h.b16 %v768
  %v3181 = vunpack.c.l.b16 %v769
  %v3182 = vunpack.c.h.b16 %v769
  %v3183 = vunpack.c.l.b16 %v770
  %v3184 = vunpack.c.h.b16 %v770
  %v3185 = vunpack.c.l.b16 %v771
  %v3186 = vunpack.c.h.b16 %v771
  %v3187 = vunpack.c.l.b16 %v772
  %v3188 = vunpack.c.h.b16 %v772
  %v3189 = vunpack.c.l.b16 %v773
  %v3190 = vunpack.c.h.b16 %v773
  %v3191 = vunpack.c.l.b16 %v774
  %v3192 = vunpack.c.h.b16 %v774
  %v3193 = vunpack.c.l.b16 %v775
  %v3194 = vunpack.c.h.b16 %v775
  %v3195 = vunpack.c.l.b16 %v776
  %v3196 = vunpack.c.h.b16 %v776
  %v3197 = vunpack.c.l.b16 %v777
  %v3198 = vunpack.c.h.b16 %v777
  %v3199 = vunpack.c.l.b16 %v778
  %v3200 = vunpack.c.h.b16 %v778
  %v3201 = vunpack.c.l.b16 %v779
  %v3202 = vunpack.c.h.b16 %v779
  %v3203 = vunpack.c.l.b16 %v780
  %v3204 = vunpack.c.h.b16 %v780
  %v3205 = vunpack.c.l.b16 %v781
  %v3206 = vunpack.c.h.b16 %v781
  %v3207 = vunpack.c.l.b16 %v782
  %v3208 = vunpack.c.h.b16 %v782
  %v3209 = vunpack.c.l.b16 %v783
  %v3210 = vunpack.c.h.b16 %v783
  %v3211 = vunpack.c.l.b16 %v784
  %v3212 = vunpack.c.h.b16 %v784
  %v3213 = vunpack.c.l.b16 %v785
  %v3214 = vunpack.c.h.b16 %v785
  %v3215 = vunpack.c.l.b16 %v786
  %v3216 = vunpack.c.h.b16 %v786
  %v3217 = vunpack.c.l.b16 %v787
  %v3218 = vunpack.c.h.b16 %v787
  %v3219 = vunpack.c.l.b16 %v788
  %v3220 = vunpack.c.h.b16 %v788
  %v3221 = vunpack.c.l.b16 %v789
  %v3222 = vunpack.c.h.b16 %v789
  %v3223 = vunpack.c.l.b16 %v790
  %v3224 = vunpack.c.h.b16 %v790
  %v3225 = vunpack.c.l.b16 %v791
  %v3226 = vunpack.c.h.b16 %v791
  %v3227 = vunpack.c.l.b16 %v792
  %v3228 = vunpack.c.h.b16 %v792
  %v3229 = vunpack.c.l.b16 %v793
  %v3230 = vunpack.c.h.b16 %v793
  %v3231 = vunpack.c.l.b16 %v794
  %v3232 = vunpack.c.h.b16 %v794
  %v3233 = vunpack.c.l.b16 %v795
  %v3234 = vunpack.c.h.b16 %v795
  %v3235 = vunpack.c.l.b16 %v796
  %v3236 = vunpack.c.h.b16 %v796
  %v3237 = vunpack.c.l.b16 %v797
  %v3238 = vunpack.c.h.b16 %v797
  %v3239 = vunpack.c.l.b16 %v798
  %v3240 = vunpack.c.h.b16 %v798
  %v3241 = vunpack.c.l.b16 %v799
  %v3242 = vunpack.c.h.b16 %v799
  %v3243 = vunpack.c.l.b16 %v800
  %v3244 = vunpack.c.h.b16 %v800
  %v3245 = vunpack.c.l.b16 %v801
  %v3246 = vunpack.c.h.b16 %v801
  %v3247 = vunpack.c.l.b16 %v802
  %v3248 = vunpack.c.h.b16 %v802
  %v3249 = vunpack.c.l.b16 %v803
  %v3250 = vunpack.c.h.b16 %v803
  %v3251 = vunpack.c.l.b16 %v804
  %v3252 = vunpack.c.h.b16 %v804
  %v3253 = vunpack.c.l.b16 %v805
  %v3254 = vunpack.c.h.b16 %v805
  %v3255 = vunpack.c.l.b16 %v806
  %v3256 = vunpack.c.h.b16 %v806
  %v3257 = vunpack.c.l.b16 %v807
  %v3258 = vunpack.c.h.b16 %v807
  %v3259 = vunpack.c.l.b16 %v808
  %v3260 = vunpack.c.h.b16 %v808
  %v3261 = vunpack.c.l.b16 %v809
  %v3262 = vunpack.c.h.b16 %v809
  %v3263 = vunpack.c.l.b16 %v810
  %v3264 = vunpack.c.h.b16 %v810
  %v3265 = vunpack.c.l.b16 %v811
  %v3266 = vunpack.c.h.b16 %v811
  %v3267 = vunpack.c.l.b16 %v812
  %v3268 = vunpack.c.h.b16 %v812
  %v3269 = vunpack.c.l.b16 %v813
  %v3270 = vunpack.c.h.b16 %v813
  %v3271 = vunpack.c.l.b16 %v814
  %v3272 = vunpack.c.h.b16 %v814
  %v3273 = vunpack.c.l.b16 %v815
  %v3274 = vunpack.c.h.b16 %v815
  %v3275 = vunpack.c.l.b16 %v816
  %v3276 = vunpack.c.h.b16 %v816
  %v3277 = vunpack.c.l.b16 %v817
  %v3278 = vunpack.c.h.b16 %v817
  %v3279 = vpack.c.b16 %v1715, %v1711
  %v3280 = vpack.c.b16 %v1716, %v1712
  %v3281 = vpack.c.b16 %v1717, %v1713
  %v3282 = vpack.c.b16 %v1718, %v1714
  %v3283 = vpack.c.b16 %v1723, %v1719
  %v3284 = vpack.c.b16 %v1724, %v1720
  %v3285 = vpack.c.b16 %v1725, %v1721
  %v3286 = vpack.c.b16 %v1726, %v1722
  %v3287 = vpack.c.b16 %v1731, %v1727
  %v3288 = vpack.c.b16 %v1732, %v1728
  %v3289 = vpack.c.b16 %v1733, %v1729
  %v3290 = vpack.c.b16 %v1734, %v1730
  %v3291 = vpack.c.b16 %v1739, %v1735
  %v3292 = vpack.c.b16 %v1740, %v1736
  %v3293 = vpack.c.b16 %v1741, %v1737
  %v3294 = vpack.c.b16 %v1742, %v1738
  %v3295 = vpack.c.b16 %v1747, %v1743
  %v3296 = vpack.c.b16 %v1748, %v1744
  %v3297 = vpack.c.b16 %v1749, %v1745
  %v3298 = vpack.c.b16 %v1750, %v1746
  %v3299 = vpack.c.b16 %v1755, %v1751
  %v3300 = vpack.c.b16 %v1756, %v1752
  %v3301 = vpack.c.b16 %v1757, %v1753
  %v3302 = vpack.c.b16 %v1758, %v1754
  %v3303 = vpack.c.b16 %v1763, %v1759
  %v3304 = vpack.c.b16 %v1764, %v1760
  %v3305 = vpack.c.b16 %v1765, %v1761
  %v3306 = vpack.c.b16 %v1766, %v1762
  %v3307 = vpack.c.b16 %v1771, %v1767
  %v3308 = vpack.c.b16 %v1772, %v1768
  %v3309 = vpack.c.b16 %v1773, %v1769
  %v3310 = vpack.c.b16 %v1774, %v1770
  %v3311 = vpack.c.b16 %v1779, %v1775
  %v3312 = vpack.c.b16 %v1780, %v1776
  %v3313 = vpack.c.b16 %v1781, %v1777
  %v3314 = vpack.c.b16 %v1782, %v1778
  %v3315 = vpack.c.b16 %v1787, %v1783
  %v3316 = vpack.c.b16 %v1788, %v1784
  %v3317 = vpack.c.b16 %v1789, %v1785
  %v3318 = vpack.c.b16 %v1790, %v1786
  %v3319 = vpack.c.b16 %v1795, %v1791
  %v3320 = vpack.c.b16 %v1796, %v1792
  %v3321 = vpack.c.b16 %v1797, %v1793
  %v3322 = vpack.c.b16 %v1798, %v1794
  %v3323 = vpack.c.b16 %v1803, %v1799
  %v3324 = vpack.c.b16 %v1804, %v1800
  %v3325 = vpack.c.b16 %v1805, %v1801
  %v3326 = vpack.c.b16 %v1806, %v1802
  %v3327 = vpack.c.b16 %v1811, %v1807
  %v3328 = vpack.c.b16 %v1812, %v1808
  %v3329 = vpack.c.b16 %v1813, %v1809
  %v3330 = vpack.c.b16 %v1814, %v1810
  %v3331 = vpack.c.b16 %v1819, %v1815
  %v3332 = vpack.c.b16 %v1820, %v1816
  %v3333 = vpack.c.b16 %v1821, %v1817
  %v3334 = vpack.c.b16 %v1822, %v1818
  %v3335 = vpack.c.b16 %v1827, %v1823
  %v3336 = vpack.c.b16 %v1828, %v1824
  %v3337 = vpack.c.b16 %v1829, %v1825
  %v3338 = vpack.c.b16 %v1830, %v1826
  %v3339 = vpack.c.b16 %v1835, %v1831
  %v3340 = vpack.c.b16 %v1836, %v1832
  %v3341 = vpack.c.b16 %v1837, %v1833
  %v3342 = vpack.c.b16 %v1838, %v1834
  %v3343 = vpack.c.b16 %v1843, %v1839
  %v3344 = vpack.c.b16 %v1844, %v1840
  %v3345 = vpack.c.b16 %v1845, %v1841
  %v3346 = vpack.c.b16 %v1846, %v1842
  %v3347 = vpack.c.b16 %v1851, %v1847
  %v3348 = vpack.c.b16 %v1852, %v1848
  %v3349 = vpack.c.b16 %v1853, %v1849
  %v3350 = vpack.c.b16 %v1854, %v1850
  %v3351 = vpack.c.b16 %v1859, %v1855
  %v3352 = vpack.c.b16 %v1860, %v1856
  %v3353 = vpack.c.b16 %v1861, %v1857
  %v3354 = vpack.c.b16 %v1862, %v1858
  %v3355 = vpack.c.b16 %v1867, %v1863
  %v3356 = vpack.c.b16 %v1868, %v1864
  %v3357 = vpack.c.b16 %v1869, %v1865
  %v3358 = vpack.c.b16 %v1870, %v1866
  %v3359 = vpack.c.b16 %v1875, %v1871
  %v3360 = vpack.c.b16 %v1876, %v1872
  %v3361 = vpack.c.b16 %v1877, %v1873
  %v3362 = vpack.c.b16 %v1878, %v1874
  %v3363 = vpack.c.b16 %v1883, %v1879
  %v3364 = vpack.c.b16 %v1884, %v1880
  %v3365 = vpack.c.b16 %v1885, %v1881
  %v3366 = vpack.c.b16 %v1886, %v1882
  %v3367 = vpack.c.b16 %v1891, %v1887
  %v3368 = vpack.c.b16 %v1892, %v1888
  %v3369 = vpack.c.b16 %v1893, %v1889
  %v3370 = vpack.c.b16 %v1894, %v1890
  %v3371 = vpack.c.b16 %v1899, %v1895
  %v3372 = vpack.c.b16 %v1900, %v1896
  %v3373 = vpack.c.b16 %v1901, %v1897
  %v3374 = vpack.c.b16 %v1902, %v1898
  %v3375 = vpack.c.b16 %v1907, %v1903
  %v3376 = vpack.c.b16 %v1908, %v1904
  %v3377 = vpack.c.b16 %v1909, %v1905
  %v3378 = vpack.c.b16 %v1910, %v1906
  %v3379 = vpack.c.b16 %v1915, %v1911
  %v3380 = vpack.c.b16 %v1916, %v1912
  %v3381 = vpack.c.b16 %v1917, %v1913
  %v3382 = vpack.c.b16 %v1918, %v1914
  %v3383 = vpack.c.b16 %v1923, %v1919
  %v3384 = vpack.c.b16 %v1924, %v1920
  %v3385 = vpack.c.b16 %v1925, %v1921
  %v3386 = vpack.c.b16 %v1926, %v1922
  %v3387 = vpack.c.b16 %v1931, %v1927
  %v3388 = vpack.c.b16 %v1932, %v1928
  %v3389 = vpack.c.b16 %v1933, %v1929
  %v3390 = vpack.c.b16 %v1934, %v1930
  %v3391 = vpack.c.b16 %v1939, %v1935
  %v3392 = vpack.c.b16 %v1940, %v1936
  %v3393 = vpack.c.b16 %v1941, %v1937
  %v3394 = vpack.c.b16 %v1942, %v1938
  %v3395 = vpack.c.b16 %v1947, %v1943
  %v3396 = vpack.c.b16 %v1948, %v1944
  %v3397 = vpack.c.b16 %v1949, %v1945
  %v3398 = vpack.c.b16 %v1950, %v1946
  %v3399 = vpack.c.b16 %v1955, %v1951
  %v3400 = vpack.c.b16 %v1956, %v1952
  %v3401 = vpack.c.b16 %v1957, %v1953
  %v3402 = vpack.c.b16 %v1958, %v1954
  %v3403 = vpack.c.b16 %v1963, %v1959
  %v3404 = vpack.c.b16 %v1964, %v1960
  %v3405 = vpack.c.b16 %v1965, %v1961
  %v3406 = vpack.c.b16 %v1966, %v1962
  %v3407 = vpack.c.b16 %v1971, %v1967
  %v3408 = vpack.c.b16 %v1972, %v1968
  %v3409 = vpack.c.b16 %v1973, %v1969
  %v3410 = vpack.c.b16 %v1974, %v1970
  %v3411 = vpack.c.b16 %v1979, %v1975
  %v3412 = vpack.c.b16 %v1980, %v1976
  %v3413 = vpack.c.b16 %v1981, %v1977
  %v3414 = vpack.c.b16 %v1982, %v1978
  %v3415 = vpack.c.b16 %v1987, %v1983
  %v3416 = vpack.c.b16 %v1988, %v1984
  %v3417 = vpack.c.b16 %v1989, %v1985
  %v3418 = vpack.c.b16 %v1990, %v1986
  %v3419 = vpack.c.b16 %v1995, %v1991
  %v3420 = vpack.c.b16 %v1996, %v1992
  %v3421 = vpack.c.b16 %v1997, %v1993
  %v3422 = vpack.c.b16 %v1998, %v1994
  %v3423 = vpack.c.b16 %v2003, %v1999
  %v3424 = vpack.c.b16 %v2004, %v2000
  %v3425 = vpack.c.b16 %v2005, %v2001
  %v3426 = vpack.c.b16 %v2006, %v2002
  %v3427 = vpack.c.b16 %v2011, %v2007
  %v3428 = vpack.c.b16 %v2012, %v2008
  %v3429 = vpack.c.b16 %v2013, %v2009
  %v3430 = vpack.c.b16 %v2014, %v2010
  %v3431 = vpack.c.b16 %v2019, %v2015
  %v3432 = vpack.c.b16 %v2020, %v2016
  %v3433 = vpack.c.b16 %v2021, %v2017
  %v3434 = vpack.c.b16 %v2022, %v2018
  %v3435 = vpack.c.b16 %v2027, %v2023
  %v3436 = vpack.c.b16 %v2028, %v2024
  %v3437 = vpack.c.b16 %v2029, %v2025
  %v3438 = vpack.c.b16 %v2030, %v2026
  %v3439 = vpack.c.b16 %v2035, %v2031
  %v3440 = vpack.c.b16 %v2036, %v2032
  %v3441 = vpack.c.b16 %v2037, %v2033
  %v3442 = vpack.c.b16 %v2038, %v2034
  %v3443 = vpack.c.b16 %v2043, %v2039
  %v3444 = vpack.c.b16 %v2044, %v2040
  %v3445 = vpack.c.b16 %v2045, %v2041
  %v3446 = vpack.c.b16 %v2046, %v2042
  %v3447 = vpack.c.b16 %v2051, %v2047
  %v3448 = vpack.c.b16 %v2052, %v2048
  %v3449 = vpack.c.b16 %v2053, %v2049
  %v3450 = vpack.c.b16 %v2054, %v2050
  %v3451 = vpack.c.b16 %v2059, %v2055
  %v3452 = vpack.c.b16 %v2060, %v2056
  %v3453 = vpack.c.b16 %v2061, %v2057
  %v3454 = vpack.c.b16 %v2062, %v2058
  %v3455 = vpack.c.b16 %v2067, %v2063
  %v3456 = vpack.c.b16 %v2068, %v2064
  %v3457 = vpack.c.b16 %v2069, %v2065
  %v3458 = vpack.c.b16 %v2070, %v2066
  %v3459 = vpack.c.b16 %v2075, %v2071
  %v3460 = vpack.c.b16 %v2076, %v2072
  %v3461 = vpack.c.b16 %v2077, %v2073
  %v3462 = vpack.c.b16 %v2078, %v2074
  %v3463 = vpack.c.b16 %v2083, %v2079
  %v3464 = vpack.c.b16 %v2084, %v2080
  %v3465 = vpack.c.b16 %v2085, %v2081
  %v3466 = vpack.c.b16 %v2086, %v2082
  %v3467 = vpack.c.b16 %v2091, %v2087
  %v3468 = vpack.c.b16 %v2092, %v2088
  %v3469 = vpack.c.b16 %v2093, %v2089
  %v3470 = vpack.c.b16 %v2094, %v2090
  %v3471 = vpack.c.b16 %v2099, %v2095
  %v3472 = vpack.c.b16 %v2100, %v2096
  %v3473 = vpack.c.b16 %v2101, %v2097
  %v3474 = vpack.c.b16 %v2102, %v2098
  %v3475 = vpack.c.b16 %v2107, %v2103
  %v3476 = vpack.c.b16 %v2108, %v2104
  %v3477 = vpack.c.b16 %v2109, %v2105
  %v3478 = vpack.c.b16 %v2110, %v2106
  %v3479 = vpack.c.b16 %v2115, %v2111
  %v3480 = vpack.c.b16 %v2116, %v2112
  %v3481 = vpack.c.b16 %v2117, %v2113
  %v3482 = vpack.c.b16 %v2118, %v2114
  %v3483 = vpack.c.b16 %v2123, %v2119
  %v3484 = vpack.c.b16 %v2124, %v2120
  %v3485 = vpack.c.b16 %v2125, %v2121
  %v3486 = vpack.c.b16 %v2126, %v2122
  %v3487 = vpack.c.b16 %v2131, %v2127
  %v3488 = vpack.c.b16 %v2132, %v2128
  %v3489 = vpack.c.b16 %v2133, %v2129
  %v3490 = vpack.c.b16 %v2134, %v2130
  %v3491 = vpack.c.b16 %v2139, %v2135
  %v3492 = vpack.c.b16 %v2140, %v2136
  %v3493 = vpack.c.b16 %v2141, %v2137
  %v3494 = vpack.c.b16 %v2142, %v2138
  %v3495 = vpack.c.b16 %v2147, %v2143
  %v3496 = vpack.c.b16 %v2148, %v2144
  %v3497 = vpack.c.b16 %v2149, %v2145
  %v3498 = vpack.c.b16 %v2150, %v2146
  %v3499 = vpack.c.b16 %v2155, %v2151
  %v3500 = vpack.c.b16 %v2156, %v2152
  %v3501 = vpack.c.b16 %v2157, %v2153
  %v3502 = vpack.c.b16 %v2158, %v2154
  %v3503 = vpack.c.b16 %v2163, %v2159
  %v3504 = vpack.c.b16 %v2164, %v2160
  %v3505 = vpack.c.b16 %v2165, %v2161
  %v3506 = vpack.c.b16 %v2166, %v2162
  %v3507 = vpack.c.b16 %v2171, %v2167
  %v3508 = vpack.c.b16 %v2172, %v2168
  %v3509 = vpack.c.b16 %v2173, %v2169
  %v3510 = vpack.c.b16 %v2174, %v2170
  %v3511 = vpack.c.b16 %v2179, %v2175
  %v3512 = vpack.c.b16 %v2180, %v2176
  %v3513 = vpack.c.b16 %v2181, %v2177
  %v3514 = vpack.c.b16 %v2182, %v2178
  %v3515 = vpack.c.b16 %v2187, %v2183
  %v3516 = vpack.c.b16 %v2188, %v2184
  %v3517 = vpack.c.b16 %v2189, %v2185
  %v3518 = vpack.c.b16 %v2190, %v2186
  %v3519 = vpack.c.b16 %v2195, %v2191
  %v3520 = vpack.c.b16 %v2196, %v2192
  %v3521 = vpack.c.b16 %v2197, %v2193
  %v3522 = vpack.c.b16 %v2198, %v2194
  %v3523 = vpack.c.b16 %v2203, %v2199
  %v3524 = vpack.c.b16 %v2204, %v2200
  %v3525 = vpack.c.b16 %v2205, %v2201
  %v3526 = vpack.c.b16 %v2206, %v2202
  %v3527 = vpack.c.b16 %v2211, %v2207
  %v3528 = vpack.c.b16 %v2212, %v2208
  %v3529 = vpack.c.b16 %v2213, %v2209
  %v3530 = vpack.c.b16 %v2214, %v2210
  %v3531 = vpack.c.b16 %v2219, %v2215
  %v3532 = vpack.c.b16 %v2220, %v2216
  %v3533 = vpack.c.b16 %v2221, %v2217
  %v3534 = vpack.c.b16 %v2222, %v2218
  %v3535 = vpack.c.b16 %v2227, %v2223
  %v3536 = vpack.c.b16 %v2228, %v2224
  %v3537 = vpack.c.b16 %v2229, %v2225
  %v3538 = vpack.c.b16 %v2230, %v2226
  %v3539 = vpack.c.b16 %v2235, %v2231
  %v3540 = vpack.c.b16 %v2236, %v2232
  %v3541 = vpack.c.b16 %v2237, %v2233
  %v3542 = vpack.c.b16 %v2238, %v2234
  %v3543 = vpack.c.b16 %v2243, %v2239
  %v3544 = vpack.c.b16 %v2244, %v2240
  %v3545 = vpack.c.b16 %v2245, %v2241
  %v3546 = vpack.c.b16 %v2246, %v2242
  %v3547 = vpack.c.b16 %v2251, %v2247
  %v3548 = vpack.c.b16 %v2252, %v2248
  %v3549 = vpack.c.b16 %v2253, %v2249
  %v3550 = vpack.c.b16 %v2254, %v2250
  %v3551 = vpack.c.b16 %v2259, %v2255
  %v3552 = vpack.c.b16 %v2260, %v2256
  %v3553 = vpack.c.b16 %v2261, %v2257
  %v3554 = vpack.c.b16 %v2262, %v2258
  %v3555 = vpack.c.b16 %v2267, %v2263
  %v3556 = vpack.c.b16 %v2268, %v2264
  %v3557 = vpack.c.b16 %v2269, %v2265
  %v3558 = vpack.c.b16 %v2270, %v2266
  %v3559 = vpack.c.b16 %v2275, %v2271
  %v3560 = vpack.c.b16 %v2276, %v2272
  %v3561 = vpack.c.b16 %v2277, %v2273
  %v3562 = vpack.c.b16 %v2278, %v2274
  %v3563 = vpack.c.b16 %v2283, %v2279
  %v3564 = vpack.c.b16 %v2284, %v2280
  %v3565 = vpack.c.b16 %v2285, %v2281
  %v3566 = vpack.c.b16 %v2286, %v2282
  %v3567 = vpack.c.b16 %v2291, %v2287
  %v3568 = vpack.c.b16 %v2292, %v2288
  %v3569 = vpack.c.b16 %v2293, %v2289
  %v3570 = vpack.c.b16 %v2294, %v2290
  %v3571 = vpack.c.b16 %v2299, %v2295
  %v3572 = vpack.c.b16 %v2300, %v2296
  %v3573 = vpack.c.b16 %v2301, %v2297
  %v3574 = vpack.c.b16 %v2302, %v2298
  %v3575 = vpack.c.b16 %v2307, %v2303
  %v3576 = vpack.c.b16 %v2308, %v2304
  %v3577 = vpack.c.b16 %v2309, %v2305
  %v3578 = vpack.c.b16 %v2310, %v2306
  %v3579 = vpack.c.b16 %v2315, %v2311
  %v3580 = vpack.c.b16 %v2316, %v2312
  %v3581 = vpack.c.b16 %v2317, %v2313
  %v3582 = vpack.c.b16 %v2318, %v2314
  %v3583 = vpack.c.b16 %v2323, %v2319
  %v3584 = vpack.c.b16 %v2324, %v2320
  %v3585 = vpack.c.b16 %v2325, %v2321
  %v3586 = vpack.c.b16 %v2326, %v2322
  %v3587 = vpack.c.b16 %v2331, %v2327
  %v3588 = vpack.c.b16 %v2332, %v2328
  %v3589 = vpack.c.b16 %v2333, %v2329
  %v3590 = vpack.c.b16 %v2334, %v2330
  %v3591 = vpack.c.b16 %v2339, %v2335
  %v3592 = vpack.c.b16 %v2340, %v2336
  %v3593 = vpack.c.b16 %v2341, %v2337
  %v3594 = vpack.c.b16 %v2342, %v2338
  %v3595 = vpack.c.b16 %v2347, %v2343
  %v3596 = vpack.c.b16 %v2348, %v2344
  %v3597 = vpack.c.b16 %v2349, %v2345
  %v3598 = vpack.c.b16 %v2350, %v2346
  %v3599 = vpack.c.b16 %v2355, %v2351
  %v3600 = vpack.c.b16 %v2356, %v2352
  %v3601 = vpack.c.b16 %v2357, %v2353
  %v3602 = vpack.c.b16 %v2358, %v2354
  %v3603 = vpack.c.b16 %v2363, %v2359
  %v3604 = vpack.c.b16 %v2364, %v2360
  %v3605 = vpack.c.b16 %v2365, %v2361
  %v3606 = vpack.c.b16 %v2366, %v2362
  %v3607 = vpack.c.b16 %v2371, %v2367
  %v3608 = vpack.c.b16 %v2372, %v2368
  %v3609 = vpack.c.b16 %v2373, %v2369
  %v3610 = vpack.c.b16 %v2374, %v2370
  %v3611 = vpack.c.b16 %v2379, %v2375
  %v3612 = vpack.c.b16 %v2380, %v2376
  %v3613 = vpack.c.b16 %v2381, %v2377
  %v3614 = vpack.c.b16 %v2382, %v2378
  %v3615 = vpack.c.b16 %v2387, %v2383
  %v3616 = vpack.c.b16 %v2388, %v2384
  %v3617 = vpack.c.b16 %v2389, %v2385
  %v3618 = vpack.c.b16 %v2390, %v2386
  %v3619 = vpack.c.b16 %v2395, %v2391
  %v3620 = vpack.c.b16 %v2396, %v2392
  %v3621 = vpack.c.b16 %v2397, %v2393
  %v3622 = vpack.c.b16 %v2398, %v2394
  %v3623 = vpack.c.b16 %v2403, %v2399
  %v3624 = vpack.c.b16 %v2404, %v2400
  %v3625 = vpack.c.b16 %v2405, %v2401
  %v3626 = vpack.c.b16 %v2406, %v2402
  %v3627 = vpack.c.b16 %v2411, %v2407
  %v3628 = vpack.c.b16 %v2412, %v2408
  %v3629 = vpack.c.b16 %v2413, %v2409
  %v3630 = vpack.c.b16 %v2414, %v2410
  %v3631 = vpack.c.b16 %v2419, %v2415
  %v3632 = vpack.c.b16 %v2420, %v2416
  %v3633 = vpack.c.b16 %v2421, %v2417
  %v3634 = vpack.c.b16 %v2422, %v2418
  %v3635 = vpack.c.b16 %v2427, %v2423
  %v3636 = vpack.c.b16 %v2428, %v2424
  %v3637 = vpack.c.b16 %v2429, %v2425
  %v3638 = vpack.c.b16 %v2430, %v2426
  %v3639 = vpack.c.b16 %v2435, %v2431
  %v3640 = vpack.c.b16 %v2436, %v2432
  %v3641 = vpack.c.b16 %v2437, %v2433
  %v3642 = vpack.c.b16 %v2438, %v2434
  %v3643 = vpack.c.b16 %v2443, %v2439
  %v3644 = vpack.c.b16 %v2444, %v2440
  %v3645 = vpack.c.b16 %v2445, %v2441
  %v3646 = vpack.c.b16 %v2446, %v2442
  %v3647 = vpack.c.b16 %v2451, %v2447
  %v3648 = vpack.c.b16 %v2452, %v2448
  %v3649 = vpack.c.b16 %v2453, %v2449
  %v3650 = vpack.c.b16 %v2454, %v2450
  %v3651 = vpack.c.b16 %v2459, %v2455
  %v3652 = vpack.c.b16 %v2460, %v2456
  %v3653 = vpack.c.b16 %v2461, %v2457
  %v3654 = vpack.c.b16 %v2462, %v2458
  %v3655 = vpack.c.b16 %v2467, %v2463
  %v3656 = vpack.c.b16 %v2468, %v2464
  %v3657 = vpack.c.b16 %v2469, %v2465
  %v3658 = vpack.c.b16 %v2470, %v2466
  %v3659 = vpack.c.b16 %v2475, %v2471
  %v3660 = vpack.c.b16 %v2476, %v2472
  %v3661 = vpack.c.b16 %v2477, %v2473
  %v3662 = vpack.c.b16 %v2478, %v2474
  %v3663 = vpack.c.b16 %v2483, %v2479
  %v3664 = vpack.c.b16 %v2484, %v2480
  %v3665 = vpack.c.b16 %v2485, %v2481
  %v3666 = vpack.c.b16 %v2486, %v2482
  %v3667 = vpack.c.b16 %v2491, %v2487
  %v3668 = vpack.c.b16 %v2492, %v2488
  %v3669 = vpack.c.b16 %v2493, %v2489
  %v3670 = vpack.c.b16 %v2494, %v2490
  %v3671 = vpack.c.b16 %v2499, %v2495
  %v3672 = vpack.c.b16 %v2500, %v2496
  %v3673 = vpack.c.b16 %v2501, %v2497
  %v3674 = vpack.c.b16 %v2502, %v2498
  %v3675 = vpack.c.b16 %v2507, %v2503
  %v3676 = vpack.c.b16 %v2508, %v2504
  %v3677 = vpack.c.b16 %v2509, %v2505
  %v3678 = vpack.c.b16 %v2510, %v2506
  %v3679 = vpack.c.b16 %v2515, %v2511
  %v3680 = vpack.c.b16 %v2516, %v2512
  %v3681 = vpack.c.b16 %v2517, %v2513
  %v3682 = vpack.c.b16 %v2518, %v2514
  %v3683 = vpack.c.b16 %v2523, %v2519
  %v3684 = vpack.c.b16 %v2524, %v2520
  %v3685 = vpack.c.b16 %v2525, %v2521
  %v3686 = vpack.c.b16 %v2526, %v2522
  %v3687 = vpack.c.b16 %v2531, %v2527
  %v3688 = vpack.c.b16 %v2532, %v2528
  %v3689 = vpack.c.b16 %v2533, %v2529
  %v3690 = vpack.c.b16 %v2534, %v2530
  %v3691 = vpack.c.b16 %v2539, %v2535
  %v3692 = vpack.c.b16 %v2540, %v2536
  %v3693 = vpack.c.b16 %v2541, %v2537
  %v3694 = vpack.c.b16 %v2542, %v2538
  %v3695 = vpack.c.b16 %v2547, %v2543
  %v3696 = vpack.c.b16 %v2548, %v2544
  %v3697 = vpack.c.b16 %v2549, %v2545
  %v3698 = vpack.c.b16 %v2550, %v2546
  %v3699 = vpack.c.b16 %v2555, %v2551
  %v3700 = vpack.c.b16 %v2556, %v2552
  %v3701 = vpack.c.b16 %v2557, %v2553
  %v3702 = vpack.c.b16 %v2558, %v2554
  %v3703 = vpack.c.b16 %v2563, %v2559
  %v3704 = vpack.c.b16 %v2564, %v2560
  %v3705 = vpack.c.b16 %v2565, %v2561
  %v3706 = vpack.c.b16 %v2566, %v2562
  %v3707 = vpack.c.b16 %v2571, %v2567
  %v3708 = vpack.c.b16 %v2572, %v2568
  %v3709 = vpack.c.b16 %v2573, %v2569
  %v3710 = vpack.c.b16 %v2574, %v2570
  %v3711 = vpack.c.b16 %v2579, %v2575
  %v3712 = vpack.c.b16 %v2580, %v2576
  %v3713 = vpack.c.b16 %v2581, %v2577
  %v3714 = vpack.c.b16 %v2582, %v2578
  %v3715 = vpack.c.b16 %v2587, %v2583
  %v3716 = vpack.c.b16 %v2588, %v2584
  %v3717 = vpack.c.b16 %v2589, %v2585
  %v3718 = vpack.c.b16 %v2590, %v2586
  %v3719 = vpack.c.b16 %v2595, %v2591
  %v3720 = vpack.c.b16 %v2596, %v2592
  %v3721 = vpack.c.b16 %v2597, %v2593
  %v3722 = vpack.c.b16 %v2598, %v2594
  %v3723 = vpack.c.b16 %v2603, %v2599
  %v3724 = vpack.c.b16 %v2604, %v2600
  %v3725 = vpack.c.b16 %v2605, %v2601
  %v3726 = vpack.c.b16 %v2606, %v2602
  %v3727 = vpack.c.b16 %v2611, %v2607
  %v3728 = vpack.c.b16 %v2612, %v2608
  %v3729 = vpack.c.b16 %v2613, %v2609
  %v3730 = vpack.c.b16 %v2614, %v2610
  %v3731 = vpack.c.b16 %v2619, %v2615
  %v3732 = vpack.c.b16 %v2620, %v2616
  %v3733 = vpack.c.b16 %v2621, %v2617
  %v3734 = vpack.c.b16 %v2622, %v2618
  %v3735 = vpack.c.b16 %v2627, %v2623
  %v3736 = vpack.c.b16 %v2628, %v2624
  %v3737 = vpack.c.b16 %v2629, %v2625
  %v3738 = vpack.c.b16 %v2630, %v2626
  %v3739 = vpack.c.b16 %v2635, %v2631
  %v3740 = vpack.c.b16 %v2636, %v2632
  %v3741 = vpack.c.b16 %v2637, %v2633
  %v3742 = vpack.c.b16 %v2638, %v2634
  %v3743 = vpack.c.b16 %v2643, %v2639
  %v3744 = vpack.c.b16 %v2644, %v2640
  %v3745 = vpack.c.b16 %v2645, %v2641
  %v3746 = vpack.c.b16 %v2646, %v2642
  %v3747 = vpack.c.b16 %v2651, %v2647
  %v3748 = vpack.c.b16 %v2652, %v2648
  %v3749 = vpack.c.b16 %v2653, %v2649
  %v3750 = vpack.c.b16 %v2654, %v2650
  %v3751 = vpack.c.b16 %v2659, %v2655
  %v3752 = vpack.c.b16 %v2660, %v2656
  %v3753 = vpack.c.b16 %v2661, %v2657
  %v3754 = vpack.c.b16 %v2662, %v2658
  %v3755 = vpack.c.b16 %v2667, %v2663
  %v3756 = vpack.c.b16 %v2668, %v2664
  %v3757 = vpack.c.b16 %v2669, %v2665
  %v3758 = vpack.c.b16 %v2670, %v2666
  %v3759 = vpack.c.b16 %v2675, %v2671
  %v3760 = vpack.c.b16 %v2676, %v2672
  %v3761 = vpack.c.b16 %v2677, %v2673
  %v3762 = vpack.c.b16 %v2678, %v2674
  %v3763 = vpack.c.b16 %v2683, %v2679
  %v3764 = vpack.c.b16 %v2684, %v2680
  %v3765 = vpack.c.b16 %v2685, %v2681
  %v3766 = vpack.c.b16 %v2686, %v2682
  %v3767 = vpack.c.b16 %v2691, %v2687
  %v3768 = vpack.c.b16 %v2692, %v2688
  %v3769 = vpack.c.b16 %v2693, %v2689
  %v3770 = vpack.c.b16 %v2694, %v2690
  %v3771 = vpack.c.b16 %v2699, %v2695
  %v3772 = vpack.c.b16 %v2700, %v2696
  %v3773 = vpack.c.b16 %v2701, %v2697
  %v3774 = vpack.c.b16 %v2702, %v2698
  %v3775 = vpack.c.b16 %v2707, %v2703
  %v3776 = vpack.c.b16 %v2708, %v2704
  %v3777 = vpack.c.b16 %v2709, %v2705
  %v3778 = vpack.c.b16 %v2710, %v2706
  %v3779 = vpack.c.b16 %v2715, %v2711
  %v3780 = vpack.c.b16 %v2716, %v2712
  %v3781 = vpack.c.b16 %v2717, %v2713
  %v3782 = vpack.c.b16 %v2718, %v2714
  %v3783 = vpack.c.b16 %v2723, %v2719
  %v3784 = vpack.c.b16 %v2724, %v2720
  %v3785 = vpack.c.b16 %v2725, %v2721
  %v3786 = vpack.c.b16 %v2726, %v2722
  %v3787 = vpack.c.b16 %v2731, %v2727
  %v3788 = vpack.c.b16 %v2732, %v2728
  %v3789 = vpack.c.b16 %v2733, %v2729
  %v3790 = vpack.c.b16 %v2734, %v2730
  %v3791 = vpack.c.b16 %v2739, %v2735
  %v3792 = vpack.c.b16 %v2740, %v2736
  %v3793 = vpack.c.b16 %v2741, %v2737
  %v3794 = vpack.c.b16 %v2742, %v2738
  %v3795 = vpack.c.b16 %v2747, %v2743
  %v3796 = vpack.c.b16 %v2748, %v2744
  %v3797 = vpack.c.b16 %v2749, %v2745
  %v3798 = vpack.c.b16 %v2750, %v2746
  %v3799 = vpack.c.b16 %v2755, %v2751
  %v3800 = vpack.c.b16 %v2756, %v2752
  %v3801 = vpack.c.b16 %v2757, %v2753
  %v3802 = vpack.c.b16 %v2758, %v2754
  %v3803 = vpack.c.b16 %v2763, %v2759
  %v3804 = vpack.c.b16 %v2764, %v2760
  %v3805 = vpack.c.b16 %v2765, %v2761
  %v3806 = vpack.c.b16 %v2766, %v2762
  %v3807 = vpack.c.b16 %v2771, %v2767
  %v3808 = vpack.c.b16 %v2772, %v2768
  %v3809 = vpack.c.b16 %v2773, %v2769
  %v3810 = vpack.c.b16 %v2774, %v2770
  %v3811 = vpack.c.b16 %v2779, %v2775
  %v3812 = vpack.c.b16 %v2780, %v2776
  %v3813 = vpack.c.b16 %v2781, %v2777
  %v3814 = vpack.c.b16 %v2782, %v2778
  %v3815 = vpack.c.b16 %v2787, %v2783
  %v3816 = vpack.c.b16 %v2788, %v2784
  %v3817 = vpack.c.b16 %v2789, %v2785
  %v3818 = vpack.c.b16 %v2790, %v2786
  %v3819 = vpack.c.b16 %v2795, %v2791
  %v3820 = vpack.c.b16 %v2796, %v2792
  %v3821 = vpack.c.b16 %v2797, %v2793
  %v3822 = vpack.c.b16 %v2798, %v2794
  %v3823 = vpack.c.b16 %v2803, %v2799
  %v3824 = vpack.c.b16 %v2804, %v2800
  %v3825 = vpack.c.b16 %v2805, %v2801
  %v3826 = vpack.c.b16 %v2806, %v2802
  %v3827 = vpack.c.b16 %v2811, %v2807
  %v3828 = vpack.c.b16 %v2812, %v2808
  %v3829 = vpack.c.b16 %v2813, %v2809
  %v3830 = vpack.c.b16 %v2814, %v2810
  %v3831 = vpack.c.b16 %v2819, %v2815
  %v3832 = vpack.c.b16 %v2820, %v2816
  %v3833 = vpack.c.b16 %v2821, %v2817
  %v3834 = vpack.c.b16 %v2822, %v2818
  %v3835 = vpack.c.b16 %v2827, %v2823
  %v3836 = vpack.c.b16 %v2828, %v2824
  %v3837 = vpack.c.b16 %v2829, %v2825
  %v3838 = vpack.c.b16 %v2830, %v2826
  %v3839 = vpack.c.b16 %v2835, %v2831
  %v3840 = vpack.c.b16 %v2836, %v2832
  %v3841 = vpack.c.b16 %v2837, %v2833
  %v3842 = vpack.c.b16 %v2838, %v2834
  %v3843 = vpack.c.b16 %v2843, %v2839
  %v3844 = vpack.c.b16 %v2844, %v2840
  %v3845 = vpack.c.b16 %v2845, %v2841
  %v3846 = vpack.c.b16 %v2846, %v2842
  %v3847 = vpack.c.b16 %v2851, %v2847
  %v3848 = vpack.c.b16 %v2852, %v2848
  %v3849 = vpack.c.b16 %v2853, %v2849
  %v3850 = vpack.c.b16 %v2854, %v2850
  %v3851 = vpack.c.b16 %v2859, %v2855
  %v3852 = vpack.c.b16 %v2860, %v2856
  %v3853 = vpack.c.b16 %v2861, %v2857
  %v3854 = vpack.c.b16 %v2862, %v2858
  %v3855 = vpack.c.b16 %v2867, %v2863
  %v3856 = vpack.c.b16 %v2868, %v2864
  %v3857 = vpack.c.b16 %v2869, %v2865
  %v3858 = vpack.c.b16 %v2870, %v2866
  %v3859 = vpack.c.b16 %v2875, %v2871
  %v3860 = vpack.c.b16 %v2876, %v2872
  %v3861 = vpack.c.b16 %v2877, %v2873
  %v3862 = vpack.c.b16 %v2878, %v2874
  %v3863 = vpack.c.b16 %v2883, %v2879
  %v3864 = vpack.c.b16 %v2884, %v2880
  %v3865 = vpack.c.b16 %v2885, %v2881
  %v3866 = vpack.c.b16 %v2886, %v2882
  %v3867 = vpack.c.b16 %v2891, %v2887
  %v3868 = vpack.c.b16 %v2892, %v2888
  %v3869 = vpack.c.b16 %v2893, %v2889
  %v3870 = vpack.c.b16 %v2894, %v2890
  %v3871 = vpack.c.b16 %v2899, %v2895
  %v3872 = vpack.c.b16 %v2900, %v2896
  %v3873 = vpack.c.b16 %v2901, %v2897
  %v3874 = vpack.c.b16 %v2902, %v2898
  %v3875 = vpack.c.b16 %v2907, %v2903
  %v3876 = vpack.c.b16 %v2908, %v2904
  %v3877 = vpack.c.b16 %v2909, %v2905
  %v3878 = vpack.c.b16 %v2910, %v2906
  %v3879 = vpack.c.b16 %v2915, %v2911
  %v3880 = vpack.c.b16 %v2916, %v2912
  %v3881 = vpack.c.b16 %v2917, %v2913
  %v3882 = vpack.c.b16 %v2918, %v2914
  %v3883 = vpack.c.b16 %v2923, %v2919
  %v3884 = vpack.c.b16 %v2924, %v2920
  %v3885 = vpack.c.b16 %v2925, %v2921
  %v3886 = vpack.c.b16 %v2926, %v2922
  %v3887 = vpack.c.b16 %v2931, %v2927
  %v3888 = vpack.c.b16 %v2932, %v2928
  %v3889 = vpack.c.b16 %v2933, %v2929
  %v3890 = vpack.c.b16 %v2934, %v2930
  %v3891 = vpack.c.b16 %v2939, %v2935
  %v3892 = vpack.c.b16 %v2940, %v2936
  %v3893 = vpack.c.b16 %v2941, %v2937
  %v3894 = vpack.c.b16 %v2942, %v2938
  %v3895 = vpack.c.b16 %v2947, %v2943
  %v3896 = vpack.c.b16 %v2948, %v2944
  %v3897 = vpack.c.b16 %v2949, %v2945
  %v3898 = vpack.c.b16 %v2950, %v2946
  %v3899 = vpack.c.b16 %v2955, %v2951
  %v3900 = vpack.c.b16 %v2956, %v2952
  %v3901 = vpack.c.b16 %v2957, %v2953
  %v3902 = vpack.c.b16 %v2958, %v2954
  %v3903 = vpack.c.b16 %v2963, %v2959
  %v3904 = vpack.c.b16 %v2964, %v2960
  %v3905 = vpack.c.b16 %v2965, %v2961
  %v3906 = vpack.c.b16 %v2966, %v2962
  %v3907 = vpack.c.b16 %v2971, %v2967
  %v3908 = vpack.c.b16 %v2972, %v2968
  %v3909 = vpack.c.b16 %v2973, %v2969
  %v3910 = vpack.c.b16 %v2974, %v2970
  %v3911 = vpack.c.b16 %v2979, %v2975
  %v3912 = vpack.c.b16 %v2980, %v2976
  %v3913 = vpack.c.b16 %v2981, %v2977
  %v3914 = vpack.c.b16 %v2982, %v2978
  %v3915 = vpack.c.b16 %v2987, %v2983
  %v3916 = vpack.c.b16 %v2988, %v2984
  %v3917 = vpack.c.b16 %v2989, %v2985
  %v3918 = vpack.c.b16 %v2990, %v2986
  %v3919 = vpack.c.b16 %v2995, %v2991
  %v3920 = vpack.c.b16 %v2996, %v2992
  %v3921 = vpack.c.b16 %v2997, %v2993
  %v3922 = vpack.c.b16 %v2998, %v2994
  %v3923 = vpack.c.b16 %v3003, %v2999
  %v3924 = vpack.c.b16 %v3004, %v3000
  %v3925 = vpack.c.b16 %v3005, %v3001
  %v3926 = vpack.c.b16 %v3006, %v3002
  %v3927 = vpack.c.b16 %v3011, %v3007
  %v3928 = vpack.c.b16 %v3012, %v3008
  %v3929 = vpack.c.b16 %v3013, %v3009
  %v3930 = vpack.c.b16 %v3014, %v3010
  %v3931 = vpack.c.b16 %v3019, %v3015
  %v3932 = vpack.c.b16 %v3020, %v3016
  %v3933 = vpack.c.b16 %v3021, %v3017
  %v3934 = vpack.c.b16 %v3022, %v3018
  %v3935 = vpack.c.b16 %v3027, %v3023
  %v3936 = vpack.c.b16 %v3028, %v3024
  %v3937 = vpack.c.b16 %v3029, %v3025
  %v3938 = vpack.c.b16 %v3030, %v3026
  %v3939 = vpack.c.b16 %v3035, %v3031
  %v3940 = vpack.c.b16 %v3036, %v3032
  %v3941 = vpack.c.b16 %v3037, %v3033
  %v3942 = vpack.c.b16 %v3038, %v3034
  %v3943 = vpack.c.b16 %v3043, %v3039
  %v3944 = vpack.c.b16 %v3044, %v3040
  %v3945 = vpack.c.b16 %v3045, %v3041
  %v3946 = vpack.c.b16 %v3046, %v3042
  %v3947 = vpack.c.b16 %v3051, %v3047
  %v3948 = vpack.c.b16 %v3052, %v3048
  %v3949 = vpack.c.b16 %v3053, %v3049
  %v3950 = vpack.c.b16 %v3054, %v3050
  %v3951 = vpack.c.b16 %v3059, %v3055
  %v3952 = vpack.c.b16 %v3060, %v3056
  %v3953 = vpack.c.b16 %v3061, %v3057
  %v3954 = vpack.c.b16 %v3062, %v3058
  %v3955 = vpack.c.b16 %v3067, %v3063
  %v3956 = vpack.c.b16 %v3068, %v3064
  %v3957 = vpack.c.b16 %v3069, %v3065
  %v3958 = vpack.c.b16 %v3070, %v3066
  %v3959 = vpack.c.b16 %v3075, %v3071
  %v3960 = vpack.c.b16 %v3076, %v3072
  %v3961 = vpack.c.b16 %v3077, %v3073
  %v3962 = vpack.c.b16 %v3078, %v3074
  %v3963 = vpack.c.b16 %v3083, %v3079
  %v3964 = vpack.c.b16 %v3084, %v3080
  %v3965 = vpack.c.b16 %v3085, %v3081
  %v3966 = vpack.c.b16 %v3086, %v3082
  %v3967 = vpack.c.b16 %v3091, %v3087
  %v3968 = vpack.c.b16 %v3092, %v3088
  %v3969 = vpack.c.b16 %v3093, %v3089
  %v3970 = vpack.c.b16 %v3094, %v3090
  %v3971 = vpack.c.b16 %v3099, %v3095
  %v3972 = vpack.c.b16 %v3100, %v3096
  %v3973 = vpack.c.b16 %v3101, %v3097
  %v3974 = vpack.c.b16 %v3102, %v3098
  %v3975 = vpack.c.b16 %v3107, %v3103
  %v3976 = vpack.c.b16 %v3108, %v3104
  %v3977 = vpack.c.b16 %v3109, %v3105
  %v3978 = vpack.c.b16 %v3110, %v3106
  %v3979 = vpack.c.b16 %v3115, %v3111
  %v3980 = vpack.c.b16 %v3116, %v3112
  %v3981 = vpack.c.b16 %v3117, %v3113
  %v3982 = vpack.c.b16 %v3118, %v3114
  %v3983 = vpack.c.b16 %v3123, %v3119
  %v3984 = vpack.c.b16 %v3124, %v3120
  %v3985 = vpack.c.b16 %v3125, %v3121
  %v3986 = vpack.c.b16 %v3126, %v3122
  %v3987 = vpack.c.b16 %v3131, %v3127
  %v3988 = vpack.c.b16 %v3132, %v3128
  %v3989 = vpack.c.b16 %v3133, %v3129
  %v3990 = vpack.c.b16 %v3134, %v3130
  %v3991 = vpack.c.b16 %v3139, %v3135
  %v3992 = vpack.c.b16 %v3140, %v3136
  %v3993 = vpack.c.b16 %v3141, %v3137
  %v3994 = vpack.c.b16 %v3142, %v3138
  %v3995 = vpack.c.b16 %v3147, %v3143
  %v3996 = vpack.c.b16 %v3148, %v3144
  %v3997 = vpack.c.b16 %v3149, %v3145
  %v3998 = vpack.c.b16 %v3150, %v3146
  %v3999 = vpack.c.b16 %v3155, %v3151
  %v4000 = vpack.c.b16 %v3156, %v3152
  %v4001 = vpack.c.b16 %v3157, %v3153
  %v4002 = vpack.c.b16 %v3158, %v3154
  %v4003 = vpack.c.b16 %v3163, %v3159
  %v4004 = vpack.c.b16 %v3164, %v3160
  %v4005 = vpack.c.b16 %v3165, %v3161
  %v4006 = vpack.c.b16 %v3166, %v3162
  %v4007 = vpack.c.b16 %v3171, %v3167
  %v4008 = vpack.c.b16 %v3172, %v3168
  %v4009 = vpack.c.b16 %v3173, %v3169
  %v4010 = vpack.c.b16 %v3174, %v3170
  %v4011 = vpack.c.b16 %v3179, %v3175
  %v4012 = vpack.c.b16 %v3180, %v3176
  %v4013 = vpack.c.b16 %v3181, %v3177
  %v4014 = vpack.c.b16 %v3182, %v3178
  %v4015 = vpack.c.b16 %v3187, %v3183
  %v4016 = vpack.c.b16 %v3188, %v3184
  %v4017 = vpack.c.b16 %v3189, %v3185
  %v4018 = vpack.c.b16 %v3190, %v3186
  %v4019 = vpack.c.b16 %v3195, %v3191
  %v4020 = vpack.c.b16 %v3196, %v3192
  %v4021 = vpack.c.b16 %v3197, %v3193
  %v4022 = vpack.c.b16 %v3198, %v3194
  %v4023 = vpack.c.b16 %v3203, %v3199
  %v4024 = vpack.c.b16 %v3204, %v3200
  %v4025 = vpack.c.b16 %v3205, %v3201
  %v4026 = vpack.c.b16 %v3206, %v3202
  %v4027 = vpack.c.b16 %v3211, %v3207
  %v4028 = vpack.c.b16 %v3212, %v3208
  %v4029 = vpack.c.b16 %v3213, %v3209
  %v4030 = vpack.c.b16 %v3214, %v3210
  %v4031 = vpack.c.b16 %v3219, %v3215
  %v4032 = vpack.c.b16 %v3220, %v3216
  %v4033 = vpack.c.b16 %v3221, %v3217
  %v4034 = vpack.c.b16 %v3222, %v3218
  %v4035 = vpack.c.b16 %v3227, %v3223
  %v4036 = vpack.c.b16 %v3228, %v3224
  %v4037 = vpack.c.b16 %v3229, %v3225
  %v4038 = vpack.c.b16 %v3230, %v3226
  %v4039 = vpack.c.b16 %v3235, %v3231
  %v4040 = vpack.c.b16 %v3236, %v3232
  %v4041 = vpack.c.b16 %v3237, %v3233
  %v4042 = vpack.c.b16 %v3238, %v3234
  %v4043 = vpack.c.b16 %v3243, %v3239
  %v4044 = vpack.c.b16 %v3244, %v3240
  %v4045 = vpack.c.b16 %v3245, %v3241
  %v4046 = vpack.c.b16 %v3246, %v3242
  %v4047 = vpack.c.b16 %v3251, %v3247
  %v4048 = vpack.c.b16 %v3252, %v3248
  %v4049 = vpack.c.b16 %v3253, %v3249
  %v4050 = vpack.c.b16 %v3254, %v3250
  %v4051 = vpack.c.b16 %v3259, %v3255
  %v4052 = vpack.c.b16 %v3260, %v3256
  %v4053 = vpack.c.b16 %v3261, %v3257
  %v4054 = vpack.c.b16 %v3262, %v3258
  %v4055 = vpack.c.b16 %v3267, %v3263
  %v4056 = vpack.c.b16 %v3268, %v3264
  %v4057 = vpack.c.b16 %v3269, %v3265
  %v4058 = vpack.c.b16 %v3270, %v3266
  %v4059 = vpack.c.b16 %v3275, %v3271
  %v4060 = vpack.c.b16 %v3276, %v3272
  %v4061 = vpack.c.b16 %v3277, %v3273
  %v4062 = vpack.c.b16 %v3278, %v3274
  %vm4847 = vcmask 523264
  %v4849 = vsel %vm4847, %v902, 0
  %4851 = vmatprep.subr.bf16.mxu0 %v3280
  %4852 = vmatpush1.bf16.msra.mxu0 %v3279
  %4853 = vmatprep.subr.bf16.mxu0 %v3284
  %4854 = vmatpush1.bf16.msra.mxu0 %v3283
  %4855 = vmatprep.subr.bf16.mxu0 %v3288
  %4856 = vmatpush1.bf16.msra.mxu0 %v3287
  %4857 = vmatprep.subr.bf16.mxu0 %v3292
  %4858 = vmatpush1.bf16.msra.mxu0 %v3291
  %4859 = vmatprep.subr.bf16.mxu0 %v3296
  %4860 = vmatpush1.bf16.msra.mxu0 %v3295
  %4861 = vmatprep.subr.bf16.mxu0 %v3300
  %4862 = vmatpush1.bf16.msra.mxu0 %v3299
  %4863 = vmatprep.subr.bf16.mxu0 %v3304
  %4864 = vmatpush1.bf16.msra.mxu0 %v3303
  %4865 = vmatprep.subr.bf16.mxu0 %v3308
  %4866 = vmatpush1.bf16.msra.mxu0 %v3307
  %4867 = vmatprep.subr.bf16.mxu0 %v3312
  %4868 = vmatpush1.bf16.msra.mxu0 %v3311
  %4869 = vmatprep.subr.bf16.mxu0 %v3316
  %4870 = vmatpush1.bf16.msra.mxu0 %v3315
  %4871 = vmatprep.subr.bf16.mxu0 %v3320
  %4872 = vmatpush1.bf16.msra.mxu0 %v3319
  %4873 = vmatprep.subr.bf16.mxu0 %v3324
  %4874 = vmatpush1.bf16.msra.mxu0 %v3323
  %4875 = vmatprep.subr.bf16.mxu0 %v3328
  %4876 = vmatpush1.bf16.msra.mxu0 %v3327
  %4877 = vmatprep.subr.bf16.mxu0 %v3332
  %4878 = vmatpush1.bf16.msra.mxu0 %v3331
  %4879 = vmatprep.subr.bf16.mxu0 %v3336
  %4880 = vmatpush1.bf16.msra.mxu0 %v3335
  %4881 = vmatprep.subr.bf16.mxu0 %v3340
  %4882 = vmatpush1.bf16.msra.mxu0 %v3339
  %4883 = vmatprep.mubr.bf16.mxu0 %v879
  %4884 = vmatmul.mubr.bf16.gmra.mrb[0].mxu0 %v878
  %v4885 = vpop.f32.mrb[0].mxu0
  %v4886 = vadd.f32 %v823, %v4885
  %v4887 = vpop.f32.mrb[0].mxu0
  %v4888 = vadd.f32 %v827, %v4887
  %v4889 = vpop.f32.mrb[0].mxu0
  %v4890 = vpop.f32.mrb[0].mxu0
  %4891 = vdwg.mxu0
  %4892 = vmatprep.subr.bf16.mxu0 %v3344
  %4893 = vmatpush1.bf16.msra.mxu0 %v3343
  %4894 = vmatprep.subr.bf16.mxu0 %v3348
  %4895 = vmatpush1.bf16.msra.mxu0 %v3347
  %4896 = vmatprep.subr.bf16.mxu0 %v3352
  %4897 = vmatpush1.bf16.msra.mxu0 %v3351
  %4898 = vmatprep.subr.bf16.mxu0 %v3356
  %4899 = vmatpush1.bf16.msra.mxu0 %v3355
  %4900 = vmatprep.subr.bf16.mxu0 %v3360
  %4901 = vmatpush1.bf16.msra.mxu0 %v3359
  %4902 = vmatprep.subr.bf16.mxu0 %v3364
  %4903 = vmatpush1.bf16.msra.mxu0 %v3363
  %4904 = vmatprep.subr.bf16.mxu0 %v3368
  %4905 = vmatpush1.bf16.msra.mxu0 %v3367
  %4906 = vmatprep.subr.bf16.mxu0 %v3372
  %4907 = vmatpush1.bf16.msra.mxu0 %v3371
  %4908 = vmatprep.subr.bf16.mxu0 %v3376
  %4909 = vmatpush1.bf16.msra.mxu0 %v3375
  %4910 = vmatprep.subr.bf16.mxu0 %v3380
  %4911 = vmatpush1.bf16.msra.mxu0 %v3379
  %4912 = vmatprep.subr.bf16.mxu0 %v3384
  %4913 = vmatpush1.bf16.msra.mxu0 %v3383
  %4914 = vmatprep.subr.bf16.mxu0 %v3388
  %4915 = vmatpush1.bf16.msra.mxu0 %v3387
  %4916 = vmatprep.subr.bf16.mxu0 %v3392
  %4917 = vmatpush1.bf16.msra.mxu0 %v3391
  %4918 = vmatprep.subr.bf16.mxu0 %v3396
  %4919 = vmatpush1.bf16.msra.mxu0 %v3395
  %4920 = vmatprep.subr.bf16.mxu0 %v3400
  %4921 = vmatpush1.bf16.msra.mxu0 %v3399
  %4922 = vmatprep.subr.bf16.mxu0 %v3404
  %4923 = vmatpush1.bf16.msra.mxu0 %v3403
  %4924 = vmatprep.mubr.bf16.mxu0 %v881
  %4925 = vmatmul.mubr.bf16.gmra.mrb[0].mxu0 %v880
  %v4926 = vpop.f32.mrb[0].mxu0
  %v4927 = vadd.f32 %v4886, %v4926
  %v4928 = vpop.f32.mrb[0].mxu0
  %v4929 = vadd.f32 %v4888, %v4928
  %v4930 = vpop.f32.mrb[0].mxu0
  %v4931 = vpop.f32.mrb[0].mxu0
  %4932 = vdwg.mxu0
  %4933 = vmatprep.subr.bf16.mxu0 %v3408
  %4934 = vmatpush1.bf16.msra.mxu0 %v3407
  %4935 = vmatprep.subr.bf16.mxu0 %v3412
  %4936 = vmatpush1.bf16.msra.mxu0 %v3411
  %4937 = vmatprep.subr.bf16.mxu0 %v3416
  %4938 = vmatpush1.bf16.msra.mxu0 %v3415
  %4939 = vmatprep.subr.bf16.mxu0 %v3420
  %4940 = vmatpush1.bf16.msra.mxu0 %v3419
  %4941 = vmatprep.subr.bf16.mxu0 %v3424
  %4942 = vmatpush1.bf16.msra.mxu0 %v3423
  %4943 = vmatprep.subr.bf16.mxu0 %v3428
  %4944 = vmatpush1.bf16.msra.mxu0 %v3427
  %4945 = vmatprep.subr.bf16.mxu0 %v3432
  %4946 = vmatpush1.bf16.msra.mxu0 %v3431
  %4947 = vmatprep.subr.bf16.mxu0 %v3436
  %4948 = vmatpush1.bf16.msra.mxu0 %v3435
  %4949 = vmatprep.subr.bf16.mxu0 %v3440
  %4950 = vmatpush1.bf16.msra.mxu0 %v3439
  %4951 = vmatprep.subr.bf16.mxu0 %v3444
  %4952 = vmatpush1.bf16.msra.mxu0 %v3443
  %4953 = vmatprep.subr.bf16.mxu0 %v3448
  %4954 = vmatpush1.bf16.msra.mxu0 %v3447
  %4955 = vmatprep.subr.bf16.mxu0 %v3452
  %4956 = vmatpush1.bf16.msra.mxu0 %v3451
  %4957 = vmatprep.subr.bf16.mxu0 %v3456
  %4958 = vmatpush1.bf16.msra.mxu0 %v3455
  %4959 = vmatprep.subr.bf16.mxu0 %v3460
  %4960 = vmatpush1.bf16.msra.mxu0 %v3459
  %4961 = vmatprep.subr.bf16.mxu0 %v3464
  %4962 = vmatpush1.bf16.msra.mxu0 %v3463
  %4963 = vmatprep.subr.bf16.mxu0 %v3468
  %4964 = vmatpush1.bf16.msra.mxu0 %v3467
  %4965 = vmatprep.mubr.bf16.mxu0 %v883
  %4966 = vmatmul.mubr.bf16.gmra.mrb[0].mxu0 %v882
  %v4967 = vpop.f32.mrb[0].mxu0
  %v4968 = vadd.f32 %v4927, %v4967
  %v4969 = vpop.f32.mrb[0].mxu0
  %v4970 = vadd.f32 %v4929, %v4969
  %v4971 = vpop.f32.mrb[0].mxu0
  %v4972 = vpop.f32.mrb[0].mxu0
  %4973 = vdwg.mxu0
  %4974 = vmatprep.subr.bf16.mxu0 %v3472
  %4975 = vmatpush1.bf16.msra.mxu0 %v3471
  %4976 = vmatprep.subr.bf16.mxu0 %v3476
  %4977 = vmatpush1.bf16.msra.mxu0 %v3475
  %4978 = vmatprep.subr.bf16.mxu0 %v3480
  %4979 = vmatpush1.bf16.msra.mxu0 %v3479
  %4980 = vmatprep.subr.bf16.mxu0 %v3484
  %4981 = vmatpush1.bf16.msra.mxu0 %v3483
  %4982 = vmatprep.subr.bf16.mxu0 %v3488
  %4983 = vmatpush1.bf16.msra.mxu0 %v3487
  %4984 = vmatprep.subr.bf16.mxu0 %v3492
  %4985 = vmatpush1.bf16.msra.mxu0 %v3491
  %4986 = vmatprep.subr.bf16.mxu0 %v3496
  %4987 = vmatpush1.bf16.msra.mxu0 %v3495
  %4988 = vmatprep.subr.bf16.mxu0 %v3500
  %4989 = vmatpush1.bf16.msra.mxu0 %v3499
  %4990 = vmatprep.subr.bf16.mxu0 %v3504
  %4991 = vmatpush1.bf16.msra.mxu0 %v3503
  %4992 = vmatprep.subr.bf16.mxu0 %v3508
  %4993 = vmatpush1.bf16.msra.mxu0 %v3507
  %4994 = vmatprep.subr.bf16.mxu0 %v3512
  %4995 = vmatpush1.bf16.msra.mxu0 %v3511
  %4996 = vmatprep.subr.bf16.mxu0 %v3516
  %4997 = vmatpush1.bf16.msra.mxu0 %v3515
  %4998 = vmatprep.subr.bf16.mxu0 %v3520
  %4999 = vmatpush1.bf16.msra.mxu0 %v3519
  %5000 = vmatprep.subr.bf16.mxu0 %v3524
  %5001 = vmatpush1.bf16.msra.mxu0 %v3523
  %5002 = vmatprep.subr.bf16.mxu0 %v3528
  %5003 = vmatpush1.bf16.msra.mxu0 %v3527
  %5004 = vmatprep.subr.bf16.mxu0 %v3532
  %5005 = vmatpush1.bf16.msra.mxu0 %v3531
  %5006 = vmatprep.mubr.bf16.mxu0 %v885
  %5007 = vmatmul.mubr.bf16.gmra.mrb[0].mxu0 %v884
  %v5008 = vpop.f32.mrb[0].mxu0
  %v5009 = vadd.f32 %v4968, %v5008
  %v5010 = vpop.f32.mrb[0].mxu0
  %v5011 = vadd.f32 %v4970, %v5010
  %v5012 = vpop.f32.mrb[0].mxu0
  %v5013 = vpop.f32.mrb[0].mxu0
  %5014 = vdwg.mxu0
  %5015 = vmatprep.subr.bf16.mxu0 %v3536
  %5016 = vmatpush1.bf16.msra.mxu0 %v3535
  %5017 = vmatprep.subr.bf16.mxu0 %v3540
  %5018 = vmatpush1.bf16.msra.mxu0 %v3539
  %5019 = vmatprep.subr.bf16.mxu0 %v3544
  %5020 = vmatpush1.bf16.msra.mxu0 %v3543
  %5021 = vmatprep.subr.bf16.mxu0 %v3548
  %5022 = vmatpush1.bf16.msra.mxu0 %v3547
  %5023 = vmatprep.subr.bf16.mxu0 %v3552
  %5024 = vmatpush1.bf16.msra.mxu0 %v3551
  %5025 = vmatprep.subr.bf16.mxu0 %v3556
  %5026 = vmatpush1.bf16.msra.mxu0 %v3555
  %5027 = vmatprep.subr.bf16.mxu0 %v3560
  %5028 = vmatpush1.bf16.msra.mxu0 %v3559
  %5029 = vmatprep.subr.bf16.mxu0 %v3564
  %5030 = vmatpush1.bf16.msra.mxu0 %v3563
  %5031 = vmatprep.subr.bf16.mxu0 %v3568
  %5032 = vmatpush1.bf16.msra.mxu0 %v3567
  %5033 = vmatprep.subr.bf16.mxu0 %v3572
  %5034 = vmatpush1.bf16.msra.mxu0 %v3571
  %5035 = vmatprep.subr.bf16.mxu0 %v3576
  %5036 = vmatpush1.bf16.msra.mxu0 %v3575
  %5037 = vmatprep.subr.bf16.mxu0 %v3580
  %5038 = vmatpush1.bf16.msra.mxu0 %v3579
  %5039 = vmatprep.subr.bf16.mxu0 %v3584
  %5040 = vmatpush1.bf16.msra.mxu0 %v3583
  %5041 = vmatprep.subr.bf16.mxu0 %v3588
  %5042 = vmatpush1.bf16.msra.mxu0 %v3587
  %5043 = vmatprep.subr.bf16.mxu0 %v3592
  %5044 = vmatpush1.bf16.msra.mxu0 %v3591
  %5045 = vmatprep.subr.bf16.mxu0 %v3596
  %5046 = vmatpush1.bf16.msra.mxu0 %v3595
  %5047 = vmatprep.mubr.bf16.mxu0 %v887
  %5048 = vmatmul.mubr.bf16.gmra.mrb[0].mxu0 %v886
  %v5049 = vpop.f32.mrb[0].mxu0
  %v5050 = vadd.f32 %v5009, %v5049
  %v5051 = vpop.f32.mrb[0].mxu0
  %v5052 = vadd.f32 %v5011, %v5051
  %v5053 = vpop.f32.mrb[0].mxu0
  %v5054 = vpop.f32.mrb[0].mxu0
  %5055 = vdwg.mxu0
  %5056 = vmatprep.subr.bf16.mxu0 %v3600
  %5057 = vmatpush1.bf16.msra.mxu0 %v3599
  %5058 = vmatprep.subr.bf16.mxu0 %v3604
  %5059 = vmatpush1.bf16.msra.mxu0 %v3603
  %5060 = vmatprep.subr.bf16.mxu0 %v3608
  %5061 = vmatpush1.bf16.msra.mxu0 %v3607
  %5062 = vmatprep.subr.bf16.mxu0 %v3612
  %5063 = vmatpush1.bf16.msra.mxu0 %v3611
  %5064 = vmatprep.subr.bf16.mxu0 %v3616
  %5065 = vmatpush1.bf16.msra.mxu0 %v3615
  %5066 = vmatprep.subr.bf16.mxu0 %v3620
  %5067 = vmatpush1.bf16.msra.mxu0 %v3619
  %5068 = vmatprep.subr.bf16.mxu0 %v3624
  %5069 = vmatpush1.bf16.msra.mxu0 %v3623
  %5070 = vmatprep.subr.bf16.mxu0 %v3628
  %5071 = vmatpush1.bf16.msra.mxu0 %v3627
  %5072 = vmatprep.subr.bf16.mxu0 %v3632
  %5073 = vmatpush1.bf16.msra.mxu0 %v3631
  %5074 = vmatprep.subr.bf16.mxu0 %v3636
  %5075 = vmatpush1.bf16.msra.mxu0 %v3635
  %5076 = vmatprep.subr.bf16.mxu0 %v3640
  %5077 = vmatpush1.bf16.msra.mxu0 %v3639
  %5078 = vmatprep.subr.bf16.mxu0 %v3644
  %5079 = vmatpush1.bf16.msra.mxu0 %v3643
  %5080 = vmatprep.subr.bf16.mxu0 %v3648
  %5081 = vmatpush1.bf16.msra.mxu0 %v3647
  %5082 = vmatprep.subr.bf16.mxu0 %v3652
  %5083 = vmatpush1.bf16.msra.mxu0 %v3651
  %5084 = vmatprep.subr.bf16.mxu0 %v3656
  %5085 = vmatpush1.bf16.msra.mxu0 %v3655
  %5086 = vmatprep.subr.bf16.mxu0 %v3660
  %5087 = vmatpush1.bf16.msra.mxu0 %v3659
  %5088 = vmatprep.mubr.bf16.mxu0 %v889
  %5089 = vmatmul.mubr.bf16.gmra.mrb[0].mxu0 %v888
  %v5090 = vpop.f32.mrb[0].mxu0
  %v5091 = vadd.f32 %v5050, %v5090
  %v5092 = vpop.f32.mrb[0].mxu0
  %v5093 = vadd.f32 %v5052, %v5092
  %v5094 = vpop.f32.mrb[0].mxu0
  %v5095 = vpop.f32.mrb[0].mxu0
  %5096 = vdwg.mxu0
  %5097 = vmatprep.subr.bf16.mxu0 %v3664
  %5098 = vmatpush1.bf16.msra.mxu0 %v3663
  %5099 = vmatprep.subr.bf16.mxu0 %v3668
  %5100 = vmatpush1.bf16.msra.mxu0 %v3667
  %5101 = vmatprep.subr.bf16.mxu0 %v3672
  %5102 = vmatpush1.bf16.msra.mxu0 %v3671
  %5103 = vmatprep.subr.bf16.mxu0 %v3676
  %5104 = vmatpush1.bf16.msra.mxu0 %v3675
  %5105 = vmatprep.subr.bf16.mxu0 %v3680
  %5106 = vmatpush1.bf16.msra.mxu0 %v3679
  %5107 = vmatprep.subr.bf16.mxu0 %v3684
  %5108 = vmatpush1.bf16.msra.mxu0 %v3683
  %5109 = vmatprep.subr.bf16.mxu0 %v3688
  %5110 = vmatpush1.bf16.msra.mxu0 %v3687
  %5111 = vmatprep.subr.bf16.mxu0 %v3692
  %5112 = vmatpush1.bf16.msra.mxu0 %v3691
  %5113 = vmatprep.subr.bf16.mxu0 %v3696
  %5114 = vmatpush1.bf16.msra.mxu0 %v3695
  %5115 = vmatprep.subr.bf16.mxu0 %v3700
  %5116 = vmatpush1.bf16.msra.mxu0 %v3699
  %5117 = vmatprep.subr.bf16.mxu0 %v3704
  %5118 = vmatpush1.bf16.msra.mxu0 %v3703
  %5119 = vmatprep.subr.bf16.mxu0 %v3708
  %5120 = vmatpush1.bf16.msra.mxu0 %v3707
  %5121 = vmatprep.subr.bf16.mxu0 %v3712
  %5122 = vmatpush1.bf16.msra.mxu0 %v3711
  %5123 = vmatprep.subr.bf16.mxu0 %v3716
  %5124 = vmatpush1.bf16.msra.mxu0 %v3715
  %5125 = vmatprep.subr.bf16.mxu0 %v3720
  %5126 = vmatpush1.bf16.msra.mxu0 %v3719
  %5127 = vmatprep.subr.bf16.mxu0 %v3724
  %5128 = vmatpush1.bf16.msra.mxu0 %v3723
  %5129 = vmatprep.mubr.bf16.mxu0 %v891
  %5130 = vmatmul.mubr.bf16.gmra.mrb[0].mxu0 %v890
  %v5131 = vpop.f32.mrb[0].mxu0
  %v5132 = vadd.f32 %v5091, %v5131
  %v5133 = vpop.f32.mrb[0].mxu0
  %v5134 = vadd.f32 %v5093, %v5133
  %v5135 = vpop.f32.mrb[0].mxu0
  %v5136 = vpop.f32.mrb[0].mxu0
  %5137 = vdwg.mxu0
  %5138 = vmatprep.subr.bf16.mxu0 %v3728
  %5139 = vmatpush1.bf16.msra.mxu0 %v3727
  %5140 = vmatprep.subr.bf16.mxu0 %v3732
  %5141 = vmatpush1.bf16.msra.mxu0 %v3731
  %5142 = vmatprep.subr.bf16.mxu0 %v3736
  %5143 = vmatpush1.bf16.msra.mxu0 %v3735
  %5144 = vmatprep.subr.bf16.mxu0 %v3740
  %5145 = vmatpush1.bf16.msra.mxu0 %v3739
  %5146 = vmatprep.subr.bf16.mxu0 %v3744
  %5147 = vmatpush1.bf16.msra.mxu0 %v3743
  %5148 = vmatprep.subr.bf16.mxu0 %v3748
  %5149 = vmatpush1.bf16.msra.mxu0 %v3747
  %5150 = vmatprep.subr.bf16.mxu0 %v3752
  %5151 = vmatpush1.bf16.msra.mxu0 %v3751
  %5152 = vmatprep.subr.bf16.mxu0 %v3756
  %5153 = vmatpush1.bf16.msra.mxu0 %v3755
  %5154 = vmatprep.subr.bf16.mxu0 %v3760
  %5155 = vmatpush1.bf16.msra.mxu0 %v3759
  %5156 = vmatprep.subr.bf16.mxu0 %v3764
  %5157 = vmatpush1.bf16.msra.mxu0 %v3763
  %5158 = vmatprep.subr.bf16.mxu0 %v3768
  %5159 = vmatpush1.bf16.msra.mxu0 %v3767
  %5160 = vmatprep.subr.bf16.mxu0 %v3772
  %5161 = vmatpush1.bf16.msra.mxu0 %v3771
  %5162 = vmatprep.subr.bf16.mxu0 %v3776
  %5163 = vmatpush1.bf16.msra.mxu0 %v3775
  %5164 = vmatprep.subr.bf16.mxu0 %v3780
  %5165 = vmatpush1.bf16.msra.mxu0 %v3779
  %5166 = vmatprep.subr.bf16.mxu0 %v3784
  %5167 = vmatpush1.bf16.msra.mxu0 %v3783
  %5168 = vmatprep.subr.bf16.mxu0 %v3788
  %5169 = vmatpush1.bf16.msra.mxu0 %v3787
  %5170 = vmatprep.mubr.bf16.mxu0 %v893
  %5171 = vmatmul.mubr.bf16.gmra.mrb[0].mxu0 %v892
  %v5172 = vpop.f32.mrb[0].mxu0
  %v5173 = vadd.f32 %v5132, %v5172
  %v5174 = vpop.f32.mrb[0].mxu0
  %v5175 = vadd.f32 %v5134, %v5174
  %v5176 = vpop.f32.mrb[0].mxu0
  %v5177 = vpop.f32.mrb[0].mxu0
  %5178 = vdwg.mxu0
  %5179 = vmatprep.subr.bf16.mxu0 %v3792
  %5180 = vmatpush1.bf16.msra.mxu0 %v3791
  %5181 = vmatprep.subr.bf16.mxu0 %v3796
  %5182 = vmatpush1.bf16.msra.mxu0 %v3795
  %5183 = vmatprep.subr.bf16.mxu0 %v3800
  %5184 = vmatpush1.bf16.msra.mxu0 %v3799
  %5185 = vmatprep.subr.bf16.mxu0 %v3804
  %5186 = vmatpush1.bf16.msra.mxu0 %v3803
  %5187 = vmatprep.subr.bf16.mxu0 %v3808
  %5188 = vmatpush1.bf16.msra.mxu0 %v3807
  %5189 = vmatprep.subr.bf16.mxu0 %v3812
  %5190 = vmatpush1.bf16.msra.mxu0 %v3811
  %5191 = vmatprep.subr.bf16.mxu0 %v3816
  %5192 = vmatpush1.bf16.msra.mxu0 %v3815
  %5193 = vmatprep.subr.bf16.mxu0 %v3820
  %5194 = vmatpush1.bf16.msra.mxu0 %v3819
  %5195 = vmatprep.subr.bf16.mxu0 %v3824
  %5196 = vmatpush1.bf16.msra.mxu0 %v3823
  %5197 = vmatprep.subr.bf16.mxu0 %v3828
  %5198 = vmatpush1.bf16.msra.mxu0 %v3827
  %5199 = vmatprep.subr.bf16.mxu0 %v3832
  %5200 = vmatpush1.bf16.msra.mxu0 %v3831
  %5201 = vmatprep.subr.bf16.mxu0 %v3836
  %5202 = vmatpush1.bf16.msra.mxu0 %v3835
  %5203 = vmatprep.subr.bf16.mxu0 %v3840
  %5204 = vmatpush1.bf16.msra.mxu0 %v3839
  %5205 = vmatprep.subr.bf16.mxu0 %v3844
  %5206 = vmatpush1.bf16.msra.mxu0 %v3843
  %5207 = vmatprep.subr.bf16.mxu0 %v3848
  %5208 = vmatpush1.bf16.msra.mxu0 %v3847
  %5209 = vmatprep.subr.bf16.mxu0 %v3852
  %5210 = vmatpush1.bf16.msra.mxu0 %v3851
  %5211 = vmatprep.mubr.bf16.mxu0 %v895
  %5212 = vmatmul.mubr.bf16.gmra.mrb[0].mxu0 %v894
  %v5213 = vpop.f32.mrb[0].mxu0
  %v5214 = vadd.f32 %v5173, %v5213
  %v5215 = vpop.f32.mrb[0].mxu0
  %v5216 = vadd.f32 %v5175, %v5215
  %v5217 = vpop.f32.mrb[0].mxu0
  %v5218 = vpop.f32.mrb[0].mxu0
  %5219 = vdwg.mxu0
  %5220 = vmatprep.subr.bf16.mxu0 %v3856
  %5221 = vmatpush1.bf16.msra.mxu0 %v3855
  %5222 = vmatprep.subr.bf16.mxu0 %v3860
  %5223 = vmatpush1.bf16.msra.mxu0 %v3859
  %5224 = vmatprep.subr.bf16.mxu0 %v3864
  %5225 = vmatpush1.bf16.msra.mxu0 %v3863
  %5226 = vmatprep.subr.bf16.mxu0 %v3868
  %5227 = vmatpush1.bf16.msra.mxu0 %v3867
  %5228 = vmatprep.subr.bf16.mxu0 %v3872
  %5229 = vmatpush1.bf16.msra.mxu0 %v3871
  %5230 = vmatprep.subr.bf16.mxu0 %v3876
  %5231 = vmatpush1.bf16.msra.mxu0 %v3875
  %5232 = vmatprep.subr.bf16.mxu0 %v3880
  %5233 = vmatpush1.bf16.msra.mxu0 %v3879
  %5234 = vmatprep.subr.bf16.mxu0 %v3884
  %5235 = vmatpush1.bf16.msra.mxu0 %v3883
  %5236 = vmatprep.subr.bf16.mxu0 %v3888
  %5237 = vmatpush1.bf16.msra.mxu0 %v3887
  %5238 = vmatprep.subr.bf16.mxu0 %v3892
  %5239 = vmatpush1.bf16.msra.mxu0 %v3891
  %5240 = vmatprep.subr.bf16.mxu0 %v3896
  %5241 = vmatpush1.bf16.msra.mxu0 %v3895
  %5242 = vmatprep.subr.bf16.mxu0 %v3900
  %5243 = vmatpush1.bf16.msra.mxu0 %v3899
  %5244 = vmatprep.subr.bf16.mxu0 %v3904
  %5245 = vmatpush1.bf16.msra.mxu0 %v3903
  %5246 = vmatprep.subr.bf16.mxu0 %v3908
  %5247 = vmatpush1.bf16.msra.mxu0 %v3907
  %5248 = vmatprep.subr.bf16.mxu0 %v3912
  %5249 = vmatpush1.bf16.msra.mxu0 %v3911
  %5250 = vmatprep.subr.bf16.mxu0 %v3916
  %5251 = vmatpush1.bf16.msra.mxu0 %v3915
  %5252 = vmatprep.mubr.bf16.mxu0 %v897
  %5253 = vmatmul.mubr.bf16.gmra.mrb[0].mxu0 %v896
  %v5254 = vpop.f32.mrb[0].mxu0
  %v5255 = vadd.f32 %v5214, %v5254
  %v5256 = vpop.f32.mrb[0].mxu0
  %v5257 = vadd.f32 %v5216, %v5256
  %v5258 = vpop.f32.mrb[0].mxu0
  %v5259 = vpop.f32.mrb[0].mxu0
  %5260 = vdwg.mxu0
  %5261 = vmatprep.subr.bf16.mxu0 %v3920
  %5262 = vmatpush1.bf16.msra.mxu0 %v3919
  %5263 = vmatprep.subr.bf16.mxu0 %v3924
  %5264 = vmatpush1.bf16.msra.mxu0 %v3923
  %5265 = vmatprep.subr.bf16.mxu0 %v3928
  %5266 = vmatpush1.bf16.msra.mxu0 %v3927
  %5267 = vmatprep.subr.bf16.mxu0 %v3932
  %5268 = vmatpush1.bf16.msra.mxu0 %v3931
  %5269 = vmatprep.subr.bf16.mxu0 %v3936
  %5270 = vmatpush1.bf16.msra.mxu0 %v3935
  %5271 = vmatprep.subr.bf16.mxu0 %v3940
  %5272 = vmatpush1.bf16.msra.mxu0 %v3939
  %5273 = vmatprep.subr.bf16.mxu0 %v3944
  %5274 = vmatpush1.bf16.msra.mxu0 %v3943
  %5275 = vmatprep.subr.bf16.mxu0 %v3948
  %5276 = vmatpush1.bf16.msra.mxu0 %v3947
  %5277 = vmatprep.subr.bf16.mxu0 %v3952
  %5278 = vmatpush1.bf16.msra.mxu0 %v3951
  %5279 = vmatprep.subr.bf16.mxu0 %v3956
  %5280 = vmatpush1.bf16.msra.mxu0 %v3955
  %5281 = vmatprep.subr.bf16.mxu0 %v3960
  %5282 = vmatpush1.bf16.msra.mxu0 %v3959
  %5283 = vmatprep.subr.bf16.mxu0 %v3964
  %5284 = vmatpush1.bf16.msra.mxu0 %v3963
  %5285 = vmatprep.subr.bf16.mxu0 %v3968
  %5286 = vmatpush1.bf16.msra.mxu0 %v3967
  %5287 = vmatprep.subr.bf16.mxu0 %v3972
  %5288 = vmatpush1.bf16.msra.mxu0 %v3971
  %5289 = vmatprep.subr.bf16.mxu0 %v3976
  %5290 = vmatpush1.bf16.msra.mxu0 %v3975
  %5291 = vmatprep.subr.bf16.mxu0 %v3980
  %5292 = vmatpush1.bf16.msra.mxu0 %v3979
  %5293 = vmatprep.mubr.bf16.mxu0 %v899
  %5294 = vmatmul.mubr.bf16.gmra.mrb[0].mxu0 %v898
  %v5295 = vpop.f32.mrb[0].mxu0
  %v5296 = vadd.f32 %v5255, %v5295
  %v5297 = vpop.f32.mrb[0].mxu0
  %v5298 = vadd.f32 %v5257, %v5297
  %v5299 = vpop.f32.mrb[0].mxu0
  %v5300 = vpop.f32.mrb[0].mxu0
  %5301 = vdwg.mxu0
  %5302 = vmatprep.subr.bf16.mxu0 %v3984
  %5303 = vmatpush1.bf16.msra.mxu0 %v3983
  %5304 = vmatprep.subr.bf16.mxu0 %v3988
  %5305 = vmatpush1.bf16.msra.mxu0 %v3987
  %5306 = vmatprep.subr.bf16.mxu0 %v3992
  %5307 = vmatpush1.bf16.msra.mxu0 %v3991
  %5308 = vmatprep.subr.bf16.mxu0 %v3996
  %5309 = vmatpush1.bf16.msra.mxu0 %v3995
  %5310 = vmatprep.subr.bf16.mxu0 %v4000
  %5311 = vmatpush1.bf16.msra.mxu0 %v3999
  %5312 = vmatprep.subr.bf16.mxu0 %v4004
  %5313 = vmatpush1.bf16.msra.mxu0 %v4003
  %5314 = vmatprep.subr.bf16.mxu0 %v4008
  %5315 = vmatpush1.bf16.msra.mxu0 %v4007
  %5316 = vmatprep.subr.bf16.mxu0 %v4012
  %5317 = vmatpush1.bf16.msra.mxu0 %v4011
  %5318 = vmatprep.subr.bf16.mxu0 %v4016
  %5319 = vmatpush1.bf16.msra.mxu0 %v4015
  %5320 = vmatprep.subr.bf16.mxu0 %v4020
  %5321 = vmatpush1.bf16.msra.mxu0 %v4019
  %5322 = vmatprep.subr.bf16.mxu0 %v4024
  %5323 = vmatpush1.bf16.msra.mxu0 %v4023
  %5324 = vmatprep.subr.bf16.mxu0 %v4028
  %5325 = vmatpush1.bf16.msra.mxu0 %v4027
  %5326 = vmatprep.subr.bf16.mxu0 %v4032
  %5327 = vmatpush1.bf16.msra.mxu0 %v4031
  %5328 = vmatprep.subr.bf16.mxu0 %v4036
  %5329 = vmatpush1.bf16.msra.mxu0 %v4035
  %5330 = vmatprep.subr.bf16.mxu0 %v4040
  %5331 = vmatpush1.bf16.msra.mxu0 %v4039
  %5332 = vmatprep.subr.bf16.mxu0 %v4044
  %5333 = vmatpush1.bf16.msra.mxu0 %v4043
  %5334 = vmatprep.mubr.bf16.mxu0 %v901
  %5335 = vmatmul.mubr.bf16.gmra.mrb[0].mxu0 %v900
  %v5336 = vpop.f32.mrb[0].mxu0
  %v5337 = vadd.f32 %v5296, %v5336
  %v5338 = vpop.f32.mrb[0].mxu0
  %v5339 = vadd.f32 %v5298, %v5338
  %v5340 = vpop.f32.mrb[0].mxu0
  %v5341 = vpop.f32.mrb[0].mxu0
  %5342 = vdwg.mxu0
  %5343 = vmatprep.subr.bf16.mxu0 %v4048
  %5344 = vmatpush1.bf16.msra.mxu0 %v4047
  %5345 = vmatprep.subr.bf16.mxu0 %v4052
  %5346 = vmatpush1.bf16.msra.mxu0 %v4051
  %5347 = vmatprep.subr.bf16.mxu0 %v4056
  %5348 = vmatpush1.bf16.msra.mxu0 %v4055
  %5349 = vmatprep.subr.bf16.mxu0 %v4060
  %5350 = vmatpush1.bf16.msra.mxu0 %v4059
  %5351 = vmatprep.subr.bf16.mxu0 0
  %5352 = vmatpush1.bf16.msra.mxu0 0
  %5353 = vmatprep.subr.bf16.mxu0 0
  %5354 = vmatpush1.bf16.msra.mxu0 0
  %5355 = vmatprep.subr.bf16.mxu0 0
  %5356 = vmatpush1.bf16.msra.mxu0 0
  %5357 = vmatprep.subr.bf16.mxu0 0
  %5358 = vmatpush1.bf16.msra.mxu0 0
  %5359 = vmatprep.subr.bf16.mxu0 0
  %5360 = vmatpush1.bf16.msra.mxu0 0
  %5361 = vmatprep.subr.bf16.mxu0 0
  %5362 = vmatpush1.bf16.msra.mxu0 0
  %5363 = vmatprep.subr.bf16.mxu0 0
  %5364 = vmatpush1.bf16.msra.mxu0 0
  %5365 = vmatprep.subr.bf16.mxu0 0
  %5366 = vmatpush1.bf16.msra.mxu0 0
  %5367 = vmatprep.subr.bf16.mxu0 0
  %5368 = vmatpush1.bf16.msra.mxu0 0
  %5369 = vmatprep.subr.bf16.mxu0 0
  %5370 = vmatpush1.bf16.msra.mxu0 0
  %5371 = vmatprep.subr.bf16.mxu0 0
  %5372 = vmatpush1.bf16.msra.mxu0 0
  %5373 = vmatprep.subr.bf16.mxu0 0
  %5374 = vmatpush1.bf16.msra.mxu0 0
  %5375 = vmatprep.mubr.bf16.mxu0 0
  %5376 = vmatmul.mubr.bf16.gmra.mrb[0].mxu0 %v4849
  %v5377 = vpop.f32.mrb[0].mxu0
  %v5378 = vadd.f32 %v5337, %v5377
  %v5379 = vpop.f32.mrb[0].mxu0
  %v5380 = vadd.f32 %v5339, %v5379
  %v5381 = vpop.f32.mrb[0].mxu0
  %v5382 = vpop.f32.mrb[0].mxu0
  %5383 = vdwg.mxu0
  %5384 = vmatprep.subr.bf16.mxu0 %v3282
  %5385 = vmatpush1.bf16.msra.mxu0 %v3281
  %5386 = vmatprep.subr.bf16.mxu0 %v3286
  %5387 = vmatpush1.bf16.msra.mxu0 %v3285
  %5388 = vmatprep.subr.bf16.mxu0 %v3290
  %5389 = vmatpush1.bf16.msra.mxu0 %v3289
  %5390 = vmatprep.subr.bf16.mxu0 %v3294
  %5391 = vmatpush1.bf16.msra.mxu0 %v3293
  %5392 = vmatprep.subr.bf16.mxu0 %v3298
  %5393 = vmatpush1.bf16.msra.mxu0 %v3297
  %5394 = vmatprep.subr.bf16.mxu0 %v3302
  %5395 = vmatpush1.bf16.msra.mxu0 %v3301
  %5396 = vmatprep.subr.bf16.mxu0 %v3306
  %5397 = vmatpush1.bf16.msra.mxu0 %v3305
  %5398 = vmatprep.subr.bf16.mxu0 %v3310
  %5399 = vmatpush1.bf16.msra.mxu0 %v3309
  %5400 = vmatprep.subr.bf16.mxu0 %v3314
  %5401 = vmatpush1.bf16.msra.mxu0 %v3313
  %5402 = vmatprep.subr.bf16.mxu0 %v3318
  %5403 = vmatpush1.bf16.msra.mxu0 %v3317
  %5404 = vmatprep.subr.bf16.mxu0 %v3322
  %5405 = vmatpush1.bf16.msra.mxu0 %v3321
  %5406 = vmatprep.subr.bf16.mxu0 %v3326
  %5407 = vmatpush1.bf16.msra.mxu0 %v3325
  %5408 = vmatprep.subr.bf16.mxu0 %v3330
  %5409 = vmatpush1.bf16.msra.mxu0 %v3329
  %5410 = vmatprep.subr.bf16.mxu0 %v3334
  %5411 = vmatpush1.bf16.msra.mxu0 %v3333
  %5412 = vmatprep.subr.bf16.mxu0 %v3338
  %5413 = vmatpush1.bf16.msra.mxu0 %v3337
  %5414 = vmatprep.subr.bf16.mxu0 %v3342
  %5415 = vmatpush1.bf16.msra.mxu0 %v3341
  %5416 = vmatprep.mubr.bf16.mxu0 %v879
  %5417 = vmatmul.mubr.bf16.gmra.mrb[0].mxu0 %v878
  %v5418 = vpop.f32.mrb[0].mxu0
  %v5419 = vadd.f32 %v831, %v5418
  %v5420 = vpop.f32.mrb[0].mxu0
  %v5421 = vadd.f32 %v835, %v5420
  %v5422 = vpop.f32.mrb[0].mxu0
  %v5423 = vpop.f32.mrb[0].mxu0
  %5424 = vdwg.mxu0
  %5425 = vmatprep.subr.bf16.mxu0 %v3346
  %5426 = vmatpush1.bf16.msra.mxu0 %v3345
  %5427 = vmatprep.subr.bf16.mxu0 %v3350
  %5428 = vmatpush1.bf16.msra.mxu0 %v3349
  %5429 = vmatprep.subr.bf16.mxu0 %v3354
  %5430 = vmatpush1.bf16.msra.mxu0 %v3353
  %5431 = vmatprep.subr.bf16.mxu0 %v3358
  %5432 = vmatpush1.bf16.msra.mxu0 %v3357
  %5433 = vmatprep.subr.bf16.mxu0 %v3362
  %5434 = vmatpush1.bf16.msra.mxu0 %v3361
  %5435 = vmatprep.subr.bf16.mxu0 %v3366
  %5436 = vmatpush1.bf16.msra.mxu0 %v3365
  %5437 = vmatprep.subr.bf16.mxu0 %v3370
  %5438 = vmatpush1.bf16.msra.mxu0 %v3369
  %5439 = vmatprep.subr.bf16.mxu0 %v3374
  %5440 = vmatpush1.bf16.msra.mxu0 %v3373
  %5441 = vmatprep.subr.bf16.mxu0 %v3378
  %5442 = vmatpush1.bf16.msra.mxu0 %v3377
  %5443 = vmatprep.subr.bf16.mxu0 %v3382
  %5444 = vmatpush1.bf16.msra.mxu0 %v3381
  %5445 = vmatprep.subr.bf16.mxu0 %v3386
  %5446 = vmatpush1.bf16.msra.mxu0 %v3385
  %5447 = vmatprep.subr.bf16.mxu0 %v3390
  %5448 = vmatpush1.bf16.msra.mxu0 %v3389
  %5449 = vmatprep.subr.bf16.mxu0 %v3394
  %5450 = vmatpush1.bf16.msra.mxu0 %v3393
  %5451 = vmatprep.subr.bf16.mxu0 %v3398
  %5452 = vmatpush1.bf16.msra.mxu0 %v3397
  %5453 = vmatprep.subr.bf16.mxu0 %v3402
  %5454 = vmatpush1.bf16.msra.mxu0 %v3401
  %5455 = vmatprep.subr.bf16.mxu0 %v3406
  %5456 = vmatpush1.bf16.msra.mxu0 %v3405
  %5457 = vmatprep.mubr.bf16.mxu0 %v881
  %5458 = vmatmul.mubr.bf16.gmra.mrb[0].mxu0 %v880
  %v5459 = vpop.f32.mrb[0].mxu0
  %v5460 = vadd.f32 %v5419, %v5459
  %v5461 = vpop.f32.mrb[0].mxu0
  %v5462 = vadd.f32 %v5421, %v5461
  %v5463 = vpop.f32.mrb[0].mxu0
  %v5464 = vpop.f32.mrb[0].mxu0
  %5465 = vdwg.mxu0
  %5466 = vmatprep.subr.bf16.mxu0 %v3410
  %5467 = vmatpush1.bf16.msra.mxu0 %v3409
  %5468 = vmatprep.subr.bf16.mxu0 %v3414
  %5469 = vmatpush1.bf16.msra.mxu0 %v3413
  %5470 = vmatprep.subr.bf16.mxu0 %v3418
  %5471 = vmatpush1.bf16.msra.mxu0 %v3417
  %5472 = vmatprep.subr.bf16.mxu0 %v3422
  %5473 = vmatpush1.bf16.msra.mxu0 %v3421
  %5474 = vmatprep.subr.bf16.mxu0 %v3426
  %5475 = vmatpush1.bf16.msra.mxu0 %v3425
  %5476 = vmatprep.subr.bf16.mxu0 %v3430
  %5477 = vmatpush1.bf16.msra.mxu0 %v3429
  %5478 = vmatprep.subr.bf16.mxu0 %v3434
  %5479 = vmatpush1.bf16.msra.mxu0 %v3433
  %5480 = vmatprep.subr.bf16.mxu0 %v3438
  %5481 = vmatpush1.bf16.msra.mxu0 %v3437
  %5482 = vmatprep.subr.bf16.mxu0 %v3442
  %5483 = vmatpush1.bf16.msra.mxu0 %v3441
  %5484 = vmatprep.subr.bf16.mxu0 %v3446
  %5485 = vmatpush1.bf16.msra.mxu0 %v3445
  %5486 = vmatprep.subr.bf16.mxu0 %v3450
  %5487 = vmatpush1.bf16.msra.mxu0 %v3449
  %5488 = vmatprep.subr.bf16.mxu0 %v3454
  %5489 = vmatpush1.bf16.msra.mxu0 %v3453
  %5490 = vmatprep.subr.bf16.mxu0 %v3458
  %5491 = vmatpush1.bf16.msra.mxu0 %v3457
  %5492 = vmatprep.subr.bf16.mxu0 %v3462
  %5493 = vmatpush1.bf16.msra.mxu0 %v3461
  %5494 = vmatprep.subr.bf16.mxu0 %v3466
  %5495 = vmatpush1.bf16.msra.mxu0 %v3465
  %5496 = vmatprep.subr.bf16.mxu0 %v3470
  %5497 = vmatpush1.bf16.msra.mxu0 %v3469
  %5498 = vmatprep.mubr.bf16.mxu0 %v883
  %5499 = vmatmul.mubr.bf16.gmra.mrb[0].mxu0 %v882
  %v5500 = vpop.f32.mrb[0].mxu0
  %v5501 = vadd.f32 %v5460, %v5500
  %v5502 = vpop.f32.mrb[0].mxu0
  %v5503 = vadd.f32 %v5462, %v5502
  %v5504 = vpop.f32.mrb[0].mxu0
  %v5505 = vpop.f32.mrb[0].mxu0
  %5506 = vdwg.mxu0
  %5507 = vmatprep.subr.bf16.mxu0 %v3474
  %5508 = vmatpush1.bf16.msra.mxu0 %v3473
  %5509 = vmatprep.subr.bf16.mxu0 %v3478
  %5510 = vmatpush1.bf16.msra.mxu0 %v3477
  %5511 = vmatprep.subr.bf16.mxu0 %v3482
  %5512 = vmatpush1.bf16.msra.mxu0 %v3481
  %5513 = vmatprep.subr.bf16.mxu0 %v3486
  %5514 = vmatpush1.bf16.msra.mxu0 %v3485
  %5515 = vmatprep.subr.bf16.mxu0 %v3490
  %5516 = vmatpush1.bf16.msra.mxu0 %v3489
  %5517 = vmatprep.subr.bf16.mxu0 %v3494
  %5518 = vmatpush1.bf16.msra.mxu0 %v3493
  %5519 = vmatprep.subr.bf16.mxu0 %v3498
  %5520 = vmatpush1.bf16.msra.mxu0 %v3497
  %5521 = vmatprep.subr.bf16.mxu0 %v3502
  %5522 = vmatpush1.bf16.msra.mxu0 %v3501
  %5523 = vmatprep.subr.bf16.mxu0 %v3506
  %5524 = vmatpush1.bf16.msra.mxu0 %v3505
  %5525 = vmatprep.subr.bf16.mxu0 %v3510
  %5526 = vmatpush1.bf16.msra.mxu0 %v3509
  %5527 = vmatprep.subr.bf16.mxu0 %v3514
  %5528 = vmatpush1.bf16.msra.mxu0 %v3513
  %5529 = vmatprep.subr.bf16.mxu0 %v3518
  %5530 = vmatpush1.bf16.msra.mxu0 %v3517
  %5531 = vmatprep.subr.bf16.mxu0 %v3522
  %5532 = vmatpush1.bf16.msra.mxu0 %v3521
  %5533 = vmatprep.subr.bf16.mxu0 %v3526
  %5534 = vmatpush1.bf16.msra.mxu0 %v3525
  %5535 = vmatprep.subr.bf16.mxu0 %v3530
  %5536 = vmatpush1.bf16.msra.mxu0 %v3529
  %5537 = vmatprep.subr.bf16.mxu0 %v3534
  %5538 = vmatpush1.bf16.msra.mxu0 %v3533
  %5539 = vmatprep.mubr.bf16.mxu0 %v885
  %5540 = vmatmul.mubr.bf16.gmra.mrb[0].mxu0 %v884
  %v5541 = vpop.f32.mrb[0].mxu0
  %v5542 = vadd.f32 %v5501, %v5541
  %v5543 = vpop.f32.mrb[0].mxu0
  %v5544 = vadd.f32 %v5503, %v5543
  %v5545 = vpop.f32.mrb[0].mxu0
  %v5546 = vpop.f32.mrb[0].mxu0
  %5547 = vdwg.mxu0
  %5548 = vmatprep.subr.bf16.mxu0 %v3538
  %5549 = vmatpush1.bf16.msra.mxu0 %v3537
  %5550 = vmatprep.subr.bf16.mxu0 %v3542
  %5551 = vmatpush1.bf16.msra.mxu0 %v3541
  %5552 = vmatprep.subr.bf16.mxu0 %v3546
  %5553 = vmatpush1.bf16.msra.mxu0 %v3545
  %5554 = vmatprep.subr.bf16.mxu0 %v3550
  %5555 = vmatpush1.bf16.msra.mxu0 %v3549
  %5556 = vmatprep.subr.bf16.mxu0 %v3554
  %5557 = vmatpush1.bf16.msra.mxu0 %v3553
  %5558 = vmatprep.subr.bf16.mxu0 %v3558
  %5559 = vmatpush1.bf16.msra.mxu0 %v3557
  %5560 = vmatprep.subr.bf16.mxu0 %v3562
  %5561 = vmatpush1.bf16.msra.mxu0 %v3561
  %5562 = vmatprep.subr.bf16.mxu0 %v3566
  %5563 = vmatpush1.bf16.msra.mxu0 %v3565
  %5564 = vmatprep.subr.bf16.mxu0 %v3570
  %5565 = vmatpush1.bf16.msra.mxu0 %v3569
  %5566 = vmatprep.subr.bf16.mxu0 %v3574
  %5567 = vmatpush1.bf16.msra.mxu0 %v3573
  %5568 = vmatprep.subr.bf16.mxu0 %v3578
  %5569 = vmatpush1.bf16.msra.mxu0 %v3577
  %5570 = vmatprep.subr.bf16.mxu0 %v3582
  %5571 = vmatpush1.bf16.msra.mxu0 %v3581
  %5572 = vmatprep.subr.bf16.mxu0 %v3586
  %5573 = vmatpush1.bf16.msra.mxu0 %v3585
  %5574 = vmatprep.subr.bf16.mxu0 %v3590
  %5575 = vmatpush1.bf16.msra.mxu0 %v3589
  %5576 = vmatprep.subr.bf16.mxu0 %v3594
  %5577 = vmatpush1.bf16.msra.mxu0 %v3593
  %5578 = vmatprep.subr.bf16.mxu0 %v3598
  %5579 = vmatpush1.bf16.msra.mxu0 %v3597
  %5580 = vmatprep.mubr.bf16.mxu0 %v887
  %5581 = vmatmul.mubr.bf16.gmra.mrb[0].mxu0 %v886
  %v5582 = vpop.f32.mrb[0].mxu0
  %v5583 = vadd.f32 %v5542, %v5582
  %v5584 = vpop.f32.mrb[0].mxu0
  %v5585 = vadd.f32 %v5544, %v5584
  %v5586 = vpop.f32.mrb[0].mxu0
  %v5587 = vpop.f32.mrb[0].mxu0
  %5588 = vdwg.mxu0
  %5589 = vmatprep.subr.bf16.mxu0 %v3602
  %5590 = vmatpush1.bf16.msra.mxu0 %v3601
  %5591 = vmatprep.subr.bf16.mxu0 %v3606
  %5592 = vmatpush1.bf16.msra.mxu0 %v3605
  %5593 = vmatprep.subr.bf16.mxu0 %v3610
  %5594 = vmatpush1.bf16.msra.mxu0 %v3609
  %5595 = vmatprep.subr.bf16.mxu0 %v3614
  %5596 = vmatpush1.bf16.msra.mxu0 %v3613
  %5597 = vmatprep.subr.bf16.mxu0 %v3618
  %5598 = vmatpush1.bf16.msra.mxu0 %v3617
  %5599 = vmatprep.subr.bf16.mxu0 %v3622
  %5600 = vmatpush1.bf16.msra.mxu0 %v3621
  %5601 = vmatprep.subr.bf16.mxu0 %v3626
  %5602 = vmatpush1.bf16.msra.mxu0 %v3625
  %5603 = vmatprep.subr.bf16.mxu0 %v3630
  %5604 = vmatpush1.bf16.msra.mxu0 %v3629
  %5605 = vmatprep.subr.bf16.mxu0 %v3634
  %5606 = vmatpush1.bf16.msra.mxu0 %v3633
  %5607 = vmatprep.subr.bf16.mxu0 %v3638
  %5608 = vmatpush1.bf16.msra.mxu0 %v3637
  %5609 = vmatprep.subr.bf16.mxu0 %v3642
  %5610 = vmatpush1.bf16.msra.mxu0 %v3641
  %5611 = vmatprep.subr.bf16.mxu0 %v3646
  %5612 = vmatpush1.bf16.msra.mxu0 %v3645
  %5613 = vmatprep.subr.bf16.mxu0 %v3650
  %5614 = vmatpush1.bf16.msra.mxu0 %v3649
  %5615 = vmatprep.subr.bf16.mxu0 %v3654
  %5616 = vmatpush1.bf16.msra.mxu0 %v3653
  %5617 = vmatprep.subr.bf16.mxu0 %v3658
  %5618 = vmatpush1.bf16.msra.mxu0 %v3657
  %5619 = vmatprep.subr.bf16.mxu0 %v3662
  %5620 = vmatpush1.bf16.msra.mxu0 %v3661
  %5621 = vmatprep.mubr.bf16.mxu0 %v889
  %5622 = vmatmul.mubr.bf16.gmra.mrb[0].mxu0 %v888
  %v5623 = vpop.f32.mrb[0].mxu0
  %v5624 = vadd.f32 %v5583, %v5623
  %v5625 = vpop.f32.mrb[0].mxu0
  %v5626 = vadd.f32 %v5585, %v5625
  %v5627 = vpop.f32.mrb[0].mxu0
  %v5628 = vpop.f32.mrb[0].mxu0
  %5629 = vdwg.mxu0
  %5630 = vmatprep.subr.bf16.mxu0 %v3666
  %5631 = vmatpush1.bf16.msra.mxu0 %v3665
  %5632 = vmatprep.subr.bf16.mxu0 %v3670
  %5633 = vmatpush1.bf16.msra.mxu0 %v3669
  %5634 = vmatprep.subr.bf16.mxu0 %v3674
  %5635 = vmatpush1.bf16.msra.mxu0 %v3673
  %5636 = vmatprep.subr.bf16.mxu0 %v3678
  %5637 = vmatpush1.bf16.msra.mxu0 %v3677
  %5638 = vmatprep.subr.bf16.mxu0 %v3682
  %5639 = vmatpush1.bf16.msra.mxu0 %v3681
  %5640 = vmatprep.subr.bf16.mxu0 %v3686
  %5641 = vmatpush1.bf16.msra.mxu0 %v3685
  %5642 = vmatprep.subr.bf16.mxu0 %v3690
  %5643 = vmatpush1.bf16.msra.mxu0 %v3689
  %5644 = vmatprep.subr.bf16.mxu0 %v3694
  %5645 = vmatpush1.bf16.msra.mxu0 %v3693
  %5646 = vmatprep.subr.bf16.mxu0 %v3698
  %5647 = vmatpush1.bf16.msra.mxu0 %v3697
  %5648 = vmatprep.subr.bf16.mxu0 %v3702
  %5649 = vmatpush1.bf16.msra.mxu0 %v3701
  %5650 = vmatprep.subr.bf16.mxu0 %v3706
  %5651 = vmatpush1.bf16.msra.mxu0 %v3705
  %5652 = vmatprep.subr.bf16.mxu0 %v3710
  %5653 = vmatpush1.bf16.msra.mxu0 %v3709
  %5654 = vmatprep.subr.bf16.mxu0 %v3714
  %5655 = vmatpush1.bf16.msra.mxu0 %v3713
  %5656 = vmatprep.subr.bf16.mxu0 %v3718
  %5657 = vmatpush1.bf16.msra.mxu0 %v3717
  %5658 = vmatprep.subr.bf16.mxu0 %v3722
  %5659 = vmatpush1.bf16.msra.mxu0 %v3721
  %5660 = vmatprep.subr.bf16.mxu0 %v3726
  %5661 = vmatpush1.bf16.msra.mxu0 %v3725
  %5662 = vmatprep.mubr.bf16.mxu0 %v891
  %5663 = vmatmul.mubr.bf16.gmra.mrb[0].mxu0 %v890
  %v5664 = vpop.f32.mrb[0].mxu0
  %v5665 = vadd.f32 %v5624, %v5664
  %v5666 = vpop.f32.mrb[0].mxu0
  %v5667 = vadd.f32 %v5626, %v5666
  %v5668 = vpop.f32.mrb[0].mxu0
  %v5669 = vpop.f32.mrb[0].mxu0
  %5670 = vdwg.mxu0
  %5671 = vmatprep.subr.bf16.mxu0 %v3730
  %5672 = vmatpush1.bf16.msra.mxu0 %v3729
  %5673 = vmatprep.subr.bf16.mxu0 %v3734
  %5674 = vmatpush1.bf16.msra.mxu0 %v3733
  %5675 = vmatprep.subr.bf16.mxu0 %v3738
  %5676 = vmatpush1.bf16.msra.mxu0 %v3737
  %5677 = vmatprep.subr.bf16.mxu0 %v3742
  %5678 = vmatpush1.bf16.msra.mxu0 %v3741
  %5679 = vmatprep.subr.bf16.mxu0 %v3746
  %5680 = vmatpush1.bf16.msra.mxu0 %v3745
  %5681 = vmatprep.subr.bf16.mxu0 %v3750
  %5682 = vmatpush1.bf16.msra.mxu0 %v3749
  %5683 = vmatprep.subr.bf16.mxu0 %v3754
  %5684 = vmatpush1.bf16.msra.mxu0 %v3753
  %5685 = vmatprep.subr.bf16.mxu0 %v3758
  %5686 = vmatpush1.bf16.msra.mxu0 %v3757
  %5687 = vmatprep.subr.bf16.mxu0 %v3762
  %5688 = vmatpush1.bf16.msra.mxu0 %v3761
  %5689 = vmatprep.subr.bf16.mxu0 %v3766
  %5690 = vmatpush1.bf16.msra.mxu0 %v3765
  %5691 = vmatprep.subr.bf16.mxu0 %v3770
  %5692 = vmatpush1.bf16.msra.mxu0 %v3769
  %5693 = vmatprep.subr.bf16.mxu0 %v3774
  %5694 = vmatpush1.bf16.msra.mxu0 %v3773
  %5695 = vmatprep.subr.bf16.mxu0 %v3778
  %5696 = vmatpush1.bf16.msra.mxu0 %v3777
  %5697 = vmatprep.subr.bf16.mxu0 %v3782
  %5698 = vmatpush1.bf16.msra.mxu0 %v3781
  %5699 = vmatprep.subr.bf16.mxu0 %v3786
  %5700 = vmatpush1.bf16.msra.mxu0 %v3785
  %5701 = vmatprep.subr.bf16.mxu0 %v3790
  %5702 = vmatpush1.bf16.msra.mxu0 %v3789
  %5703 = vmatprep.mubr.bf16.mxu0 %v893
  %5704 = vmatmul.mubr.bf16.gmra.mrb[0].mxu0 %v892
  %v5705 = vpop.f32.mrb[0].mxu0
  %v5706 = vadd.f32 %v5665, %v5705
  %v5707 = vpop.f32.mrb[0].mxu0
  %v5708 = vadd.f32 %v5667, %v5707
  %v5709 = vpop.f32.mrb[0].mxu0
  %v5710 = vpop.f32.mrb[0].mxu0
  %5711 = vdwg.mxu0
  %5712 = vmatprep.subr.bf16.mxu0 %v3794
  %5713 = vmatpush1.bf16.msra.mxu0 %v3793
  %5714 = vmatprep.subr.bf16.mxu0 %v3798
  %5715 = vmatpush1.bf16.msra.mxu0 %v3797
  %5716 = vmatprep.subr.bf16.mxu0 %v3802
  %5717 = vmatpush1.bf16.msra.mxu0 %v3801
  %5718 = vmatprep.subr.bf16.mxu0 %v3806
  %5719 = vmatpush1.bf16.msra.mxu0 %v3805
  %5720 = vmatprep.subr.bf16.mxu0 %v3810
  %5721 = vmatpush1.bf16.msra.mxu0 %v3809
  %5722 = vmatprep.subr.bf16.mxu0 %v3814
  %5723 = vmatpush1.bf16.msra.mxu0 %v3813
  %5724 = vmatprep.subr.bf16.mxu0 %v3818
  %5725 = vmatpush1.bf16.msra.mxu0 %v3817
  %5726 = vmatprep.subr.bf16.mxu0 %v3822
  %5727 = vmatpush1.bf16.msra.mxu0 %v3821
  %5728 = vmatprep.subr.bf16.mxu0 %v3826
  %5729 = vmatpush1.bf16.msra.mxu0 %v3825
  %5730 = vmatprep.subr.bf16.mxu0 %v3830
  %5731 = vmatpush1.bf16.msra.mxu0 %v3829
  %5732 = vmatprep.subr.bf16.mxu0 %v3834
  %5733 = vmatpush1.bf16.msra.mxu0 %v3833
  %5734 = vmatprep.subr.bf16.mxu0 %v3838
  %5735 = vmatpush1.bf16.msra.mxu0 %v3837
  %5736 = vmatprep.subr.bf16.mxu0 %v3842
  %5737 = vmatpush1.bf16.msra.mxu0 %v3841
  %5738 = vmatprep.subr.bf16.mxu0 %v3846
  %5739 = vmatpush1.bf16.msra.mxu0 %v3845
  %5740 = vmatprep.subr.bf16.mxu0 %v3850
  %5741 = vmatpush1.bf16.msra.mxu0 %v3849
  %5742 = vmatprep.subr.bf16.mxu0 %v3854
  %5743 = vmatpush1.bf16.msra.mxu0 %v3853
  %5744 = vmatprep.mubr.bf16.mxu0 %v895
  %5745 = vmatmul.mubr.bf16.gmra.mrb[0].mxu0 %v894
  %v5746 = vpop.f32.mrb[0].mxu0
  %v5747 = vadd.f32 %v5706, %v5746
  %v5748 = vpop.f32.mrb[0].mxu0
  %v5749 = vadd.f32 %v5708, %v5748
  %v5750 = vpop.f32.mrb[0].mxu0
  %v5751 = vpop.f32.mrb[0].mxu0
  %5752 = vdwg.mxu0
  %5753 = vmatprep.subr.bf16.mxu0 %v3858
  %5754 = vmatpush1.bf16.msra.mxu0 %v3857
  %5755 = vmatprep.subr.bf16.mxu0 %v3862
  %5756 = vmatpush1.bf16.msra.mxu0 %v3861
  %5757 = vmatprep.subr.bf16.mxu0 %v3866
  %5758 = vmatpush1.bf16.msra.mxu0 %v3865
  %5759 = vmatprep.subr.bf16.mxu0 %v3870
  %5760 = vmatpush1.bf16.msra.mxu0 %v3869
  %5761 = vmatprep.subr.bf16.mxu0 %v3874
  %5762 = vmatpush1.bf16.msra.mxu0 %v3873
  %5763 = vmatprep.subr.bf16.mxu0 %v3878
  %5764 = vmatpush1.bf16.msra.mxu0 %v3877
  %5765 = vmatprep.subr.bf16.mxu0 %v3882
  %5766 = vmatpush1.bf16.msra.mxu0 %v3881
  %5767 = vmatprep.subr.bf16.mxu0 %v3886
  %5768 = vmatpush1.bf16.msra.mxu0 %v3885
  %5769 = vmatprep.subr.bf16.mxu0 %v3890
  %5770 = vmatpush1.bf16.msra.mxu0 %v3889
  %5771 = vmatprep.subr.bf16.mxu0 %v3894
  %5772 = vmatpush1.bf16.msra.mxu0 %v3893
  %5773 = vmatprep.subr.bf16.mxu0 %v3898
  %5774 = vmatpush1.bf16.msra.mxu0 %v3897
  %5775 = vmatprep.subr.bf16.mxu0 %v3902
  %5776 = vmatpush1.bf16.msra.mxu0 %v3901
  %5777 = vmatprep.subr.bf16.mxu0 %v3906
  %5778 = vmatpush1.bf16.msra.mxu0 %v3905
  %5779 = vmatprep.subr.bf16.mxu0 %v3910
  %5780 = vmatpush1.bf16.msra.mxu0 %v3909
  %5781 = vmatprep.subr.bf16.mxu0 %v3914
  %5782 = vmatpush1.bf16.msra.mxu0 %v3913
  %5783 = vmatprep.subr.bf16.mxu0 %v3918
  %5784 = vmatpush1.bf16.msra.mxu0 %v3917
  %5785 = vmatprep.mubr.bf16.mxu0 %v897
  %5786 = vmatmul.mubr.bf16.gmra.mrb[0].mxu0 %v896
  %v5787 = vpop.f32.mrb[0].mxu0
  %v5788 = vadd.f32 %v5747, %v5787
  %v5789 = vpop.f32.mrb[0].mxu0
  %v5790 = vadd.f32 %v5749, %v5789
  %v5791 = vpop.f32.mrb[0].mxu0
  %v5792 = vpop.f32.mrb[0].mxu0
  %5793 = vdwg.mxu0
  %5794 = vmatprep.subr.bf16.mxu0 %v3922
  %5795 = vmatpush1.bf16.msra.mxu0 %v3921
  %5796 = vmatprep.subr.bf16.mxu0 %v3926
  %5797 = vmatpush1.bf16.msra.mxu0 %v3925
  %5798 = vmatprep.subr.bf16.mxu0 %v3930
  %5799 = vmatpush1.bf16.msra.mxu0 %v3929
  %5800 = vmatprep.subr.bf16.mxu0 %v3934
  %5801 = vmatpush1.bf16.msra.mxu0 %v3933
  %5802 = vmatprep.subr.bf16.mxu0 %v3938
  %5803 = vmatpush1.bf16.msra.mxu0 %v3937
  %5804 = vmatprep.subr.bf16.mxu0 %v3942
  %5805 = vmatpush1.bf16.msra.mxu0 %v3941
  %5806 = vmatprep.subr.bf16.mxu0 %v3946
  %5807 = vmatpush1.bf16.msra.mxu0 %v3945
  %5808 = vmatprep.subr.bf16.mxu0 %v3950
  %5809 = vmatpush1.bf16.msra.mxu0 %v3949
  %5810 = vmatprep.subr.bf16.mxu0 %v3954
  %5811 = vmatpush1.bf16.msra.mxu0 %v3953
  %5812 = vmatprep.subr.bf16.mxu0 %v3958
  %5813 = vmatpush1.bf16.msra.mxu0 %v3957
  %5814 = vmatprep.subr.bf16.mxu0 %v3962
  %5815 = vmatpush1.bf16.msra.mxu0 %v3961
  %5816 = vmatprep.subr.bf16.mxu0 %v3966
  %5817 = vmatpush1.bf16.msra.mxu0 %v3965
  %5818 = vmatprep.subr.bf16.mxu0 %v3970
  %5819 = vmatpush1.bf16.msra.mxu0 %v3969
  %5820 = vmatprep.subr.bf16.mxu0 %v3974
  %5821 = vmatpush1.bf16.msra.mxu0 %v3973
  %5822 = vmatprep.subr.bf16.mxu0 %v3978
  %5823 = vmatpush1.bf16.msra.mxu0 %v3977
  %5824 = vmatprep.subr.bf16.mxu0 %v3982
  %5825 = vmatpush1.bf16.msra.mxu0 %v3981
  %5826 = vmatprep.mubr.bf16.mxu0 %v899
  %5827 = vmatmul.mubr.bf16.gmra.mrb[0].mxu0 %v898
  %v5828 = vpop.f32.mrb[0].mxu0
  %v5829 = vadd.f32 %v5788, %v5828
  %v5830 = vpop.f32.mrb[0].mxu0
  %v5831 = vadd.f32 %v5790, %v5830
  %v5832 = vpop.f32.mrb[0].mxu0
  %v5833 = vpop.f32.mrb[0].mxu0
  %5834 = vdwg.mxu0
  %5835 = vmatprep.subr.bf16.mxu0 %v3986
  %5836 = vmatpush1.bf16.msra.mxu0 %v3985
  %5837 = vmatprep.subr.bf16.mxu0 %v3990
  %5838 = vmatpush1.bf16.msra.mxu0 %v3989
  %5839 = vmatprep.subr.bf16.mxu0 %v3994
  %5840 = vmatpush1.bf16.msra.mxu0 %v3993
  %5841 = vmatprep.subr.bf16.mxu0 %v3998
  %5842 = vmatpush1.bf16.msra.mxu0 %v3997
  %5843 = vmatprep.subr.bf16.mxu0 %v4002
  %5844 = vmatpush1.bf16.msra.mxu0 %v4001
  %5845 = vmatprep.subr.bf16.mxu0 %v4006
  %5846 = vmatpush1.bf16.msra.mxu0 %v4005
  %5847 = vmatprep.subr.bf16.mxu0 %v4010
  %5848 = vmatpush1.bf16.msra.mxu0 %v4009
  %5849 = vmatprep.subr.bf16.mxu0 %v4014
  %5850 = vmatpush1.bf16.msra.mxu0 %v4013
  %5851 = vmatprep.subr.bf16.mxu0 %v4018
  %5852 = vmatpush1.bf16.msra.mxu0 %v4017
  %5853 = vmatprep.subr.bf16.mxu0 %v4022
  %5854 = vmatpush1.bf16.msra.mxu0 %v4021
  %5855 = vmatprep.subr.bf16.mxu0 %v4026
  %5856 = vmatpush1.bf16.msra.mxu0 %v4025
  %5857 = vmatprep.subr.bf16.mxu0 %v4030
  %5858 = vmatpush1.bf16.msra.mxu0 %v4029
  %5859 = vmatprep.subr.bf16.mxu0 %v4034
  %5860 = vmatpush1.bf16.msra.mxu0 %v4033
  %5861 = vmatprep.subr.bf16.mxu0 %v4038
  %5862 = vmatpush1.bf16.msra.mxu0 %v4037
  %5863 = vmatprep.subr.bf16.mxu0 %v4042
  %5864 = vmatpush1.bf16.msra.mxu0 %v4041
  %5865 = vmatprep.subr.bf16.mxu0 %v4046
  %5866 = vmatpush1.bf16.msra.mxu0 %v4045
  %5867 = vmatprep.mubr.bf16.mxu0 %v901
  %5868 = vmatmul.mubr.bf16.gmra.mrb[0].mxu0 %v900
  %v5869 = vpop.f32.mrb[0].mxu0
  %v5870 = vadd.f32 %v5829, %v5869
  %v5871 = vpop.f32.mrb[0].mxu0
  %v5872 = vadd.f32 %v5831, %v5871
  %v5873 = vpop.f32.mrb[0].mxu0
  %v5874 = vpop.f32.mrb[0].mxu0
  %5875 = vdwg.mxu0
  %5876 = vmatprep.subr.bf16.mxu0 %v4050
  %5877 = vmatpush1.bf16.msra.mxu0 %v4049
  %5878 = vmatprep.subr.bf16.mxu0 %v4054
  %5879 = vmatpush1.bf16.msra.mxu0 %v4053
  %5880 = vmatprep.subr.bf16.mxu0 %v4058
  %5881 = vmatpush1.bf16.msra.mxu0 %v4057
  %5882 = vmatprep.subr.bf16.mxu0 %v4062
  %5883 = vmatpush1.bf16.msra.mxu0 %v4061
  %5884 = vmatprep.subr.bf16.mxu0 0
  %5885 = vmatpush1.bf16.msra.mxu0 0
  %5886 = vmatprep.subr.bf16.mxu0 0
  %5887 = vmatpush1.bf16.msra.mxu0 0
  %5888 = vmatprep.subr.bf16.mxu0 0
  %5889 = vmatpush1.bf16.msra.mxu0 0
  %5890 = vmatprep.subr.bf16.mxu0 0
  %5891 = vmatpush1.bf16.msra.mxu0 0
  %5892 = vmatprep.subr.bf16.mxu0 0
  %5893 = vmatpush1.bf16.msra.mxu0 0
  %5894 = vmatprep.subr.bf16.mxu0 0
  %5895 = vmatpush1.bf16.msra.mxu0 0
  %5896 = vmatprep.subr.bf16.mxu0 0
  %5897 = vmatpush1.bf16.msra.mxu0 0
  %5898 = vmatprep.subr.bf16.mxu0 0
  %5899 = vmatpush1.bf16.msra.mxu0 0
  %5900 = vmatprep.subr.bf16.mxu0 0
  %5901 = vmatpush1.bf16.msra.mxu0 0
  %5902 = vmatprep.subr.bf16.mxu0 0
  %5903 = vmatpush1.bf16.msra.mxu0 0
  %5904 = vmatprep.subr.bf16.mxu0 0
  %5905 = vmatpush1.bf16.msra.mxu0 0
  %5906 = vmatprep.subr.bf16.mxu0 0
  %5907 = vmatpush1.bf16.msra.mxu0 0
  %5908 = vmatprep.mubr.bf16.mxu0 0
  %5909 = vmatmul.mubr.bf16.gmra.mrb[0].mxu0 %v4849
  %v5910 = vpop.f32.mrb[0].mxu0
  %v5911 = vadd.f32 %v5870, %v5910
  %v5912 = vpop.f32.mrb[0].mxu0
  %v5913 = vadd.f32 %v5872, %v5912
  %v5914 = vpop.f32.mrb[0].mxu0
  %v5915 = vpop.f32.mrb[0].mxu0
  %5916 = vdwg.mxu0
  %v5917 = vmax.f32 %v5378, 0.0
  %v5918 = vmax.f32 %v5380, 0.0
  %v5919 = vmax.f32 %v5911, 0.0
  %v5920 = vmax.f32 %v5913, 0.0
  %v5921 = vpack.c.bf16 %v5917, %v5917
  %v5922 = vpack.c.bf16 %v5918, %v5918
  %v5923 = vpack.c.bf16 %v5919, %v5919
  %v5924 = vpack.c.bf16 %v5920, %v5920
  %v5925 = vld [vmem:[%s3] sm:$0xf]
  %v5926 = vld [vmem:[%s3 + $0x4] sm:$0xf]
  %v5927 = vld [vmem:[%s3 + $0x8] sm:$0xf]
  %v5928 = vld [vmem:[%s3 + $0xc] sm:$0xf]
  %v5929 = vld [vmem:[%s3 + $0x10] sm:$0xf]
  %v5930 = vld [vmem:[%s3 + $0x14] sm:$0xf]
  %v5931 = vld [vmem:[%s3 + $0x18] sm:$0xf]
  %v5932 = vld [vmem:[%s3 + $0x1c] sm:$0xf]
  %v5933 = vld [vmem:[%s3 + $0x20] sm:$0xf]
  %v5934 = vld [vmem:[%s3 + $0x24] sm:$0xf]
  %v5935 = vld [vmem:[%s3 + $0x28] sm:$0xf]
  %v5936 = vld [vmem:[%s3 + $0x2c] sm:$0xf]
  %v5937 = vld [vmem:[%s3 + $0x30] sm:$0xf]
  %v5938 = vld [vmem:[%s3 + $0x34] sm:$0xf]
  %v5939 = vld [vmem:[%s3 + $0x38] sm:$0xf]
  %v5940 = vld [vmem:[%s3 + $0x3c] sm:$0xf]
  %v5941 = vld [vmem:[%s3 + $0x40] sm:$0xf]
  %v5942 = vld [vmem:[%s3 + $0x44] sm:$0xf]
  %v5943 = vld [vmem:[%s3 + $0x48] sm:$0xf]
  %v5944 = vld [vmem:[%s3 + $0x4c] sm:$0xf]
  %v5945 = vld [vmem:[%s3 + $0x50] sm:$0xf]
  %v5946 = vld [vmem:[%s3 + $0x54] sm:$0xf]
  %v5947 = vld [vmem:[%s3 + $0x58] sm:$0xf]
  %v5948 = vld [vmem:[%s3 + $0x5c] sm:$0xf]
  %v5949 = vld [vmem:[%s3 + $0x60] sm:$0xf]
  %v5950 = vld [vmem:[%s3 + $0x64] sm:$0xf]
  %v5951 = vld [vmem:[%s3 + $0x68] sm:$0xf]
  %v5952 = vld [vmem:[%s3 + $0x6c] sm:$0xf]
  %v5953 = vld [vmem:[%s3 + $0x70] sm:$0xf]
  %v5954 = vld [vmem:[%s3 + $0x74] sm:$0xf]
  %v5955 = vld [vmem:[%s3 + $0x78] sm:$0xf]
  %v5956 = vld [vmem:[%s3 + $0x7c] sm:$0xf]
  %v5957 = vld [vmem:[%s3 + $0x80] sm:$0xf]
  %v5958 = vld [vmem:[%s3 + $0x84] sm:$0xf]
  %v5959 = vld [vmem:[%s3 + $0x88] sm:$0xf]
  %v5960 = vld [vmem:[%s3 + $0x8c] sm:$0xf]
  %v5961 = vld [vmem:[%s3 + $0x90] sm:$0xf]
  %v5962 = vld [vmem:[%s3 + $0x94] sm:$0xf]
  %v5963 = vld [vmem:[%s3 + $0x98] sm:$0xf]
  %v5964 = vld [vmem:[%s3 + $0x9c] sm:$0xf]
  %v5965 = vld [vmem:[%s3 + $0xa0] sm:$0xf]
  %v5966 = vld [vmem:[%s3 + $0xa4] sm:$0xf]
  %v5967 = vld [vmem:[%s3 + $0xa8] sm:$0xf]
  %v5968 = vld [vmem:[%s3 + $0xac] sm:$0xf]
  %v5969 = vld [vmem:[%s3 + $0xb0] sm:$0xf]
  %v5970 = vld [vmem:[%s3 + $0xb4] sm:$0xf]
  %v5971 = vld [vmem:[%s3 + $0xb8] sm:$0xf]
  %v5972 = vld [vmem:[%s3 + $0xbc] sm:$0xf]
  %v5973 = vld [vmem:[%s3 + $0xc0] sm:$0xf]
  %v5974 = vld [vmem:[%s3 + $0xc4] sm:$0xf]
  %v5975 = vld [vmem:[%s3 + $0xc8] sm:$0xf]
  %v5976 = vld [vmem:[%s3 + $0xcc] sm:$0xf]
  %v5977 = vld [vmem:[%s3 + $0xd0] sm:$0xf]
  %v5978 = vld [vmem:[%s3 + $0xd4] sm:$0xf]
  %v5979 = vld [vmem:[%s3 + $0xd8] sm:$0xf]
  %v5980 = vld [vmem:[%s3 + $0xdc] sm:$0xf]
  %v5981 = vld [vmem:[%s3 + $0xe0] sm:$0xf]
  %v5982 = vld [vmem:[%s3 + $0xe4] sm:$0xf]
  %v5983 = vld [vmem:[%s3 + $0xe8] sm:$0xf]
  %v5984 = vld [vmem:[%s3 + $0xec] sm:$0xf]
  %v5985 = vld [vmem:[%s3 + $0xf0] sm:$0xf]
  %v5986 = vld [vmem:[%s3 + $0xf4] sm:$0xf]
  %v5987 = vld [vmem:[%s3 + $0xf8] sm:$0xf]
  %v5988 = vld [vmem:[%s3 + $0xfc] sm:$0xf]
  %v5989 = vld [vmem:[%s4] sm:$0x1]
  %v5991 = vlaneseq
  %v5992 = vshrl.u32 %v5991, 7
  %v5993 = vsub.s32 0, %v5992
  %v5994 = vrot.slane %v5989, %v5993
  %v6060 = vunpack.c.l.b16 %v5925
  %v6061 = vunpack.c.l.b16 %v5926
  %v6062 = vunpack.c.l.b16 %v5927
  %v6063 = vunpack.c.l.b16 %v5928
  %v6064 = vunpack.c.l.b16 %v5929
  %v6065 = vunpack.c.l.b16 %v5930
  %v6066 = vunpack.c.l.b16 %v5931
  %v6067 = vunpack.c.l.b16 %v5932
  %v6068 = vunpack.c.l.b16 %v5933
  %v6069 = vunpack.c.l.b16 %v5934
  %v6070 = vunpack.c.l.b16 %v5935
  %v6071 = vunpack.c.l.b16 %v5936
  %v6072 = vunpack.c.l.b16 %v5937
  %v6073 = vunpack.c.l.b16 %v5938
  %v6074 = vunpack.c.l.b16 %v5939
  %v6075 = vunpack.c.l.b16 %v5940
  %v6076 = vunpack.c.l.b16 %v5941
  %v6077 = vunpack.c.l.b16 %v5942
  %v6078 = vunpack.c.l.b16 %v5943
  %v6079 = vunpack.c.l.b16 %v5944
  %v6080 = vunpack.c.l.b16 %v5945
  %v6081 = vunpack.c.l.b16 %v5946
  %v6082 = vunpack.c.l.b16 %v5947
  %v6083 = vunpack.c.l.b16 %v5948
  %v6084 = vunpack.c.l.b16 %v5949
  %v6085 = vunpack.c.l.b16 %v5950
  %v6086 = vunpack.c.l.b16 %v5951
  %v6087 = vunpack.c.l.b16 %v5952
  %v6088 = vunpack.c.l.b16 %v5953
  %v6089 = vunpack.c.l.b16 %v5954
  %v6090 = vunpack.c.l.b16 %v5955
  %v6091 = vunpack.c.l.b16 %v5956
  %v6092 = vunpack.c.l.b16 %v5957
  %v6093 = vunpack.c.l.b16 %v5958
  %v6094 = vunpack.c.l.b16 %v5959
  %v6095 = vunpack.c.l.b16 %v5960
  %v6096 = vunpack.c.l.b16 %v5961
  %v6097 = vunpack.c.l.b16 %v5962
  %v6098 = vunpack.c.l.b16 %v5963
  %v6099 = vunpack.c.l.b16 %v5964
  %v6100 = vunpack.c.l.b16 %v5965
  %v6101 = vunpack.c.l.b16 %v5966
  %v6102 = vunpack.c.l.b16 %v5967
  %v6103 = vunpack.c.l.b16 %v5968
  %v6104 = vunpack.c.l.b16 %v5969
  %v6105 = vunpack.c.l.b16 %v5970
  %v6106 = vunpack.c.l.b16 %v5971
  %v6107 = vunpack.c.l.b16 %v5972
  %v6108 = vunpack.c.l.b16 %v5973
  %v6109 = vunpack.c.l.b16 %v5974
  %v6110 = vunpack.c.l.b16 %v5975
  %v6111 = vunpack.c.l.b16 %v5976
  %v6112 = vunpack.c.l.b16 %v5977
  %v6113 = vunpack.c.l.b16 %v5978
  %v6114 = vunpack.c.l.b16 %v5979
  %v6115 = vunpack.c.l.b16 %v5980
  %v6116 = vunpack.c.l.b16 %v5981
  %v6117 = vunpack.c.l.b16 %v5982
  %v6118 = vunpack.c.l.b16 %v5983
  %v6119 = vunpack.c.l.b16 %v5984
  %v6120 = vunpack.c.l.b16 %v5985
  %v6121 = vunpack.c.l.b16 %v5986
  %v6122 = vunpack.c.l.b16 %v5987
  %v6123 = vunpack.c.l.b16 %v5988
  %v6124 = vpack.c.b16 %v6061, %v6060
  %v6125 = vpack.c.b16 %v6063, %v6062
  %v6126 = vpack.c.b16 %v6065, %v6064
  %v6127 = vpack.c.b16 %v6067, %v6066
  %v6128 = vpack.c.b16 %v6069, %v6068
  %v6129 = vpack.c.b16 %v6071, %v6070
  %v6130 = vpack.c.b16 %v6073, %v6072
  %v6131 = vpack.c.b16 %v6075, %v6074
  %v6132 = vpack.c.b16 %v6077, %v6076
  %v6133 = vpack.c.b16 %v6079, %v6078
  %v6134 = vpack.c.b16 %v6081, %v6080
  %v6135 = vpack.c.b16 %v6083, %v6082
  %v6136 = vpack.c.b16 %v6085, %v6084
  %v6137 = vpack.c.b16 %v6087, %v6086
  %v6138 = vpack.c.b16 %v6089, %v6088
  %v6139 = vpack.c.b16 %v6091, %v6090
  %v6140 = vpack.c.b16 %v6093, %v6092
  %v6141 = vpack.c.b16 %v6095, %v6094
  %v6142 = vpack.c.b16 %v6097, %v6096
  %v6143 = vpack.c.b16 %v6099, %v6098
  %v6144 = vpack.c.b16 %v6101, %v6100
  %v6145 = vpack.c.b16 %v6103, %v6102
  %v6146 = vpack.c.b16 %v6105, %v6104
  %v6147 = vpack.c.b16 %v6107, %v6106
  %v6148 = vpack.c.b16 %v6109, %v6108
  %v6149 = vpack.c.b16 %v6111, %v6110
  %v6150 = vpack.c.b16 %v6113, %v6112
  %v6151 = vpack.c.b16 %v6115, %v6114
  %v6152 = vpack.c.b16 %v6117, %v6116
  %v6153 = vpack.c.b16 %v6119, %v6118
  %v6154 = vpack.c.b16 %v6121, %v6120
  %v6155 = vpack.c.b16 %v6123, %v6122
  %6188 = vmatprep.subr.bf16.mxu0 0
  %6189 = vmatpush1.bf16.msra.mxu0 %v6124
  %6190 = vmatprep.subr.bf16.mxu0 0
  %6191 = vmatpush1.bf16.msra.mxu0 %v6125
  %6192 = vmatprep.subr.bf16.mxu0 0
  %6193 = vmatpush1.bf16.msra.mxu0 %v6126
  %6194 = vmatprep.subr.bf16.mxu0 0
  %6195 = vmatpush1.bf16.msra.mxu0 %v6127
  %6196 = vmatprep.subr.bf16.mxu0 0
  %6197 = vmatpush1.bf16.msra.mxu0 %v6128
  %6198 = vmatprep.subr.bf16.mxu0 0
  %6199 = vmatpush1.bf16.msra.mxu0 %v6129
  %6200 = vmatprep.subr.bf16.mxu0 0
  %6201 = vmatpush1.bf16.msra.mxu0 %v6130
  %6202 = vmatprep.subr.bf16.mxu0 0
  %6203 = vmatpush1.bf16.msra.mxu0 %v6131
  %6204 = vmatprep.subr.bf16.mxu0 0
  %6205 = vmatpush1.bf16.msra.mxu0 %v6132
  %6206 = vmatprep.subr.bf16.mxu0 0
  %6207 = vmatpush1.bf16.msra.mxu0 %v6133
  %6208 = vmatprep.subr.bf16.mxu0 0
  %6209 = vmatpush1.bf16.msra.mxu0 %v6134
  %6210 = vmatprep.subr.bf16.mxu0 0
  %6211 = vmatpush1.bf16.msra.mxu0 %v6135
  %6212 = vmatprep.subr.bf16.mxu0 0
  %6213 = vmatpush1.bf16.msra.mxu0 %v6136
  %6214 = vmatprep.subr.bf16.mxu0 0
  %6215 = vmatpush1.bf16.msra.mxu0 %v6137
  %6216 = vmatprep.subr.bf16.mxu0 0
  %6217 = vmatpush1.bf16.msra.mxu0 %v6138
  %6218 = vmatprep.subr.bf16.mxu0 0
  %6219 = vmatpush1.bf16.msra.mxu0 %v6139
  %6220 = vmatprep.mubr.bf16.mxu0 %v5922
  %6221 = vmatmul.mubr.bf16.gmra.mrb[0].mxu0 %v5921
  %v6222 = vpop.f32.mrb[0].mxu0
  %v6223 = vadd.f32 %v5994, %v6222
  %v6224 = vpop.f32.mrb[0].mxu0
  %v6225 = vpop.f32.mrb[0].mxu0
  %v6226 = vpop.f32.mrb[0].mxu0
  %6227 = vdwg.mxu0
  %6228 = vmatprep.subr.bf16.mxu0 0
  %6229 = vmatpush1.bf16.msra.mxu0 %v6140
  %6230 = vmatprep.subr.bf16.mxu0 0
  %6231 = vmatpush1.bf16.msra.mxu0 %v6141
  %6232 = vmatprep.subr.bf16.mxu0 0
  %6233 = vmatpush1.bf16.msra.mxu0 %v6142
  %6234 = vmatprep.subr.bf16.mxu0 0
  %6235 = vmatpush1.bf16.msra.mxu0 %v6143
  %6236 = vmatprep.subr.bf16.mxu0 0
  %6237 = vmatpush1.bf16.msra.mxu0 %v6144
  %6238 = vmatprep.subr.bf16.mxu0 0
  %6239 = vmatpush1.bf16.msra.mxu0 %v6145
  %6240 = vmatprep.subr.bf16.mxu0 0
  %6241 = vmatpush1.bf16.msra.mxu0 %v6146
  %6242 = vmatprep.subr.bf16.mxu0 0
  %6243 = vmatpush1.bf16.msra.mxu0 %v6147
  %6244 = vmatprep.subr.bf16.mxu0 0
  %6245 = vmatpush1.bf16.msra.mxu0 %v6148
  %6246 = vmatprep.subr.bf16.mxu0 0
  %6247 = vmatpush1.bf16.msra.mxu0 %v6149
  %6248 = vmatprep.subr.bf16.mxu0 0
  %6249 = vmatpush1.bf16.msra.mxu0 %v6150
  %6250 = vmatprep.subr.bf16.mxu0 0
  %6251 = vmatpush1.bf16.msra.mxu0 %v6151
  %6252 = vmatprep.subr.bf16.mxu0 0
  %6253 = vmatpush1.bf16.msra.mxu0 %v6152
  %6254 = vmatprep.subr.bf16.mxu0 0
  %6255 = vmatpush1.bf16.msra.mxu0 %v6153
  %6256 = vmatprep.subr.bf16.mxu0 0
  %6257 = vmatpush1.bf16.msra.mxu0 %v6154
  %6258 = vmatprep.subr.bf16.mxu0 0
  %6259 = vmatpush1.bf16.msra.mxu0 %v6155
  %6260 = vmatprep.mubr.bf16.mxu0 %v5924
  %6261 = vmatmul.mubr.bf16.gmra.mrb[0].mxu0 %v5923
  %v6262 = vpop.f32.mrb[0].mxu0
  %v6263 = vadd.f32 %v6223, %v6262
  %v6264 = vpop.f32.mrb[0].mxu0
  %v6265 = vpop.f32.mrb[0].mxu0
  %v6266 = vpop.f32.mrb[0].mxu0
  %6267 = vdwg.mxu0
  %6268 = vst [vmem:[%s5] sm:$0xff] %v6263
  // Predicated region
  $region22: #{qnetwork_forward.7} parent=0 // pred_check
    _
  $region23: #{qnetwork_forward.7} parent=0 // pred_check_branch
    %6270 = sbr.rel (0) target = $region25
  $region24: #{qnetwork_forward.7} parent=0 // pred_region
    _
  $region25: #{qnetwork_forward.7} parent=0 // pred_fallthru
    _
  // Predicated region
  $region26: #{qnetwork_forward.7} parent=0 // pred_check
    _
  $region27: #{qnetwork_forward.7} parent=0 // pred_check_branch
    %6272 = sbr.rel (0) target = $region29
  $region28: #{qnetwork_forward.7} parent=0 // pred_region
    _
  $region29: #{qnetwork_forward.7} parent=0 // pred_fallthru
    _

</llo_original>
